<compile_context>
chip_gen: v6e
topology: v6e:2x2x1
jax: 0.10.0
libtpu: 0.0.40
codegen_flags: <defaults>
</compile_context>

<pallas_src>
import math

import jax
import jax.numpy as jnp
from jax.experimental import pallas as pl
from jax.experimental.pallas import tpu as pltpu

EPS = 1e-5
# (kernel, stride, padding) of the five Conv2d layers in DCGAN32Inverter (channels=32):
# Conv2d(3,32,3,1,1) Conv2d(32,64,3,2,1) Conv2d(64,128,2,2,1) Conv2d(128,256,2,2) Conv2d(256,512,2,4)
CONV_CFG = [(3, 1, 1), (3, 2, 1), (2, 2, 1), (2, 2, 0), (2, 4, 0)]


def _cost_estimate(flops, arrays, out_shape):
    bytes_accessed = int(sum(a.size * a.dtype.itemsize for a in arrays)
                         + math.prod(out_shape.shape) * jnp.dtype(out_shape.dtype).itemsize)
    return pl.CostEstimate(flops=int(flops), transcendentals=0, bytes_accessed=bytes_accessed)


# -----------------------------------------------------------------------------
# Pallas kernels
# -----------------------------------------------------------------------------
def _matmul_shift_relu_kernel(x_ref, w_ref, shift_ref, o_ref):
    # Compute-dtype operands on the MXU, f32 accumulation + f32 epilogue.
    acc = jnp.dot(x_ref[...], w_ref[...], preferred_element_type=jnp.float32)
    o_ref[...] = jnp.maximum(acc + shift_ref[...], 0.0).astype(o_ref.dtype)


def fused_matmul_shift_relu(x, w, shift, *, num_blocks=1):
    """relu(x @ w + shift). x: (M,K), w: (K,N) with BN scale folded, shift: (1,N) f32."""
    m, k = x.shape
    _, n = w.shape
    grid_m = num_blocks if (num_blocks > 1 and m % num_blocks == 0
                            and (m // num_blocks) % 8 == 0) else 1
    tm = m // grid_m
    out_shape = jax.ShapeDtypeStruct((m, n), x.dtype)
    return pl.pallas_call(
        _matmul_shift_relu_kernel,
        out_shape=out_shape,
        grid=(grid_m,),
        in_specs=[
            pl.BlockSpec((tm, k), lambda i: (i, 0)),   # activation row tile (unpadded K)
            pl.BlockSpec((k, n), lambda i: (0, 0)),    # full scale-folded weight
            pl.BlockSpec((1, n), lambda i: (0, 0)),    # folded BN shift / bias
        ],
        out_specs=pl.BlockSpec((tm, n), lambda i: (i, 0)),
        compiler_params=pltpu.CompilerParams(dimension_semantics=("parallel",)),
        cost_estimate=_cost_estimate(2 * m * k * n, (x, w, shift), out_shape),
    )(x, w, shift)


def _tail_kernel(x_ref, w3_ref, s3_ref, w4_ref, s4_ref, w5_ref, s5_ref,
                 w6_ref, s6_ref, w7_ref, b7_ref, o_ref):
    # conv3 + conv4 + conv5 + Linear/BN1d/ReLU + Linear, all VMEM-resident.
    cdt = x_ref.dtype
    n = o_ref.shape[0]           # batch
    c3 = w3_ref.shape[1]         # conv3 out channels (= per-tap row size of w4)
    c4 = w4_ref.shape[1]         # conv4 out channels (= per-window row size of w5)
    rows = 4 * n                 # rows per conv4 tap: (conv4 window j, batch)

    # conv3 + BN + ReLU, only at the 4x4 output positions the head consumes.
    # x rows are packed (tap t=(kh4,kw4), window j=(kh5,kw5), batch) by build_tail_input().
    h3 = jnp.dot(x_ref[...], w3_ref[...], preferred_element_type=jnp.float32)
    h3 = jnp.maximum(h3 + s3_ref[...], 0.0).astype(cdt)                       # (16n, c3)

    # conv4 (2x2, stride 2) restricted to the 2x2 window conv5 reads: sum over its 4 taps.
    acc4 = jnp.dot(h3[0:rows, :], w4_ref[0:c3, :], preferred_element_type=jnp.float32)
    for t in range(1, 4):
        acc4 += jnp.dot(h3[t * rows:(t + 1) * rows, :], w4_ref[t * c3:(t + 1) * c3, :],
                        preferred_element_type=jnp.float32)
    h4 = jnp.maximum(acc4 + s4_ref[...], 0.0).astype(cdt)                     # (4n, c4): rows (j, batch)

    # conv5: its single 2x2/stride-4 window == sum over the 4 conv4 positions j.
    acc5 = jnp.dot(h4[0:n, :], w5_ref[0:c4, :], preferred_element_type=jnp.float32)
    for j in range(1, 4):
        acc5 += jnp.dot(h4[j * n:(j + 1) * n, :], w5_ref[j * c4:(j + 1) * c4, :],
                        preferred_element_type=jnp.float32)
    h5 = jnp.maximum(acc5 + s5_ref[...], 0.0).astype(cdt)                     # (n, 512)

    # Linear(512,512) + BatchNorm1d + ReLU, then Linear(512,100).
    h6 = jnp.dot(h5, w6_ref[...], preferred_element_type=jnp.float32)
    h6 = jnp.maximum(h6 + s6_ref[...], 0.0).astype(cdt)
    o_ref[...] = jnp.dot(h6, w7_ref[...], preferred_element_type=jnp.float32) + b7_ref[...]


def fused_tail(x, w3, s3, w4, s4, w5, s5, w6, s6, w7, b7):
    n = x.shape[0] // 16
    out_shape = jax.ShapeDtypeStruct((n, w7.shape[1]), jnp.float32)
    flops = 2 * (x.shape[0] * w3.shape[0] * w3.shape[1]
                 + 4 * n * w4.shape[0] * w4.shape[1]
                 + n * w5.shape[0] * w5.shape[1]
                 + n * w6.shape[0] * w6.shape[1]
                 + n * w7.shape[0] * w7.shape[1])
    args = (x, w3, s3, w4, s4, w5, s5, w6, s6, w7, b7)
    # Whole-array VMEM blocks, no grid: ~2 MB of weights + <50 KB activations — far under
    # VMEM on every generation (incl. v7x's 64 MiB), so spend the headroom on fusion.
    return pl.pallas_call(
        _tail_kernel,
        out_shape=out_shape,
        cost_estimate=_cost_estimate(flops, args, out_shape),
    )(*args)


# -----------------------------------------------------------------------------
# Layer wrappers / forward
# -----------------------------------------------------------------------------
def conv_bn_relu(x, w2d, shift, ksize, stride, padding, *, num_blocks=1):
    """x: (N,H,W,C) NHWC; w2d: (C*k*k, OC) with BN scale folded; shift: (1,OC) f32."""
    n = x.shape[0]
    oc = w2d.shape[1]
    # Single-op im2col; feature ordering is (in_channel, kh, kw) -> matches the
    # w.reshape(OC, IC*KH*KW) flattening used in fold_params().
    patches = jax.lax.conv_general_dilated_patches(
        x, filter_shape=(ksize, ksize), window_strides=(stride, stride),
        padding=((padding, padding), (padding, padding)),
        dimension_numbers=("NHWC", "HWIO", "NHWC"))
    _, oh, ow, k = patches.shape
    out = fused_matmul_shift_relu(patches.reshape(n * oh * ow, k), w2d, shift,
                                  num_blocks=num_blocks)
    return out.reshape(n, oh, ow, oc)


def build_tail_input(h2):
    """im2col for conv3 (k=2,s=2,p=1), restricted to the 4x4 conv3 output positions that feed
    the head, with rows packed as (conv4 tap, conv4 window, batch) so the tail kernel only
    needs leading-dim row-block slices (no in-kernel gathers or lane/sublane relayouts)."""
    n = h2.shape[0]
    p3 = jax.lax.conv_general_dilated_patches(
        h2, filter_shape=(2, 2), window_strides=(2, 2),
        padding=((1, 1), (1, 1)), dimension_numbers=("NHWC", "HWIO", "NHWC"))   # (n,9,9,4*C2)
    c = p3.shape[-1]
    p3 = p3[:, :4, :4, :]                          # only the conv3 positions reaching the head
    p3 = p3.reshape(n, 2, 2, 2, 2, c)              # [n, kh5, kh4, kw5, kw4, c]
    p3 = jnp.transpose(p3, (2, 4, 1, 3, 0, 5))     # [kh4, kw4, kh5, kw5, n, c]
    return p3.reshape(16 * n, c)                   # row = tap*4n + window*n + batch


def forward(x_nchw, p, conv1_blocks=1):
    """DCGAN32Inverter.forward: (N,3,32,32) f32 -> (N,100) f32 (inference-mode BatchNorm)."""
    cdt = p["convs"][0]["w"].dtype
    x = jnp.transpose(x_nchw, (0, 2, 3, 1))                  # the only layout transpose
    # bn0: the per-channel scale is folded into conv1's weight rows; the shift must remain a
    # pre-conv add (folding it into conv1's output shift is wrong at zero-padded borders).
    x = (x + p["bn0_pre_add"]).astype(cdt)
    (k1, s1, d1), (k2, s2, d2) = CONV_CFG[0], CONV_CFG[1]
    h1 = conv_bn_relu(x, p["convs"][0]["w"], p["convs"][0]["shift"], k1, s1, d1,
                      num_blocks=conv1_blocks)
    h2 = conv_bn_relu(h1, p["convs"][1]["w"], p["convs"][1]["shift"], k2, s2, d2)
    t = p["tail"]
    return fused_tail(build_tail_input(h2), t["w3"], t["s3"], t["w4"], t["s4"],
                      t["w5"], t["s5"], t["w6"], t["s6"], t["w7"], t["b7"])


def conv1_blocks_for_device():
    """2 M-blocks only where there are 2 TensorCores per device to shard them across
    (v4/v5p megacore, v7x); single-TC v5e/v6e run layer 1 as one full-extent block."""
    try:
        kind = jax.devices()[0].device_kind.lower()
    except Exception:
        return 1
    return 2 if any(tok in kind for tok in ("v4", "v5p", "v7", "7x")) else 1


# -----------------------------------------------------------------------------
# Parameter creation / folding
# -----------------------------------------------------------------------------
def init_raw_params(key, channels=32):
    def bn_params(key, n):
        k1, k2, k3, k4 = jax.random.split(key, 4)
        return dict(gamma=1.0 + 0.1 * jax.random.normal(k1, (n,), jnp.float32),
                    beta=0.1 * jax.random.normal(k2, (n,), jnp.float32),
                    mean=0.1 * jax.random.normal(k3, (n,), jnp.float32),
                    var=0.5 + jax.random.uniform(k4, (n,), jnp.float32))

    chans = [3, channels, channels * 2, channels * 4, channels * 8, channels * 16]
    key, kbn0 = jax.random.split(key)
    raw = {"bn0": bn_params(kbn0, 3), "convs": []}
    for li, (k, s, p) in enumerate(CONV_CFG):
        ic, oc = chans[li], chans[li + 1]
        key, kw_, kb_, kbn = jax.random.split(key, 4)
        raw["convs"].append(dict(
            w=jax.random.normal(kw_, (oc, ic, k, k), jnp.float32) / jnp.sqrt(ic * k * k),
            b=0.1 * jax.random.normal(kb_, (oc,), jnp.float32),
            bn=bn_params(kbn, oc)))
    nf = channels * 16
    key, k1, k2, kbn, k3, k4 = jax.random.split(key, 6)
    raw["dense"] = dict(
        w1=jax.random.normal(k1, (nf, nf), jnp.float32) / jnp.sqrt(nf),
        b1=0.1 * jax.random.normal(k2, (nf,), jnp.float32),
        bn=bn_params(kbn, nf),
        w2=jax.random.normal(k3, (100, nf), jnp.float32) / jnp.sqrt(nf),
        b2=0.1 * jax.random.normal(k4, (100,), jnp.float32))
    return raw


def fold_params(raw, dtype=jnp.bfloat16):
    """Fold conv/linear bias + inference BatchNorm into matmul weights (dtype) and f32 shifts."""
    def bn_scale_shift(b, bn):
        scale = bn["gamma"] / jnp.sqrt(bn["var"] + EPS)
        return scale, (b - bn["mean"]) * scale + bn["beta"]

    def fold_ckk(layer):    # K ordered (in_channel, kh, kw) -> matches XLA im2col patches
        oc, ic, kh, kw = layer["w"].shape
        scale, shift = bn_scale_shift(layer["b"], layer["bn"])
        w2d = layer["w"].reshape(oc, ic * kh * kw).T * scale[None, :]
        return w2d, shift.reshape(1, oc).astype(jnp.float32)

    def fold_kkc(layer):    # K ordered (kh, kw, in_channel) -> matches in-kernel per-tap blocks
        oc, ic, kh, kw = layer["w"].shape
        scale, shift = bn_scale_shift(layer["b"], layer["bn"])
        w2d = layer["w"].transpose(2, 3, 1, 0).reshape(kh * kw * ic, oc) * scale[None, :]
        return w2d, shift.reshape(1, oc).astype(jnp.float32)

    # bn0: scale folded into conv1 weight rows; shift kept as a pre-conv additive term.
    s0 = raw["bn0"]["gamma"] / jnp.sqrt(raw["bn0"]["var"] + EPS)
    t0 = raw["bn0"]["beta"] - raw["bn0"]["mean"] * s0
    folded = {"bn0_pre_add": (t0 / s0).astype(jnp.float32), "convs": []}

    w1, sh1 = fold_ckk(raw["convs"][0])
    w1 = w1 * jnp.repeat(s0, CONV_CFG[0][0] * CONV_CFG[0][0])[:, None]   # bn0 scale per input ch
    w2, sh2 = fold_ckk(raw["convs"][1])
    folded["convs"] = [{"w": w1.astype(dtype), "shift": sh1},
                       {"w": w2.astype(dtype), "shift": sh2}]

    w3, s3 = fold_ckk(raw["convs"][2])
    w4, s4 = fold_kkc(raw["convs"][3])
    w5, s5 = fold_kkc(raw["convs"][4])
    d = raw["dense"]
    scale6, shift6 = bn_scale_shift(d["b1"], d["bn"])
    folded["tail"] = {
        "w3": w3.astype(dtype), "s3": s3,
        "w4": w4.astype(dtype), "s4": s4,
        "w5": w5.astype(dtype), "s5": s5,
        "w6": (d["w1"].T * scale6[None, :]).astype(dtype),
        "s6": shift6.reshape(1, -1).astype(jnp.float32),
        "w7": d["w2"].T.astype(dtype),
        "b7": d["b2"].reshape(1, -1).astype(jnp.float32)}
    return folded


# -----------------------------------------------------------------------------
# Pure-JAX f32 reference (straight transcription of the PyTorch module, eval mode)
# -----------------------------------------------------------------------------
def reference_forward(x_nchw, raw):
    def bn(y, b):
        return (y - b["mean"]) / jnp.sqrt(b["var"] + EPS) * b["gamma"] + b["beta"]

    x = bn(jnp.transpose(x_nchw, (0, 2, 3, 1)).astype(jnp.float32), raw["bn0"])
    for (k, s, p), layer in zip(CONV_CFG, raw["convs"]):
        y = jax.lax.conv_general_dilated(
            x, layer["w"], (s, s), ((p, p), (p, p)),
            dimension_numbers=("NHWC", "OIHW", "NHWC"))
        x = jnp.maximum(bn(y + layer["b"].reshape(1, 1, 1, -1), layer["bn"]), 0.0)
    z = x.reshape(x.shape[0], -1)                       # (N,1,1,512) -> (N,512)
    d = raw["dense"]
    h = jnp.maximum(bn(z @ d["w1"].T + d["b1"], d["bn"]), 0.0)
    return h @ d["w2"].T + d["b2"]


if __name__ == "__main__":
    key = jax.random.PRNGKey(0)
    kx, kp = jax.random.split(key)
    # 32x32 input: spatial schedule 32 -> 32 -> 16 -> 9 -> 4 -> 1, so .squeeze() gives (N, 512).
    x = jax.random.normal(kx, (2, 3, 32, 32), jnp.float32)   # NCHW, as the PyTorch module expects

    raw = init_raw_params(kp, channels=32)
    ref = reference_forward(x, raw)
    scale = max(1.0, float(jnp.max(jnp.abs(ref))))

    nblocks = conv1_blocks_for_device()
    fwd = jax.jit(forward, static_argnames=("conv1_blocks",))

    # f32-parameter Pallas run: tighter check that locks in the im2col / tap / window
    # orderings independently of bf16 rounding.
    out32 = jax.block_until_ready(fwd(x, fold_params(raw, jnp.float32), conv1_blocks=nblocks))
    assert out32.shape == (2, 100), out32.shape
    assert bool(jnp.all(jnp.isfinite(out32)))
    err32 = float(jnp.max(jnp.abs(out32 - ref)))
    assert err32 < 5e-2 * scale, (err32, scale)

    # bf16 run (MXU-native operands): looser tolerance for bf16 rounding across 7 chained matmuls.
    out16 = jax.block_until_ready(fwd(x, fold_params(raw, jnp.bfloat16), conv1_blocks=nblocks))
    assert out16.shape == (2, 100), out16.shape
    assert bool(jnp.all(jnp.isfinite(out16)))
    err16 = float(jnp.max(jnp.abs(out16 - ref)))
    assert err16 < 0.1 * scale, (err16, scale)

    print("KERNEL_OK")
</pallas_src>

<mosaic_0001>
module attributes {stable_mosaic.version = 11 : i64} {
  func.func @_matmul_shift_relu_kernel(%arg0: i32, %arg1: memref<2048x27xf32, #tpu.memory_space<vmem>>, %arg2: memref<27x32xf32, #tpu.memory_space<vmem>>, %arg3: memref<1x32xf32, #tpu.memory_space<vmem>>, %arg4: memref<2048x32xf32, #tpu.memory_space<vmem>>) attributes {dimension_semantics = [#tpu.dimension_semantics<parallel>], iteration_bounds = array<i64: 1>, scalar_prefetch = 0 : i64, scratch_operands = 0 : i64, tpu.core_type = #tpu.core_type<tc>, window_params = [{transform_indices = @transform_0, window_bounds = array<i64: 2048, 27>}, {pipeline_mode = #tpu.pipeline_mode<synchronous>, transform_indices = @transform_1, window_bounds = array<i64: 27, 32>}, {pipeline_mode = #tpu.pipeline_mode<synchronous>, transform_indices = @transform_2, window_bounds = array<i64: 1, 32>}, {transform_indices = @transform_3, window_bounds = array<i64: 2048, 32>}]} {
    %c0 = arith.constant 0 : index
    %c0_0 = arith.constant 0 : index
    %0 = vector.load %arg1[%c0, %c0_0] : memref<2048x27xf32, #tpu.memory_space<vmem>>, vector<2048x27xf32>
    %c0_1 = arith.constant 0 : index
    %c0_2 = arith.constant 0 : index
    %1 = vector.load %arg2[%c0_1, %c0_2] : memref<27x32xf32, #tpu.memory_space<vmem>>, vector<27x32xf32>
    %cst = arith.constant dense<0.000000e+00> : vector<2048x32xf32>
    %2 = tpu.matmul %0, %1, %cst {dimension_numbers = #tpu.dot_dimension_numbers<[1], [0], [0], [1], [0, 0, 1, 1], [], []>} : vector<2048x27xf32>, vector<27x32xf32>, vector<2048x32xf32> -> vector<2048x32xf32>
    %c0_3 = arith.constant 0 : index
    %c0_4 = arith.constant 0 : index
    %3 = vector.load %arg3[%c0_3, %c0_4] : memref<1x32xf32, #tpu.memory_space<vmem>>, vector<1x32xf32>
    %4 = vector.broadcast %3 : vector<1x32xf32> to vector<2048x32xf32>
    %5 = arith.addf %2, %4 : vector<2048x32xf32>
    %cst_5 = arith.constant 0.000000e+00 : f32
    %6 = vector.broadcast %cst_5 : f32 to vector<2048x32xf32>
    %7 = arith.maximumf %5, %6 : vector<2048x32xf32>
    %c0_6 = arith.constant 0 : index
    %c0_7 = arith.constant 0 : index
    %8 = vector.load %arg4[%c0_6, %c0_7] : memref<2048x32xf32, #tpu.memory_space<vmem>>, vector<2048x32xf32>
    tpu.vector_store %arg4[%c0_6, %c0_7], %7 {strides = array<i32>} : memref<2048x32xf32, #tpu.memory_space<vmem>>, vector<2048x32xf32>,
    return
  }
  func.func @transform_0(%arg0: i32) -> (i32, i32) {
    %c0_i32 = arith.constant 0 : i32
    %c0_i32_0 = arith.constant 0 : i32
    return %arg0, %c0_i32 : i32, i32
  }
  func.func @transform_1(%arg0: i32) -> (i32, i32) {
    %c0_i32 = arith.constant 0 : i32
    %c0_i32_0 = arith.constant 0 : i32
    %c0_i32_1 = arith.constant 0 : i32
    return %c0_i32, %c0_i32_0 : i32, i32
  }
  func.func @transform_2(%arg0: i32) -> (i32, i32) {
    %c0_i32 = arith.constant 0 : i32
    %c0_i32_0 = arith.constant 0 : i32
    %c0_i32_1 = arith.constant 0 : i32
    return %c0_i32, %c0_i32_0 : i32, i32
  }
  func.func @transform_3(%arg0: i32) -> (i32, i32) {
    %c0_i32 = arith.constant 0 : i32
    %c0_i32_0 = arith.constant 0 : i32
    return %arg0, %c0_i32 : i32, i32
  }
}

module attributes {stable_mosaic.version = 11 : i64} {
  func.func @_matmul_shift_relu_kernel(%arg0: i32, %arg1: memref<512x288xf32, #tpu.memory_space<vmem>>, %arg2: memref<288x64xf32, #tpu.memory_space<vmem>>, %arg3: memref<1x64xf32, #tpu.memory_space<vmem>>, %arg4: memref<512x64xf32, #tpu.memory_space<vmem>>) attributes {dimension_semantics = [#tpu.dimension_semantics<parallel>], iteration_bounds = array<i64: 1>, scalar_prefetch = 0 : i64, scratch_operands = 0 : i64, tpu.core_type = #tpu.core_type<tc>, window_params = [{transform_indices = @transform_0, window_bounds = array<i64: 512, 288>}, {pipeline_mode = #tpu.pipeline_mode<synchronous>, transform_indices = @transform_1, window_bounds = array<i64: 288, 64>}, {pipeline_mode = #tpu.pipeline_mode<synchronous>, transform_indices = @transform_2, window_bounds = array<i64: 1, 64>}, {transform_indices = @transform_3, window_bounds = array<i64: 512, 64>}]} {
    %c0 = arith.constant 0 : index
    %c0_0 = arith.constant 0 : index
    %0 = vector.load %arg1[%c0, %c0_0] : memref<512x288xf32, #tpu.memory_space<vmem>>, vector<512x288xf32>
    %c0_1 = arith.constant 0 : index
    %c0_2 = arith.constant 0 : index
    %1 = vector.load %arg2[%c0_1, %c0_2] : memref<288x64xf32, #tpu.memory_space<vmem>>, vector<288x64xf32>
    %cst = arith.constant dense<0.000000e+00> : vector<512x64xf32>
    %2 = tpu.matmul %0, %1, %cst {dimension_numbers = #tpu.dot_dimension_numbers<[1], [0], [0], [1], [0, 0, 1, 1], [], []>} : vector<512x288xf32>, vector<288x64xf32>, vector<512x64xf32> -> vector<512x64xf32>
    %c0_3 = arith.constant 0 : index
    %c0_4 = arith.constant 0 : index
    %3 = vector.load %arg3[%c0_3, %c0_4] : memref<1x64xf32, #tpu.memory_space<vmem>>, vector<1x64xf32>
    %4 = vector.broadcast %3 : vector<1x64xf32> to vector<512x64xf32>
    %5 = arith.addf %2, %4 : vector<512x64xf32>
    %cst_5 = arith.constant 0.000000e+00 : f32
    %6 = vector.broadcast %cst_5 : f32 to vector<512x64xf32>
    %7 = arith.maximumf %5, %6 : vector<512x64xf32>
    %c0_6 = arith.constant 0 : index
    %c0_7 = arith.constant 0 : index
    %8 = vector.load %arg4[%c0_6, %c0_7] : memref<512x64xf32, #tpu.memory_space<vmem>>, vector<512x64xf32>
    tpu.vector_store %arg4[%c0_6, %c0_7], %7 {strides = array<i32>} : memref<512x64xf32, #tpu.memory_space<vmem>>, vector<512x64xf32>,
    return
  }
  func.func @transform_0(%arg0: i32) -> (i32, i32) {
    %c0_i32 = arith.constant 0 : i32
    %c0_i32_0 = arith.constant 0 : i32
    return %arg0, %c0_i32 : i32, i32
  }
  func.func @transform_1(%arg0: i32) -> (i32, i32) {
    %c0_i32 = arith.constant 0 : i32
    %c0_i32_0 = arith.constant 0 : i32
    %c0_i32_1 = arith.constant 0 : i32
    return %c0_i32, %c0_i32_0 : i32, i32
  }
  func.func @transform_2(%arg0: i32) -> (i32, i32) {
    %c0_i32 = arith.constant 0 : i32
    %c0_i32_0 = arith.constant 0 : i32
    %c0_i32_1 = arith.constant 0 : i32
    return %c0_i32, %c0_i32_0 : i32, i32
  }
  func.func @transform_3(%arg0: i32) -> (i32, i32) {
    %c0_i32 = arith.constant 0 : i32
    %c0_i32_0 = arith.constant 0 : i32
    return %arg0, %c0_i32 : i32, i32
  }
}

module attributes {stable_mosaic.version = 11 : i64} {
  func.func @_tail_kernel(%arg0: memref<32x256xf32, #tpu.memory_space<vmem>>, %arg1: memref<256x128xf32, #tpu.memory_space<vmem>>, %arg2: memref<1x128xf32, #tpu.memory_space<vmem>>, %arg3: memref<512x256xf32, #tpu.memory_space<vmem>>, %arg4: memref<1x256xf32, #tpu.memory_space<vmem>>, %arg5: memref<1024x512xf32, #tpu.memory_space<vmem>>, %arg6: memref<1x512xf32, #tpu.memory_space<vmem>>, %arg7: memref<512x512xf32, #tpu.memory_space<vmem>>, %arg8: memref<1x512xf32, #tpu.memory_space<vmem>>, %arg9: memref<512x100xf32, #tpu.memory_space<vmem>>, %arg10: memref<1x100xf32, #tpu.memory_space<vmem>>, %arg11: memref<2x100xf32, #tpu.memory_space<vmem>>) attributes {dimension_semantics = [], scalar_prefetch = 0 : i64, scratch_operands = 0 : i64, tpu.core_type = #tpu.core_type<tc>} {
    %c0 = arith.constant 0 : index
    %c0_0 = arith.constant 0 : index
    %0 = vector.load %arg0[%c0, %c0_0] : memref<32x256xf32, #tpu.memory_space<vmem>>, vector<32x256xf32>
    %c0_1 = arith.constant 0 : index
    %c0_2 = arith.constant 0 : index
    %1 = vector.load %arg1[%c0_1, %c0_2] : memref<256x128xf32, #tpu.memory_space<vmem>>, vector<256x128xf32>
    %cst = arith.constant dense<0.000000e+00> : vector<32x128xf32>
    %2 = tpu.matmul %0, %1, %cst {dimension_numbers = #tpu.dot_dimension_numbers<[1], [0], [0], [1], [0, 0, 1, 1], [], []>} : vector<32x256xf32>, vector<256x128xf32>, vector<32x128xf32> -> vector<32x128xf32>
    %c0_3 = arith.constant 0 : index
    %c0_4 = arith.constant 0 : index
    %3 = vector.load %arg2[%c0_3, %c0_4] : memref<1x128xf32, #tpu.memory_space<vmem>>, vector<1x128xf32>
    %4 = vector.broadcast %3 : vector<1x128xf32> to vector<32x128xf32>
    %5 = arith.addf %2, %4 : vector<32x128xf32>
    %cst_5 = arith.constant 0.000000e+00 : f32
    %6 = vector.broadcast %cst_5 : f32 to vector<32x128xf32>
    %7 = arith.maximumf %5, %6 : vector<32x128xf32>
    %8 = vector.extract_strided_slice %7 {offsets = [0, 0], sizes = [8, 128], strides = [1, 1]} : vector<32x128xf32> to vector<8x128xf32>
    %c0_6 = arith.constant 0 : index
    %c0_7 = arith.constant 0 : index
    %9 = vector.load %arg3[%c0_6, %c0_7] : memref<512x256xf32, #tpu.memory_space<vmem>>, vector<128x256xf32>
    %cst_8 = arith.constant dense<0.000000e+00> : vector<8x256xf32>
    %10 = tpu.matmul %8, %9, %cst_8 {dimension_numbers = #tpu.dot_dimension_numbers<[1], [0], [0], [1], [0, 0, 1, 1], [], []>} : vector<8x128xf32>, vector<128x256xf32>, vector<8x256xf32> -> vector<8x256xf32>
    %11 = vector.extract_strided_slice %7 {offsets = [8, 0], sizes = [8, 128], strides = [1, 1]} : vector<32x128xf32> to vector<8x128xf32>
    %c128 = arith.constant 128 : index
    %c0_9 = arith.constant 0 : index
    %12 = vector.load %arg3[%c128, %c0_9] : memref<512x256xf32, #tpu.memory_space<vmem>>, vector<128x256xf32>
    %cst_10 = arith.constant dense<0.000000e+00> : vector<8x256xf32>
    %13 = tpu.matmul %11, %12, %cst_10 {dimension_numbers = #tpu.dot_dimension_numbers<[1], [0], [0], [1], [0, 0, 1, 1], [], []>} : vector<8x128xf32>, vector<128x256xf32>, vector<8x256xf32> -> vector<8x256xf32>
    %14 = arith.addf %10, %13 : vector<8x256xf32>
    %15 = vector.extract_strided_slice %7 {offsets = [16, 0], sizes = [8, 128], strides = [1, 1]} : vector<32x128xf32> to vector<8x128xf32>
    %c256 = arith.constant 256 : index
    %c0_11 = arith.constant 0 : index
    %16 = vector.load %arg3[%c256, %c0_11] : memref<512x256xf32, #tpu.memory_space<vmem>>, vector<128x256xf32>
    %cst_12 = arith.constant dense<0.000000e+00> : vector<8x256xf32>
    %17 = tpu.matmul %15, %16, %cst_12 {dimension_numbers = #tpu.dot_dimension_numbers<[1], [0], [0], [1], [0, 0, 1, 1], [], []>} : vector<8x128xf32>, vector<128x256xf32>, vector<8x256xf32> -> vector<8x256xf32>
    %18 = arith.addf %14, %17 : vector<8x256xf32>
    %19 = vector.extract_strided_slice %7 {offsets = [24, 0], sizes = [8, 128], strides = [1, 1]} : vector<32x128xf32> to vector<8x128xf32>
    %c384 = arith.constant 384 : index
    %c0_13 = arith.constant 0 : index
    %20 = vector.load %arg3[%c384, %c0_13] : memref<512x256xf32, #tpu.memory_space<vmem>>, vector<128x256xf32>
    %cst_14 = arith.constant dense<0.000000e+00> : vector<8x256xf32>
    %21 = tpu.matmul %19, %20, %cst_14 {dimension_numbers = #tpu.dot_dimension_numbers<[1], [0], [0], [1], [0, 0, 1, 1], [], []>} : vector<8x128xf32>, vector<128x256xf32>, vector<8x256xf32> -> vector<8x256xf32>
    %22 = arith.addf %18, %21 : vector<8x256xf32>
    %c0_15 = arith.constant 0 : index
    %c0_16 = arith.constant 0 : index
    %23 = vector.load %arg4[%c0_15, %c0_16] : memref<1x256xf32, #tpu.memory_space<vmem>>, vector<1x256xf32>
    %24 = vector.broadcast %23 : vector<1x256xf32> to vector<8x256xf32>
    %25 = arith.addf %22, %24 : vector<8x256xf32>
    %cst_17 = arith.constant 0.000000e+00 : f32
    %26 = vector.broadcast %cst_17 : f32 to vector<8x256xf32>
    %27 = arith.maximumf %25, %26 : vector<8x256xf32>
    %28 = vector.extract_strided_slice %27 {offsets = [0, 0], sizes = [2, 256], strides = [1, 1]} : vector<8x256xf32> to vector<2x256xf32>
    %c0_18 = arith.constant 0 : index
    %c0_19 = arith.constant 0 : index
    %29 = vector.load %arg5[%c0_18, %c0_19] : memref<1024x512xf32, #tpu.memory_space<vmem>>, vector<256x512xf32>
    %cst_20 = arith.constant dense<0.000000e+00> : vector<2x512xf32>
    %30 = tpu.matmul %28, %29, %cst_20 {dimension_numbers = #tpu.dot_dimension_numbers<[1], [0], [0], [1], [0, 0, 1, 1], [], []>} : vector<2x256xf32>, vector<256x512xf32>, vector<2x512xf32> -> vector<2x512xf32>
    %31 = vector.extract_strided_slice %27 {offsets = [2, 0], sizes = [2, 256], strides = [1, 1]} : vector<8x256xf32> to vector<2x256xf32>
    %c256_21 = arith.constant 256 : index
    %c0_22 = arith.constant 0 : index
    %32 = vector.load %arg5[%c256_21, %c0_22] : memref<1024x512xf32, #tpu.memory_space<vmem>>, vector<256x512xf32>
    %cst_23 = arith.constant dense<0.000000e+00> : vector<2x512xf32>
    %33 = tpu.matmul %31, %32, %cst_23 {dimension_numbers = #tpu.dot_dimension_numbers<[1], [0], [0], [1], [0, 0, 1, 1], [], []>} : vector<2x256xf32>, vector<256x512xf32>, vector<2x512xf32> -> vector<2x512xf32>
    %34 = arith.addf %30, %33 : vector<2x512xf32>
    %35 = vector.extract_strided_slice %27 {offsets = [4, 0], sizes = [2, 256], strides = [1, 1]} : vector<8x256xf32> to vector<2x256xf32>
    %c512 = arith.constant 512 : index
    %c0_24 = arith.constant 0 : index
    %36 = vector.load %arg5[%c512, %c0_24] : memref<1024x512xf32, #tpu.memory_space<vmem>>, vector<256x512xf32>
    %cst_25 = arith.constant dense<0.000000e+00> : vector<2x512xf32>
    %37 = tpu.matmul %35, %36, %cst_25 {dimension_numbers = #tpu.dot_dimension_numbers<[1], [0], [0], [1], [0, 0, 1, 1], [], []>} : vector<2x256xf32>, vector<256x512xf32>, vector<2x512xf32> -> vector<2x512xf32>
    %38 = arith.addf %34, %37 : vector<2x512xf32>
    %39 = vector.extract_strided_slice %27 {offsets = [6, 0], sizes = [2, 256], strides = [1, 1]} : vector<8x256xf32> to vector<2x256xf32>
    %c768 = arith.constant 768 : index
    %c0_26 = arith.constant 0 : index
    %40 = vector.load %arg5[%c768, %c0_26] : memref<1024x512xf32, #tpu.memory_space<vmem>>, vector<256x512xf32>
    %cst_27 = arith.constant dense<0.000000e+00> : vector<2x512xf32>
    %41 = tpu.matmul %39, %40, %cst_27 {dimension_numbers = #tpu.dot_dimension_numbers<[1], [0], [0], [1], [0, 0, 1, 1], [], []>} : vector<2x256xf32>, vector<256x512xf32>, vector<2x512xf32> -> vector<2x512xf32>
    %42 = arith.addf %38, %41 : vector<2x512xf32>
    %c0_28 = arith.constant 0 : index
    %c0_29 = arith.constant 0 : index
    %43 = vector.load %arg6[%c0_28, %c0_29] : memref<1x512xf32, #tpu.memory_space<vmem>>, vector<1x512xf32>
    %44 = vector.broadcast %43 : vector<1x512xf32> to vector<2x512xf32>
    %45 = arith.addf %42, %44 : vector<2x512xf32>
    %cst_30 = arith.constant 0.000000e+00 : f32
    %46 = vector.broadcast %cst_30 : f32 to vector<2x512xf32>
    %47 = arith.maximumf %45, %46 : vector<2x512xf32>
    %c0_31 = arith.constant 0 : index
    %c0_32 = arith.constant 0 : index
    %48 = vector.load %arg7[%c0_31, %c0_32] : memref<512x512xf32, #tpu.memory_space<vmem>>, vector<512x512xf32>
    %cst_33 = arith.constant dense<0.000000e+00> : vector<2x512xf32>
    %49 = tpu.matmul %47, %48, %cst_33 {dimension_numbers = #tpu.dot_dimension_numbers<[1], [0], [0], [1], [0, 0, 1, 1], [], []>} : vector<2x512xf32>, vector<512x512xf32>, vector<2x512xf32> -> vector<2x512xf32>
    %c0_34 = arith.constant 0 : index
    %c0_35 = arith.constant 0 : index
    %50 = vector.load %arg8[%c0_34, %c0_35] : memref<1x512xf32, #tpu.memory_space<vmem>>, vector<1x512xf32>
    %51 = vector.broadcast %50 : vector<1x512xf32> to vector<2x512xf32>
    %52 = arith.addf %49, %51 : vector<2x512xf32>
    %cst_36 = arith.constant 0.000000e+00 : f32
    %53 = vector.broadcast %cst_36 : f32 to vector<2x512xf32>
    %54 = arith.maximumf %52, %53 : vector<2x512xf32>
    %c0_37 = arith.constant 0 : index
    %c0_38 = arith.constant 0 : index
    %55 = vector.load %arg9[%c0_37, %c0_38] : memref<512x100xf32, #tpu.memory_space<vmem>>, vector<512x100xf32>
    %cst_39 = arith.constant dense<0.000000e+00> : vector<2x100xf32>
    %56 = tpu.matmul %54, %55, %cst_39 {dimension_numbers = #tpu.dot_dimension_numbers<[1], [0], [0], [1], [0, 0, 1, 1], [], []>} : vector<2x512xf32>, vector<512x100xf32>, vector<2x100xf32> -> vector<2x100xf32>
    %c0_40 = arith.constant 0 : index
    %c0_41 = arith.constant 0 : index
    %57 = vector.load %arg10[%c0_40, %c0_41] : memref<1x100xf32, #tpu.memory_space<vmem>>, vector<1x100xf32>
    %58 = vector.broadcast %57 : vector<1x100xf32> to vector<2x100xf32>
    %59 = arith.addf %56, %58 : vector<2x100xf32>
    %c0_42 = arith.constant 0 : index
    %c0_43 = arith.constant 0 : index
    %60 = vector.load %arg11[%c0_42, %c0_43] : memref<2x100xf32, #tpu.memory_space<vmem>>, vector<2x100xf32>
    tpu.vector_store %arg11[%c0_42, %c0_43], %59 {strides = array<i32>} : memref<2x100xf32, #tpu.memory_space<vmem>>, vector<2x100xf32>,
    return
  }
}

</mosaic_0001>

<llo_original>
// kernel: forward.3
$region0: #{forward.3}
  #allocation0 [shape = 'u32[]', space=smem, size = 0x4, offset = 0x4, fixed_abs, tag = 'smem constant byte address 0x4 - core index']
  #allocation1 [shape = 'u32[144,128]{1,0:T(1,128)}', space=vmem, size = 0x12000, scoped, tag = 'internal scratch']
  %s0 = inlined_call_operand.vmem [shape: f32[2048,27], index: 0, kind: input, shape index: {}]
  %s1 = inlined_call_operand.vmem [shape: f32[27,32], index: 1, kind: input, shape index: {}]
  %s2 = inlined_call_operand.vmem [shape: f32[1,32], index: 2, kind: input, shape index: {}]
  %s3 = inlined_call_operand.vmem [shape: f32[2048,32], index: 3, kind: output, shape index: {}]
  %s4 = sld [smem:[#allocation0]]
  $region22: #{forward.3} parent=0
    _
  %s6 = ssub.s32 1, %s4
  %s7 = scalar_select 0, %s6, %s4
  // Predicated region
  $region2: #{forward.3} parent=0 // pred_check
    _
  $region3: #{forward.3} parent=0 // pred_check_branch
    %9 = sbr.rel (0) target = $region5
  $region4: #{forward.3} parent=0 // pred_region
    _
  $region5: #{forward.3} parent=0 // pred_fallthru
    _
  // Predicated region
  $region6: #{forward.3} parent=0 // pred_check
    _
  $region7: #{forward.3} parent=0 // pred_check_branch
    %11 = sbr.rel (0) target = $region9
  $region8: #{forward.3} parent=0 // pred_region
    _
  $region9: #{forward.3} parent=0 // pred_fallthru
    _
  // Predicated region
  $region10: #{forward.3} parent=0 // pred_check
    _
  $region11: #{forward.3} parent=0 // pred_check_branch
    %13 = sbr.rel (0) target = $region13
  $region12: #{forward.3} parent=0 // pred_region
    _
  $region13: #{forward.3} parent=0 // pred_fallthru
    _
  %v14 = vld [vmem:[%s0] sm:$0xff]
  %v15 = vld [vmem:[%s0 + $0x8] sm:$0xff]
  %v16 = vld [vmem:[%s0 + $0x10] sm:$0xff]
  %v17 = vld [vmem:[%s0 + $0x18] sm:$0xff]
  %v18 = vld [vmem:[%s0 + $0x20] sm:$0xff]
  %v19 = vld [vmem:[%s0 + $0x28] sm:$0xff]
  %v20 = vld [vmem:[%s0 + $0x30] sm:$0xff]
  %v21 = vld [vmem:[%s0 + $0x38] sm:$0xff]
  %v22 = vld [vmem:[%s0 + $0x40] sm:$0xff]
  %v23 = vld [vmem:[%s0 + $0x48] sm:$0xff]
  %v24 = vld [vmem:[%s0 + $0x50] sm:$0xff]
  %v25 = vld [vmem:[%s0 + $0x58] sm:$0xff]
  %v26 = vld [vmem:[%s0 + $0x60] sm:$0xff]
  %v27 = vld [vmem:[%s0 + $0x68] sm:$0xff]
  %v28 = vld [vmem:[%s0 + $0x70] sm:$0xff]
  %v29 = vld [vmem:[%s0 + $0x78] sm:$0xff]
  %v30 = vld [vmem:[%s0 + $0x80] sm:$0xff]
  %v31 = vld [vmem:[%s0 + $0x88] sm:$0xff]
  %v32 = vld [vmem:[%s0 + $0x90] sm:$0xff]
  %v33 = vld [vmem:[%s0 + $0x98] sm:$0xff]
  %v34 = vld [vmem:[%s0 + $0xa0] sm:$0xff]
  %v35 = vld [vmem:[%s0 + $0xa8] sm:$0xff]
  %v36 = vld [vmem:[%s0 + $0xb0] sm:$0xff]
  %v37 = vld [vmem:[%s0 + $0xb8] sm:$0xff]
  %v38 = vld [vmem:[%s0 + $0xc0] sm:$0xff]
  %v39 = vld [vmem:[%s0 + $0xc8] sm:$0xff]
  %v40 = vld [vmem:[%s0 + $0xd0] sm:$0xff]
  %v41 = vld [vmem:[%s0 + $0xd8] sm:$0xff]
  %v42 = vld [vmem:[%s0 + $0xe0] sm:$0xff]
  %v43 = vld [vmem:[%s0 + $0xe8] sm:$0xff]
  %v44 = vld [vmem:[%s0 + $0xf0] sm:$0xff]
  %v45 = vld [vmem:[%s0 + $0xf8] sm:$0xff]
  %v46 = vld [vmem:[%s0 + $0x100] sm:$0xff]
  %v47 = vld [vmem:[%s0 + $0x108] sm:$0xff]
  %v48 = vld [vmem:[%s0 + $0x110] sm:$0xff]
  %v49 = vld [vmem:[%s0 + $0x118] sm:$0xff]
  %v50 = vld [vmem:[%s0 + $0x120] sm:$0xff]
  %v51 = vld [vmem:[%s0 + $0x128] sm:$0xff]
  %v52 = vld [vmem:[%s0 + $0x130] sm:$0xff]
  %v53 = vld [vmem:[%s0 + $0x138] sm:$0xff]
  %v54 = vld [vmem:[%s0 + $0x140] sm:$0xff]
  %v55 = vld [vmem:[%s0 + $0x148] sm:$0xff]
  %v56 = vld [vmem:[%s0 + $0x150] sm:$0xff]
  %v57 = vld [vmem:[%s0 + $0x158] sm:$0xff]
  %v58 = vld [vmem:[%s0 + $0x160] sm:$0xff]
  %v59 = vld [vmem:[%s0 + $0x168] sm:$0xff]
  %v60 = vld [vmem:[%s0 + $0x170] sm:$0xff]
  %v61 = vld [vmem:[%s0 + $0x178] sm:$0xff]
  %v62 = vld [vmem:[%s0 + $0x180] sm:$0xff]
  %v63 = vld [vmem:[%s0 + $0x188] sm:$0xff]
  %v64 = vld [vmem:[%s0 + $0x190] sm:$0xff]
  %v65 = vld [vmem:[%s0 + $0x198] sm:$0xff]
  %v66 = vld [vmem:[%s0 + $0x1a0] sm:$0xff]
  %v67 = vld [vmem:[%s0 + $0x1a8] sm:$0xff]
  %v68 = vld [vmem:[%s0 + $0x1b0] sm:$0xff]
  %v69 = vld [vmem:[%s0 + $0x1b8] sm:$0xff]
  %v70 = vld [vmem:[%s0 + $0x1c0] sm:$0xff]
  %v71 = vld [vmem:[%s0 + $0x1c8] sm:$0xff]
  %v72 = vld [vmem:[%s0 + $0x1d0] sm:$0xff]
  %v73 = vld [vmem:[%s0 + $0x1d8] sm:$0xff]
  %v74 = vld [vmem:[%s0 + $0x1e0] sm:$0xff]
  %v75 = vld [vmem:[%s0 + $0x1e8] sm:$0xff]
  %v76 = vld [vmem:[%s0 + $0x1f0] sm:$0xff]
  %v77 = vld [vmem:[%s0 + $0x1f8] sm:$0xff]
  %v78 = vld [vmem:[%s0 + $0x200] sm:$0xff]
  %v79 = vld [vmem:[%s0 + $0x208] sm:$0xff]
  %v80 = vld [vmem:[%s0 + $0x210] sm:$0xff]
  %v81 = vld [vmem:[%s0 + $0x218] sm:$0xff]
  %v82 = vld [vmem:[%s0 + $0x220] sm:$0xff]
  %v83 = vld [vmem:[%s0 + $0x228] sm:$0xff]
  %v84 = vld [vmem:[%s0 + $0x230] sm:$0xff]
  %v85 = vld [vmem:[%s0 + $0x238] sm:$0xff]
  %v86 = vld [vmem:[%s0 + $0x240] sm:$0xff]
  %v87 = vld [vmem:[%s0 + $0x248] sm:$0xff]
  %v88 = vld [vmem:[%s0 + $0x250] sm:$0xff]
  %v89 = vld [vmem:[%s0 + $0x258] sm:$0xff]
  %v90 = vld [vmem:[%s0 + $0x260] sm:$0xff]
  %v91 = vld [vmem:[%s0 + $0x268] sm:$0xff]
  %v92 = vld [vmem:[%s0 + $0x270] sm:$0xff]
  %v93 = vld [vmem:[%s0 + $0x278] sm:$0xff]
  %v94 = vld [vmem:[%s0 + $0x280] sm:$0xff]
  %v95 = vld [vmem:[%s0 + $0x288] sm:$0xff]
  %v96 = vld [vmem:[%s0 + $0x290] sm:$0xff]
  %v97 = vld [vmem:[%s0 + $0x298] sm:$0xff]
  %v98 = vld [vmem:[%s0 + $0x2a0] sm:$0xff]
  %v99 = vld [vmem:[%s0 + $0x2a8] sm:$0xff]
  %v100 = vld [vmem:[%s0 + $0x2b0] sm:$0xff]
  %v101 = vld [vmem:[%s0 + $0x2b8] sm:$0xff]
  %v102 = vld [vmem:[%s0 + $0x2c0] sm:$0xff]
  %v103 = vld [vmem:[%s0 + $0x2c8] sm:$0xff]
  %v104 = vld [vmem:[%s0 + $0x2d0] sm:$0xff]
  %v105 = vld [vmem:[%s0 + $0x2d8] sm:$0xff]
  %v106 = vld [vmem:[%s0 + $0x2e0] sm:$0xff]
  %v107 = vld [vmem:[%s0 + $0x2e8] sm:$0xff]
  %v108 = vld [vmem:[%s0 + $0x2f0] sm:$0xff]
  %v109 = vld [vmem:[%s0 + $0x2f8] sm:$0xff]
  %v110 = vld [vmem:[%s0 + $0x300] sm:$0xff]
  %v111 = vld [vmem:[%s0 + $0x308] sm:$0xff]
  %v112 = vld [vmem:[%s0 + $0x310] sm:$0xff]
  %v113 = vld [vmem:[%s0 + $0x318] sm:$0xff]
  %v114 = vld [vmem:[%s0 + $0x320] sm:$0xff]
  %v115 = vld [vmem:[%s0 + $0x328] sm:$0xff]
  %v116 = vld [vmem:[%s0 + $0x330] sm:$0xff]
  %v117 = vld [vmem:[%s0 + $0x338] sm:$0xff]
  %v118 = vld [vmem:[%s0 + $0x340] sm:$0xff]
  %v119 = vld [vmem:[%s0 + $0x348] sm:$0xff]
  %v120 = vld [vmem:[%s0 + $0x350] sm:$0xff]
  %v121 = vld [vmem:[%s0 + $0x358] sm:$0xff]
  %v122 = vld [vmem:[%s0 + $0x360] sm:$0xff]
  %v123 = vld [vmem:[%s0 + $0x368] sm:$0xff]
  %v124 = vld [vmem:[%s0 + $0x370] sm:$0xff]
  %v125 = vld [vmem:[%s0 + $0x378] sm:$0xff]
  %v126 = vld [vmem:[%s0 + $0x380] sm:$0xff]
  %v127 = vld [vmem:[%s0 + $0x388] sm:$0xff]
  %v128 = vld [vmem:[%s0 + $0x390] sm:$0xff]
  %v129 = vld [vmem:[%s0 + $0x398] sm:$0xff]
  %v130 = vld [vmem:[%s0 + $0x3a0] sm:$0xff]
  %v131 = vld [vmem:[%s0 + $0x3a8] sm:$0xff]
  %v132 = vld [vmem:[%s0 + $0x3b0] sm:$0xff]
  %v133 = vld [vmem:[%s0 + $0x3b8] sm:$0xff]
  %v134 = vld [vmem:[%s0 + $0x3c0] sm:$0xff]
  %v135 = vld [vmem:[%s0 + $0x3c8] sm:$0xff]
  %v136 = vld [vmem:[%s0 + $0x3d0] sm:$0xff]
  %v137 = vld [vmem:[%s0 + $0x3d8] sm:$0xff]
  %v138 = vld [vmem:[%s0 + $0x3e0] sm:$0xff]
  %v139 = vld [vmem:[%s0 + $0x3e8] sm:$0xff]
  %v140 = vld [vmem:[%s0 + $0x3f0] sm:$0xff]
  %v141 = vld [vmem:[%s0 + $0x3f8] sm:$0xff]
  %v142 = vld [vmem:[%s0 + $0x400] sm:$0xff]
  %v143 = vld [vmem:[%s0 + $0x408] sm:$0xff]
  %v144 = vld [vmem:[%s0 + $0x410] sm:$0xff]
  %v145 = vld [vmem:[%s0 + $0x418] sm:$0xff]
  %v146 = vld [vmem:[%s0 + $0x420] sm:$0xff]
  %v147 = vld [vmem:[%s0 + $0x428] sm:$0xff]
  %v148 = vld [vmem:[%s0 + $0x430] sm:$0xff]
  %v149 = vld [vmem:[%s0 + $0x438] sm:$0xff]
  %v150 = vld [vmem:[%s0 + $0x440] sm:$0xff]
  %v151 = vld [vmem:[%s0 + $0x448] sm:$0xff]
  %v152 = vld [vmem:[%s0 + $0x450] sm:$0xff]
  %v153 = vld [vmem:[%s0 + $0x458] sm:$0xff]
  %v154 = vld [vmem:[%s0 + $0x460] sm:$0xff]
  %v155 = vld [vmem:[%s0 + $0x468] sm:$0xff]
  %v156 = vld [vmem:[%s0 + $0x470] sm:$0xff]
  %v157 = vld [vmem:[%s0 + $0x478] sm:$0xff]
  %v158 = vld [vmem:[%s0 + $0x480] sm:$0xff]
  %v159 = vld [vmem:[%s0 + $0x488] sm:$0xff]
  %v160 = vld [vmem:[%s0 + $0x490] sm:$0xff]
  %v161 = vld [vmem:[%s0 + $0x498] sm:$0xff]
  %v162 = vld [vmem:[%s0 + $0x4a0] sm:$0xff]
  %v163 = vld [vmem:[%s0 + $0x4a8] sm:$0xff]
  %v164 = vld [vmem:[%s0 + $0x4b0] sm:$0xff]
  %v165 = vld [vmem:[%s0 + $0x4b8] sm:$0xff]
  %v166 = vld [vmem:[%s0 + $0x4c0] sm:$0xff]
  %v167 = vld [vmem:[%s0 + $0x4c8] sm:$0xff]
  %v168 = vld [vmem:[%s0 + $0x4d0] sm:$0xff]
  %v169 = vld [vmem:[%s0 + $0x4d8] sm:$0xff]
  %v170 = vld [vmem:[%s0 + $0x4e0] sm:$0xff]
  %v171 = vld [vmem:[%s0 + $0x4e8] sm:$0xff]
  %v172 = vld [vmem:[%s0 + $0x4f0] sm:$0xff]
  %v173 = vld [vmem:[%s0 + $0x4f8] sm:$0xff]
  %v174 = vld [vmem:[%s0 + $0x500] sm:$0xff]
  %v175 = vld [vmem:[%s0 + $0x508] sm:$0xff]
  %v176 = vld [vmem:[%s0 + $0x510] sm:$0xff]
  %v177 = vld [vmem:[%s0 + $0x518] sm:$0xff]
  %v178 = vld [vmem:[%s0 + $0x520] sm:$0xff]
  %v179 = vld [vmem:[%s0 + $0x528] sm:$0xff]
  %v180 = vld [vmem:[%s0 + $0x530] sm:$0xff]
  %v181 = vld [vmem:[%s0 + $0x538] sm:$0xff]
  %v182 = vld [vmem:[%s0 + $0x540] sm:$0xff]
  %v183 = vld [vmem:[%s0 + $0x548] sm:$0xff]
  %v184 = vld [vmem:[%s0 + $0x550] sm:$0xff]
  %v185 = vld [vmem:[%s0 + $0x558] sm:$0xff]
  %v186 = vld [vmem:[%s0 + $0x560] sm:$0xff]
  %v187 = vld [vmem:[%s0 + $0x568] sm:$0xff]
  %v188 = vld [vmem:[%s0 + $0x570] sm:$0xff]
  %v189 = vld [vmem:[%s0 + $0x578] sm:$0xff]
  %v190 = vld [vmem:[%s0 + $0x580] sm:$0xff]
  %v191 = vld [vmem:[%s0 + $0x588] sm:$0xff]
  %v192 = vld [vmem:[%s0 + $0x590] sm:$0xff]
  %v193 = vld [vmem:[%s0 + $0x598] sm:$0xff]
  %v194 = vld [vmem:[%s0 + $0x5a0] sm:$0xff]
  %v195 = vld [vmem:[%s0 + $0x5a8] sm:$0xff]
  %v196 = vld [vmem:[%s0 + $0x5b0] sm:$0xff]
  %v197 = vld [vmem:[%s0 + $0x5b8] sm:$0xff]
  %v198 = vld [vmem:[%s0 + $0x5c0] sm:$0xff]
  %v199 = vld [vmem:[%s0 + $0x5c8] sm:$0xff]
  %v200 = vld [vmem:[%s0 + $0x5d0] sm:$0xff]
  %v201 = vld [vmem:[%s0 + $0x5d8] sm:$0xff]
  %v202 = vld [vmem:[%s0 + $0x5e0] sm:$0xff]
  %v203 = vld [vmem:[%s0 + $0x5e8] sm:$0xff]
  %v204 = vld [vmem:[%s0 + $0x5f0] sm:$0xff]
  %v205 = vld [vmem:[%s0 + $0x5f8] sm:$0xff]
  %v206 = vld [vmem:[%s0 + $0x600] sm:$0xff]
  %v207 = vld [vmem:[%s0 + $0x608] sm:$0xff]
  %v208 = vld [vmem:[%s0 + $0x610] sm:$0xff]
  %v209 = vld [vmem:[%s0 + $0x618] sm:$0xff]
  %v210 = vld [vmem:[%s0 + $0x620] sm:$0xff]
  %v211 = vld [vmem:[%s0 + $0x628] sm:$0xff]
  %v212 = vld [vmem:[%s0 + $0x630] sm:$0xff]
  %v213 = vld [vmem:[%s0 + $0x638] sm:$0xff]
  %v214 = vld [vmem:[%s0 + $0x640] sm:$0xff]
  %v215 = vld [vmem:[%s0 + $0x648] sm:$0xff]
  %v216 = vld [vmem:[%s0 + $0x650] sm:$0xff]
  %v217 = vld [vmem:[%s0 + $0x658] sm:$0xff]
  %v218 = vld [vmem:[%s0 + $0x660] sm:$0xff]
  %v219 = vld [vmem:[%s0 + $0x668] sm:$0xff]
  %v220 = vld [vmem:[%s0 + $0x670] sm:$0xff]
  %v221 = vld [vmem:[%s0 + $0x678] sm:$0xff]
  %v222 = vld [vmem:[%s0 + $0x680] sm:$0xff]
  %v223 = vld [vmem:[%s0 + $0x688] sm:$0xff]
  %v224 = vld [vmem:[%s0 + $0x690] sm:$0xff]
  %v225 = vld [vmem:[%s0 + $0x698] sm:$0xff]
  %v226 = vld [vmem:[%s0 + $0x6a0] sm:$0xff]
  %v227 = vld [vmem:[%s0 + $0x6a8] sm:$0xff]
  %v228 = vld [vmem:[%s0 + $0x6b0] sm:$0xff]
  %v229 = vld [vmem:[%s0 + $0x6b8] sm:$0xff]
  %v230 = vld [vmem:[%s0 + $0x6c0] sm:$0xff]
  %v231 = vld [vmem:[%s0 + $0x6c8] sm:$0xff]
  %v232 = vld [vmem:[%s0 + $0x6d0] sm:$0xff]
  %v233 = vld [vmem:[%s0 + $0x6d8] sm:$0xff]
  %v234 = vld [vmem:[%s0 + $0x6e0] sm:$0xff]
  %v235 = vld [vmem:[%s0 + $0x6e8] sm:$0xff]
  %v236 = vld [vmem:[%s0 + $0x6f0] sm:$0xff]
  %v237 = vld [vmem:[%s0 + $0x6f8] sm:$0xff]
  %v238 = vld [vmem:[%s0 + $0x700] sm:$0xff]
  %v239 = vld [vmem:[%s0 + $0x708] sm:$0xff]
  %v240 = vld [vmem:[%s0 + $0x710] sm:$0xff]
  %v241 = vld [vmem:[%s0 + $0x718] sm:$0xff]
  %v242 = vld [vmem:[%s0 + $0x720] sm:$0xff]
  %v243 = vld [vmem:[%s0 + $0x728] sm:$0xff]
  %v244 = vld [vmem:[%s0 + $0x730] sm:$0xff]
  %v245 = vld [vmem:[%s0 + $0x738] sm:$0xff]
  %v246 = vld [vmem:[%s0 + $0x740] sm:$0xff]
  %v247 = vld [vmem:[%s0 + $0x748] sm:$0xff]
  %v248 = vld [vmem:[%s0 + $0x750] sm:$0xff]
  %v249 = vld [vmem:[%s0 + $0x758] sm:$0xff]
  %v250 = vld [vmem:[%s0 + $0x760] sm:$0xff]
  %v251 = vld [vmem:[%s0 + $0x768] sm:$0xff]
  %v252 = vld [vmem:[%s0 + $0x770] sm:$0xff]
  %v253 = vld [vmem:[%s0 + $0x778] sm:$0xff]
  %v254 = vld [vmem:[%s0 + $0x780] sm:$0xff]
  %v255 = vld [vmem:[%s0 + $0x788] sm:$0xff]
  %v256 = vld [vmem:[%s0 + $0x790] sm:$0xff]
  %v257 = vld [vmem:[%s0 + $0x798] sm:$0xff]
  %v258 = vld [vmem:[%s0 + $0x7a0] sm:$0xff]
  %v259 = vld [vmem:[%s0 + $0x7a8] sm:$0xff]
  %v260 = vld [vmem:[%s0 + $0x7b0] sm:$0xff]
  %v261 = vld [vmem:[%s0 + $0x7b8] sm:$0xff]
  %v262 = vld [vmem:[%s0 + $0x7c0] sm:$0xff]
  %v263 = vld [vmem:[%s0 + $0x7c8] sm:$0xff]
  %v264 = vld [vmem:[%s0 + $0x7d0] sm:$0xff]
  %v265 = vld [vmem:[%s0 + $0x7d8] sm:$0xff]
  %v266 = vld [vmem:[%s0 + $0x7e0] sm:$0xff]
  %v267 = vld [vmem:[%s0 + $0x7e8] sm:$0xff]
  %v268 = vld [vmem:[%s0 + $0x7f0] sm:$0xff]
  %v269 = vld [vmem:[%s0 + $0x7f8] sm:$0xff]
  %v270 = vld [vmem:[%s1] sm:$0xff]
  %v271 = vld [vmem:[%s1 + $0x8] sm:$0xff]
  %v272 = vld [vmem:[%s1 + $0x10] sm:$0xff]
  %v273 = vld [vmem:[%s1 + $0x18] sm:$0x7]
  %v274 = vld [vmem:[%s2] sm:$0x1]
  %v276 = vlaneseq
  %v277 = vshrl.u32 %v276, 7
  %v278 = vsub.s32 0, %v277
  %v279 = vrot.slane %v274, %v278
  %vm281 = vcmask 220160
  %v283 = vsel %vm281, %v14, 0
  %v286 = vsel %vm281, %v15, 0
  %v289 = vsel %vm281, %v16, 0
  %v292 = vsel %vm281, %v17, 0
  %v295 = vsel %vm281, %v18, 0
  %v298 = vsel %vm281, %v19, 0
  %v301 = vsel %vm281, %v20, 0
  %v304 = vsel %vm281, %v21, 0
  %v307 = vsel %vm281, %v22, 0
  %v310 = vsel %vm281, %v23, 0
  %v313 = vsel %vm281, %v24, 0
  %v316 = vsel %vm281, %v25, 0
  %v319 = vsel %vm281, %v26, 0
  %v322 = vsel %vm281, %v27, 0
  %v325 = vsel %vm281, %v28, 0
  %v328 = vsel %vm281, %v29, 0
  %v331 = vsel %vm281, %v30, 0
  %v334 = vsel %vm281, %v31, 0
  %v337 = vsel %vm281, %v32, 0
  %v340 = vsel %vm281, %v33, 0
  %v343 = vsel %vm281, %v34, 0
  %v346 = vsel %vm281, %v35, 0
  %v349 = vsel %vm281, %v36, 0
  %v352 = vsel %vm281, %v37, 0
  %v355 = vsel %vm281, %v38, 0
  %v358 = vsel %vm281, %v39, 0
  %v361 = vsel %vm281, %v40, 0
  %v364 = vsel %vm281, %v41, 0
  %v367 = vsel %vm281, %v42, 0
  %v370 = vsel %vm281, %v43, 0
  %v373 = vsel %vm281, %v44, 0
  %v376 = vsel %vm281, %v45, 0
  %v379 = vsel %vm281, %v46, 0
  %v382 = vsel %vm281, %v47, 0
  %v385 = vsel %vm281, %v48, 0
  %v388 = vsel %vm281, %v49, 0
  %v391 = vsel %vm281, %v50, 0
  %v394 = vsel %vm281, %v51, 0
  %v397 = vsel %vm281, %v52, 0
  %v400 = vsel %vm281, %v53, 0
  %v403 = vsel %vm281, %v54, 0
  %v406 = vsel %vm281, %v55, 0
  %v409 = vsel %vm281, %v56, 0
  %v412 = vsel %vm281, %v57, 0
  %v415 = vsel %vm281, %v58, 0
  %v418 = vsel %vm281, %v59, 0
  %v421 = vsel %vm281, %v60, 0
  %v424 = vsel %vm281, %v61, 0
  %v427 = vsel %vm281, %v62, 0
  %v430 = vsel %vm281, %v63, 0
  %v433 = vsel %vm281, %v64, 0
  %v436 = vsel %vm281, %v65, 0
  %v439 = vsel %vm281, %v66, 0
  %v442 = vsel %vm281, %v67, 0
  %v445 = vsel %vm281, %v68, 0
  %v448 = vsel %vm281, %v69, 0
  %v451 = vsel %vm281, %v70, 0
  %v454 = vsel %vm281, %v71, 0
  %v457 = vsel %vm281, %v72, 0
  %v460 = vsel %vm281, %v73, 0
  %v463 = vsel %vm281, %v74, 0
  %v466 = vsel %vm281, %v75, 0
  %v469 = vsel %vm281, %v76, 0
  %v472 = vsel %vm281, %v77, 0
  %v475 = vsel %vm281, %v78, 0
  %v478 = vsel %vm281, %v79, 0
  %v481 = vsel %vm281, %v80, 0
  %v484 = vsel %vm281, %v81, 0
  %v487 = vsel %vm281, %v82, 0
  %v490 = vsel %vm281, %v83, 0
  %v493 = vsel %vm281, %v84, 0
  %v496 = vsel %vm281, %v85, 0
  %v499 = vsel %vm281, %v86, 0
  %v502 = vsel %vm281, %v87, 0
  %v505 = vsel %vm281, %v88, 0
  %v508 = vsel %vm281, %v89, 0
  %v511 = vsel %vm281, %v90, 0
  %v514 = vsel %vm281, %v91, 0
  %v517 = vsel %vm281, %v92, 0
  %v520 = vsel %vm281, %v93, 0
  %v523 = vsel %vm281, %v94, 0
  %v526 = vsel %vm281, %v95, 0
  %v529 = vsel %vm281, %v96, 0
  %v532 = vsel %vm281, %v97, 0
  %v535 = vsel %vm281, %v98, 0
  %v538 = vsel %vm281, %v99, 0
  %v541 = vsel %vm281, %v100, 0
  %v544 = vsel %vm281, %v101, 0
  %v547 = vsel %vm281, %v102, 0
  %v550 = vsel %vm281, %v103, 0
  %v553 = vsel %vm281, %v104, 0
  %v556 = vsel %vm281, %v105, 0
  %v559 = vsel %vm281, %v106, 0
  %v562 = vsel %vm281, %v107, 0
  %v565 = vsel %vm281, %v108, 0
  %v568 = vsel %vm281, %v109, 0
  %v571 = vsel %vm281, %v110, 0
  %v574 = vsel %vm281, %v111, 0
  %v577 = vsel %vm281, %v112, 0
  %v580 = vsel %vm281, %v113, 0
  %v583 = vsel %vm281, %v114, 0
  %v586 = vsel %vm281, %v115, 0
  %v589 = vsel %vm281, %v116, 0
  %v592 = vsel %vm281, %v117, 0
  %v595 = vsel %vm281, %v118, 0
  %v598 = vsel %vm281, %v119, 0
  %v601 = vsel %vm281, %v120, 0
  %v604 = vsel %vm281, %v121, 0
  %v607 = vsel %vm281, %v122, 0
  %v610 = vsel %vm281, %v123, 0
  %v613 = vsel %vm281, %v124, 0
  %v616 = vsel %vm281, %v125, 0
  %v619 = vsel %vm281, %v126, 0
  %v622 = vsel %vm281, %v127, 0
  %v625 = vsel %vm281, %v128, 0
  %v628 = vsel %vm281, %v129, 0
  %v631 = vsel %vm281, %v130, 0
  %v634 = vsel %vm281, %v131, 0
  %v637 = vsel %vm281, %v132, 0
  %v640 = vsel %vm281, %v133, 0
  %v643 = vsel %vm281, %v134, 0
  %v646 = vsel %vm281, %v135, 0
  %v649 = vsel %vm281, %v136, 0
  %v652 = vsel %vm281, %v137, 0
  %v655 = vsel %vm281, %v138, 0
  %v658 = vsel %vm281, %v139, 0
  %v661 = vsel %vm281, %v140, 0
  %v664 = vsel %vm281, %v141, 0
  %v667 = vsel %vm281, %v142, 0
  %v670 = vsel %vm281, %v143, 0
  %v673 = vsel %vm281, %v144, 0
  %v676 = vsel %vm281, %v145, 0
  %v679 = vsel %vm281, %v146, 0
  %v682 = vsel %vm281, %v147, 0
  %v685 = vsel %vm281, %v148, 0
  %v688 = vsel %vm281, %v149, 0
  %v691 = vsel %vm281, %v150, 0
  %v694 = vsel %vm281, %v151, 0
  %v697 = vsel %vm281, %v152, 0
  %v700 = vsel %vm281, %v153, 0
  %v703 = vsel %vm281, %v154, 0
  %v706 = vsel %vm281, %v155, 0
  %v709 = vsel %vm281, %v156, 0
  %v712 = vsel %vm281, %v157, 0
  %v715 = vsel %vm281, %v158, 0
  %v718 = vsel %vm281, %v159, 0
  %v721 = vsel %vm281, %v160, 0
  %v724 = vsel %vm281, %v161, 0
  %v727 = vsel %vm281, %v162, 0
  %v730 = vsel %vm281, %v163, 0
  %v733 = vsel %vm281, %v164, 0
  %v736 = vsel %vm281, %v165, 0
  %v739 = vsel %vm281, %v166, 0
  %v742 = vsel %vm281, %v167, 0
  %v745 = vsel %vm281, %v168, 0
  %v748 = vsel %vm281, %v169, 0
  %v751 = vsel %vm281, %v170, 0
  %v754 = vsel %vm281, %v171, 0
  %v757 = vsel %vm281, %v172, 0
  %v760 = vsel %vm281, %v173, 0
  %v763 = vsel %vm281, %v174, 0
  %v766 = vsel %vm281, %v175, 0
  %v769 = vsel %vm281, %v176, 0
  %v772 = vsel %vm281, %v177, 0
  %v775 = vsel %vm281, %v178, 0
  %v778 = vsel %vm281, %v179, 0
  %v781 = vsel %vm281, %v180, 0
  %v784 = vsel %vm281, %v181, 0
  %v787 = vsel %vm281, %v182, 0
  %v790 = vsel %vm281, %v183, 0
  %v793 = vsel %vm281, %v184, 0
  %v796 = vsel %vm281, %v185, 0
  %v799 = vsel %vm281, %v186, 0
  %v802 = vsel %vm281, %v187, 0
  %v805 = vsel %vm281, %v188, 0
  %v808 = vsel %vm281, %v189, 0
  %v811 = vsel %vm281, %v190, 0
  %v814 = vsel %vm281, %v191, 0
  %v817 = vsel %vm281, %v192, 0
  %v820 = vsel %vm281, %v193, 0
  %v823 = vsel %vm281, %v194, 0
  %v826 = vsel %vm281, %v195, 0
  %v829 = vsel %vm281, %v196, 0
  %v832 = vsel %vm281, %v197, 0
  %v835 = vsel %vm281, %v198, 0
  %v838 = vsel %vm281, %v199, 0
  %v841 = vsel %vm281, %v200, 0
  %v844 = vsel %vm281, %v201, 0
  %v847 = vsel %vm281, %v202, 0
  %v850 = vsel %vm281, %v203, 0
  %v853 = vsel %vm281, %v204, 0
  %v856 = vsel %vm281, %v205, 0
  %v859 = vsel %vm281, %v206, 0
  %v862 = vsel %vm281, %v207, 0
  %v865 = vsel %vm281, %v208, 0
  %v868 = vsel %vm281, %v209, 0
  %v871 = vsel %vm281, %v210, 0
  %v874 = vsel %vm281, %v211, 0
  %v877 = vsel %vm281, %v212, 0
  %v880 = vsel %vm281, %v213, 0
  %v883 = vsel %vm281, %v214, 0
  %v886 = vsel %vm281, %v215, 0
  %v889 = vsel %vm281, %v216, 0
  %v892 = vsel %vm281, %v217, 0
  %v895 = vsel %vm281, %v218, 0
  %v898 = vsel %vm281, %v219, 0
  %v901 = vsel %vm281, %v220, 0
  %v904 = vsel %vm281, %v221, 0
  %v907 = vsel %vm281, %v222, 0
  %v910 = vsel %vm281, %v223, 0
  %v913 = vsel %vm281, %v224, 0
  %v916 = vsel %vm281, %v225, 0
  %v919 = vsel %vm281, %v226, 0
  %v922 = vsel %vm281, %v227, 0
  %v925 = vsel %vm281, %v228, 0
  %v928 = vsel %vm281, %v229, 0
  %v931 = vsel %vm281, %v230, 0
  %v934 = vsel %vm281, %v231, 0
  %v937 = vsel %vm281, %v232, 0
  %v940 = vsel %vm281, %v233, 0
  %v943 = vsel %vm281, %v234, 0
  %v946 = vsel %vm281, %v235, 0
  %v949 = vsel %vm281, %v236, 0
  %v952 = vsel %vm281, %v237, 0
  %v955 = vsel %vm281, %v238, 0
  %v958 = vsel %vm281, %v239, 0
  %v961 = vsel %vm281, %v240, 0
  %v964 = vsel %vm281, %v241, 0
  %v967 = vsel %vm281, %v242, 0
  %v970 = vsel %vm281, %v243, 0
  %v973 = vsel %vm281, %v244, 0
  %v976 = vsel %vm281, %v245, 0
  %v979 = vsel %vm281, %v246, 0
  %v982 = vsel %vm281, %v247, 0
  %v985 = vsel %vm281, %v248, 0
  %v988 = vsel %vm281, %v249, 0
  %v991 = vsel %vm281, %v250, 0
  %v994 = vsel %vm281, %v251, 0
  %v997 = vsel %vm281, %v252, 0
  %v1000 = vsel %vm281, %v253, 0
  %v1003 = vsel %vm281, %v254, 0
  %v1006 = vsel %vm281, %v255, 0
  %v1009 = vsel %vm281, %v256, 0
  %v1012 = vsel %vm281, %v257, 0
  %v1015 = vsel %vm281, %v258, 0
  %v1018 = vsel %vm281, %v259, 0
  %v1021 = vsel %vm281, %v260, 0
  %v1024 = vsel %vm281, %v261, 0
  %v1027 = vsel %vm281, %v262, 0
  %v1030 = vsel %vm281, %v263, 0
  %v1033 = vsel %vm281, %v264, 0
  %v1036 = vsel %vm281, %v265, 0
  %v1039 = vsel %vm281, %v266, 0
  %v1042 = vsel %vm281, %v267, 0
  %v1045 = vsel %vm281, %v268, 0
  %v1048 = vsel %vm281, %v269, 0
  %vm1050 = vcmask 1042432
  %v1052 = vsel %vm1050, %v273, 0
  %1054 = vmatprep.subr.mxu0 0.0
  %1055 = vmatpush1.msra.mxu0 0.0
  %1056 = vmatprep.subr.mxu0 0.0
  %1057 = vmatpush1.msra.mxu0 0.0
  %1058 = vmatprep.subr.mxu0 0.0
  %1059 = vmatpush1.msra.mxu0 0.0
  %1060 = vmatprep.subr.mxu0 0.0
  %1061 = vmatpush1.msra.mxu0 0.0
  %1062 = vmatprep.subr.mxu0 0.0
  %1063 = vmatpush1.msra.mxu0 0.0
  %1064 = vmatprep.subr.mxu0 0.0
  %1065 = vmatpush1.msra.mxu0 0.0
  %1066 = vmatprep.subr.mxu0 0.0
  %1067 = vmatpush1.msra.mxu0 0.0
  %1068 = vmatprep.subr.mxu0 0.0
  %1069 = vmatpush1.msra.mxu0 0.0
  %1070 = vmatprep.subr.mxu0 0.0
  %1071 = vmatpush1.msra.mxu0 0.0
  %1072 = vmatprep.subr.mxu0 0.0
  %1073 = vmatpush1.msra.mxu0 0.0
  %1074 = vmatprep.subr.mxu0 0.0
  %1075 = vmatpush1.msra.mxu0 0.0
  %1076 = vmatprep.subr.mxu0 0.0
  %1077 = vmatpush1.msra.mxu0 0.0
  %1078 = vmatprep.subr.mxu0 0.0
  %1079 = vmatpush1.msra.mxu0 %v1052
  %1080 = vmatprep.subr.mxu0 0.0
  %1081 = vmatpush1.msra.mxu0 %v272
  %1082 = vmatprep.subr.mxu0 0.0
  %1083 = vmatpush1.msra.mxu0 %v271
  %1084 = vmatprep.subr.mxu0 0.0
  %1085 = vmatpush1.msra.mxu0 %v270
  %1086 = vmatprep.subr.mxu0 0.0
  %1087 = vmatpush2.msra.mxu0 0.0
  %1088 = vmatprep.subr.mxu0 0.0
  %1089 = vmatpush2.msra.mxu0 0.0
  %1090 = vmatprep.subr.mxu0 0.0
  %1091 = vmatpush2.msra.mxu0 0.0
  %1092 = vmatprep.subr.mxu0 0.0
  %1093 = vmatpush2.msra.mxu0 0.0
  %1094 = vmatprep.subr.mxu0 0.0
  %1095 = vmatpush2.msra.mxu0 0.0
  %1096 = vmatprep.subr.mxu0 0.0
  %1097 = vmatpush2.msra.mxu0 0.0
  %1098 = vmatprep.subr.mxu0 0.0
  %1099 = vmatpush2.msra.mxu0 0.0
  %1100 = vmatprep.subr.mxu0 0.0
  %1101 = vmatpush2.msra.mxu0 0.0
  %1102 = vmatprep.subr.mxu0 0.0
  %1103 = vmatpush2.msra.mxu0 0.0
  %1104 = vmatprep.subr.mxu0 0.0
  %1105 = vmatpush2.msra.mxu0 0.0
  %1106 = vmatprep.subr.mxu0 0.0
  %1107 = vmatpush2.msra.mxu0 0.0
  %1108 = vmatprep.subr.mxu0 0.0
  %1109 = vmatpush2.msra.mxu0 0.0
  %1110 = vmatprep.subr.mxu0 0.0
  %1111 = vmatpush2.msra.mxu0 0.0
  %1112 = vmatprep.subr.mxu0 0.0
  %1113 = vmatpush2.msra.mxu0 0.0
  %1114 = vmatprep.subr.mxu0 0.0
  %1115 = vmatpush2.msra.mxu0 0.0
  %1116 = vmatprep.subr.mxu0 0.0
  %1117 = vmatpush2.msra.mxu0 0.0
  %1118 = vmatprep.mubr.f32.mxu0 0.0
  %1119 = vmatmul.mubr.f32.gmra.mxu0 %v283
  %v1120 = vpop.f32.mrf.mxu0
  %v1121 = vadd.f32 %v279, %v1120
  %v1122 = vpop.f32.mrf.mxu0
  %1123 = vmatprep.mubr.f32.mxu0 0.0
  %1124 = vmatmul.mubr.f32.gmra.mxu0 %v286
  %v1125 = vpop.f32.mrf.mxu0
  %v1126 = vadd.f32 %v279, %v1125
  %v1127 = vpop.f32.mrf.mxu0
  %1128 = vmatprep.mubr.f32.mxu0 0.0
  %1129 = vmatmul.mubr.f32.gmra.mxu0 %v289
  %v1130 = vpop.f32.mrf.mxu0
  %v1131 = vadd.f32 %v279, %v1130
  %v1132 = vpop.f32.mrf.mxu0
  %1133 = vmatprep.mubr.f32.mxu0 0.0
  %1134 = vmatmul.mubr.f32.gmra.mxu0 %v292
  %v1135 = vpop.f32.mrf.mxu0
  %v1136 = vadd.f32 %v279, %v1135
  %v1137 = vpop.f32.mrf.mxu0
  %1138 = vmatprep.mubr.f32.mxu0 0.0
  %1139 = vmatmul.mubr.f32.gmra.mxu0 %v295
  %v1140 = vpop.f32.mrf.mxu0
  %v1141 = vadd.f32 %v279, %v1140
  %v1142 = vpop.f32.mrf.mxu0
  %1143 = vmatprep.mubr.f32.mxu0 0.0
  %1144 = vmatmul.mubr.f32.gmra.mxu0 %v298
  %v1145 = vpop.f32.mrf.mxu0
  %v1146 = vadd.f32 %v279, %v1145
  %v1147 = vpop.f32.mrf.mxu0
  %1148 = vmatprep.mubr.f32.mxu0 0.0
  %1149 = vmatmul.mubr.f32.gmra.mxu0 %v301
  %v1150 = vpop.f32.mrf.mxu0
  %v1151 = vadd.f32 %v279, %v1150
  %v1152 = vpop.f32.mrf.mxu0
  %1153 = vmatprep.mubr.f32.mxu0 0.0
  %1154 = vmatmul.mubr.f32.gmra.mxu0 %v304
  %v1155 = vpop.f32.mrf.mxu0
  %v1156 = vadd.f32 %v279, %v1155
  %v1157 = vpop.f32.mrf.mxu0
  %1158 = vmatprep.mubr.f32.mxu0 0.0
  %1159 = vmatmul.mubr.f32.gmra.mxu0 %v307
  %v1160 = vpop.f32.mrf.mxu0
  %v1161 = vadd.f32 %v279, %v1160
  %v1162 = vpop.f32.mrf.mxu0
  %1163 = vmatprep.mubr.f32.mxu0 0.0
  %1164 = vmatmul.mubr.f32.gmra.mxu0 %v310
  %v1165 = vpop.f32.mrf.mxu0
  %v1166 = vadd.f32 %v279, %v1165
  %v1167 = vpop.f32.mrf.mxu0
  %1168 = vmatprep.mubr.f32.mxu0 0.0
  %1169 = vmatmul.mubr.f32.gmra.mxu0 %v313
  %v1170 = vpop.f32.mrf.mxu0
  %v1171 = vadd.f32 %v279, %v1170
  %v1172 = vpop.f32.mrf.mxu0
  %1173 = vmatprep.mubr.f32.mxu0 0.0
  %1174 = vmatmul.mubr.f32.gmra.mxu0 %v316
  %v1175 = vpop.f32.mrf.mxu0
  %v1176 = vadd.f32 %v279, %v1175
  %v1177 = vpop.f32.mrf.mxu0
  %1178 = vmatprep.mubr.f32.mxu0 0.0
  %1179 = vmatmul.mubr.f32.gmra.mxu0 %v319
  %v1180 = vpop.f32.mrf.mxu0
  %v1181 = vadd.f32 %v279, %v1180
  %v1182 = vpop.f32.mrf.mxu0
  %1183 = vmatprep.mubr.f32.mxu0 0.0
  %1184 = vmatmul.mubr.f32.gmra.mxu0 %v322
  %v1185 = vpop.f32.mrf.mxu0
  %v1186 = vadd.f32 %v279, %v1185
  %v1187 = vpop.f32.mrf.mxu0
  %1188 = vmatprep.mubr.f32.mxu0 0.0
  %1189 = vmatmul.mubr.f32.gmra.mxu0 %v325
  %v1190 = vpop.f32.mrf.mxu0
  %v1191 = vadd.f32 %v279, %v1190
  %v1192 = vpop.f32.mrf.mxu0
  %1193 = vmatprep.mubr.f32.mxu0 0.0
  %1194 = vmatmul.mubr.f32.gmra.mxu0 %v328
  %v1195 = vpop.f32.mrf.mxu0
  %v1196 = vadd.f32 %v279, %v1195
  %v1197 = vpop.f32.mrf.mxu0
  %1198 = vmatprep.mubr.f32.mxu0 0.0
  %1199 = vmatmul.mubr.f32.gmra.mxu0 %v331
  %v1200 = vpop.f32.mrf.mxu0
  %v1201 = vadd.f32 %v279, %v1200
  %v1202 = vpop.f32.mrf.mxu0
  %1203 = vmatprep.mubr.f32.mxu0 0.0
  %1204 = vmatmul.mubr.f32.gmra.mxu0 %v334
  %v1205 = vpop.f32.mrf.mxu0
  %v1206 = vadd.f32 %v279, %v1205
  %v1207 = vpop.f32.mrf.mxu0
  %1208 = vmatprep.mubr.f32.mxu0 0.0
  %1209 = vmatmul.mubr.f32.gmra.mxu0 %v337
  %v1210 = vpop.f32.mrf.mxu0
  %v1211 = vadd.f32 %v279, %v1210
  %v1212 = vpop.f32.mrf.mxu0
  %1213 = vmatprep.mubr.f32.mxu0 0.0
  %1214 = vmatmul.mubr.f32.gmra.mxu0 %v340
  %v1215 = vpop.f32.mrf.mxu0
  %v1216 = vadd.f32 %v279, %v1215
  %v1217 = vpop.f32.mrf.mxu0
  %1218 = vmatprep.mubr.f32.mxu0 0.0
  %1219 = vmatmul.mubr.f32.gmra.mxu0 %v343
  %v1220 = vpop.f32.mrf.mxu0
  %v1221 = vadd.f32 %v279, %v1220
  %v1222 = vpop.f32.mrf.mxu0
  %1223 = vmatprep.mubr.f32.mxu0 0.0
  %1224 = vmatmul.mubr.f32.gmra.mxu0 %v346
  %v1225 = vpop.f32.mrf.mxu0
  %v1226 = vadd.f32 %v279, %v1225
  %v1227 = vpop.f32.mrf.mxu0
  %1228 = vmatprep.mubr.f32.mxu0 0.0
  %1229 = vmatmul.mubr.f32.gmra.mxu0 %v349
  %v1230 = vpop.f32.mrf.mxu0
  %v1231 = vadd.f32 %v279, %v1230
  %v1232 = vpop.f32.mrf.mxu0
  %1233 = vmatprep.mubr.f32.mxu0 0.0
  %1234 = vmatmul.mubr.f32.gmra.mxu0 %v352
  %v1235 = vpop.f32.mrf.mxu0
  %v1236 = vadd.f32 %v279, %v1235
  %v1237 = vpop.f32.mrf.mxu0
  %1238 = vmatprep.mubr.f32.mxu0 0.0
  %1239 = vmatmul.mubr.f32.gmra.mxu0 %v355
  %v1240 = vpop.f32.mrf.mxu0
  %v1241 = vadd.f32 %v279, %v1240
  %v1242 = vpop.f32.mrf.mxu0
  %1243 = vmatprep.mubr.f32.mxu0 0.0
  %1244 = vmatmul.mubr.f32.gmra.mxu0 %v358
  %v1245 = vpop.f32.mrf.mxu0
  %v1246 = vadd.f32 %v279, %v1245
  %v1247 = vpop.f32.mrf.mxu0
  %1248 = vmatprep.mubr.f32.mxu0 0.0
  %1249 = vmatmul.mubr.f32.gmra.mxu0 %v361
  %v1250 = vpop.f32.mrf.mxu0
  %v1251 = vadd.f32 %v279, %v1250
  %v1252 = vpop.f32.mrf.mxu0
  %1253 = vmatprep.mubr.f32.mxu0 0.0
  %1254 = vmatmul.mubr.f32.gmra.mxu0 %v364
  %v1255 = vpop.f32.mrf.mxu0
  %v1256 = vadd.f32 %v279, %v1255
  %v1257 = vpop.f32.mrf.mxu0
  %1258 = vmatprep.mubr.f32.mxu0 0.0
  %1259 = vmatmul.mubr.f32.gmra.mxu0 %v367
  %v1260 = vpop.f32.mrf.mxu0
  %v1261 = vadd.f32 %v279, %v1260
  %v1262 = vpop.f32.mrf.mxu0
  %1263 = vmatprep.mubr.f32.mxu0 0.0
  %1264 = vmatmul.mubr.f32.gmra.mxu0 %v370
  %v1265 = vpop.f32.mrf.mxu0
  %v1266 = vadd.f32 %v279, %v1265
  %v1267 = vpop.f32.mrf.mxu0
  %1268 = vmatprep.mubr.f32.mxu0 0.0
  %1269 = vmatmul.mubr.f32.gmra.mxu0 %v373
  %v1270 = vpop.f32.mrf.mxu0
  %v1271 = vadd.f32 %v279, %v1270
  %v1272 = vpop.f32.mrf.mxu0
  %1273 = vmatprep.mubr.f32.mxu0 0.0
  %1274 = vmatmul.mubr.f32.gmra.mxu0 %v376
  %v1275 = vpop.f32.mrf.mxu0
  %v1276 = vadd.f32 %v279, %v1275
  %v1277 = vpop.f32.mrf.mxu0
  %1278 = vmatprep.mubr.f32.mxu0 0.0
  %1279 = vmatmul.mubr.f32.gmra.mxu0 %v379
  %v1280 = vpop.f32.mrf.mxu0
  %v1281 = vadd.f32 %v279, %v1280
  %v1282 = vpop.f32.mrf.mxu0
  %1283 = vmatprep.mubr.f32.mxu0 0.0
  %1284 = vmatmul.mubr.f32.gmra.mxu0 %v382
  %v1285 = vpop.f32.mrf.mxu0
  %v1286 = vadd.f32 %v279, %v1285
  %v1287 = vpop.f32.mrf.mxu0
  %1288 = vmatprep.mubr.f32.mxu0 0.0
  %1289 = vmatmul.mubr.f32.gmra.mxu0 %v385
  %v1290 = vpop.f32.mrf.mxu0
  %v1291 = vadd.f32 %v279, %v1290
  %v1292 = vpop.f32.mrf.mxu0
  %1293 = vmatprep.mubr.f32.mxu0 0.0
  %1294 = vmatmul.mubr.f32.gmra.mxu0 %v388
  %v1295 = vpop.f32.mrf.mxu0
  %v1296 = vadd.f32 %v279, %v1295
  %v1297 = vpop.f32.mrf.mxu0
  %1298 = vmatprep.mubr.f32.mxu0 0.0
  %1299 = vmatmul.mubr.f32.gmra.mxu0 %v391
  %v1300 = vpop.f32.mrf.mxu0
  %v1301 = vadd.f32 %v279, %v1300
  %v1302 = vpop.f32.mrf.mxu0
  %1303 = vmatprep.mubr.f32.mxu0 0.0
  %1304 = vmatmul.mubr.f32.gmra.mxu0 %v394
  %v1305 = vpop.f32.mrf.mxu0
  %v1306 = vadd.f32 %v279, %v1305
  %v1307 = vpop.f32.mrf.mxu0
  %1308 = vmatprep.mubr.f32.mxu0 0.0
  %1309 = vmatmul.mubr.f32.gmra.mxu0 %v397
  %v1310 = vpop.f32.mrf.mxu0
  %v1311 = vadd.f32 %v279, %v1310
  %v1312 = vpop.f32.mrf.mxu0
  %1313 = vmatprep.mubr.f32.mxu0 0.0
  %1314 = vmatmul.mubr.f32.gmra.mxu0 %v400
  %v1315 = vpop.f32.mrf.mxu0
  %v1316 = vadd.f32 %v279, %v1315
  %v1317 = vpop.f32.mrf.mxu0
  %1318 = vmatprep.mubr.f32.mxu0 0.0
  %1319 = vmatmul.mubr.f32.gmra.mxu0 %v403
  %v1320 = vpop.f32.mrf.mxu0
  %v1321 = vadd.f32 %v279, %v1320
  %v1322 = vpop.f32.mrf.mxu0
  %1323 = vmatprep.mubr.f32.mxu0 0.0
  %1324 = vmatmul.mubr.f32.gmra.mxu0 %v406
  %v1325 = vpop.f32.mrf.mxu0
  %v1326 = vadd.f32 %v279, %v1325
  %v1327 = vpop.f32.mrf.mxu0
  %1328 = vmatprep.mubr.f32.mxu0 0.0
  %1329 = vmatmul.mubr.f32.gmra.mxu0 %v409
  %v1330 = vpop.f32.mrf.mxu0
  %v1331 = vadd.f32 %v279, %v1330
  %v1332 = vpop.f32.mrf.mxu0
  %1333 = vmatprep.mubr.f32.mxu0 0.0
  %1334 = vmatmul.mubr.f32.gmra.mxu0 %v412
  %v1335 = vpop.f32.mrf.mxu0
  %v1336 = vadd.f32 %v279, %v1335
  %v1337 = vpop.f32.mrf.mxu0
  %1338 = vmatprep.mubr.f32.mxu0 0.0
  %1339 = vmatmul.mubr.f32.gmra.mxu0 %v415
  %v1340 = vpop.f32.mrf.mxu0
  %v1341 = vadd.f32 %v279, %v1340
  %v1342 = vpop.f32.mrf.mxu0
  %1343 = vmatprep.mubr.f32.mxu0 0.0
  %1344 = vmatmul.mubr.f32.gmra.mxu0 %v418
  %v1345 = vpop.f32.mrf.mxu0
  %v1346 = vadd.f32 %v279, %v1345
  %v1347 = vpop.f32.mrf.mxu0
  %1348 = vmatprep.mubr.f32.mxu0 0.0
  %1349 = vmatmul.mubr.f32.gmra.mxu0 %v421
  %v1350 = vpop.f32.mrf.mxu0
  %v1351 = vadd.f32 %v279, %v1350
  %v1352 = vpop.f32.mrf.mxu0
  %1353 = vmatprep.mubr.f32.mxu0 0.0
  %1354 = vmatmul.mubr.f32.gmra.mxu0 %v424
  %v1355 = vpop.f32.mrf.mxu0
  %v1356 = vadd.f32 %v279, %v1355
  %v1357 = vpop.f32.mrf.mxu0
  %1358 = vmatprep.mubr.f32.mxu0 0.0
  %1359 = vmatmul.mubr.f32.gmra.mxu0 %v427
  %v1360 = vpop.f32.mrf.mxu0
  %v1361 = vadd.f32 %v279, %v1360
  %v1362 = vpop.f32.mrf.mxu0
  %1363 = vmatprep.mubr.f32.mxu0 0.0
  %1364 = vmatmul.mubr.f32.gmra.mxu0 %v430
  %v1365 = vpop.f32.mrf.mxu0
  %v1366 = vadd.f32 %v279, %v1365
  %v1367 = vpop.f32.mrf.mxu0
  %1368 = vmatprep.mubr.f32.mxu0 0.0
  %1369 = vmatmul.mubr.f32.gmra.mxu0 %v433
  %v1370 = vpop.f32.mrf.mxu0
  %v1371 = vadd.f32 %v279, %v1370
  %v1372 = vpop.f32.mrf.mxu0
  %1373 = vmatprep.mubr.f32.mxu0 0.0
  %1374 = vmatmul.mubr.f32.gmra.mxu0 %v436
  %v1375 = vpop.f32.mrf.mxu0
  %v1376 = vadd.f32 %v279, %v1375
  %v1377 = vpop.f32.mrf.mxu0
  %1378 = vmatprep.mubr.f32.mxu0 0.0
  %1379 = vmatmul.mubr.f32.gmra.mxu0 %v439
  %v1380 = vpop.f32.mrf.mxu0
  %v1381 = vadd.f32 %v279, %v1380
  %v1382 = vpop.f32.mrf.mxu0
  %1383 = vmatprep.mubr.f32.mxu0 0.0
  %1384 = vmatmul.mubr.f32.gmra.mxu0 %v442
  %v1385 = vpop.f32.mrf.mxu0
  %v1386 = vadd.f32 %v279, %v1385
  %v1387 = vpop.f32.mrf.mxu0
  %1388 = vmatprep.mubr.f32.mxu0 0.0
  %1389 = vmatmul.mubr.f32.gmra.mxu0 %v445
  %v1390 = vpop.f32.mrf.mxu0
  %v1391 = vadd.f32 %v279, %v1390
  %v1392 = vpop.f32.mrf.mxu0
  %1393 = vmatprep.mubr.f32.mxu0 0.0
  %1394 = vmatmul.mubr.f32.gmra.mxu0 %v448
  %v1395 = vpop.f32.mrf.mxu0
  %v1396 = vadd.f32 %v279, %v1395
  %v1397 = vpop.f32.mrf.mxu0
  %1398 = vmatprep.mubr.f32.mxu0 0.0
  %1399 = vmatmul.mubr.f32.gmra.mxu0 %v451
  %v1400 = vpop.f32.mrf.mxu0
  %v1401 = vadd.f32 %v279, %v1400
  %v1402 = vpop.f32.mrf.mxu0
  %1403 = vmatprep.mubr.f32.mxu0 0.0
  %1404 = vmatmul.mubr.f32.gmra.mxu0 %v454
  %v1405 = vpop.f32.mrf.mxu0
  %v1406 = vadd.f32 %v279, %v1405
  %v1407 = vpop.f32.mrf.mxu0
  %1408 = vmatprep.mubr.f32.mxu0 0.0
  %1409 = vmatmul.mubr.f32.gmra.mxu0 %v457
  %v1410 = vpop.f32.mrf.mxu0
  %v1411 = vadd.f32 %v279, %v1410
  %v1412 = vpop.f32.mrf.mxu0
  %1413 = vmatprep.mubr.f32.mxu0 0.0
  %1414 = vmatmul.mubr.f32.gmra.mxu0 %v460
  %v1415 = vpop.f32.mrf.mxu0
  %v1416 = vadd.f32 %v279, %v1415
  %v1417 = vpop.f32.mrf.mxu0
  %1418 = vmatprep.mubr.f32.mxu0 0.0
  %1419 = vmatmul.mubr.f32.gmra.mxu0 %v463
  %v1420 = vpop.f32.mrf.mxu0
  %v1421 = vadd.f32 %v279, %v1420
  %v1422 = vpop.f32.mrf.mxu0
  %1423 = vmatprep.mubr.f32.mxu0 0.0
  %1424 = vmatmul.mubr.f32.gmra.mxu0 %v466
  %v1425 = vpop.f32.mrf.mxu0
  %v1426 = vadd.f32 %v279, %v1425
  %v1427 = vpop.f32.mrf.mxu0
  %1428 = vmatprep.mubr.f32.mxu0 0.0
  %1429 = vmatmul.mubr.f32.gmra.mxu0 %v469
  %v1430 = vpop.f32.mrf.mxu0
  %v1431 = vadd.f32 %v279, %v1430
  %v1432 = vpop.f32.mrf.mxu0
  %1433 = vmatprep.mubr.f32.mxu0 0.0
  %1434 = vmatmul.mubr.f32.gmra.mxu0 %v472
  %v1435 = vpop.f32.mrf.mxu0
  %v1436 = vadd.f32 %v279, %v1435
  %v1437 = vpop.f32.mrf.mxu0
  %1438 = vmatprep.mubr.f32.mxu0 0.0
  %1439 = vmatmul.mubr.f32.gmra.mxu0 %v475
  %v1440 = vpop.f32.mrf.mxu0
  %v1441 = vadd.f32 %v279, %v1440
  %v1442 = vpop.f32.mrf.mxu0
  %1443 = vmatprep.mubr.f32.mxu0 0.0
  %1444 = vmatmul.mubr.f32.gmra.mxu0 %v478
  %v1445 = vpop.f32.mrf.mxu0
  %v1446 = vadd.f32 %v279, %v1445
  %v1447 = vpop.f32.mrf.mxu0
  %1448 = vmatprep.mubr.f32.mxu0 0.0
  %1449 = vmatmul.mubr.f32.gmra.mxu0 %v481
  %v1450 = vpop.f32.mrf.mxu0
  %v1451 = vadd.f32 %v279, %v1450
  %v1452 = vpop.f32.mrf.mxu0
  %1453 = vmatprep.mubr.f32.mxu0 0.0
  %1454 = vmatmul.mubr.f32.gmra.mxu0 %v484
  %v1455 = vpop.f32.mrf.mxu0
  %v1456 = vadd.f32 %v279, %v1455
  %v1457 = vpop.f32.mrf.mxu0
  %1458 = vmatprep.mubr.f32.mxu0 0.0
  %1459 = vmatmul.mubr.f32.gmra.mxu0 %v487
  %v1460 = vpop.f32.mrf.mxu0
  %v1461 = vadd.f32 %v279, %v1460
  %v1462 = vpop.f32.mrf.mxu0
  %1463 = vmatprep.mubr.f32.mxu0 0.0
  %1464 = vmatmul.mubr.f32.gmra.mxu0 %v490
  %v1465 = vpop.f32.mrf.mxu0
  %v1466 = vadd.f32 %v279, %v1465
  %v1467 = vpop.f32.mrf.mxu0
  %1468 = vmatprep.mubr.f32.mxu0 0.0
  %1469 = vmatmul.mubr.f32.gmra.mxu0 %v493
  %v1470 = vpop.f32.mrf.mxu0
  %v1471 = vadd.f32 %v279, %v1470
  %v1472 = vpop.f32.mrf.mxu0
  %1473 = vmatprep.mubr.f32.mxu0 0.0
  %1474 = vmatmul.mubr.f32.gmra.mxu0 %v496
  %v1475 = vpop.f32.mrf.mxu0
  %v1476 = vadd.f32 %v279, %v1475
  %v1477 = vpop.f32.mrf.mxu0
  %1478 = vmatprep.mubr.f32.mxu0 0.0
  %1479 = vmatmul.mubr.f32.gmra.mxu0 %v499
  %v1480 = vpop.f32.mrf.mxu0
  %v1481 = vadd.f32 %v279, %v1480
  %v1482 = vpop.f32.mrf.mxu0
  %1483 = vmatprep.mubr.f32.mxu0 0.0
  %1484 = vmatmul.mubr.f32.gmra.mxu0 %v502
  %v1485 = vpop.f32.mrf.mxu0
  %v1486 = vadd.f32 %v279, %v1485
  %v1487 = vpop.f32.mrf.mxu0
  %1488 = vmatprep.mubr.f32.mxu0 0.0
  %1489 = vmatmul.mubr.f32.gmra.mxu0 %v505
  %v1490 = vpop.f32.mrf.mxu0
  %v1491 = vadd.f32 %v279, %v1490
  %v1492 = vpop.f32.mrf.mxu0
  %1493 = vmatprep.mubr.f32.mxu0 0.0
  %1494 = vmatmul.mubr.f32.gmra.mxu0 %v508
  %v1495 = vpop.f32.mrf.mxu0
  %v1496 = vadd.f32 %v279, %v1495
  %v1497 = vpop.f32.mrf.mxu0
  %1498 = vmatprep.mubr.f32.mxu0 0.0
  %1499 = vmatmul.mubr.f32.gmra.mxu0 %v511
  %v1500 = vpop.f32.mrf.mxu0
  %v1501 = vadd.f32 %v279, %v1500
  %v1502 = vpop.f32.mrf.mxu0
  %1503 = vmatprep.mubr.f32.mxu0 0.0
  %1504 = vmatmul.mubr.f32.gmra.mxu0 %v514
  %v1505 = vpop.f32.mrf.mxu0
  %v1506 = vadd.f32 %v279, %v1505
  %v1507 = vpop.f32.mrf.mxu0
  %1508 = vmatprep.mubr.f32.mxu0 0.0
  %1509 = vmatmul.mubr.f32.gmra.mxu0 %v517
  %v1510 = vpop.f32.mrf.mxu0
  %v1511 = vadd.f32 %v279, %v1510
  %v1512 = vpop.f32.mrf.mxu0
  %1513 = vmatprep.mubr.f32.mxu0 0.0
  %1514 = vmatmul.mubr.f32.gmra.mxu0 %v520
  %v1515 = vpop.f32.mrf.mxu0
  %v1516 = vadd.f32 %v279, %v1515
  %v1517 = vpop.f32.mrf.mxu0
  %1518 = vmatprep.mubr.f32.mxu0 0.0
  %1519 = vmatmul.mubr.f32.gmra.mxu0 %v523
  %v1520 = vpop.f32.mrf.mxu0
  %v1521 = vadd.f32 %v279, %v1520
  %v1522 = vpop.f32.mrf.mxu0
  %1523 = vmatprep.mubr.f32.mxu0 0.0
  %1524 = vmatmul.mubr.f32.gmra.mxu0 %v526
  %v1525 = vpop.f32.mrf.mxu0
  %v1526 = vadd.f32 %v279, %v1525
  %v1527 = vpop.f32.mrf.mxu0
  %1528 = vmatprep.mubr.f32.mxu0 0.0
  %1529 = vmatmul.mubr.f32.gmra.mxu0 %v529
  %v1530 = vpop.f32.mrf.mxu0
  %v1531 = vadd.f32 %v279, %v1530
  %v1532 = vpop.f32.mrf.mxu0
  %1533 = vmatprep.mubr.f32.mxu0 0.0
  %1534 = vmatmul.mubr.f32.gmra.mxu0 %v532
  %v1535 = vpop.f32.mrf.mxu0
  %v1536 = vadd.f32 %v279, %v1535
  %v1537 = vpop.f32.mrf.mxu0
  %1538 = vmatprep.mubr.f32.mxu0 0.0
  %1539 = vmatmul.mubr.f32.gmra.mxu0 %v535
  %v1540 = vpop.f32.mrf.mxu0
  %v1541 = vadd.f32 %v279, %v1540
  %v1542 = vpop.f32.mrf.mxu0
  %1543 = vmatprep.mubr.f32.mxu0 0.0
  %1544 = vmatmul.mubr.f32.gmra.mxu0 %v538
  %v1545 = vpop.f32.mrf.mxu0
  %v1546 = vadd.f32 %v279, %v1545
  %v1547 = vpop.f32.mrf.mxu0
  %1548 = vmatprep.mubr.f32.mxu0 0.0
  %1549 = vmatmul.mubr.f32.gmra.mxu0 %v541
  %v1550 = vpop.f32.mrf.mxu0
  %v1551 = vadd.f32 %v279, %v1550
  %v1552 = vpop.f32.mrf.mxu0
  %1553 = vmatprep.mubr.f32.mxu0 0.0
  %1554 = vmatmul.mubr.f32.gmra.mxu0 %v544
  %v1555 = vpop.f32.mrf.mxu0
  %v1556 = vadd.f32 %v279, %v1555
  %v1557 = vpop.f32.mrf.mxu0
  %1558 = vmatprep.mubr.f32.mxu0 0.0
  %1559 = vmatmul.mubr.f32.gmra.mxu0 %v547
  %v1560 = vpop.f32.mrf.mxu0
  %v1561 = vadd.f32 %v279, %v1560
  %v1562 = vpop.f32.mrf.mxu0
  %1563 = vmatprep.mubr.f32.mxu0 0.0
  %1564 = vmatmul.mubr.f32.gmra.mxu0 %v550
  %v1565 = vpop.f32.mrf.mxu0
  %v1566 = vadd.f32 %v279, %v1565
  %v1567 = vpop.f32.mrf.mxu0
  %1568 = vmatprep.mubr.f32.mxu0 0.0
  %1569 = vmatmul.mubr.f32.gmra.mxu0 %v553
  %v1570 = vpop.f32.mrf.mxu0
  %v1571 = vadd.f32 %v279, %v1570
  %v1572 = vpop.f32.mrf.mxu0
  %1573 = vmatprep.mubr.f32.mxu0 0.0
  %1574 = vmatmul.mubr.f32.gmra.mxu0 %v556
  %v1575 = vpop.f32.mrf.mxu0
  %v1576 = vadd.f32 %v279, %v1575
  %v1577 = vpop.f32.mrf.mxu0
  %1578 = vmatprep.mubr.f32.mxu0 0.0
  %1579 = vmatmul.mubr.f32.gmra.mxu0 %v559
  %v1580 = vpop.f32.mrf.mxu0
  %v1581 = vadd.f32 %v279, %v1580
  %v1582 = vpop.f32.mrf.mxu0
  %1583 = vmatprep.mubr.f32.mxu0 0.0
  %1584 = vmatmul.mubr.f32.gmra.mxu0 %v562
  %v1585 = vpop.f32.mrf.mxu0
  %v1586 = vadd.f32 %v279, %v1585
  %v1587 = vpop.f32.mrf.mxu0
  %1588 = vmatprep.mubr.f32.mxu0 0.0
  %1589 = vmatmul.mubr.f32.gmra.mxu0 %v565
  %v1590 = vpop.f32.mrf.mxu0
  %v1591 = vadd.f32 %v279, %v1590
  %v1592 = vpop.f32.mrf.mxu0
  %1593 = vmatprep.mubr.f32.mxu0 0.0
  %1594 = vmatmul.mubr.f32.gmra.mxu0 %v568
  %v1595 = vpop.f32.mrf.mxu0
  %v1596 = vadd.f32 %v279, %v1595
  %v1597 = vpop.f32.mrf.mxu0
  %1598 = vmatprep.mubr.f32.mxu0 0.0
  %1599 = vmatmul.mubr.f32.gmra.mxu0 %v571
  %v1600 = vpop.f32.mrf.mxu0
  %v1601 = vadd.f32 %v279, %v1600
  %v1602 = vpop.f32.mrf.mxu0
  %1603 = vmatprep.mubr.f32.mxu0 0.0
  %1604 = vmatmul.mubr.f32.gmra.mxu0 %v574
  %v1605 = vpop.f32.mrf.mxu0
  %v1606 = vadd.f32 %v279, %v1605
  %v1607 = vpop.f32.mrf.mxu0
  %1608 = vmatprep.mubr.f32.mxu0 0.0
  %1609 = vmatmul.mubr.f32.gmra.mxu0 %v577
  %v1610 = vpop.f32.mrf.mxu0
  %v1611 = vadd.f32 %v279, %v1610
  %v1612 = vpop.f32.mrf.mxu0
  %1613 = vmatprep.mubr.f32.mxu0 0.0
  %1614 = vmatmul.mubr.f32.gmra.mxu0 %v580
  %v1615 = vpop.f32.mrf.mxu0
  %v1616 = vadd.f32 %v279, %v1615
  %v1617 = vpop.f32.mrf.mxu0
  %1618 = vmatprep.mubr.f32.mxu0 0.0
  %1619 = vmatmul.mubr.f32.gmra.mxu0 %v583
  %v1620 = vpop.f32.mrf.mxu0
  %v1621 = vadd.f32 %v279, %v1620
  %v1622 = vpop.f32.mrf.mxu0
  %1623 = vmatprep.mubr.f32.mxu0 0.0
  %1624 = vmatmul.mubr.f32.gmra.mxu0 %v586
  %v1625 = vpop.f32.mrf.mxu0
  %v1626 = vadd.f32 %v279, %v1625
  %v1627 = vpop.f32.mrf.mxu0
  %1628 = vmatprep.mubr.f32.mxu0 0.0
  %1629 = vmatmul.mubr.f32.gmra.mxu0 %v589
  %v1630 = vpop.f32.mrf.mxu0
  %v1631 = vadd.f32 %v279, %v1630
  %v1632 = vpop.f32.mrf.mxu0
  %1633 = vmatprep.mubr.f32.mxu0 0.0
  %1634 = vmatmul.mubr.f32.gmra.mxu0 %v592
  %v1635 = vpop.f32.mrf.mxu0
  %v1636 = vadd.f32 %v279, %v1635
  %v1637 = vpop.f32.mrf.mxu0
  %1638 = vmatprep.mubr.f32.mxu0 0.0
  %1639 = vmatmul.mubr.f32.gmra.mxu0 %v595
  %v1640 = vpop.f32.mrf.mxu0
  %v1641 = vadd.f32 %v279, %v1640
  %v1642 = vpop.f32.mrf.mxu0
  %1643 = vmatprep.mubr.f32.mxu0 0.0
  %1644 = vmatmul.mubr.f32.gmra.mxu0 %v598
  %v1645 = vpop.f32.mrf.mxu0
  %v1646 = vadd.f32 %v279, %v1645
  %v1647 = vpop.f32.mrf.mxu0
  %1648 = vmatprep.mubr.f32.mxu0 0.0
  %1649 = vmatmul.mubr.f32.gmra.mxu0 %v601
  %v1650 = vpop.f32.mrf.mxu0
  %v1651 = vadd.f32 %v279, %v1650
  %v1652 = vpop.f32.mrf.mxu0
  %1653 = vmatprep.mubr.f32.mxu0 0.0
  %1654 = vmatmul.mubr.f32.gmra.mxu0 %v604
  %v1655 = vpop.f32.mrf.mxu0
  %v1656 = vadd.f32 %v279, %v1655
  %v1657 = vpop.f32.mrf.mxu0
  %1658 = vmatprep.mubr.f32.mxu0 0.0
  %1659 = vmatmul.mubr.f32.gmra.mxu0 %v607
  %v1660 = vpop.f32.mrf.mxu0
  %v1661 = vadd.f32 %v279, %v1660
  %v1662 = vpop.f32.mrf.mxu0
  %1663 = vmatprep.mubr.f32.mxu0 0.0
  %1664 = vmatmul.mubr.f32.gmra.mxu0 %v610
  %v1665 = vpop.f32.mrf.mxu0
  %v1666 = vadd.f32 %v279, %v1665
  %v1667 = vpop.f32.mrf.mxu0
  %1668 = vmatprep.mubr.f32.mxu0 0.0
  %1669 = vmatmul.mubr.f32.gmra.mxu0 %v613
  %v1670 = vpop.f32.mrf.mxu0
  %v1671 = vadd.f32 %v279, %v1670
  %v1672 = vpop.f32.mrf.mxu0
  %1673 = vmatprep.mubr.f32.mxu0 0.0
  %1674 = vmatmul.mubr.f32.gmra.mxu0 %v616
  %v1675 = vpop.f32.mrf.mxu0
  %v1676 = vadd.f32 %v279, %v1675
  %v1677 = vpop.f32.mrf.mxu0
  %1678 = vmatprep.mubr.f32.mxu0 0.0
  %1679 = vmatmul.mubr.f32.gmra.mxu0 %v619
  %v1680 = vpop.f32.mrf.mxu0
  %v1681 = vadd.f32 %v279, %v1680
  %v1682 = vpop.f32.mrf.mxu0
  %1683 = vmatprep.mubr.f32.mxu0 0.0
  %1684 = vmatmul.mubr.f32.gmra.mxu0 %v622
  %v1685 = vpop.f32.mrf.mxu0
  %v1686 = vadd.f32 %v279, %v1685
  %v1687 = vpop.f32.mrf.mxu0
  %1688 = vmatprep.mubr.f32.mxu0 0.0
  %1689 = vmatmul.mubr.f32.gmra.mxu0 %v625
  %v1690 = vpop.f32.mrf.mxu0
  %v1691 = vadd.f32 %v279, %v1690
  %v1692 = vpop.f32.mrf.mxu0
  %1693 = vmatprep.mubr.f32.mxu0 0.0
  %1694 = vmatmul.mubr.f32.gmra.mxu0 %v628
  %v1695 = vpop.f32.mrf.mxu0
  %v1696 = vadd.f32 %v279, %v1695
  %v1697 = vpop.f32.mrf.mxu0
  %1698 = vmatprep.mubr.f32.mxu0 0.0
  %1699 = vmatmul.mubr.f32.gmra.mxu0 %v631
  %v1700 = vpop.f32.mrf.mxu0
  %v1701 = vadd.f32 %v279, %v1700
  %v1702 = vpop.f32.mrf.mxu0
  %1703 = vmatprep.mubr.f32.mxu0 0.0
  %1704 = vmatmul.mubr.f32.gmra.mxu0 %v634
  %v1705 = vpop.f32.mrf.mxu0
  %v1706 = vadd.f32 %v279, %v1705
  %v1707 = vpop.f32.mrf.mxu0
  %1708 = vmatprep.mubr.f32.mxu0 0.0
  %1709 = vmatmul.mubr.f32.gmra.mxu0 %v637
  %v1710 = vpop.f32.mrf.mxu0
  %v1711 = vadd.f32 %v279, %v1710
  %v1712 = vpop.f32.mrf.mxu0
  %1713 = vmatprep.mubr.f32.mxu0 0.0
  %1714 = vmatmul.mubr.f32.gmra.mxu0 %v640
  %v1715 = vpop.f32.mrf.mxu0
  %v1716 = vadd.f32 %v279, %v1715
  %v1717 = vpop.f32.mrf.mxu0
  %1718 = vmatprep.mubr.f32.mxu0 0.0
  %1719 = vmatmul.mubr.f32.gmra.mxu0 %v643
  %v1720 = vpop.f32.mrf.mxu0
  %v1721 = vadd.f32 %v279, %v1720
  %v1722 = vpop.f32.mrf.mxu0
  %1723 = vmatprep.mubr.f32.mxu0 0.0
  %1724 = vmatmul.mubr.f32.gmra.mxu0 %v646
  %v1725 = vpop.f32.mrf.mxu0
  %v1726 = vadd.f32 %v279, %v1725
  %v1727 = vpop.f32.mrf.mxu0
  %1728 = vmatprep.mubr.f32.mxu0 0.0
  %1729 = vmatmul.mubr.f32.gmra.mxu0 %v649
  %v1730 = vpop.f32.mrf.mxu0
  %v1731 = vadd.f32 %v279, %v1730
  %v1732 = vpop.f32.mrf.mxu0
  %1733 = vmatprep.mubr.f32.mxu0 0.0
  %1734 = vmatmul.mubr.f32.gmra.mxu0 %v652
  %v1735 = vpop.f32.mrf.mxu0
  %v1736 = vadd.f32 %v279, %v1735
  %v1737 = vpop.f32.mrf.mxu0
  %1738 = vmatprep.mubr.f32.mxu0 0.0
  %1739 = vmatmul.mubr.f32.gmra.mxu0 %v655
  %v1740 = vpop.f32.mrf.mxu0
  %v1741 = vadd.f32 %v279, %v1740
  %v1742 = vpop.f32.mrf.mxu0
  %1743 = vmatprep.mubr.f32.mxu0 0.0
  %1744 = vmatmul.mubr.f32.gmra.mxu0 %v658
  %v1745 = vpop.f32.mrf.mxu0
  %v1746 = vadd.f32 %v279, %v1745
  %v1747 = vpop.f32.mrf.mxu0
  %1748 = vmatprep.mubr.f32.mxu0 0.0
  %1749 = vmatmul.mubr.f32.gmra.mxu0 %v661
  %v1750 = vpop.f32.mrf.mxu0
  %v1751 = vadd.f32 %v279, %v1750
  %v1752 = vpop.f32.mrf.mxu0
  %1753 = vmatprep.mubr.f32.mxu0 0.0
  %1754 = vmatmul.mubr.f32.gmra.mxu0 %v664
  %v1755 = vpop.f32.mrf.mxu0
  %v1756 = vadd.f32 %v279, %v1755
  %v1757 = vpop.f32.mrf.mxu0
  %1758 = vmatprep.mubr.f32.mxu0 0.0
  %1759 = vmatmul.mubr.f32.gmra.mxu0 %v667
  %v1760 = vpop.f32.mrf.mxu0
  %v1761 = vadd.f32 %v279, %v1760
  %v1762 = vpop.f32.mrf.mxu0
  %1763 = vmatprep.mubr.f32.mxu0 0.0
  %1764 = vmatmul.mubr.f32.gmra.mxu0 %v670
  %v1765 = vpop.f32.mrf.mxu0
  %v1766 = vadd.f32 %v279, %v1765
  %v1767 = vpop.f32.mrf.mxu0
  %1768 = vmatprep.mubr.f32.mxu0 0.0
  %1769 = vmatmul.mubr.f32.gmra.mxu0 %v673
  %v1770 = vpop.f32.mrf.mxu0
  %v1771 = vadd.f32 %v279, %v1770
  %v1772 = vpop.f32.mrf.mxu0
  %1773 = vmatprep.mubr.f32.mxu0 0.0
  %1774 = vmatmul.mubr.f32.gmra.mxu0 %v676
  %v1775 = vpop.f32.mrf.mxu0
  %v1776 = vadd.f32 %v279, %v1775
  %v1777 = vpop.f32.mrf.mxu0
  %1778 = vmatprep.mubr.f32.mxu0 0.0
  %1779 = vmatmul.mubr.f32.gmra.mxu0 %v679
  %v1780 = vpop.f32.mrf.mxu0
  %v1781 = vadd.f32 %v279, %v1780
  %v1782 = vpop.f32.mrf.mxu0
  %1783 = vmatprep.mubr.f32.mxu0 0.0
  %1784 = vmatmul.mubr.f32.gmra.mxu0 %v682
  %v1785 = vpop.f32.mrf.mxu0
  %v1786 = vadd.f32 %v279, %v1785
  %v1787 = vpop.f32.mrf.mxu0
  %1788 = vmatprep.mubr.f32.mxu0 0.0
  %1789 = vmatmul.mubr.f32.gmra.mxu0 %v685
  %v1790 = vpop.f32.mrf.mxu0
  %v1791 = vadd.f32 %v279, %v1790
  %v1792 = vpop.f32.mrf.mxu0
  %1793 = vmatprep.mubr.f32.mxu0 0.0
  %1794 = vmatmul.mubr.f32.gmra.mxu0 %v688
  %v1795 = vpop.f32.mrf.mxu0
  %v1796 = vadd.f32 %v279, %v1795
  %v1797 = vpop.f32.mrf.mxu0
  %1798 = vmatprep.mubr.f32.mxu0 0.0
  %1799 = vmatmul.mubr.f32.gmra.mxu0 %v691
  %v1800 = vpop.f32.mrf.mxu0
  %v1801 = vadd.f32 %v279, %v1800
  %v1802 = vpop.f32.mrf.mxu0
  %1803 = vmatprep.mubr.f32.mxu0 0.0
  %1804 = vmatmul.mubr.f32.gmra.mxu0 %v694
  %v1805 = vpop.f32.mrf.mxu0
  %v1806 = vadd.f32 %v279, %v1805
  %v1807 = vpop.f32.mrf.mxu0
  %1808 = vmatprep.mubr.f32.mxu0 0.0
  %1809 = vmatmul.mubr.f32.gmra.mxu0 %v697
  %v1810 = vpop.f32.mrf.mxu0
  %v1811 = vadd.f32 %v279, %v1810
  %v1812 = vpop.f32.mrf.mxu0
  %1813 = vmatprep.mubr.f32.mxu0 0.0
  %1814 = vmatmul.mubr.f32.gmra.mxu0 %v700
  %v1815 = vpop.f32.mrf.mxu0
  %v1816 = vadd.f32 %v279, %v1815
  %v1817 = vpop.f32.mrf.mxu0
  %1818 = vmatprep.mubr.f32.mxu0 0.0
  %1819 = vmatmul.mubr.f32.gmra.mxu0 %v703
  %v1820 = vpop.f32.mrf.mxu0
  %v1821 = vadd.f32 %v279, %v1820
  %v1822 = vpop.f32.mrf.mxu0
  %1823 = vmatprep.mubr.f32.mxu0 0.0
  %1824 = vmatmul.mubr.f32.gmra.mxu0 %v706
  %v1825 = vpop.f32.mrf.mxu0
  %v1826 = vadd.f32 %v279, %v1825
  %v1827 = vpop.f32.mrf.mxu0
  %1828 = vmatprep.mubr.f32.mxu0 0.0
  %1829 = vmatmul.mubr.f32.gmra.mxu0 %v709
  %v1830 = vpop.f32.mrf.mxu0
  %v1831 = vadd.f32 %v279, %v1830
  %v1832 = vpop.f32.mrf.mxu0
  %1833 = vmatprep.mubr.f32.mxu0 0.0
  %1834 = vmatmul.mubr.f32.gmra.mxu0 %v712
  %v1835 = vpop.f32.mrf.mxu0
  %v1836 = vadd.f32 %v279, %v1835
  %v1837 = vpop.f32.mrf.mxu0
  %1838 = vmatprep.mubr.f32.mxu0 0.0
  %1839 = vmatmul.mubr.f32.gmra.mxu0 %v715
  %v1840 = vpop.f32.mrf.mxu0
  %v1841 = vadd.f32 %v279, %v1840
  %v1842 = vpop.f32.mrf.mxu0
  %1843 = vmatprep.mubr.f32.mxu0 0.0
  %1844 = vmatmul.mubr.f32.gmra.mxu0 %v718
  %v1845 = vpop.f32.mrf.mxu0
  %v1846 = vadd.f32 %v279, %v1845
  %v1847 = vpop.f32.mrf.mxu0
  %1848 = vmatprep.mubr.f32.mxu0 0.0
  %1849 = vmatmul.mubr.f32.gmra.mxu0 %v721
  %v1850 = vpop.f32.mrf.mxu0
  %v1851 = vadd.f32 %v279, %v1850
  %v1852 = vpop.f32.mrf.mxu0
  %1853 = vmatprep.mubr.f32.mxu0 0.0
  %1854 = vmatmul.mubr.f32.gmra.mxu0 %v724
  %v1855 = vpop.f32.mrf.mxu0
  %v1856 = vadd.f32 %v279, %v1855
  %v1857 = vpop.f32.mrf.mxu0
  %1858 = vmatprep.mubr.f32.mxu0 0.0
  %1859 = vmatmul.mubr.f32.gmra.mxu0 %v727
  %v1860 = vpop.f32.mrf.mxu0
  %v1861 = vadd.f32 %v279, %v1860
  %v1862 = vpop.f32.mrf.mxu0
  %1863 = vmatprep.mubr.f32.mxu0 0.0
  %1864 = vmatmul.mubr.f32.gmra.mxu0 %v730
  %v1865 = vpop.f32.mrf.mxu0
  %v1866 = vadd.f32 %v279, %v1865
  %v1867 = vpop.f32.mrf.mxu0
  %1868 = vmatprep.mubr.f32.mxu0 0.0
  %1869 = vmatmul.mubr.f32.gmra.mxu0 %v733
  %v1870 = vpop.f32.mrf.mxu0
  %v1871 = vadd.f32 %v279, %v1870
  %v1872 = vpop.f32.mrf.mxu0
  %1873 = vmatprep.mubr.f32.mxu0 0.0
  %1874 = vmatmul.mubr.f32.gmra.mxu0 %v736
  %v1875 = vpop.f32.mrf.mxu0
  %v1876 = vadd.f32 %v279, %v1875
  %v1877 = vpop.f32.mrf.mxu0
  %1878 = vmatprep.mubr.f32.mxu0 0.0
  %1879 = vmatmul.mubr.f32.gmra.mxu0 %v739
  %v1880 = vpop.f32.mrf.mxu0
  %v1881 = vadd.f32 %v279, %v1880
  %v1882 = vpop.f32.mrf.mxu0
  %1883 = vmatprep.mubr.f32.mxu0 0.0
  %1884 = vmatmul.mubr.f32.gmra.mxu0 %v742
  %v1885 = vpop.f32.mrf.mxu0
  %v1886 = vadd.f32 %v279, %v1885
  %v1887 = vpop.f32.mrf.mxu0
  %1888 = vmatprep.mubr.f32.mxu0 0.0
  %1889 = vmatmul.mubr.f32.gmra.mxu0 %v745
  %v1890 = vpop.f32.mrf.mxu0
  %v1891 = vadd.f32 %v279, %v1890
  %v1892 = vpop.f32.mrf.mxu0
  %1893 = vmatprep.mubr.f32.mxu0 0.0
  %1894 = vmatmul.mubr.f32.gmra.mxu0 %v748
  %v1895 = vpop.f32.mrf.mxu0
  %v1896 = vadd.f32 %v279, %v1895
  %v1897 = vpop.f32.mrf.mxu0
  %1898 = vmatprep.mubr.f32.mxu0 0.0
  %1899 = vmatmul.mubr.f32.gmra.mxu0 %v751
  %v1900 = vpop.f32.mrf.mxu0
  %v1901 = vadd.f32 %v279, %v1900
  %v1902 = vpop.f32.mrf.mxu0
  %1903 = vmatprep.mubr.f32.mxu0 0.0
  %1904 = vmatmul.mubr.f32.gmra.mxu0 %v754
  %v1905 = vpop.f32.mrf.mxu0
  %v1906 = vadd.f32 %v279, %v1905
  %v1907 = vpop.f32.mrf.mxu0
  %1908 = vmatprep.mubr.f32.mxu0 0.0
  %1909 = vmatmul.mubr.f32.gmra.mxu0 %v757
  %v1910 = vpop.f32.mrf.mxu0
  %v1911 = vadd.f32 %v279, %v1910
  %v1912 = vpop.f32.mrf.mxu0
  %1913 = vmatprep.mubr.f32.mxu0 0.0
  %1914 = vmatmul.mubr.f32.gmra.mxu0 %v760
  %v1915 = vpop.f32.mrf.mxu0
  %v1916 = vadd.f32 %v279, %v1915
  %v1917 = vpop.f32.mrf.mxu0
  %1918 = vmatprep.mubr.f32.mxu0 0.0
  %1919 = vmatmul.mubr.f32.gmra.mxu0 %v763
  %v1920 = vpop.f32.mrf.mxu0
  %v1921 = vadd.f32 %v279, %v1920
  %v1922 = vpop.f32.mrf.mxu0
  %1923 = vmatprep.mubr.f32.mxu0 0.0
  %1924 = vmatmul.mubr.f32.gmra.mxu0 %v766
  %v1925 = vpop.f32.mrf.mxu0
  %v1926 = vadd.f32 %v279, %v1925
  %v1927 = vpop.f32.mrf.mxu0
  %1928 = vmatprep.mubr.f32.mxu0 0.0
  %1929 = vmatmul.mubr.f32.gmra.mxu0 %v769
  %v1930 = vpop.f32.mrf.mxu0
  %v1931 = vadd.f32 %v279, %v1930
  %v1932 = vpop.f32.mrf.mxu0
  %1933 = vmatprep.mubr.f32.mxu0 0.0
  %1934 = vmatmul.mubr.f32.gmra.mxu0 %v772
  %v1935 = vpop.f32.mrf.mxu0
  %v1936 = vadd.f32 %v279, %v1935
  %v1937 = vpop.f32.mrf.mxu0
  %1938 = vmatprep.mubr.f32.mxu0 0.0
  %1939 = vmatmul.mubr.f32.gmra.mxu0 %v775
  %v1940 = vpop.f32.mrf.mxu0
  %v1941 = vadd.f32 %v279, %v1940
  %v1942 = vpop.f32.mrf.mxu0
  %1943 = vmatprep.mubr.f32.mxu0 0.0
  %1944 = vmatmul.mubr.f32.gmra.mxu0 %v778
  %v1945 = vpop.f32.mrf.mxu0
  %v1946 = vadd.f32 %v279, %v1945
  %v1947 = vpop.f32.mrf.mxu0
  %1948 = vmatprep.mubr.f32.mxu0 0.0
  %1949 = vmatmul.mubr.f32.gmra.mxu0 %v781
  %v1950 = vpop.f32.mrf.mxu0
  %v1951 = vadd.f32 %v279, %v1950
  %v1952 = vpop.f32.mrf.mxu0
  %1953 = vmatprep.mubr.f32.mxu0 0.0
  %1954 = vmatmul.mubr.f32.gmra.mxu0 %v784
  %v1955 = vpop.f32.mrf.mxu0
  %v1956 = vadd.f32 %v279, %v1955
  %v1957 = vpop.f32.mrf.mxu0
  %1958 = vmatprep.mubr.f32.mxu0 0.0
  %1959 = vmatmul.mubr.f32.gmra.mxu0 %v787
  %v1960 = vpop.f32.mrf.mxu0
  %v1961 = vadd.f32 %v279, %v1960
  %v1962 = vpop.f32.mrf.mxu0
  %1963 = vmatprep.mubr.f32.mxu0 0.0
  %1964 = vmatmul.mubr.f32.gmra.mxu0 %v790
  %v1965 = vpop.f32.mrf.mxu0
  %v1966 = vadd.f32 %v279, %v1965
  %v1967 = vpop.f32.mrf.mxu0
  %1968 = vmatprep.mubr.f32.mxu0 0.0
  %1969 = vmatmul.mubr.f32.gmra.mxu0 %v793
  %v1970 = vpop.f32.mrf.mxu0
  %v1971 = vadd.f32 %v279, %v1970
  %v1972 = vpop.f32.mrf.mxu0
  %1973 = vmatprep.mubr.f32.mxu0 0.0
  %1974 = vmatmul.mubr.f32.gmra.mxu0 %v796
  %v1975 = vpop.f32.mrf.mxu0
  %v1976 = vadd.f32 %v279, %v1975
  %v1977 = vpop.f32.mrf.mxu0
  %1978 = vmatprep.mubr.f32.mxu0 0.0
  %1979 = vmatmul.mubr.f32.gmra.mxu0 %v799
  %v1980 = vpop.f32.mrf.mxu0
  %v1981 = vadd.f32 %v279, %v1980
  %v1982 = vpop.f32.mrf.mxu0
  %1983 = vmatprep.mubr.f32.mxu0 0.0
  %1984 = vmatmul.mubr.f32.gmra.mxu0 %v802
  %v1985 = vpop.f32.mrf.mxu0
  %v1986 = vadd.f32 %v279, %v1985
  %v1987 = vpop.f32.mrf.mxu0
  %1988 = vmatprep.mubr.f32.mxu0 0.0
  %1989 = vmatmul.mubr.f32.gmra.mxu0 %v805
  %v1990 = vpop.f32.mrf.mxu0
  %v1991 = vadd.f32 %v279, %v1990
  %v1992 = vpop.f32.mrf.mxu0
  %1993 = vmatprep.mubr.f32.mxu0 0.0
  %1994 = vmatmul.mubr.f32.gmra.mxu0 %v808
  %v1995 = vpop.f32.mrf.mxu0
  %v1996 = vadd.f32 %v279, %v1995
  %v1997 = vpop.f32.mrf.mxu0
  %1998 = vmatprep.mubr.f32.mxu0 0.0
  %1999 = vmatmul.mubr.f32.gmra.mxu0 %v811
  %v2000 = vpop.f32.mrf.mxu0
  %v2001 = vadd.f32 %v279, %v2000
  %v2002 = vpop.f32.mrf.mxu0
  %2003 = vmatprep.mubr.f32.mxu0 0.0
  %2004 = vmatmul.mubr.f32.gmra.mxu0 %v814
  %v2005 = vpop.f32.mrf.mxu0
  %v2006 = vadd.f32 %v279, %v2005
  %v2007 = vpop.f32.mrf.mxu0
  %2008 = vmatprep.mubr.f32.mxu0 0.0
  %2009 = vmatmul.mubr.f32.gmra.mxu0 %v817
  %v2010 = vpop.f32.mrf.mxu0
  %v2011 = vadd.f32 %v279, %v2010
  %v2012 = vpop.f32.mrf.mxu0
  %2013 = vmatprep.mubr.f32.mxu0 0.0
  %2014 = vmatmul.mubr.f32.gmra.mxu0 %v820
  %v2015 = vpop.f32.mrf.mxu0
  %v2016 = vadd.f32 %v279, %v2015
  %v2017 = vpop.f32.mrf.mxu0
  %2018 = vmatprep.mubr.f32.mxu0 0.0
  %2019 = vmatmul.mubr.f32.gmra.mxu0 %v823
  %v2020 = vpop.f32.mrf.mxu0
  %v2021 = vadd.f32 %v279, %v2020
  %v2022 = vpop.f32.mrf.mxu0
  %2023 = vmatprep.mubr.f32.mxu0 0.0
  %2024 = vmatmul.mubr.f32.gmra.mxu0 %v826
  %v2025 = vpop.f32.mrf.mxu0
  %v2026 = vadd.f32 %v279, %v2025
  %v2027 = vpop.f32.mrf.mxu0
  %2028 = vmatprep.mubr.f32.mxu0 0.0
  %2029 = vmatmul.mubr.f32.gmra.mxu0 %v829
  %v2030 = vpop.f32.mrf.mxu0
  %v2031 = vadd.f32 %v279, %v2030
  %v2032 = vpop.f32.mrf.mxu0
  %2033 = vmatprep.mubr.f32.mxu0 0.0
  %2034 = vmatmul.mubr.f32.gmra.mxu0 %v832
  %v2035 = vpop.f32.mrf.mxu0
  %v2036 = vadd.f32 %v279, %v2035
  %v2037 = vpop.f32.mrf.mxu0
  %2038 = vmatprep.mubr.f32.mxu0 0.0
  %2039 = vmatmul.mubr.f32.gmra.mxu0 %v835
  %v2040 = vpop.f32.mrf.mxu0
  %v2041 = vadd.f32 %v279, %v2040
  %v2042 = vpop.f32.mrf.mxu0
  %2043 = vmatprep.mubr.f32.mxu0 0.0
  %2044 = vmatmul.mubr.f32.gmra.mxu0 %v838
  %v2045 = vpop.f32.mrf.mxu0
  %v2046 = vadd.f32 %v279, %v2045
  %v2047 = vpop.f32.mrf.mxu0
  %2048 = vmatprep.mubr.f32.mxu0 0.0
  %2049 = vmatmul.mubr.f32.gmra.mxu0 %v841
  %v2050 = vpop.f32.mrf.mxu0
  %v2051 = vadd.f32 %v279, %v2050
  %v2052 = vpop.f32.mrf.mxu0
  %2053 = vmatprep.mubr.f32.mxu0 0.0
  %2054 = vmatmul.mubr.f32.gmra.mxu0 %v844
  %v2055 = vpop.f32.mrf.mxu0
  %v2056 = vadd.f32 %v279, %v2055
  %v2057 = vpop.f32.mrf.mxu0
  %2058 = vmatprep.mubr.f32.mxu0 0.0
  %2059 = vmatmul.mubr.f32.gmra.mxu0 %v847
  %v2060 = vpop.f32.mrf.mxu0
  %v2061 = vadd.f32 %v279, %v2060
  %v2062 = vpop.f32.mrf.mxu0
  %2063 = vmatprep.mubr.f32.mxu0 0.0
  %2064 = vmatmul.mubr.f32.gmra.mxu0 %v850
  %v2065 = vpop.f32.mrf.mxu0
  %v2066 = vadd.f32 %v279, %v2065
  %v2067 = vpop.f32.mrf.mxu0
  %2068 = vmatprep.mubr.f32.mxu0 0.0
  %2069 = vmatmul.mubr.f32.gmra.mxu0 %v853
  %v2070 = vpop.f32.mrf.mxu0
  %v2071 = vadd.f32 %v279, %v2070
  %v2072 = vpop.f32.mrf.mxu0
  %2073 = vmatprep.mubr.f32.mxu0 0.0
  %2074 = vmatmul.mubr.f32.gmra.mxu0 %v856
  %v2075 = vpop.f32.mrf.mxu0
  %v2076 = vadd.f32 %v279, %v2075
  %v2077 = vpop.f32.mrf.mxu0
  %2078 = vmatprep.mubr.f32.mxu0 0.0
  %2079 = vmatmul.mubr.f32.gmra.mxu0 %v859
  %v2080 = vpop.f32.mrf.mxu0
  %v2081 = vadd.f32 %v279, %v2080
  %v2082 = vpop.f32.mrf.mxu0
  %2083 = vmatprep.mubr.f32.mxu0 0.0
  %2084 = vmatmul.mubr.f32.gmra.mxu0 %v862
  %v2085 = vpop.f32.mrf.mxu0
  %v2086 = vadd.f32 %v279, %v2085
  %v2087 = vpop.f32.mrf.mxu0
  %2088 = vmatprep.mubr.f32.mxu0 0.0
  %2089 = vmatmul.mubr.f32.gmra.mxu0 %v865
  %v2090 = vpop.f32.mrf.mxu0
  %v2091 = vadd.f32 %v279, %v2090
  %v2092 = vpop.f32.mrf.mxu0
  %2093 = vmatprep.mubr.f32.mxu0 0.0
  %2094 = vmatmul.mubr.f32.gmra.mxu0 %v868
  %v2095 = vpop.f32.mrf.mxu0
  %v2096 = vadd.f32 %v279, %v2095
  %v2097 = vpop.f32.mrf.mxu0
  %2098 = vmatprep.mubr.f32.mxu0 0.0
  %2099 = vmatmul.mubr.f32.gmra.mxu0 %v871
  %v2100 = vpop.f32.mrf.mxu0
  %v2101 = vadd.f32 %v279, %v2100
  %v2102 = vpop.f32.mrf.mxu0
  %2103 = vmatprep.mubr.f32.mxu0 0.0
  %2104 = vmatmul.mubr.f32.gmra.mxu0 %v874
  %v2105 = vpop.f32.mrf.mxu0
  %v2106 = vadd.f32 %v279, %v2105
  %v2107 = vpop.f32.mrf.mxu0
  %2108 = vmatprep.mubr.f32.mxu0 0.0
  %2109 = vmatmul.mubr.f32.gmra.mxu0 %v877
  %v2110 = vpop.f32.mrf.mxu0
  %v2111 = vadd.f32 %v279, %v2110
  %v2112 = vpop.f32.mrf.mxu0
  %2113 = vmatprep.mubr.f32.mxu0 0.0
  %2114 = vmatmul.mubr.f32.gmra.mxu0 %v880
  %v2115 = vpop.f32.mrf.mxu0
  %v2116 = vadd.f32 %v279, %v2115
  %v2117 = vpop.f32.mrf.mxu0
  %2118 = vmatprep.mubr.f32.mxu0 0.0
  %2119 = vmatmul.mubr.f32.gmra.mxu0 %v883
  %v2120 = vpop.f32.mrf.mxu0
  %v2121 = vadd.f32 %v279, %v2120
  %v2122 = vpop.f32.mrf.mxu0
  %2123 = vmatprep.mubr.f32.mxu0 0.0
  %2124 = vmatmul.mubr.f32.gmra.mxu0 %v886
  %v2125 = vpop.f32.mrf.mxu0
  %v2126 = vadd.f32 %v279, %v2125
  %v2127 = vpop.f32.mrf.mxu0
  %2128 = vmatprep.mubr.f32.mxu0 0.0
  %2129 = vmatmul.mubr.f32.gmra.mxu0 %v889
  %v2130 = vpop.f32.mrf.mxu0
  %v2131 = vadd.f32 %v279, %v2130
  %v2132 = vpop.f32.mrf.mxu0
  %2133 = vmatprep.mubr.f32.mxu0 0.0
  %2134 = vmatmul.mubr.f32.gmra.mxu0 %v892
  %v2135 = vpop.f32.mrf.mxu0
  %v2136 = vadd.f32 %v279, %v2135
  %v2137 = vpop.f32.mrf.mxu0
  %2138 = vmatprep.mubr.f32.mxu0 0.0
  %2139 = vmatmul.mubr.f32.gmra.mxu0 %v895
  %v2140 = vpop.f32.mrf.mxu0
  %v2141 = vadd.f32 %v279, %v2140
  %v2142 = vpop.f32.mrf.mxu0
  %2143 = vmatprep.mubr.f32.mxu0 0.0
  %2144 = vmatmul.mubr.f32.gmra.mxu0 %v898
  %v2145 = vpop.f32.mrf.mxu0
  %v2146 = vadd.f32 %v279, %v2145
  %v2147 = vpop.f32.mrf.mxu0
  %2148 = vmatprep.mubr.f32.mxu0 0.0
  %2149 = vmatmul.mubr.f32.gmra.mxu0 %v901
  %v2150 = vpop.f32.mrf.mxu0
  %v2151 = vadd.f32 %v279, %v2150
  %v2152 = vpop.f32.mrf.mxu0
  %2153 = vmatprep.mubr.f32.mxu0 0.0
  %2154 = vmatmul.mubr.f32.gmra.mxu0 %v904
  %v2155 = vpop.f32.mrf.mxu0
  %v2156 = vadd.f32 %v279, %v2155
  %v2157 = vpop.f32.mrf.mxu0
  %2158 = vmatprep.mubr.f32.mxu0 0.0
  %2159 = vmatmul.mubr.f32.gmra.mxu0 %v907
  %v2160 = vpop.f32.mrf.mxu0
  %v2161 = vadd.f32 %v279, %v2160
  %v2162 = vpop.f32.mrf.mxu0
  %2163 = vmatprep.mubr.f32.mxu0 0.0
  %2164 = vmatmul.mubr.f32.gmra.mxu0 %v910
  %v2165 = vpop.f32.mrf.mxu0
  %v2166 = vadd.f32 %v279, %v2165
  %v2167 = vpop.f32.mrf.mxu0
  %2168 = vmatprep.mubr.f32.mxu0 0.0
  %2169 = vmatmul.mubr.f32.gmra.mxu0 %v913
  %v2170 = vpop.f32.mrf.mxu0
  %v2171 = vadd.f32 %v279, %v2170
  %v2172 = vpop.f32.mrf.mxu0
  %2173 = vmatprep.mubr.f32.mxu0 0.0
  %2174 = vmatmul.mubr.f32.gmra.mxu0 %v916
  %v2175 = vpop.f32.mrf.mxu0
  %v2176 = vadd.f32 %v279, %v2175
  %v2177 = vpop.f32.mrf.mxu0
  %2178 = vmatprep.mubr.f32.mxu0 0.0
  %2179 = vmatmul.mubr.f32.gmra.mxu0 %v919
  %v2180 = vpop.f32.mrf.mxu0
  %v2181 = vadd.f32 %v279, %v2180
  %v2182 = vpop.f32.mrf.mxu0
  %2183 = vmatprep.mubr.f32.mxu0 0.0
  %2184 = vmatmul.mubr.f32.gmra.mxu0 %v922
  %v2185 = vpop.f32.mrf.mxu0
  %v2186 = vadd.f32 %v279, %v2185
  %v2187 = vpop.f32.mrf.mxu0
  %2188 = vmatprep.mubr.f32.mxu0 0.0
  %2189 = vmatmul.mubr.f32.gmra.mxu0 %v925
  %v2190 = vpop.f32.mrf.mxu0
  %v2191 = vadd.f32 %v279, %v2190
  %v2192 = vpop.f32.mrf.mxu0
  %2193 = vmatprep.mubr.f32.mxu0 0.0
  %2194 = vmatmul.mubr.f32.gmra.mxu0 %v928
  %v2195 = vpop.f32.mrf.mxu0
  %v2196 = vadd.f32 %v279, %v2195
  %v2197 = vpop.f32.mrf.mxu0
  %2198 = vmatprep.mubr.f32.mxu0 0.0
  %2199 = vmatmul.mubr.f32.gmra.mxu0 %v931
  %v2200 = vpop.f32.mrf.mxu0
  %v2201 = vadd.f32 %v279, %v2200
  %v2202 = vpop.f32.mrf.mxu0
  %2203 = vmatprep.mubr.f32.mxu0 0.0
  %2204 = vmatmul.mubr.f32.gmra.mxu0 %v934
  %v2205 = vpop.f32.mrf.mxu0
  %v2206 = vadd.f32 %v279, %v2205
  %v2207 = vpop.f32.mrf.mxu0
  %2208 = vmatprep.mubr.f32.mxu0 0.0
  %2209 = vmatmul.mubr.f32.gmra.mxu0 %v937
  %v2210 = vpop.f32.mrf.mxu0
  %v2211 = vadd.f32 %v279, %v2210
  %v2212 = vpop.f32.mrf.mxu0
  %2213 = vmatprep.mubr.f32.mxu0 0.0
  %2214 = vmatmul.mubr.f32.gmra.mxu0 %v940
  %v2215 = vpop.f32.mrf.mxu0
  %v2216 = vadd.f32 %v279, %v2215
  %v2217 = vpop.f32.mrf.mxu0
  %2218 = vmatprep.mubr.f32.mxu0 0.0
  %2219 = vmatmul.mubr.f32.gmra.mxu0 %v943
  %v2220 = vpop.f32.mrf.mxu0
  %v2221 = vadd.f32 %v279, %v2220
  %v2222 = vpop.f32.mrf.mxu0
  %2223 = vmatprep.mubr.f32.mxu0 0.0
  %2224 = vmatmul.mubr.f32.gmra.mxu0 %v946
  %v2225 = vpop.f32.mrf.mxu0
  %v2226 = vadd.f32 %v279, %v2225
  %v2227 = vpop.f32.mrf.mxu0
  %2228 = vmatprep.mubr.f32.mxu0 0.0
  %2229 = vmatmul.mubr.f32.gmra.mxu0 %v949
  %v2230 = vpop.f32.mrf.mxu0
  %v2231 = vadd.f32 %v279, %v2230
  %v2232 = vpop.f32.mrf.mxu0
  %2233 = vmatprep.mubr.f32.mxu0 0.0
  %2234 = vmatmul.mubr.f32.gmra.mxu0 %v952
  %v2235 = vpop.f32.mrf.mxu0
  %v2236 = vadd.f32 %v279, %v2235
  %v2237 = vpop.f32.mrf.mxu0
  %2238 = vmatprep.mubr.f32.mxu0 0.0
  %2239 = vmatmul.mubr.f32.gmra.mxu0 %v955
  %v2240 = vpop.f32.mrf.mxu0
  %v2241 = vadd.f32 %v279, %v2240
  %v2242 = vpop.f32.mrf.mxu0
  %2243 = vmatprep.mubr.f32.mxu0 0.0
  %2244 = vmatmul.mubr.f32.gmra.mxu0 %v958
  %v2245 = vpop.f32.mrf.mxu0
  %v2246 = vadd.f32 %v279, %v2245
  %v2247 = vpop.f32.mrf.mxu0
  %2248 = vmatprep.mubr.f32.mxu0 0.0
  %2249 = vmatmul.mubr.f32.gmra.mxu0 %v961
  %v2250 = vpop.f32.mrf.mxu0
  %v2251 = vadd.f32 %v279, %v2250
  %v2252 = vpop.f32.mrf.mxu0
  %2253 = vmatprep.mubr.f32.mxu0 0.0
  %2254 = vmatmul.mubr.f32.gmra.mxu0 %v964
  %v2255 = vpop.f32.mrf.mxu0
  %v2256 = vadd.f32 %v279, %v2255
  %v2257 = vpop.f32.mrf.mxu0
  %2258 = vmatprep.mubr.f32.mxu0 0.0
  %2259 = vmatmul.mubr.f32.gmra.mxu0 %v967
  %v2260 = vpop.f32.mrf.mxu0
  %v2261 = vadd.f32 %v279, %v2260
  %v2262 = vpop.f32.mrf.mxu0
  %2263 = vmatprep.mubr.f32.mxu0 0.0
  %2264 = vmatmul.mubr.f32.gmra.mxu0 %v970
  %v2265 = vpop.f32.mrf.mxu0
  %v2266 = vadd.f32 %v279, %v2265
  %v2267 = vpop.f32.mrf.mxu0
  %2268 = vmatprep.mubr.f32.mxu0 0.0
  %2269 = vmatmul.mubr.f32.gmra.mxu0 %v973
  %v2270 = vpop.f32.mrf.mxu0
  %v2271 = vadd.f32 %v279, %v2270
  %v2272 = vpop.f32.mrf.mxu0
  %2273 = vmatprep.mubr.f32.mxu0 0.0
  %2274 = vmatmul.mubr.f32.gmra.mxu0 %v976
  %v2275 = vpop.f32.mrf.mxu0
  %v2276 = vadd.f32 %v279, %v2275
  %v2277 = vpop.f32.mrf.mxu0
  %2278 = vmatprep.mubr.f32.mxu0 0.0
  %2279 = vmatmul.mubr.f32.gmra.mxu0 %v979
  %v2280 = vpop.f32.mrf.mxu0
  %v2281 = vadd.f32 %v279, %v2280
  %v2282 = vpop.f32.mrf.mxu0
  %2283 = vmatprep.mubr.f32.mxu0 0.0
  %2284 = vmatmul.mubr.f32.gmra.mxu0 %v982
  %v2285 = vpop.f32.mrf.mxu0
  %v2286 = vadd.f32 %v279, %v2285
  %v2287 = vpop.f32.mrf.mxu0
  %2288 = vmatprep.mubr.f32.mxu0 0.0
  %2289 = vmatmul.mubr.f32.gmra.mxu0 %v985
  %v2290 = vpop.f32.mrf.mxu0
  %v2291 = vadd.f32 %v279, %v2290
  %v2292 = vpop.f32.mrf.mxu0
  %2293 = vmatprep.mubr.f32.mxu0 0.0
  %2294 = vmatmul.mubr.f32.gmra.mxu0 %v988
  %v2295 = vpop.f32.mrf.mxu0
  %v2296 = vadd.f32 %v279, %v2295
  %v2297 = vpop.f32.mrf.mxu0
  %2298 = vmatprep.mubr.f32.mxu0 0.0
  %2299 = vmatmul.mubr.f32.gmra.mxu0 %v991
  %v2300 = vpop.f32.mrf.mxu0
  %v2301 = vadd.f32 %v279, %v2300
  %v2302 = vpop.f32.mrf.mxu0
  %2303 = vmatprep.mubr.f32.mxu0 0.0
  %2304 = vmatmul.mubr.f32.gmra.mxu0 %v994
  %v2305 = vpop.f32.mrf.mxu0
  %v2306 = vadd.f32 %v279, %v2305
  %v2307 = vpop.f32.mrf.mxu0
  %2308 = vmatprep.mubr.f32.mxu0 0.0
  %2309 = vmatmul.mubr.f32.gmra.mxu0 %v997
  %v2310 = vpop.f32.mrf.mxu0
  %v2311 = vadd.f32 %v279, %v2310
  %v2312 = vpop.f32.mrf.mxu0
  %2313 = vmatprep.mubr.f32.mxu0 0.0
  %2314 = vmatmul.mubr.f32.gmra.mxu0 %v1000
  %v2315 = vpop.f32.mrf.mxu0
  %v2316 = vadd.f32 %v279, %v2315
  %v2317 = vpop.f32.mrf.mxu0
  %2318 = vmatprep.mubr.f32.mxu0 0.0
  %2319 = vmatmul.mubr.f32.gmra.mxu0 %v1003
  %v2320 = vpop.f32.mrf.mxu0
  %v2321 = vadd.f32 %v279, %v2320
  %v2322 = vpop.f32.mrf.mxu0
  %2323 = vmatprep.mubr.f32.mxu0 0.0
  %2324 = vmatmul.mubr.f32.gmra.mxu0 %v1006
  %v2325 = vpop.f32.mrf.mxu0
  %v2326 = vadd.f32 %v279, %v2325
  %v2327 = vpop.f32.mrf.mxu0
  %2328 = vmatprep.mubr.f32.mxu0 0.0
  %2329 = vmatmul.mubr.f32.gmra.mxu0 %v1009
  %v2330 = vpop.f32.mrf.mxu0
  %v2331 = vadd.f32 %v279, %v2330
  %v2332 = vpop.f32.mrf.mxu0
  %2333 = vmatprep.mubr.f32.mxu0 0.0
  %2334 = vmatmul.mubr.f32.gmra.mxu0 %v1012
  %v2335 = vpop.f32.mrf.mxu0
  %v2336 = vadd.f32 %v279, %v2335
  %v2337 = vpop.f32.mrf.mxu0
  %2338 = vmatprep.mubr.f32.mxu0 0.0
  %2339 = vmatmul.mubr.f32.gmra.mxu0 %v1015
  %v2340 = vpop.f32.mrf.mxu0
  %v2341 = vadd.f32 %v279, %v2340
  %v2342 = vpop.f32.mrf.mxu0
  %2343 = vmatprep.mubr.f32.mxu0 0.0
  %2344 = vmatmul.mubr.f32.gmra.mxu0 %v1018
  %v2345 = vpop.f32.mrf.mxu0
  %v2346 = vadd.f32 %v279, %v2345
  %v2347 = vpop.f32.mrf.mxu0
  %2348 = vmatprep.mubr.f32.mxu0 0.0
  %2349 = vmatmul.mubr.f32.gmra.mxu0 %v1021
  %v2350 = vpop.f32.mrf.mxu0
  %v2351 = vadd.f32 %v279, %v2350
  %v2352 = vpop.f32.mrf.mxu0
  %2353 = vmatprep.mubr.f32.mxu0 0.0
  %2354 = vmatmul.mubr.f32.gmra.mxu0 %v1024
  %v2355 = vpop.f32.mrf.mxu0
  %v2356 = vadd.f32 %v279, %v2355
  %v2357 = vpop.f32.mrf.mxu0
  %2358 = vmatprep.mubr.f32.mxu0 0.0
  %2359 = vmatmul.mubr.f32.gmra.mxu0 %v1027
  %v2360 = vpop.f32.mrf.mxu0
  %v2361 = vadd.f32 %v279, %v2360
  %v2362 = vpop.f32.mrf.mxu0
  %2363 = vmatprep.mubr.f32.mxu0 0.0
  %2364 = vmatmul.mubr.f32.gmra.mxu0 %v1030
  %v2365 = vpop.f32.mrf.mxu0
  %v2366 = vadd.f32 %v279, %v2365
  %v2367 = vpop.f32.mrf.mxu0
  %2368 = vmatprep.mubr.f32.mxu0 0.0
  %2369 = vmatmul.mubr.f32.gmra.mxu0 %v1033
  %v2370 = vpop.f32.mrf.mxu0
  %v2371 = vadd.f32 %v279, %v2370
  %v2372 = vpop.f32.mrf.mxu0
  %2373 = vmatprep.mubr.f32.mxu0 0.0
  %2374 = vmatmul.mubr.f32.gmra.mxu0 %v1036
  %v2375 = vpop.f32.mrf.mxu0
  %v2376 = vadd.f32 %v279, %v2375
  %v2377 = vpop.f32.mrf.mxu0
  %2378 = vmatprep.mubr.f32.mxu0 0.0
  %2379 = vmatmul.mubr.f32.gmra.mxu0 %v1039
  %v2380 = vpop.f32.mrf.mxu0
  %v2381 = vadd.f32 %v279, %v2380
  %v2382 = vpop.f32.mrf.mxu0
  %2383 = vmatprep.mubr.f32.mxu0 0.0
  %2384 = vmatmul.mubr.f32.gmra.mxu0 %v1042
  %v2385 = vpop.f32.mrf.mxu0
  %v2386 = vadd.f32 %v279, %v2385
  %v2387 = vpop.f32.mrf.mxu0
  %2388 = vmatprep.mubr.f32.mxu0 0.0
  %2389 = vmatmul.mubr.f32.gmra.mxu0 %v1045
  %v2390 = vpop.f32.mrf.mxu0
  %v2391 = vadd.f32 %v279, %v2390
  %v2392 = vpop.f32.mrf.mxu0
  %2393 = vmatprep.mubr.f32.mxu0 0.0
  %2394 = vmatmul.mubr.f32.gmra.mxu0 %v1048
  %v2395 = vpop.f32.mrf.mxu0
  %v2396 = vadd.f32 %v279, %v2395
  %v2397 = vpop.f32.mrf.mxu0
  %2398 = vdwg.mxu0
  %v2399 = vmax.f32 %v1121, 0.0
  %v2400 = vmax.f32 %v1126, 0.0
  %v2401 = vmax.f32 %v1131, 0.0
  %v2402 = vmax.f32 %v1136, 0.0
  %v2403 = vmax.f32 %v1141, 0.0
  %v2404 = vmax.f32 %v1146, 0.0
  %v2405 = vmax.f32 %v1151, 0.0
  %v2406 = vmax.f32 %v1156, 0.0
  %v2407 = vmax.f32 %v1161, 0.0
  %v2408 = vmax.f32 %v1166, 0.0
  %v2409 = vmax.f32 %v1171, 0.0
  %v2410 = vmax.f32 %v1176, 0.0
  %v2411 = vmax.f32 %v1181, 0.0
  %v2412 = vmax.f32 %v1186, 0.0
  %v2413 = vmax.f32 %v1191, 0.0
  %v2414 = vmax.f32 %v1196, 0.0
  %v2415 = vmax.f32 %v1201, 0.0
  %v2416 = vmax.f32 %v1206, 0.0
  %v2417 = vmax.f32 %v1211, 0.0
  %v2418 = vmax.f32 %v1216, 0.0
  %v2419 = vmax.f32 %v1221, 0.0
  %v2420 = vmax.f32 %v1226, 0.0
  %v2421 = vmax.f32 %v1231, 0.0
  %v2422 = vmax.f32 %v1236, 0.0
  %v2423 = vmax.f32 %v1241, 0.0
  %v2424 = vmax.f32 %v1246, 0.0
  %v2425 = vmax.f32 %v1251, 0.0
  %v2426 = vmax.f32 %v1256, 0.0
  %v2427 = vmax.f32 %v1261, 0.0
  %v2428 = vmax.f32 %v1266, 0.0
  %v2429 = vmax.f32 %v1271, 0.0
  %v2430 = vmax.f32 %v1276, 0.0
  %v2431 = vmax.f32 %v1281, 0.0
  %v2432 = vmax.f32 %v1286, 0.0
  %v2433 = vmax.f32 %v1291, 0.0
  %v2434 = vmax.f32 %v1296, 0.0
  %v2435 = vmax.f32 %v1301, 0.0
  %v2436 = vmax.f32 %v1306, 0.0
  %v2437 = vmax.f32 %v1311, 0.0
  %v2438 = vmax.f32 %v1316, 0.0
  %v2439 = vmax.f32 %v1321, 0.0
  %v2440 = vmax.f32 %v1326, 0.0
  %v2441 = vmax.f32 %v1331, 0.0
  %v2442 = vmax.f32 %v1336, 0.0
  %v2443 = vmax.f32 %v1341, 0.0
  %v2444 = vmax.f32 %v1346, 0.0
  %v2445 = vmax.f32 %v1351, 0.0
  %v2446 = vmax.f32 %v1356, 0.0
  %v2447 = vmax.f32 %v1361, 0.0
  %v2448 = vmax.f32 %v1366, 0.0
  %v2449 = vmax.f32 %v1371, 0.0
  %v2450 = vmax.f32 %v1376, 0.0
  %v2451 = vmax.f32 %v1381, 0.0
  %v2452 = vmax.f32 %v1386, 0.0
  %v2453 = vmax.f32 %v1391, 0.0
  %v2454 = vmax.f32 %v1396, 0.0
  %v2455 = vmax.f32 %v1401, 0.0
  %v2456 = vmax.f32 %v1406, 0.0
  %v2457 = vmax.f32 %v1411, 0.0
  %v2458 = vmax.f32 %v1416, 0.0
  %v2459 = vmax.f32 %v1421, 0.0
  %v2460 = vmax.f32 %v1426, 0.0
  %v2461 = vmax.f32 %v1431, 0.0
  %v2462 = vmax.f32 %v1436, 0.0
  %v2463 = vmax.f32 %v1441, 0.0
  %v2464 = vmax.f32 %v1446, 0.0
  %v2465 = vmax.f32 %v1451, 0.0
  %v2466 = vmax.f32 %v1456, 0.0
  %v2467 = vmax.f32 %v1461, 0.0
  %v2468 = vmax.f32 %v1466, 0.0
  %v2469 = vmax.f32 %v1471, 0.0
  %v2470 = vmax.f32 %v1476, 0.0
  %v2471 = vmax.f32 %v1481, 0.0
  %v2472 = vmax.f32 %v1486, 0.0
  %v2473 = vmax.f32 %v1491, 0.0
  %v2474 = vmax.f32 %v1496, 0.0
  %v2475 = vmax.f32 %v1501, 0.0
  %v2476 = vmax.f32 %v1506, 0.0
  %v2477 = vmax.f32 %v1511, 0.0
  %v2478 = vmax.f32 %v1516, 0.0
  %v2479 = vmax.f32 %v1521, 0.0
  %v2480 = vmax.f32 %v1526, 0.0
  %v2481 = vmax.f32 %v1531, 0.0
  %v2482 = vmax.f32 %v1536, 0.0
  %v2483 = vmax.f32 %v1541, 0.0
  %v2484 = vmax.f32 %v1546, 0.0
  %v2485 = vmax.f32 %v1551, 0.0
  %v2486 = vmax.f32 %v1556, 0.0
  %v2487 = vmax.f32 %v1561, 0.0
  %v2488 = vmax.f32 %v1566, 0.0
  %v2489 = vmax.f32 %v1571, 0.0
  %v2490 = vmax.f32 %v1576, 0.0
  %v2491 = vmax.f32 %v1581, 0.0
  %v2492 = vmax.f32 %v1586, 0.0
  %v2493 = vmax.f32 %v1591, 0.0
  %v2494 = vmax.f32 %v1596, 0.0
  %v2495 = vmax.f32 %v1601, 0.0
  %v2496 = vmax.f32 %v1606, 0.0
  %v2497 = vmax.f32 %v1611, 0.0
  %v2498 = vmax.f32 %v1616, 0.0
  %v2499 = vmax.f32 %v1621, 0.0
  %v2500 = vmax.f32 %v1626, 0.0
  %v2501 = vmax.f32 %v1631, 0.0
  %v2502 = vmax.f32 %v1636, 0.0
  %v2503 = vmax.f32 %v1641, 0.0
  %v2504 = vmax.f32 %v1646, 0.0
  %v2505 = vmax.f32 %v1651, 0.0
  %v2506 = vmax.f32 %v1656, 0.0
  %v2507 = vmax.f32 %v1661, 0.0
  %v2508 = vmax.f32 %v1666, 0.0
  %v2509 = vmax.f32 %v1671, 0.0
  %v2510 = vmax.f32 %v1676, 0.0
  %v2511 = vmax.f32 %v1681, 0.0
  %v2512 = vmax.f32 %v1686, 0.0
  %v2513 = vmax.f32 %v1691, 0.0
  %v2514 = vmax.f32 %v1696, 0.0
  %v2515 = vmax.f32 %v1701, 0.0
  %v2516 = vmax.f32 %v1706, 0.0
  %v2517 = vmax.f32 %v1711, 0.0
  %v2518 = vmax.f32 %v1716, 0.0
  %v2519 = vmax.f32 %v1721, 0.0
  %v2520 = vmax.f32 %v1726, 0.0
  %v2521 = vmax.f32 %v1731, 0.0
  %v2522 = vmax.f32 %v1736, 0.0
  %v2523 = vmax.f32 %v1741, 0.0
  %v2524 = vmax.f32 %v1746, 0.0
  %v2525 = vmax.f32 %v1751, 0.0
  %v2526 = vmax.f32 %v1756, 0.0
  %v2527 = vmax.f32 %v1761, 0.0
  %v2528 = vmax.f32 %v1766, 0.0
  %v2529 = vmax.f32 %v1771, 0.0
  %v2530 = vmax.f32 %v1776, 0.0
  %v2531 = vmax.f32 %v1781, 0.0
  %v2532 = vmax.f32 %v1786, 0.0
  %v2533 = vmax.f32 %v1791, 0.0
  %v2534 = vmax.f32 %v1796, 0.0
  %v2535 = vmax.f32 %v1801, 0.0
  %v2536 = vmax.f32 %v1806, 0.0
  %v2537 = vmax.f32 %v1811, 0.0
  %v2538 = vmax.f32 %v1816, 0.0
  %v2539 = vmax.f32 %v1821, 0.0
  %v2540 = vmax.f32 %v1826, 0.0
  %v2541 = vmax.f32 %v1831, 0.0
  %v2542 = vmax.f32 %v1836, 0.0
  %v2543 = vmax.f32 %v1841, 0.0
  %v2544 = vmax.f32 %v1846, 0.0
  %v2545 = vmax.f32 %v1851, 0.0
  %v2546 = vmax.f32 %v1856, 0.0
  %v2547 = vmax.f32 %v1861, 0.0
  %v2548 = vmax.f32 %v1866, 0.0
  %v2549 = vmax.f32 %v1871, 0.0
  %v2550 = vmax.f32 %v1876, 0.0
  %v2551 = vmax.f32 %v1881, 0.0
  %v2552 = vmax.f32 %v1886, 0.0
  %v2553 = vmax.f32 %v1891, 0.0
  %v2554 = vmax.f32 %v1896, 0.0
  %v2555 = vmax.f32 %v1901, 0.0
  %v2556 = vmax.f32 %v1906, 0.0
  %v2557 = vmax.f32 %v1911, 0.0
  %v2558 = vmax.f32 %v1916, 0.0
  %v2559 = vmax.f32 %v1921, 0.0
  %v2560 = vmax.f32 %v1926, 0.0
  %v2561 = vmax.f32 %v1931, 0.0
  %v2562 = vmax.f32 %v1936, 0.0
  %v2563 = vmax.f32 %v1941, 0.0
  %v2564 = vmax.f32 %v1946, 0.0
  %v2565 = vmax.f32 %v1951, 0.0
  %v2566 = vmax.f32 %v1956, 0.0
  %v2567 = vmax.f32 %v1961, 0.0
  %v2568 = vmax.f32 %v1966, 0.0
  %v2569 = vmax.f32 %v1971, 0.0
  %v2570 = vmax.f32 %v1976, 0.0
  %v2571 = vmax.f32 %v1981, 0.0
  %v2572 = vmax.f32 %v1986, 0.0
  %v2573 = vmax.f32 %v1991, 0.0
  %v2574 = vmax.f32 %v1996, 0.0
  %v2575 = vmax.f32 %v2001, 0.0
  %v2576 = vmax.f32 %v2006, 0.0
  %v2577 = vmax.f32 %v2011, 0.0
  %v2578 = vmax.f32 %v2016, 0.0
  %v2579 = vmax.f32 %v2021, 0.0
  %v2580 = vmax.f32 %v2026, 0.0
  %v2581 = vmax.f32 %v2031, 0.0
  %v2582 = vmax.f32 %v2036, 0.0
  %v2583 = vmax.f32 %v2041, 0.0
  %v2584 = vmax.f32 %v2046, 0.0
  %v2585 = vmax.f32 %v2051, 0.0
  %v2586 = vmax.f32 %v2056, 0.0
  %v2587 = vmax.f32 %v2061, 0.0
  %v2588 = vmax.f32 %v2066, 0.0
  %v2589 = vmax.f32 %v2071, 0.0
  %v2590 = vmax.f32 %v2076, 0.0
  %v2591 = vmax.f32 %v2081, 0.0
  %v2592 = vmax.f32 %v2086, 0.0
  %v2593 = vmax.f32 %v2091, 0.0
  %v2594 = vmax.f32 %v2096, 0.0
  %v2595 = vmax.f32 %v2101, 0.0
  %v2596 = vmax.f32 %v2106, 0.0
  %v2597 = vmax.f32 %v2111, 0.0
  %v2598 = vmax.f32 %v2116, 0.0
  %v2599 = vmax.f32 %v2121, 0.0
  %v2600 = vmax.f32 %v2126, 0.0
  %v2601 = vmax.f32 %v2131, 0.0
  %v2602 = vmax.f32 %v2136, 0.0
  %v2603 = vmax.f32 %v2141, 0.0
  %v2604 = vmax.f32 %v2146, 0.0
  %v2605 = vmax.f32 %v2151, 0.0
  %v2606 = vmax.f32 %v2156, 0.0
  %v2607 = vmax.f32 %v2161, 0.0
  %v2608 = vmax.f32 %v2166, 0.0
  %v2609 = vmax.f32 %v2171, 0.0
  %v2610 = vmax.f32 %v2176, 0.0
  %v2611 = vmax.f32 %v2181, 0.0
  %v2612 = vmax.f32 %v2186, 0.0
  %v2613 = vmax.f32 %v2191, 0.0
  %v2614 = vmax.f32 %v2196, 0.0
  %v2615 = vmax.f32 %v2201, 0.0
  %v2616 = vmax.f32 %v2206, 0.0
  %v2617 = vmax.f32 %v2211, 0.0
  %v2618 = vmax.f32 %v2216, 0.0
  %v2619 = vmax.f32 %v2221, 0.0
  %v2620 = vmax.f32 %v2226, 0.0
  %v2621 = vmax.f32 %v2231, 0.0
  %v2622 = vmax.f32 %v2236, 0.0
  %v2623 = vmax.f32 %v2241, 0.0
  %v2624 = vmax.f32 %v2246, 0.0
  %v2625 = vmax.f32 %v2251, 0.0
  %v2626 = vmax.f32 %v2256, 0.0
  %v2627 = vmax.f32 %v2261, 0.0
  %v2628 = vmax.f32 %v2266, 0.0
  %v2629 = vmax.f32 %v2271, 0.0
  %v2630 = vmax.f32 %v2276, 0.0
  %v2631 = vmax.f32 %v2281, 0.0
  %v2632 = vmax.f32 %v2286, 0.0
  %v2633 = vmax.f32 %v2291, 0.0
  %v2634 = vmax.f32 %v2296, 0.0
  %v2635 = vmax.f32 %v2301, 0.0
  %v2636 = vmax.f32 %v2306, 0.0
  %v2637 = vmax.f32 %v2311, 0.0
  %v2638 = vmax.f32 %v2316, 0.0
  %v2639 = vmax.f32 %v2321, 0.0
  %v2640 = vmax.f32 %v2326, 0.0
  %v2641 = vmax.f32 %v2331, 0.0
  %v2642 = vmax.f32 %v2336, 0.0
  %v2643 = vmax.f32 %v2341, 0.0
  %v2644 = vmax.f32 %v2346, 0.0
  %v2645 = vmax.f32 %v2351, 0.0
  %v2646 = vmax.f32 %v2356, 0.0
  %v2647 = vmax.f32 %v2361, 0.0
  %v2648 = vmax.f32 %v2366, 0.0
  %v2649 = vmax.f32 %v2371, 0.0
  %v2650 = vmax.f32 %v2376, 0.0
  %v2651 = vmax.f32 %v2381, 0.0
  %v2652 = vmax.f32 %v2386, 0.0
  %v2653 = vmax.f32 %v2391, 0.0
  %v2654 = vmax.f32 %v2396, 0.0
  %vm2655 = vcmask 261120
  %2656 = vst.msk [vmem:[%s3] sm:$0xff] %vm2655, %v2399
  %2657 = vst.msk [vmem:[%s3 + $0x8] sm:$0xff] %vm2655, %v2400
  %2658 = vst.msk [vmem:[%s3 + $0x10] sm:$0xff] %vm2655, %v2401
  %2659 = vst.msk [vmem:[%s3 + $0x18] sm:$0xff] %vm2655, %v2402
  %2660 = vst.msk [vmem:[%s3 + $0x20] sm:$0xff] %vm2655, %v2403
  %2661 = vst.msk [vmem:[%s3 + $0x28] sm:$0xff] %vm2655, %v2404
  %2662 = vst.msk [vmem:[%s3 + $0x30] sm:$0xff] %vm2655, %v2405
  %2663 = vst.msk [vmem:[%s3 + $0x38] sm:$0xff] %vm2655, %v2406
  %2664 = vst.msk [vmem:[%s3 + $0x40] sm:$0xff] %vm2655, %v2407
  %2665 = vst.msk [vmem:[%s3 + $0x48] sm:$0xff] %vm2655, %v2408
  %2666 = vst.msk [vmem:[%s3 + $0x50] sm:$0xff] %vm2655, %v2409
  %2667 = vst.msk [vmem:[%s3 + $0x58] sm:$0xff] %vm2655, %v2410
  %2668 = vst.msk [vmem:[%s3 + $0x60] sm:$0xff] %vm2655, %v2411
  %2669 = vst.msk [vmem:[%s3 + $0x68] sm:$0xff] %vm2655, %v2412
  %2670 = vst.msk [vmem:[%s3 + $0x70] sm:$0xff] %vm2655, %v2413
  %2671 = vst.msk [vmem:[%s3 + $0x78] sm:$0xff] %vm2655, %v2414
  %2672 = vst.msk [vmem:[%s3 + $0x80] sm:$0xff] %vm2655, %v2415
  %2673 = vst.msk [vmem:[%s3 + $0x88] sm:$0xff] %vm2655, %v2416
  %2674 = vst.msk [vmem:[%s3 + $0x90] sm:$0xff] %vm2655, %v2417
  %2675 = vst.msk [vmem:[%s3 + $0x98] sm:$0xff] %vm2655, %v2418
  %2676 = vst.msk [vmem:[%s3 + $0xa0] sm:$0xff] %vm2655, %v2419
  %2677 = vst.msk [vmem:[%s3 + $0xa8] sm:$0xff] %vm2655, %v2420
  %2678 = vst.msk [vmem:[%s3 + $0xb0] sm:$0xff] %vm2655, %v2421
  %2679 = vst.msk [vmem:[%s3 + $0xb8] sm:$0xff] %vm2655, %v2422
  %2680 = vst.msk [vmem:[%s3 + $0xc0] sm:$0xff] %vm2655, %v2423
  %2681 = vst.msk [vmem:[%s3 + $0xc8] sm:$0xff] %vm2655, %v2424
  %2682 = vst.msk [vmem:[%s3 + $0xd0] sm:$0xff] %vm2655, %v2425
  %2683 = vst.msk [vmem:[%s3 + $0xd8] sm:$0xff] %vm2655, %v2426
  %2684 = vst.msk [vmem:[%s3 + $0xe0] sm:$0xff] %vm2655, %v2427
  %2685 = vst.msk [vmem:[%s3 + $0xe8] sm:$0xff] %vm2655, %v2428
  %2686 = vst.msk [vmem:[%s3 + $0xf0] sm:$0xff] %vm2655, %v2429
  %2687 = vst.msk [vmem:[%s3 + $0xf8] sm:$0xff] %vm2655, %v2430
  %2688 = vst.msk [vmem:[%s3 + $0x100] sm:$0xff] %vm2655, %v2431
  %2689 = vst.msk [vmem:[%s3 + $0x108] sm:$0xff] %vm2655, %v2432
  %2690 = vst.msk [vmem:[%s3 + $0x110] sm:$0xff] %vm2655, %v2433
  %2691 = vst.msk [vmem:[%s3 + $0x118] sm:$0xff] %vm2655, %v2434
  %2692 = vst.msk [vmem:[%s3 + $0x120] sm:$0xff] %vm2655, %v2435
  %2693 = vst.msk [vmem:[%s3 + $0x128] sm:$0xff] %vm2655, %v2436
  %2694 = vst.msk [vmem:[%s3 + $0x130] sm:$0xff] %vm2655, %v2437
  %2695 = vst.msk [vmem:[%s3 + $0x138] sm:$0xff] %vm2655, %v2438
  %2696 = vst.msk [vmem:[%s3 + $0x140] sm:$0xff] %vm2655, %v2439
  %2697 = vst.msk [vmem:[%s3 + $0x148] sm:$0xff] %vm2655, %v2440
  %2698 = vst.msk [vmem:[%s3 + $0x150] sm:$0xff] %vm2655, %v2441
  %2699 = vst.msk [vmem:[%s3 + $0x158] sm:$0xff] %vm2655, %v2442
  %2700 = vst.msk [vmem:[%s3 + $0x160] sm:$0xff] %vm2655, %v2443
  %2701 = vst.msk [vmem:[%s3 + $0x168] sm:$0xff] %vm2655, %v2444
  %2702 = vst.msk [vmem:[%s3 + $0x170] sm:$0xff] %vm2655, %v2445
  %2703 = vst.msk [vmem:[%s3 + $0x178] sm:$0xff] %vm2655, %v2446
  %2704 = vst.msk [vmem:[%s3 + $0x180] sm:$0xff] %vm2655, %v2447
  %2705 = vst.msk [vmem:[%s3 + $0x188] sm:$0xff] %vm2655, %v2448
  %2706 = vst.msk [vmem:[%s3 + $0x190] sm:$0xff] %vm2655, %v2449
  %2707 = vst.msk [vmem:[%s3 + $0x198] sm:$0xff] %vm2655, %v2450
  %2708 = vst.msk [vmem:[%s3 + $0x1a0] sm:$0xff] %vm2655, %v2451
  %2709 = vst.msk [vmem:[%s3 + $0x1a8] sm:$0xff] %vm2655, %v2452
  %2710 = vst.msk [vmem:[%s3 + $0x1b0] sm:$0xff] %vm2655, %v2453
  %2711 = vst.msk [vmem:[%s3 + $0x1b8] sm:$0xff] %vm2655, %v2454
  %2712 = vst.msk [vmem:[%s3 + $0x1c0] sm:$0xff] %vm2655, %v2455
  %2713 = vst.msk [vmem:[%s3 + $0x1c8] sm:$0xff] %vm2655, %v2456
  %2714 = vst.msk [vmem:[%s3 + $0x1d0] sm:$0xff] %vm2655, %v2457
  %2715 = vst.msk [vmem:[%s3 + $0x1d8] sm:$0xff] %vm2655, %v2458
  %2716 = vst.msk [vmem:[%s3 + $0x1e0] sm:$0xff] %vm2655, %v2459
  %2717 = vst.msk [vmem:[%s3 + $0x1e8] sm:$0xff] %vm2655, %v2460
  %2718 = vst.msk [vmem:[%s3 + $0x1f0] sm:$0xff] %vm2655, %v2461
  %2719 = vst.msk [vmem:[%s3 + $0x1f8] sm:$0xff] %vm2655, %v2462
  %2720 = vst.msk [vmem:[%s3 + $0x200] sm:$0xff] %vm2655, %v2463
  %2721 = vst.msk [vmem:[%s3 + $0x208] sm:$0xff] %vm2655, %v2464
  %2722 = vst.msk [vmem:[%s3 + $0x210] sm:$0xff] %vm2655, %v2465
  %2723 = vst.msk [vmem:[%s3 + $0x218] sm:$0xff] %vm2655, %v2466
  %2724 = vst.msk [vmem:[%s3 + $0x220] sm:$0xff] %vm2655, %v2467
  %2725 = vst.msk [vmem:[%s3 + $0x228] sm:$0xff] %vm2655, %v2468
  %2726 = vst.msk [vmem:[%s3 + $0x230] sm:$0xff] %vm2655, %v2469
  %2727 = vst.msk [vmem:[%s3 + $0x238] sm:$0xff] %vm2655, %v2470
  %2728 = vst.msk [vmem:[%s3 + $0x240] sm:$0xff] %vm2655, %v2471
  %2729 = vst.msk [vmem:[%s3 + $0x248] sm:$0xff] %vm2655, %v2472
  %2730 = vst.msk [vmem:[%s3 + $0x250] sm:$0xff] %vm2655, %v2473
  %2731 = vst.msk [vmem:[%s3 + $0x258] sm:$0xff] %vm2655, %v2474
  %2732 = vst.msk [vmem:[%s3 + $0x260] sm:$0xff] %vm2655, %v2475
  %2733 = vst.msk [vmem:[%s3 + $0x268] sm:$0xff] %vm2655, %v2476
  %2734 = vst.msk [vmem:[%s3 + $0x270] sm:$0xff] %vm2655, %v2477
  %2735 = vst.msk [vmem:[%s3 + $0x278] sm:$0xff] %vm2655, %v2478
  %2736 = vst.msk [vmem:[%s3 + $0x280] sm:$0xff] %vm2655, %v2479
  %2737 = vst.msk [vmem:[%s3 + $0x288] sm:$0xff] %vm2655, %v2480
  %2738 = vst.msk [vmem:[%s3 + $0x290] sm:$0xff] %vm2655, %v2481
  %2739 = vst.msk [vmem:[%s3 + $0x298] sm:$0xff] %vm2655, %v2482
  %2740 = vst.msk [vmem:[%s3 + $0x2a0] sm:$0xff] %vm2655, %v2483
  %2741 = vst.msk [vmem:[%s3 + $0x2a8] sm:$0xff] %vm2655, %v2484
  %2742 = vst.msk [vmem:[%s3 + $0x2b0] sm:$0xff] %vm2655, %v2485
  %2743 = vst.msk [vmem:[%s3 + $0x2b8] sm:$0xff] %vm2655, %v2486
  %2744 = vst.msk [vmem:[%s3 + $0x2c0] sm:$0xff] %vm2655, %v2487
  %2745 = vst.msk [vmem:[%s3 + $0x2c8] sm:$0xff] %vm2655, %v2488
  %2746 = vst.msk [vmem:[%s3 + $0x2d0] sm:$0xff] %vm2655, %v2489
  %2747 = vst.msk [vmem:[%s3 + $0x2d8] sm:$0xff] %vm2655, %v2490
  %2748 = vst.msk [vmem:[%s3 + $0x2e0] sm:$0xff] %vm2655, %v2491
  %2749 = vst.msk [vmem:[%s3 + $0x2e8] sm:$0xff] %vm2655, %v2492
  %2750 = vst.msk [vmem:[%s3 + $0x2f0] sm:$0xff] %vm2655, %v2493
  %2751 = vst.msk [vmem:[%s3 + $0x2f8] sm:$0xff] %vm2655, %v2494
  %2752 = vst.msk [vmem:[%s3 + $0x300] sm:$0xff] %vm2655, %v2495
  %2753 = vst.msk [vmem:[%s3 + $0x308] sm:$0xff] %vm2655, %v2496
  %2754 = vst.msk [vmem:[%s3 + $0x310] sm:$0xff] %vm2655, %v2497
  %2755 = vst.msk [vmem:[%s3 + $0x318] sm:$0xff] %vm2655, %v2498
  %2756 = vst.msk [vmem:[%s3 + $0x320] sm:$0xff] %vm2655, %v2499
  %2757 = vst.msk [vmem:[%s3 + $0x328] sm:$0xff] %vm2655, %v2500
  %2758 = vst.msk [vmem:[%s3 + $0x330] sm:$0xff] %vm2655, %v2501
  %2759 = vst.msk [vmem:[%s3 + $0x338] sm:$0xff] %vm2655, %v2502
  %2760 = vst.msk [vmem:[%s3 + $0x340] sm:$0xff] %vm2655, %v2503
  %2761 = vst.msk [vmem:[%s3 + $0x348] sm:$0xff] %vm2655, %v2504
  %2762 = vst.msk [vmem:[%s3 + $0x350] sm:$0xff] %vm2655, %v2505
  %2763 = vst.msk [vmem:[%s3 + $0x358] sm:$0xff] %vm2655, %v2506
  %2764 = vst.msk [vmem:[%s3 + $0x360] sm:$0xff] %vm2655, %v2507
  %2765 = vst.msk [vmem:[%s3 + $0x368] sm:$0xff] %vm2655, %v2508
  %2766 = vst.msk [vmem:[%s3 + $0x370] sm:$0xff] %vm2655, %v2509
  %2767 = vst.msk [vmem:[%s3 + $0x378] sm:$0xff] %vm2655, %v2510
  %2768 = vst.msk [vmem:[%s3 + $0x380] sm:$0xff] %vm2655, %v2511
  %2769 = vst.msk [vmem:[%s3 + $0x388] sm:$0xff] %vm2655, %v2512
  %2770 = vst.msk [vmem:[%s3 + $0x390] sm:$0xff] %vm2655, %v2513
  %2771 = vst.msk [vmem:[%s3 + $0x398] sm:$0xff] %vm2655, %v2514
  %2772 = vst.msk [vmem:[%s3 + $0x3a0] sm:$0xff] %vm2655, %v2515
  %2773 = vst.msk [vmem:[%s3 + $0x3a8] sm:$0xff] %vm2655, %v2516
  %2774 = vst.msk [vmem:[%s3 + $0x3b0] sm:$0xff] %vm2655, %v2517
  %2775 = vst.msk [vmem:[%s3 + $0x3b8] sm:$0xff] %vm2655, %v2518
  %2776 = vst.msk [vmem:[%s3 + $0x3c0] sm:$0xff] %vm2655, %v2519
  %2777 = vst.msk [vmem:[%s3 + $0x3c8] sm:$0xff] %vm2655, %v2520
  %2778 = vst.msk [vmem:[%s3 + $0x3d0] sm:$0xff] %vm2655, %v2521
  %2779 = vst.msk [vmem:[%s3 + $0x3d8] sm:$0xff] %vm2655, %v2522
  %2780 = vst.msk [vmem:[%s3 + $0x3e0] sm:$0xff] %vm2655, %v2523
  %2781 = vst.msk [vmem:[%s3 + $0x3e8] sm:$0xff] %vm2655, %v2524
  %2782 = vst.msk [vmem:[%s3 + $0x3f0] sm:$0xff] %vm2655, %v2525
  %2783 = vst.msk [vmem:[%s3 + $0x3f8] sm:$0xff] %vm2655, %v2526
  %2784 = vst.msk [vmem:[%s3 + $0x400] sm:$0xff] %vm2655, %v2527
  %2785 = vst.msk [vmem:[%s3 + $0x408] sm:$0xff] %vm2655, %v2528
  %2786 = vst.msk [vmem:[%s3 + $0x410] sm:$0xff] %vm2655, %v2529
  %2787 = vst.msk [vmem:[%s3 + $0x418] sm:$0xff] %vm2655, %v2530
  %2788 = vst.msk [vmem:[%s3 + $0x420] sm:$0xff] %vm2655, %v2531
  %2789 = vst.msk [vmem:[%s3 + $0x428] sm:$0xff] %vm2655, %v2532
  %2790 = vst.msk [vmem:[%s3 + $0x430] sm:$0xff] %vm2655, %v2533
  %2791 = vst.msk [vmem:[%s3 + $0x438] sm:$0xff] %vm2655, %v2534
  %2792 = vst.msk [vmem:[%s3 + $0x440] sm:$0xff] %vm2655, %v2535
  %2793 = vst.msk [vmem:[%s3 + $0x448] sm:$0xff] %vm2655, %v2536
  %2794 = vst.msk [vmem:[%s3 + $0x450] sm:$0xff] %vm2655, %v2537
  %2795 = vst.msk [vmem:[%s3 + $0x458] sm:$0xff] %vm2655, %v2538
  %2796 = vst.msk [vmem:[%s3 + $0x460] sm:$0xff] %vm2655, %v2539
  %2797 = vst.msk [vmem:[%s3 + $0x468] sm:$0xff] %vm2655, %v2540
  %2798 = vst.msk [vmem:[%s3 + $0x470] sm:$0xff] %vm2655, %v2541
  %2799 = vst.msk [vmem:[%s3 + $0x478] sm:$0xff] %vm2655, %v2542
  %2800 = vst.msk [vmem:[%s3 + $0x480] sm:$0xff] %vm2655, %v2543
  %2801 = vst.msk [vmem:[%s3 + $0x488] sm:$0xff] %vm2655, %v2544
  %2802 = vst.msk [vmem:[%s3 + $0x490] sm:$0xff] %vm2655, %v2545
  %2803 = vst.msk [vmem:[%s3 + $0x498] sm:$0xff] %vm2655, %v2546
  %2804 = vst.msk [vmem:[%s3 + $0x4a0] sm:$0xff] %vm2655, %v2547
  %2805 = vst.msk [vmem:[%s3 + $0x4a8] sm:$0xff] %vm2655, %v2548
  %2806 = vst.msk [vmem:[%s3 + $0x4b0] sm:$0xff] %vm2655, %v2549
  %2807 = vst.msk [vmem:[%s3 + $0x4b8] sm:$0xff] %vm2655, %v2550
  %2808 = vst.msk [vmem:[%s3 + $0x4c0] sm:$0xff] %vm2655, %v2551
  %2809 = vst.msk [vmem:[%s3 + $0x4c8] sm:$0xff] %vm2655, %v2552
  %2810 = vst.msk [vmem:[%s3 + $0x4d0] sm:$0xff] %vm2655, %v2553
  %2811 = vst.msk [vmem:[%s3 + $0x4d8] sm:$0xff] %vm2655, %v2554
  %2812 = vst.msk [vmem:[%s3 + $0x4e0] sm:$0xff] %vm2655, %v2555
  %2813 = vst.msk [vmem:[%s3 + $0x4e8] sm:$0xff] %vm2655, %v2556
  %2814 = vst.msk [vmem:[%s3 + $0x4f0] sm:$0xff] %vm2655, %v2557
  %2815 = vst.msk [vmem:[%s3 + $0x4f8] sm:$0xff] %vm2655, %v2558
  %2816 = vst.msk [vmem:[%s3 + $0x500] sm:$0xff] %vm2655, %v2559
  %2817 = vst.msk [vmem:[%s3 + $0x508] sm:$0xff] %vm2655, %v2560
  %2818 = vst.msk [vmem:[%s3 + $0x510] sm:$0xff] %vm2655, %v2561
  %2819 = vst.msk [vmem:[%s3 + $0x518] sm:$0xff] %vm2655, %v2562
  %2820 = vst.msk [vmem:[%s3 + $0x520] sm:$0xff] %vm2655, %v2563
  %2821 = vst.msk [vmem:[%s3 + $0x528] sm:$0xff] %vm2655, %v2564
  %2822 = vst.msk [vmem:[%s3 + $0x530] sm:$0xff] %vm2655, %v2565
  %2823 = vst.msk [vmem:[%s3 + $0x538] sm:$0xff] %vm2655, %v2566
  %2824 = vst.msk [vmem:[%s3 + $0x540] sm:$0xff] %vm2655, %v2567
  %2825 = vst.msk [vmem:[%s3 + $0x548] sm:$0xff] %vm2655, %v2568
  %2826 = vst.msk [vmem:[%s3 + $0x550] sm:$0xff] %vm2655, %v2569
  %2827 = vst.msk [vmem:[%s3 + $0x558] sm:$0xff] %vm2655, %v2570
  %2828 = vst.msk [vmem:[%s3 + $0x560] sm:$0xff] %vm2655, %v2571
  %2829 = vst.msk [vmem:[%s3 + $0x568] sm:$0xff] %vm2655, %v2572
  %2830 = vst.msk [vmem:[%s3 + $0x570] sm:$0xff] %vm2655, %v2573
  %2831 = vst.msk [vmem:[%s3 + $0x578] sm:$0xff] %vm2655, %v2574
  %2832 = vst.msk [vmem:[%s3 + $0x580] sm:$0xff] %vm2655, %v2575
  %2833 = vst.msk [vmem:[%s3 + $0x588] sm:$0xff] %vm2655, %v2576
  %2834 = vst.msk [vmem:[%s3 + $0x590] sm:$0xff] %vm2655, %v2577
  %2835 = vst.msk [vmem:[%s3 + $0x598] sm:$0xff] %vm2655, %v2578
  %2836 = vst.msk [vmem:[%s3 + $0x5a0] sm:$0xff] %vm2655, %v2579
  %2837 = vst.msk [vmem:[%s3 + $0x5a8] sm:$0xff] %vm2655, %v2580
  %2838 = vst.msk [vmem:[%s3 + $0x5b0] sm:$0xff] %vm2655, %v2581
  %2839 = vst.msk [vmem:[%s3 + $0x5b8] sm:$0xff] %vm2655, %v2582
  %2840 = vst.msk [vmem:[%s3 + $0x5c0] sm:$0xff] %vm2655, %v2583
  %2841 = vst.msk [vmem:[%s3 + $0x5c8] sm:$0xff] %vm2655, %v2584
  %2842 = vst.msk [vmem:[%s3 + $0x5d0] sm:$0xff] %vm2655, %v2585
  %2843 = vst.msk [vmem:[%s3 + $0x5d8] sm:$0xff] %vm2655, %v2586
  %2844 = vst.msk [vmem:[%s3 + $0x5e0] sm:$0xff] %vm2655, %v2587
  %2845 = vst.msk [vmem:[%s3 + $0x5e8] sm:$0xff] %vm2655, %v2588
  %2846 = vst.msk [vmem:[%s3 + $0x5f0] sm:$0xff] %vm2655, %v2589
  %2847 = vst.msk [vmem:[%s3 + $0x5f8] sm:$0xff] %vm2655, %v2590
  %2848 = vst.msk [vmem:[%s3 + $0x600] sm:$0xff] %vm2655, %v2591
  %2849 = vst.msk [vmem:[%s3 + $0x608] sm:$0xff] %vm2655, %v2592
  %2850 = vst.msk [vmem:[%s3 + $0x610] sm:$0xff] %vm2655, %v2593
  %2851 = vst.msk [vmem:[%s3 + $0x618] sm:$0xff] %vm2655, %v2594
  %2852 = vst.msk [vmem:[%s3 + $0x620] sm:$0xff] %vm2655, %v2595
  %2853 = vst.msk [vmem:[%s3 + $0x628] sm:$0xff] %vm2655, %v2596
  %2854 = vst.msk [vmem:[%s3 + $0x630] sm:$0xff] %vm2655, %v2597
  %2855 = vst.msk [vmem:[%s3 + $0x638] sm:$0xff] %vm2655, %v2598
  %2856 = vst.msk [vmem:[%s3 + $0x640] sm:$0xff] %vm2655, %v2599
  %2857 = vst.msk [vmem:[%s3 + $0x648] sm:$0xff] %vm2655, %v2600
  %2858 = vst.msk [vmem:[%s3 + $0x650] sm:$0xff] %vm2655, %v2601
  %2859 = vst.msk [vmem:[%s3 + $0x658] sm:$0xff] %vm2655, %v2602
  %2860 = vst.msk [vmem:[%s3 + $0x660] sm:$0xff] %vm2655, %v2603
  %2861 = vst.msk [vmem:[%s3 + $0x668] sm:$0xff] %vm2655, %v2604
  %2862 = vst.msk [vmem:[%s3 + $0x670] sm:$0xff] %vm2655, %v2605
  %2863 = vst.msk [vmem:[%s3 + $0x678] sm:$0xff] %vm2655, %v2606
  %2864 = vst.msk [vmem:[%s3 + $0x680] sm:$0xff] %vm2655, %v2607
  %2865 = vst.msk [vmem:[%s3 + $0x688] sm:$0xff] %vm2655, %v2608
  %2866 = vst.msk [vmem:[%s3 + $0x690] sm:$0xff] %vm2655, %v2609
  %2867 = vst.msk [vmem:[%s3 + $0x698] sm:$0xff] %vm2655, %v2610
  %2868 = vst.msk [vmem:[%s3 + $0x6a0] sm:$0xff] %vm2655, %v2611
  %2869 = vst.msk [vmem:[%s3 + $0x6a8] sm:$0xff] %vm2655, %v2612
  %2870 = vst.msk [vmem:[%s3 + $0x6b0] sm:$0xff] %vm2655, %v2613
  %2871 = vst.msk [vmem:[%s3 + $0x6b8] sm:$0xff] %vm2655, %v2614
  %2872 = vst.msk [vmem:[%s3 + $0x6c0] sm:$0xff] %vm2655, %v2615
  %2873 = vst.msk [vmem:[%s3 + $0x6c8] sm:$0xff] %vm2655, %v2616
  %2874 = vst.msk [vmem:[%s3 + $0x6d0] sm:$0xff] %vm2655, %v2617
  %2875 = vst.msk [vmem:[%s3 + $0x6d8] sm:$0xff] %vm2655, %v2618
  %2876 = vst.msk [vmem:[%s3 + $0x6e0] sm:$0xff] %vm2655, %v2619
  %2877 = vst.msk [vmem:[%s3 + $0x6e8] sm:$0xff] %vm2655, %v2620
  %2878 = vst.msk [vmem:[%s3 + $0x6f0] sm:$0xff] %vm2655, %v2621
  %2879 = vst.msk [vmem:[%s3 + $0x6f8] sm:$0xff] %vm2655, %v2622
  %2880 = vst.msk [vmem:[%s3 + $0x700] sm:$0xff] %vm2655, %v2623
  %2881 = vst.msk [vmem:[%s3 + $0x708] sm:$0xff] %vm2655, %v2624
  %2882 = vst.msk [vmem:[%s3 + $0x710] sm:$0xff] %vm2655, %v2625
  %2883 = vst.msk [vmem:[%s3 + $0x718] sm:$0xff] %vm2655, %v2626
  %2884 = vst.msk [vmem:[%s3 + $0x720] sm:$0xff] %vm2655, %v2627
  %2885 = vst.msk [vmem:[%s3 + $0x728] sm:$0xff] %vm2655, %v2628
  %2886 = vst.msk [vmem:[%s3 + $0x730] sm:$0xff] %vm2655, %v2629
  %2887 = vst.msk [vmem:[%s3 + $0x738] sm:$0xff] %vm2655, %v2630
  %2888 = vst.msk [vmem:[%s3 + $0x740] sm:$0xff] %vm2655, %v2631
  %2889 = vst.msk [vmem:[%s3 + $0x748] sm:$0xff] %vm2655, %v2632
  %2890 = vst.msk [vmem:[%s3 + $0x750] sm:$0xff] %vm2655, %v2633
  %2891 = vst.msk [vmem:[%s3 + $0x758] sm:$0xff] %vm2655, %v2634
  %2892 = vst.msk [vmem:[%s3 + $0x760] sm:$0xff] %vm2655, %v2635
  %2893 = vst.msk [vmem:[%s3 + $0x768] sm:$0xff] %vm2655, %v2636
  %2894 = vst.msk [vmem:[%s3 + $0x770] sm:$0xff] %vm2655, %v2637
  %2895 = vst.msk [vmem:[%s3 + $0x778] sm:$0xff] %vm2655, %v2638
  %2896 = vst.msk [vmem:[%s3 + $0x780] sm:$0xff] %vm2655, %v2639
  %2897 = vst.msk [vmem:[%s3 + $0x788] sm:$0xff] %vm2655, %v2640
  %2898 = vst.msk [vmem:[%s3 + $0x790] sm:$0xff] %vm2655, %v2641
  %2899 = vst.msk [vmem:[%s3 + $0x798] sm:$0xff] %vm2655, %v2642
  %2900 = vst.msk [vmem:[%s3 + $0x7a0] sm:$0xff] %vm2655, %v2643
  %2901 = vst.msk [vmem:[%s3 + $0x7a8] sm:$0xff] %vm2655, %v2644
  %2902 = vst.msk [vmem:[%s3 + $0x7b0] sm:$0xff] %vm2655, %v2645
  %2903 = vst.msk [vmem:[%s3 + $0x7b8] sm:$0xff] %vm2655, %v2646
  %2904 = vst.msk [vmem:[%s3 + $0x7c0] sm:$0xff] %vm2655, %v2647
  %2905 = vst.msk [vmem:[%s3 + $0x7c8] sm:$0xff] %vm2655, %v2648
  %2906 = vst.msk [vmem:[%s3 + $0x7d0] sm:$0xff] %vm2655, %v2649
  %2907 = vst.msk [vmem:[%s3 + $0x7d8] sm:$0xff] %vm2655, %v2650
  %2908 = vst.msk [vmem:[%s3 + $0x7e0] sm:$0xff] %vm2655, %v2651
  %2909 = vst.msk [vmem:[%s3 + $0x7e8] sm:$0xff] %vm2655, %v2652
  %2910 = vst.msk [vmem:[%s3 + $0x7f0] sm:$0xff] %vm2655, %v2653
  %2911 = vst.msk [vmem:[%s3 + $0x7f8] sm:$0xff] %vm2655, %v2654
  // Predicated region
  $region14: #{forward.3} parent=0 // pred_check
    _
  $region15: #{forward.3} parent=0 // pred_check_branch
    %2913 = sbr.rel (0) target = $region17
  $region16: #{forward.3} parent=0 // pred_region
    _
  $region17: #{forward.3} parent=0 // pred_fallthru
    _
  // Predicated region
  $region18: #{forward.3} parent=0 // pred_check
    _
  $region19: #{forward.3} parent=0 // pred_check_branch
    %2915 = sbr.rel (0) target = $region21
  $region20: #{forward.3} parent=0 // pred_region
    _
  $region21: #{forward.3} parent=0 // pred_fallthru
    _

// kernel: forward.4
$region0: #{forward.4}
  #allocation0 [shape = 'u32[]', space=smem, size = 0x4, offset = 0x4, fixed_abs, tag = 'smem constant byte address 0x4 - core index']
  #allocation1 [shape = 'u32[144,128]{1,0:T(1,128)}', space=vmem, size = 0x12000, scoped, tag = 'internal scratch']
  %s0 = inlined_call_operand.vmem [shape: f32[512,288], index: 0, kind: input, shape index: {}]
  %s1 = inlined_call_operand.vmem [shape: f32[288,64], index: 1, kind: input, shape index: {}]
  %s2 = inlined_call_operand.vmem [shape: f32[1,64], index: 2, kind: input, shape index: {}]
  %s3 = inlined_call_operand.vmem [shape: f32[512,64], index: 3, kind: output, shape index: {}]
  %s4 = sld [smem:[#allocation0]]
  $region22: #{forward.4} parent=0
    _
  %s6 = ssub.s32 1, %s4
  %s7 = scalar_select 0, %s6, %s4
  // Predicated region
  $region2: #{forward.4} parent=0 // pred_check
    _
  $region3: #{forward.4} parent=0 // pred_check_branch
    %9 = sbr.rel (0) target = $region5
  $region4: #{forward.4} parent=0 // pred_region
    _
  $region5: #{forward.4} parent=0 // pred_fallthru
    _
  // Predicated region
  $region6: #{forward.4} parent=0 // pred_check
    _
  $region7: #{forward.4} parent=0 // pred_check_branch
    %11 = sbr.rel (0) target = $region9
  $region8: #{forward.4} parent=0 // pred_region
    _
  $region9: #{forward.4} parent=0 // pred_fallthru
    _
  // Predicated region
  $region10: #{forward.4} parent=0 // pred_check
    _
  $region11: #{forward.4} parent=0 // pred_check_branch
    %13 = sbr.rel (0) target = $region13
  $region12: #{forward.4} parent=0 // pred_region
    _
  $region13: #{forward.4} parent=0 // pred_fallthru
    _
  %v14 = vld [vmem:[%s0] sm:$0xff]
  %v15 = vld [vmem:[%s0 + $0x8] sm:$0xff]
  %v16 = vld [vmem:[%s0 + $0x10] sm:$0xff]
  %v17 = vld [vmem:[%s0 + $0x18] sm:$0xff]
  %v18 = vld [vmem:[%s0 + $0x20] sm:$0xff]
  %v19 = vld [vmem:[%s0 + $0x28] sm:$0xff]
  %v20 = vld [vmem:[%s0 + $0x30] sm:$0xff]
  %v21 = vld [vmem:[%s0 + $0x38] sm:$0xff]
  %v22 = vld [vmem:[%s0 + $0x40] sm:$0xff]
  %v23 = vld [vmem:[%s0 + $0x48] sm:$0xff]
  %v24 = vld [vmem:[%s0 + $0x50] sm:$0xff]
  %v25 = vld [vmem:[%s0 + $0x58] sm:$0xff]
  %v26 = vld [vmem:[%s0 + $0x60] sm:$0xff]
  %v27 = vld [vmem:[%s0 + $0x68] sm:$0xff]
  %v28 = vld [vmem:[%s0 + $0x70] sm:$0xff]
  %v29 = vld [vmem:[%s0 + $0x78] sm:$0xff]
  %v30 = vld [vmem:[%s0 + $0x80] sm:$0xff]
  %v31 = vld [vmem:[%s0 + $0x88] sm:$0xff]
  %v32 = vld [vmem:[%s0 + $0x90] sm:$0xff]
  %v33 = vld [vmem:[%s0 + $0x98] sm:$0xff]
  %v34 = vld [vmem:[%s0 + $0xa0] sm:$0xff]
  %v35 = vld [vmem:[%s0 + $0xa8] sm:$0xff]
  %v36 = vld [vmem:[%s0 + $0xb0] sm:$0xff]
  %v37 = vld [vmem:[%s0 + $0xb8] sm:$0xff]
  %v38 = vld [vmem:[%s0 + $0xc0] sm:$0xff]
  %v39 = vld [vmem:[%s0 + $0xc8] sm:$0xff]
  %v40 = vld [vmem:[%s0 + $0xd0] sm:$0xff]
  %v41 = vld [vmem:[%s0 + $0xd8] sm:$0xff]
  %v42 = vld [vmem:[%s0 + $0xe0] sm:$0xff]
  %v43 = vld [vmem:[%s0 + $0xe8] sm:$0xff]
  %v44 = vld [vmem:[%s0 + $0xf0] sm:$0xff]
  %v45 = vld [vmem:[%s0 + $0xf8] sm:$0xff]
  %v46 = vld [vmem:[%s0 + $0x100] sm:$0xff]
  %v47 = vld [vmem:[%s0 + $0x108] sm:$0xff]
  %v48 = vld [vmem:[%s0 + $0x110] sm:$0xff]
  %v49 = vld [vmem:[%s0 + $0x118] sm:$0xff]
  %v50 = vld [vmem:[%s0 + $0x120] sm:$0xff]
  %v51 = vld [vmem:[%s0 + $0x128] sm:$0xff]
  %v52 = vld [vmem:[%s0 + $0x130] sm:$0xff]
  %v53 = vld [vmem:[%s0 + $0x138] sm:$0xff]
  %v54 = vld [vmem:[%s0 + $0x140] sm:$0xff]
  %v55 = vld [vmem:[%s0 + $0x148] sm:$0xff]
  %v56 = vld [vmem:[%s0 + $0x150] sm:$0xff]
  %v57 = vld [vmem:[%s0 + $0x158] sm:$0xff]
  %v58 = vld [vmem:[%s0 + $0x160] sm:$0xff]
  %v59 = vld [vmem:[%s0 + $0x168] sm:$0xff]
  %v60 = vld [vmem:[%s0 + $0x170] sm:$0xff]
  %v61 = vld [vmem:[%s0 + $0x178] sm:$0xff]
  %v62 = vld [vmem:[%s0 + $0x180] sm:$0xff]
  %v63 = vld [vmem:[%s0 + $0x188] sm:$0xff]
  %v64 = vld [vmem:[%s0 + $0x190] sm:$0xff]
  %v65 = vld [vmem:[%s0 + $0x198] sm:$0xff]
  %v66 = vld [vmem:[%s0 + $0x1a0] sm:$0xff]
  %v67 = vld [vmem:[%s0 + $0x1a8] sm:$0xff]
  %v68 = vld [vmem:[%s0 + $0x1b0] sm:$0xff]
  %v69 = vld [vmem:[%s0 + $0x1b8] sm:$0xff]
  %v70 = vld [vmem:[%s0 + $0x1c0] sm:$0xff]
  %v71 = vld [vmem:[%s0 + $0x1c8] sm:$0xff]
  %v72 = vld [vmem:[%s0 + $0x1d0] sm:$0xff]
  %v73 = vld [vmem:[%s0 + $0x1d8] sm:$0xff]
  %v74 = vld [vmem:[%s0 + $0x1e0] sm:$0xff]
  %v75 = vld [vmem:[%s0 + $0x1e8] sm:$0xff]
  %v76 = vld [vmem:[%s0 + $0x1f0] sm:$0xff]
  %v77 = vld [vmem:[%s0 + $0x1f8] sm:$0xff]
  %v78 = vld [vmem:[%s0 + $0x200] sm:$0xff]
  %v79 = vld [vmem:[%s0 + $0x208] sm:$0xff]
  %v80 = vld [vmem:[%s0 + $0x210] sm:$0xff]
  %v81 = vld [vmem:[%s0 + $0x218] sm:$0xff]
  %v82 = vld [vmem:[%s0 + $0x220] sm:$0xff]
  %v83 = vld [vmem:[%s0 + $0x228] sm:$0xff]
  %v84 = vld [vmem:[%s0 + $0x230] sm:$0xff]
  %v85 = vld [vmem:[%s0 + $0x238] sm:$0xff]
  %v86 = vld [vmem:[%s0 + $0x240] sm:$0xff]
  %v87 = vld [vmem:[%s0 + $0x248] sm:$0xff]
  %v88 = vld [vmem:[%s0 + $0x250] sm:$0xff]
  %v89 = vld [vmem:[%s0 + $0x258] sm:$0xff]
  %v90 = vld [vmem:[%s0 + $0x260] sm:$0xff]
  %v91 = vld [vmem:[%s0 + $0x268] sm:$0xff]
  %v92 = vld [vmem:[%s0 + $0x270] sm:$0xff]
  %v93 = vld [vmem:[%s0 + $0x278] sm:$0xff]
  %v94 = vld [vmem:[%s0 + $0x280] sm:$0xff]
  %v95 = vld [vmem:[%s0 + $0x288] sm:$0xff]
  %v96 = vld [vmem:[%s0 + $0x290] sm:$0xff]
  %v97 = vld [vmem:[%s0 + $0x298] sm:$0xff]
  %v98 = vld [vmem:[%s0 + $0x2a0] sm:$0xff]
  %v99 = vld [vmem:[%s0 + $0x2a8] sm:$0xff]
  %v100 = vld [vmem:[%s0 + $0x2b0] sm:$0xff]
  %v101 = vld [vmem:[%s0 + $0x2b8] sm:$0xff]
  %v102 = vld [vmem:[%s0 + $0x2c0] sm:$0xff]
  %v103 = vld [vmem:[%s0 + $0x2c8] sm:$0xff]
  %v104 = vld [vmem:[%s0 + $0x2d0] sm:$0xff]
  %v105 = vld [vmem:[%s0 + $0x2d8] sm:$0xff]
  %v106 = vld [vmem:[%s0 + $0x2e0] sm:$0xff]
  %v107 = vld [vmem:[%s0 + $0x2e8] sm:$0xff]
  %v108 = vld [vmem:[%s0 + $0x2f0] sm:$0xff]
  %v109 = vld [vmem:[%s0 + $0x2f8] sm:$0xff]
  %v110 = vld [vmem:[%s0 + $0x300] sm:$0xff]
  %v111 = vld [vmem:[%s0 + $0x308] sm:$0xff]
  %v112 = vld [vmem:[%s0 + $0x310] sm:$0xff]
  %v113 = vld [vmem:[%s0 + $0x318] sm:$0xff]
  %v114 = vld [vmem:[%s0 + $0x320] sm:$0xff]
  %v115 = vld [vmem:[%s0 + $0x328] sm:$0xff]
  %v116 = vld [vmem:[%s0 + $0x330] sm:$0xff]
  %v117 = vld [vmem:[%s0 + $0x338] sm:$0xff]
  %v118 = vld [vmem:[%s0 + $0x340] sm:$0xff]
  %v119 = vld [vmem:[%s0 + $0x348] sm:$0xff]
  %v120 = vld [vmem:[%s0 + $0x350] sm:$0xff]
  %v121 = vld [vmem:[%s0 + $0x358] sm:$0xff]
  %v122 = vld [vmem:[%s0 + $0x360] sm:$0xff]
  %v123 = vld [vmem:[%s0 + $0x368] sm:$0xff]
  %v124 = vld [vmem:[%s0 + $0x370] sm:$0xff]
  %v125 = vld [vmem:[%s0 + $0x378] sm:$0xff]
  %v126 = vld [vmem:[%s0 + $0x380] sm:$0xff]
  %v127 = vld [vmem:[%s0 + $0x388] sm:$0xff]
  %v128 = vld [vmem:[%s0 + $0x390] sm:$0xff]
  %v129 = vld [vmem:[%s0 + $0x398] sm:$0xff]
  %v130 = vld [vmem:[%s0 + $0x3a0] sm:$0xff]
  %v131 = vld [vmem:[%s0 + $0x3a8] sm:$0xff]
  %v132 = vld [vmem:[%s0 + $0x3b0] sm:$0xff]
  %v133 = vld [vmem:[%s0 + $0x3b8] sm:$0xff]
  %v134 = vld [vmem:[%s0 + $0x3c0] sm:$0xff]
  %v135 = vld [vmem:[%s0 + $0x3c8] sm:$0xff]
  %v136 = vld [vmem:[%s0 + $0x3d0] sm:$0xff]
  %v137 = vld [vmem:[%s0 + $0x3d8] sm:$0xff]
  %v138 = vld [vmem:[%s0 + $0x3e0] sm:$0xff]
  %v139 = vld [vmem:[%s0 + $0x3e8] sm:$0xff]
  %v140 = vld [vmem:[%s0 + $0x3f0] sm:$0xff]
  %v141 = vld [vmem:[%s0 + $0x3f8] sm:$0xff]
  %v142 = vld [vmem:[%s0 + $0x400] sm:$0xff]
  %v143 = vld [vmem:[%s0 + $0x408] sm:$0xff]
  %v144 = vld [vmem:[%s0 + $0x410] sm:$0xff]
  %v145 = vld [vmem:[%s0 + $0x418] sm:$0xff]
  %v146 = vld [vmem:[%s0 + $0x420] sm:$0xff]
  %v147 = vld [vmem:[%s0 + $0x428] sm:$0xff]
  %v148 = vld [vmem:[%s0 + $0x430] sm:$0xff]
  %v149 = vld [vmem:[%s0 + $0x438] sm:$0xff]
  %v150 = vld [vmem:[%s0 + $0x440] sm:$0xff]
  %v151 = vld [vmem:[%s0 + $0x448] sm:$0xff]
  %v152 = vld [vmem:[%s0 + $0x450] sm:$0xff]
  %v153 = vld [vmem:[%s0 + $0x458] sm:$0xff]
  %v154 = vld [vmem:[%s0 + $0x460] sm:$0xff]
  %v155 = vld [vmem:[%s0 + $0x468] sm:$0xff]
  %v156 = vld [vmem:[%s0 + $0x470] sm:$0xff]
  %v157 = vld [vmem:[%s0 + $0x478] sm:$0xff]
  %v158 = vld [vmem:[%s0 + $0x480] sm:$0xff]
  %v159 = vld [vmem:[%s0 + $0x488] sm:$0xff]
  %v160 = vld [vmem:[%s0 + $0x490] sm:$0xff]
  %v161 = vld [vmem:[%s0 + $0x498] sm:$0xff]
  %v162 = vld [vmem:[%s0 + $0x4a0] sm:$0xff]
  %v163 = vld [vmem:[%s0 + $0x4a8] sm:$0xff]
  %v164 = vld [vmem:[%s0 + $0x4b0] sm:$0xff]
  %v165 = vld [vmem:[%s0 + $0x4b8] sm:$0xff]
  %v166 = vld [vmem:[%s0 + $0x4c0] sm:$0xff]
  %v167 = vld [vmem:[%s0 + $0x4c8] sm:$0xff]
  %v168 = vld [vmem:[%s0 + $0x4d0] sm:$0xff]
  %v169 = vld [vmem:[%s0 + $0x4d8] sm:$0xff]
  %v170 = vld [vmem:[%s0 + $0x4e0] sm:$0xff]
  %v171 = vld [vmem:[%s0 + $0x4e8] sm:$0xff]
  %v172 = vld [vmem:[%s0 + $0x4f0] sm:$0xff]
  %v173 = vld [vmem:[%s0 + $0x4f8] sm:$0xff]
  %v174 = vld [vmem:[%s0 + $0x500] sm:$0xff]
  %v175 = vld [vmem:[%s0 + $0x508] sm:$0xff]
  %v176 = vld [vmem:[%s0 + $0x510] sm:$0xff]
  %v177 = vld [vmem:[%s0 + $0x518] sm:$0xff]
  %v178 = vld [vmem:[%s0 + $0x520] sm:$0xff]
  %v179 = vld [vmem:[%s0 + $0x528] sm:$0xff]
  %v180 = vld [vmem:[%s0 + $0x530] sm:$0xff]
  %v181 = vld [vmem:[%s0 + $0x538] sm:$0xff]
  %v182 = vld [vmem:[%s0 + $0x540] sm:$0xff]
  %v183 = vld [vmem:[%s0 + $0x548] sm:$0xff]
  %v184 = vld [vmem:[%s0 + $0x550] sm:$0xff]
  %v185 = vld [vmem:[%s0 + $0x558] sm:$0xff]
  %v186 = vld [vmem:[%s0 + $0x560] sm:$0xff]
  %v187 = vld [vmem:[%s0 + $0x568] sm:$0xff]
  %v188 = vld [vmem:[%s0 + $0x570] sm:$0xff]
  %v189 = vld [vmem:[%s0 + $0x578] sm:$0xff]
  %v190 = vld [vmem:[%s0 + $0x580] sm:$0xff]
  %v191 = vld [vmem:[%s0 + $0x588] sm:$0xff]
  %v192 = vld [vmem:[%s0 + $0x590] sm:$0xff]
  %v193 = vld [vmem:[%s0 + $0x598] sm:$0xff]
  %v194 = vld [vmem:[%s0 + $0x5a0] sm:$0xff]
  %v195 = vld [vmem:[%s0 + $0x5a8] sm:$0xff]
  %v196 = vld [vmem:[%s0 + $0x5b0] sm:$0xff]
  %v197 = vld [vmem:[%s0 + $0x5b8] sm:$0xff]
  %v198 = vld [vmem:[%s0 + $0x5c0] sm:$0xff]
  %v199 = vld [vmem:[%s0 + $0x5c8] sm:$0xff]
  %v200 = vld [vmem:[%s0 + $0x5d0] sm:$0xff]
  %v201 = vld [vmem:[%s0 + $0x5d8] sm:$0xff]
  %v202 = vld [vmem:[%s0 + $0x5e0] sm:$0xff]
  %v203 = vld [vmem:[%s0 + $0x5e8] sm:$0xff]
  %v204 = vld [vmem:[%s0 + $0x5f0] sm:$0xff]
  %v205 = vld [vmem:[%s0 + $0x5f8] sm:$0xff]
  %v206 = vld [vmem:[%s1] sm:$0xff]
  %v207 = vld [vmem:[%s1 + $0x8] sm:$0xff]
  %v208 = vld [vmem:[%s1 + $0x10] sm:$0xff]
  %v209 = vld [vmem:[%s1 + $0x18] sm:$0xff]
  %v210 = vld [vmem:[%s1 + $0x20] sm:$0xff]
  %v211 = vld [vmem:[%s1 + $0x28] sm:$0xff]
  %v212 = vld [vmem:[%s1 + $0x30] sm:$0xff]
  %v213 = vld [vmem:[%s1 + $0x38] sm:$0xff]
  %v214 = vld [vmem:[%s1 + $0x40] sm:$0xff]
  %v215 = vld [vmem:[%s1 + $0x48] sm:$0xff]
  %v216 = vld [vmem:[%s1 + $0x50] sm:$0xff]
  %v217 = vld [vmem:[%s1 + $0x58] sm:$0xff]
  %v218 = vld [vmem:[%s1 + $0x60] sm:$0xff]
  %v219 = vld [vmem:[%s1 + $0x68] sm:$0xff]
  %v220 = vld [vmem:[%s1 + $0x70] sm:$0xff]
  %v221 = vld [vmem:[%s1 + $0x78] sm:$0xff]
  %v222 = vld [vmem:[%s1 + $0x80] sm:$0xff]
  %v223 = vld [vmem:[%s1 + $0x88] sm:$0xff]
  %v224 = vld [vmem:[%s1 + $0x90] sm:$0xff]
  %v225 = vld [vmem:[%s1 + $0x98] sm:$0xff]
  %v226 = vld [vmem:[%s1 + $0xa0] sm:$0xff]
  %v227 = vld [vmem:[%s1 + $0xa8] sm:$0xff]
  %v228 = vld [vmem:[%s1 + $0xb0] sm:$0xff]
  %v229 = vld [vmem:[%s1 + $0xb8] sm:$0xff]
  %v230 = vld [vmem:[%s1 + $0xc0] sm:$0xff]
  %v231 = vld [vmem:[%s1 + $0xc8] sm:$0xff]
  %v232 = vld [vmem:[%s1 + $0xd0] sm:$0xff]
  %v233 = vld [vmem:[%s1 + $0xd8] sm:$0xff]
  %v234 = vld [vmem:[%s1 + $0xe0] sm:$0xff]
  %v235 = vld [vmem:[%s1 + $0xe8] sm:$0xff]
  %v236 = vld [vmem:[%s1 + $0xf0] sm:$0xff]
  %v237 = vld [vmem:[%s1 + $0xf8] sm:$0xff]
  %v238 = vld [vmem:[%s1 + $0x100] sm:$0xff]
  %v239 = vld [vmem:[%s1 + $0x108] sm:$0xff]
  %v240 = vld [vmem:[%s1 + $0x110] sm:$0xff]
  %v241 = vld [vmem:[%s1 + $0x118] sm:$0xff]
  %v242 = vld [vmem:[%s2] sm:$0x1]
  %v244 = vlaneseq
  %v245 = vshrl.u32 %v244, 7
  %v246 = vsub.s32 0, %v245
  %v247 = vrot.slane %v242, %v246
  %vm249 = vcmask 261120
  %v251 = vsel %vm249, %v16, 0
  %v254 = vsel %vm249, %v19, 0
  %v257 = vsel %vm249, %v22, 0
  %v260 = vsel %vm249, %v25, 0
  %v263 = vsel %vm249, %v28, 0
  %v266 = vsel %vm249, %v31, 0
  %v269 = vsel %vm249, %v34, 0
  %v272 = vsel %vm249, %v37, 0
  %v275 = vsel %vm249, %v40, 0
  %v278 = vsel %vm249, %v43, 0
  %v281 = vsel %vm249, %v46, 0
  %v284 = vsel %vm249, %v49, 0
  %v287 = vsel %vm249, %v52, 0
  %v290 = vsel %vm249, %v55, 0
  %v293 = vsel %vm249, %v58, 0
  %v296 = vsel %vm249, %v61, 0
  %v299 = vsel %vm249, %v64, 0
  %v302 = vsel %vm249, %v67, 0
  %v305 = vsel %vm249, %v70, 0
  %v308 = vsel %vm249, %v73, 0
  %v311 = vsel %vm249, %v76, 0
  %v314 = vsel %vm249, %v79, 0
  %v317 = vsel %vm249, %v82, 0
  %v320 = vsel %vm249, %v85, 0
  %v323 = vsel %vm249, %v88, 0
  %v326 = vsel %vm249, %v91, 0
  %v329 = vsel %vm249, %v94, 0
  %v332 = vsel %vm249, %v97, 0
  %v335 = vsel %vm249, %v100, 0
  %v338 = vsel %vm249, %v103, 0
  %v341 = vsel %vm249, %v106, 0
  %v344 = vsel %vm249, %v109, 0
  %v347 = vsel %vm249, %v112, 0
  %v350 = vsel %vm249, %v115, 0
  %v353 = vsel %vm249, %v118, 0
  %v356 = vsel %vm249, %v121, 0
  %v359 = vsel %vm249, %v124, 0
  %v362 = vsel %vm249, %v127, 0
  %v365 = vsel %vm249, %v130, 0
  %v368 = vsel %vm249, %v133, 0
  %v371 = vsel %vm249, %v136, 0
  %v374 = vsel %vm249, %v139, 0
  %v377 = vsel %vm249, %v142, 0
  %v380 = vsel %vm249, %v145, 0
  %v383 = vsel %vm249, %v148, 0
  %v386 = vsel %vm249, %v151, 0
  %v389 = vsel %vm249, %v154, 0
  %v392 = vsel %vm249, %v157, 0
  %v395 = vsel %vm249, %v160, 0
  %v398 = vsel %vm249, %v163, 0
  %v401 = vsel %vm249, %v166, 0
  %v404 = vsel %vm249, %v169, 0
  %v407 = vsel %vm249, %v172, 0
  %v410 = vsel %vm249, %v175, 0
  %v413 = vsel %vm249, %v178, 0
  %v416 = vsel %vm249, %v181, 0
  %v419 = vsel %vm249, %v184, 0
  %v422 = vsel %vm249, %v187, 0
  %v425 = vsel %vm249, %v190, 0
  %v428 = vsel %vm249, %v193, 0
  %v431 = vsel %vm249, %v196, 0
  %v434 = vsel %vm249, %v199, 0
  %v437 = vsel %vm249, %v202, 0
  %v440 = vsel %vm249, %v205, 0
  %442 = vmatprep.subr.mxu0 0.0
  %443 = vmatpush1.msra.mxu0 %v221
  %444 = vmatprep.subr.mxu0 0.0
  %445 = vmatpush1.msra.mxu0 %v220
  %446 = vmatprep.subr.mxu0 0.0
  %447 = vmatpush1.msra.mxu0 %v219
  %448 = vmatprep.subr.mxu0 0.0
  %449 = vmatpush1.msra.mxu0 %v218
  %450 = vmatprep.subr.mxu0 0.0
  %451 = vmatpush1.msra.mxu0 %v217
  %452 = vmatprep.subr.mxu0 0.0
  %453 = vmatpush1.msra.mxu0 %v216
  %454 = vmatprep.subr.mxu0 0.0
  %455 = vmatpush1.msra.mxu0 %v215
  %456 = vmatprep.subr.mxu0 0.0
  %457 = vmatpush1.msra.mxu0 %v214
  %458 = vmatprep.subr.mxu0 0.0
  %459 = vmatpush1.msra.mxu0 %v213
  %460 = vmatprep.subr.mxu0 0.0
  %461 = vmatpush1.msra.mxu0 %v212
  %462 = vmatprep.subr.mxu0 0.0
  %463 = vmatpush1.msra.mxu0 %v211
  %464 = vmatprep.subr.mxu0 0.0
  %465 = vmatpush1.msra.mxu0 %v210
  %466 = vmatprep.subr.mxu0 0.0
  %467 = vmatpush1.msra.mxu0 %v209
  %468 = vmatprep.subr.mxu0 0.0
  %469 = vmatpush1.msra.mxu0 %v208
  %470 = vmatprep.subr.mxu0 0.0
  %471 = vmatpush1.msra.mxu0 %v207
  %472 = vmatprep.subr.mxu0 0.0
  %473 = vmatpush1.msra.mxu0 %v206
  %474 = vmatprep.subr.mxu0 0.0
  %475 = vmatpush2.msra.mxu0 %v237
  %476 = vmatprep.subr.mxu0 0.0
  %477 = vmatpush2.msra.mxu0 %v236
  %478 = vmatprep.subr.mxu0 0.0
  %479 = vmatpush2.msra.mxu0 %v235
  %480 = vmatprep.subr.mxu0 0.0
  %481 = vmatpush2.msra.mxu0 %v234
  %482 = vmatprep.subr.mxu0 0.0
  %483 = vmatpush2.msra.mxu0 %v233
  %484 = vmatprep.subr.mxu0 0.0
  %485 = vmatpush2.msra.mxu0 %v232
  %486 = vmatprep.subr.mxu0 0.0
  %487 = vmatpush2.msra.mxu0 %v231
  %488 = vmatprep.subr.mxu0 0.0
  %489 = vmatpush2.msra.mxu0 %v230
  %490 = vmatprep.subr.mxu0 0.0
  %491 = vmatpush2.msra.mxu0 %v229
  %492 = vmatprep.subr.mxu0 0.0
  %493 = vmatpush2.msra.mxu0 %v228
  %494 = vmatprep.subr.mxu0 0.0
  %495 = vmatpush2.msra.mxu0 %v227
  %496 = vmatprep.subr.mxu0 0.0
  %497 = vmatpush2.msra.mxu0 %v226
  %498 = vmatprep.subr.mxu0 0.0
  %499 = vmatpush2.msra.mxu0 %v225
  %500 = vmatprep.subr.mxu0 0.0
  %501 = vmatpush2.msra.mxu0 %v224
  %502 = vmatprep.subr.mxu0 0.0
  %503 = vmatpush2.msra.mxu0 %v223
  %504 = vmatprep.subr.mxu0 0.0
  %505 = vmatpush2.msra.mxu0 %v222
  %506 = vmatprep.mubr.f32.mxu0 %v15
  %507 = vmatmul.mubr.f32.gmra.mxu0 %v14
  %v508 = vpop.f32.mrf.mxu0
  %v509 = vadd.f32 %v247, %v508
  %v510 = vpop.f32.mrf.mxu0
  %511 = vmatprep.mubr.f32.mxu0 %v18
  %512 = vmatmul.mubr.f32.gmra.mxu0 %v17
  %v513 = vpop.f32.mrf.mxu0
  %v514 = vadd.f32 %v247, %v513
  %v515 = vpop.f32.mrf.mxu0
  %516 = vmatprep.mubr.f32.mxu0 %v21
  %517 = vmatmul.mubr.f32.gmra.mxu0 %v20
  %v518 = vpop.f32.mrf.mxu0
  %v519 = vadd.f32 %v247, %v518
  %v520 = vpop.f32.mrf.mxu0
  %521 = vmatprep.mubr.f32.mxu0 %v24
  %522 = vmatmul.mubr.f32.gmra.mxu0 %v23
  %v523 = vpop.f32.mrf.mxu0
  %v524 = vadd.f32 %v247, %v523
  %v525 = vpop.f32.mrf.mxu0
  %526 = vmatprep.mubr.f32.mxu0 %v27
  %527 = vmatmul.mubr.f32.gmra.mxu0 %v26
  %v528 = vpop.f32.mrf.mxu0
  %v529 = vadd.f32 %v247, %v528
  %v530 = vpop.f32.mrf.mxu0
  %531 = vmatprep.mubr.f32.mxu0 %v30
  %532 = vmatmul.mubr.f32.gmra.mxu0 %v29
  %v533 = vpop.f32.mrf.mxu0
  %v534 = vadd.f32 %v247, %v533
  %v535 = vpop.f32.mrf.mxu0
  %536 = vmatprep.mubr.f32.mxu0 %v33
  %537 = vmatmul.mubr.f32.gmra.mxu0 %v32
  %v538 = vpop.f32.mrf.mxu0
  %v539 = vadd.f32 %v247, %v538
  %v540 = vpop.f32.mrf.mxu0
  %541 = vmatprep.mubr.f32.mxu0 %v36
  %542 = vmatmul.mubr.f32.gmra.mxu0 %v35
  %v543 = vpop.f32.mrf.mxu0
  %v544 = vadd.f32 %v247, %v543
  %v545 = vpop.f32.mrf.mxu0
  %546 = vmatprep.mubr.f32.mxu0 %v39
  %547 = vmatmul.mubr.f32.gmra.mxu0 %v38
  %v548 = vpop.f32.mrf.mxu0
  %v549 = vadd.f32 %v247, %v548
  %v550 = vpop.f32.mrf.mxu0
  %551 = vmatprep.mubr.f32.mxu0 %v42
  %552 = vmatmul.mubr.f32.gmra.mxu0 %v41
  %v553 = vpop.f32.mrf.mxu0
  %v554 = vadd.f32 %v247, %v553
  %v555 = vpop.f32.mrf.mxu0
  %556 = vmatprep.mubr.f32.mxu0 %v45
  %557 = vmatmul.mubr.f32.gmra.mxu0 %v44
  %v558 = vpop.f32.mrf.mxu0
  %v559 = vadd.f32 %v247, %v558
  %v560 = vpop.f32.mrf.mxu0
  %561 = vmatprep.mubr.f32.mxu0 %v48
  %562 = vmatmul.mubr.f32.gmra.mxu0 %v47
  %v563 = vpop.f32.mrf.mxu0
  %v564 = vadd.f32 %v247, %v563
  %v565 = vpop.f32.mrf.mxu0
  %566 = vmatprep.mubr.f32.mxu0 %v51
  %567 = vmatmul.mubr.f32.gmra.mxu0 %v50
  %v568 = vpop.f32.mrf.mxu0
  %v569 = vadd.f32 %v247, %v568
  %v570 = vpop.f32.mrf.mxu0
  %571 = vmatprep.mubr.f32.mxu0 %v54
  %572 = vmatmul.mubr.f32.gmra.mxu0 %v53
  %v573 = vpop.f32.mrf.mxu0
  %v574 = vadd.f32 %v247, %v573
  %v575 = vpop.f32.mrf.mxu0
  %576 = vmatprep.mubr.f32.mxu0 %v57
  %577 = vmatmul.mubr.f32.gmra.mxu0 %v56
  %v578 = vpop.f32.mrf.mxu0
  %v579 = vadd.f32 %v247, %v578
  %v580 = vpop.f32.mrf.mxu0
  %581 = vmatprep.mubr.f32.mxu0 %v60
  %582 = vmatmul.mubr.f32.gmra.mxu0 %v59
  %v583 = vpop.f32.mrf.mxu0
  %v584 = vadd.f32 %v247, %v583
  %v585 = vpop.f32.mrf.mxu0
  %586 = vmatprep.mubr.f32.mxu0 %v63
  %587 = vmatmul.mubr.f32.gmra.mxu0 %v62
  %v588 = vpop.f32.mrf.mxu0
  %v589 = vadd.f32 %v247, %v588
  %v590 = vpop.f32.mrf.mxu0
  %591 = vmatprep.mubr.f32.mxu0 %v66
  %592 = vmatmul.mubr.f32.gmra.mxu0 %v65
  %v593 = vpop.f32.mrf.mxu0
  %v594 = vadd.f32 %v247, %v593
  %v595 = vpop.f32.mrf.mxu0
  %596 = vmatprep.mubr.f32.mxu0 %v69
  %597 = vmatmul.mubr.f32.gmra.mxu0 %v68
  %v598 = vpop.f32.mrf.mxu0
  %v599 = vadd.f32 %v247, %v598
  %v600 = vpop.f32.mrf.mxu0
  %601 = vmatprep.mubr.f32.mxu0 %v72
  %602 = vmatmul.mubr.f32.gmra.mxu0 %v71
  %v603 = vpop.f32.mrf.mxu0
  %v604 = vadd.f32 %v247, %v603
  %v605 = vpop.f32.mrf.mxu0
  %606 = vmatprep.mubr.f32.mxu0 %v75
  %607 = vmatmul.mubr.f32.gmra.mxu0 %v74
  %v608 = vpop.f32.mrf.mxu0
  %v609 = vadd.f32 %v247, %v608
  %v610 = vpop.f32.mrf.mxu0
  %611 = vmatprep.mubr.f32.mxu0 %v78
  %612 = vmatmul.mubr.f32.gmra.mxu0 %v77
  %v613 = vpop.f32.mrf.mxu0
  %v614 = vadd.f32 %v247, %v613
  %v615 = vpop.f32.mrf.mxu0
  %616 = vmatprep.mubr.f32.mxu0 %v81
  %617 = vmatmul.mubr.f32.gmra.mxu0 %v80
  %v618 = vpop.f32.mrf.mxu0
  %v619 = vadd.f32 %v247, %v618
  %v620 = vpop.f32.mrf.mxu0
  %621 = vmatprep.mubr.f32.mxu0 %v84
  %622 = vmatmul.mubr.f32.gmra.mxu0 %v83
  %v623 = vpop.f32.mrf.mxu0
  %v624 = vadd.f32 %v247, %v623
  %v625 = vpop.f32.mrf.mxu0
  %626 = vmatprep.mubr.f32.mxu0 %v87
  %627 = vmatmul.mubr.f32.gmra.mxu0 %v86
  %v628 = vpop.f32.mrf.mxu0
  %v629 = vadd.f32 %v247, %v628
  %v630 = vpop.f32.mrf.mxu0
  %631 = vmatprep.mubr.f32.mxu0 %v90
  %632 = vmatmul.mubr.f32.gmra.mxu0 %v89
  %v633 = vpop.f32.mrf.mxu0
  %v634 = vadd.f32 %v247, %v633
  %v635 = vpop.f32.mrf.mxu0
  %636 = vmatprep.mubr.f32.mxu0 %v93
  %637 = vmatmul.mubr.f32.gmra.mxu0 %v92
  %v638 = vpop.f32.mrf.mxu0
  %v639 = vadd.f32 %v247, %v638
  %v640 = vpop.f32.mrf.mxu0
  %641 = vmatprep.mubr.f32.mxu0 %v96
  %642 = vmatmul.mubr.f32.gmra.mxu0 %v95
  %v643 = vpop.f32.mrf.mxu0
  %v644 = vadd.f32 %v247, %v643
  %v645 = vpop.f32.mrf.mxu0
  %646 = vmatprep.mubr.f32.mxu0 %v99
  %647 = vmatmul.mubr.f32.gmra.mxu0 %v98
  %v648 = vpop.f32.mrf.mxu0
  %v649 = vadd.f32 %v247, %v648
  %v650 = vpop.f32.mrf.mxu0
  %651 = vmatprep.mubr.f32.mxu0 %v102
  %652 = vmatmul.mubr.f32.gmra.mxu0 %v101
  %v653 = vpop.f32.mrf.mxu0
  %v654 = vadd.f32 %v247, %v653
  %v655 = vpop.f32.mrf.mxu0
  %656 = vmatprep.mubr.f32.mxu0 %v105
  %657 = vmatmul.mubr.f32.gmra.mxu0 %v104
  %v658 = vpop.f32.mrf.mxu0
  %v659 = vadd.f32 %v247, %v658
  %v660 = vpop.f32.mrf.mxu0
  %661 = vmatprep.mubr.f32.mxu0 %v108
  %662 = vmatmul.mubr.f32.gmra.mxu0 %v107
  %v663 = vpop.f32.mrf.mxu0
  %v664 = vadd.f32 %v247, %v663
  %v665 = vpop.f32.mrf.mxu0
  %666 = vmatprep.mubr.f32.mxu0 %v111
  %667 = vmatmul.mubr.f32.gmra.mxu0 %v110
  %v668 = vpop.f32.mrf.mxu0
  %v669 = vadd.f32 %v247, %v668
  %v670 = vpop.f32.mrf.mxu0
  %671 = vmatprep.mubr.f32.mxu0 %v114
  %672 = vmatmul.mubr.f32.gmra.mxu0 %v113
  %v673 = vpop.f32.mrf.mxu0
  %v674 = vadd.f32 %v247, %v673
  %v675 = vpop.f32.mrf.mxu0
  %676 = vmatprep.mubr.f32.mxu0 %v117
  %677 = vmatmul.mubr.f32.gmra.mxu0 %v116
  %v678 = vpop.f32.mrf.mxu0
  %v679 = vadd.f32 %v247, %v678
  %v680 = vpop.f32.mrf.mxu0
  %681 = vmatprep.mubr.f32.mxu0 %v120
  %682 = vmatmul.mubr.f32.gmra.mxu0 %v119
  %v683 = vpop.f32.mrf.mxu0
  %v684 = vadd.f32 %v247, %v683
  %v685 = vpop.f32.mrf.mxu0
  %686 = vmatprep.mubr.f32.mxu0 %v123
  %687 = vmatmul.mubr.f32.gmra.mxu0 %v122
  %v688 = vpop.f32.mrf.mxu0
  %v689 = vadd.f32 %v247, %v688
  %v690 = vpop.f32.mrf.mxu0
  %691 = vmatprep.mubr.f32.mxu0 %v126
  %692 = vmatmul.mubr.f32.gmra.mxu0 %v125
  %v693 = vpop.f32.mrf.mxu0
  %v694 = vadd.f32 %v247, %v693
  %v695 = vpop.f32.mrf.mxu0
  %696 = vmatprep.mubr.f32.mxu0 %v129
  %697 = vmatmul.mubr.f32.gmra.mxu0 %v128
  %v698 = vpop.f32.mrf.mxu0
  %v699 = vadd.f32 %v247, %v698
  %v700 = vpop.f32.mrf.mxu0
  %701 = vmatprep.mubr.f32.mxu0 %v132
  %702 = vmatmul.mubr.f32.gmra.mxu0 %v131
  %v703 = vpop.f32.mrf.mxu0
  %v704 = vadd.f32 %v247, %v703
  %v705 = vpop.f32.mrf.mxu0
  %706 = vmatprep.mubr.f32.mxu0 %v135
  %707 = vmatmul.mubr.f32.gmra.mxu0 %v134
  %v708 = vpop.f32.mrf.mxu0
  %v709 = vadd.f32 %v247, %v708
  %v710 = vpop.f32.mrf.mxu0
  %711 = vmatprep.mubr.f32.mxu0 %v138
  %712 = vmatmul.mubr.f32.gmra.mxu0 %v137
  %v713 = vpop.f32.mrf.mxu0
  %v714 = vadd.f32 %v247, %v713
  %v715 = vpop.f32.mrf.mxu0
  %716 = vmatprep.mubr.f32.mxu0 %v141
  %717 = vmatmul.mubr.f32.gmra.mxu0 %v140
  %v718 = vpop.f32.mrf.mxu0
  %v719 = vadd.f32 %v247, %v718
  %v720 = vpop.f32.mrf.mxu0
  %721 = vmatprep.mubr.f32.mxu0 %v144
  %722 = vmatmul.mubr.f32.gmra.mxu0 %v143
  %v723 = vpop.f32.mrf.mxu0
  %v724 = vadd.f32 %v247, %v723
  %v725 = vpop.f32.mrf.mxu0
  %726 = vmatprep.mubr.f32.mxu0 %v147
  %727 = vmatmul.mubr.f32.gmra.mxu0 %v146
  %v728 = vpop.f32.mrf.mxu0
  %v729 = vadd.f32 %v247, %v728
  %v730 = vpop.f32.mrf.mxu0
  %731 = vmatprep.mubr.f32.mxu0 %v150
  %732 = vmatmul.mubr.f32.gmra.mxu0 %v149
  %v733 = vpop.f32.mrf.mxu0
  %v734 = vadd.f32 %v247, %v733
  %v735 = vpop.f32.mrf.mxu0
  %736 = vmatprep.mubr.f32.mxu0 %v153
  %737 = vmatmul.mubr.f32.gmra.mxu0 %v152
  %v738 = vpop.f32.mrf.mxu0
  %v739 = vadd.f32 %v247, %v738
  %v740 = vpop.f32.mrf.mxu0
  %741 = vmatprep.mubr.f32.mxu0 %v156
  %742 = vmatmul.mubr.f32.gmra.mxu0 %v155
  %v743 = vpop.f32.mrf.mxu0
  %v744 = vadd.f32 %v247, %v743
  %v745 = vpop.f32.mrf.mxu0
  %746 = vmatprep.mubr.f32.mxu0 %v159
  %747 = vmatmul.mubr.f32.gmra.mxu0 %v158
  %v748 = vpop.f32.mrf.mxu0
  %v749 = vadd.f32 %v247, %v748
  %v750 = vpop.f32.mrf.mxu0
  %751 = vmatprep.mubr.f32.mxu0 %v162
  %752 = vmatmul.mubr.f32.gmra.mxu0 %v161
  %v753 = vpop.f32.mrf.mxu0
  %v754 = vadd.f32 %v247, %v753
  %v755 = vpop.f32.mrf.mxu0
  %756 = vmatprep.mubr.f32.mxu0 %v165
  %757 = vmatmul.mubr.f32.gmra.mxu0 %v164
  %v758 = vpop.f32.mrf.mxu0
  %v759 = vadd.f32 %v247, %v758
  %v760 = vpop.f32.mrf.mxu0
  %761 = vmatprep.mubr.f32.mxu0 %v168
  %762 = vmatmul.mubr.f32.gmra.mxu0 %v167
  %v763 = vpop.f32.mrf.mxu0
  %v764 = vadd.f32 %v247, %v763
  %v765 = vpop.f32.mrf.mxu0
  %766 = vmatprep.mubr.f32.mxu0 %v171
  %767 = vmatmul.mubr.f32.gmra.mxu0 %v170
  %v768 = vpop.f32.mrf.mxu0
  %v769 = vadd.f32 %v247, %v768
  %v770 = vpop.f32.mrf.mxu0
  %771 = vmatprep.mubr.f32.mxu0 %v174
  %772 = vmatmul.mubr.f32.gmra.mxu0 %v173
  %v773 = vpop.f32.mrf.mxu0
  %v774 = vadd.f32 %v247, %v773
  %v775 = vpop.f32.mrf.mxu0
  %776 = vmatprep.mubr.f32.mxu0 %v177
  %777 = vmatmul.mubr.f32.gmra.mxu0 %v176
  %v778 = vpop.f32.mrf.mxu0
  %v779 = vadd.f32 %v247, %v778
  %v780 = vpop.f32.mrf.mxu0
  %781 = vmatprep.mubr.f32.mxu0 %v180
  %782 = vmatmul.mubr.f32.gmra.mxu0 %v179
  %v783 = vpop.f32.mrf.mxu0
  %v784 = vadd.f32 %v247, %v783
  %v785 = vpop.f32.mrf.mxu0
  %786 = vmatprep.mubr.f32.mxu0 %v183
  %787 = vmatmul.mubr.f32.gmra.mxu0 %v182
  %v788 = vpop.f32.mrf.mxu0
  %v789 = vadd.f32 %v247, %v788
  %v790 = vpop.f32.mrf.mxu0
  %791 = vmatprep.mubr.f32.mxu0 %v186
  %792 = vmatmul.mubr.f32.gmra.mxu0 %v185
  %v793 = vpop.f32.mrf.mxu0
  %v794 = vadd.f32 %v247, %v793
  %v795 = vpop.f32.mrf.mxu0
  %796 = vmatprep.mubr.f32.mxu0 %v189
  %797 = vmatmul.mubr.f32.gmra.mxu0 %v188
  %v798 = vpop.f32.mrf.mxu0
  %v799 = vadd.f32 %v247, %v798
  %v800 = vpop.f32.mrf.mxu0
  %801 = vmatprep.mubr.f32.mxu0 %v192
  %802 = vmatmul.mubr.f32.gmra.mxu0 %v191
  %v803 = vpop.f32.mrf.mxu0
  %v804 = vadd.f32 %v247, %v803
  %v805 = vpop.f32.mrf.mxu0
  %806 = vmatprep.mubr.f32.mxu0 %v195
  %807 = vmatmul.mubr.f32.gmra.mxu0 %v194
  %v808 = vpop.f32.mrf.mxu0
  %v809 = vadd.f32 %v247, %v808
  %v810 = vpop.f32.mrf.mxu0
  %811 = vmatprep.mubr.f32.mxu0 %v198
  %812 = vmatmul.mubr.f32.gmra.mxu0 %v197
  %v813 = vpop.f32.mrf.mxu0
  %v814 = vadd.f32 %v247, %v813
  %v815 = vpop.f32.mrf.mxu0
  %816 = vmatprep.mubr.f32.mxu0 %v201
  %817 = vmatmul.mubr.f32.gmra.mxu0 %v200
  %v818 = vpop.f32.mrf.mxu0
  %v819 = vadd.f32 %v247, %v818
  %v820 = vpop.f32.mrf.mxu0
  %821 = vmatprep.mubr.f32.mxu0 %v204
  %822 = vmatmul.mubr.f32.gmra.mxu0 %v203
  %v823 = vpop.f32.mrf.mxu0
  %v824 = vadd.f32 %v247, %v823
  %v825 = vpop.f32.mrf.mxu0
  %826 = vdwg.mxu0
  %827 = vmatprep.subr.mxu0 0.0
  %828 = vmatpush1.msra.mxu0 0.0
  %829 = vmatprep.subr.mxu0 0.0
  %830 = vmatpush1.msra.mxu0 0.0
  %831 = vmatprep.subr.mxu0 0.0
  %832 = vmatpush1.msra.mxu0 0.0
  %833 = vmatprep.subr.mxu0 0.0
  %834 = vmatpush1.msra.mxu0 0.0
  %835 = vmatprep.subr.mxu0 0.0
  %836 = vmatpush1.msra.mxu0 0.0
  %837 = vmatprep.subr.mxu0 0.0
  %838 = vmatpush1.msra.mxu0 0.0
  %839 = vmatprep.subr.mxu0 0.0
  %840 = vmatpush1.msra.mxu0 0.0
  %841 = vmatprep.subr.mxu0 0.0
  %842 = vmatpush1.msra.mxu0 0.0
  %843 = vmatprep.subr.mxu0 0.0
  %844 = vmatpush1.msra.mxu0 0.0
  %845 = vmatprep.subr.mxu0 0.0
  %846 = vmatpush1.msra.mxu0 0.0
  %847 = vmatprep.subr.mxu0 0.0
  %848 = vmatpush1.msra.mxu0 0.0
  %849 = vmatprep.subr.mxu0 0.0
  %850 = vmatpush1.msra.mxu0 0.0
  %851 = vmatprep.subr.mxu0 0.0
  %852 = vmatpush1.msra.mxu0 %v241
  %853 = vmatprep.subr.mxu0 0.0
  %854 = vmatpush1.msra.mxu0 %v240
  %855 = vmatprep.subr.mxu0 0.0
  %856 = vmatpush1.msra.mxu0 %v239
  %857 = vmatprep.subr.mxu0 0.0
  %858 = vmatpush1.msra.mxu0 %v238
  %859 = vmatprep.subr.mxu0 0.0
  %860 = vmatpush2.msra.mxu0 0.0
  %861 = vmatprep.subr.mxu0 0.0
  %862 = vmatpush2.msra.mxu0 0.0
  %863 = vmatprep.subr.mxu0 0.0
  %864 = vmatpush2.msra.mxu0 0.0
  %865 = vmatprep.subr.mxu0 0.0
  %866 = vmatpush2.msra.mxu0 0.0
  %867 = vmatprep.subr.mxu0 0.0
  %868 = vmatpush2.msra.mxu0 0.0
  %869 = vmatprep.subr.mxu0 0.0
  %870 = vmatpush2.msra.mxu0 0.0
  %871 = vmatprep.subr.mxu0 0.0
  %872 = vmatpush2.msra.mxu0 0.0
  %873 = vmatprep.subr.mxu0 0.0
  %874 = vmatpush2.msra.mxu0 0.0
  %875 = vmatprep.subr.mxu0 0.0
  %876 = vmatpush2.msra.mxu0 0.0
  %877 = vmatprep.subr.mxu0 0.0
  %878 = vmatpush2.msra.mxu0 0.0
  %879 = vmatprep.subr.mxu0 0.0
  %880 = vmatpush2.msra.mxu0 0.0
  %881 = vmatprep.subr.mxu0 0.0
  %882 = vmatpush2.msra.mxu0 0.0
  %883 = vmatprep.subr.mxu0 0.0
  %884 = vmatpush2.msra.mxu0 0.0
  %885 = vmatprep.subr.mxu0 0.0
  %886 = vmatpush2.msra.mxu0 0.0
  %887 = vmatprep.subr.mxu0 0.0
  %888 = vmatpush2.msra.mxu0 0.0
  %889 = vmatprep.subr.mxu0 0.0
  %890 = vmatpush2.msra.mxu0 0.0
  %891 = vmatprep.mubr.f32.mxu0 0.0
  %892 = vmatmul.mubr.f32.gmra.mxu0 %v251
  %v893 = vpop.f32.mrf.mxu0
  %v894 = vadd.f32 %v509, %v893
  %v895 = vpop.f32.mrf.mxu0
  %896 = vmatprep.mubr.f32.mxu0 0.0
  %897 = vmatmul.mubr.f32.gmra.mxu0 %v254
  %v898 = vpop.f32.mrf.mxu0
  %v899 = vadd.f32 %v514, %v898
  %v900 = vpop.f32.mrf.mxu0
  %901 = vmatprep.mubr.f32.mxu0 0.0
  %902 = vmatmul.mubr.f32.gmra.mxu0 %v257
  %v903 = vpop.f32.mrf.mxu0
  %v904 = vadd.f32 %v519, %v903
  %v905 = vpop.f32.mrf.mxu0
  %906 = vmatprep.mubr.f32.mxu0 0.0
  %907 = vmatmul.mubr.f32.gmra.mxu0 %v260
  %v908 = vpop.f32.mrf.mxu0
  %v909 = vadd.f32 %v524, %v908
  %v910 = vpop.f32.mrf.mxu0
  %911 = vmatprep.mubr.f32.mxu0 0.0
  %912 = vmatmul.mubr.f32.gmra.mxu0 %v263
  %v913 = vpop.f32.mrf.mxu0
  %v914 = vadd.f32 %v529, %v913
  %v915 = vpop.f32.mrf.mxu0
  %916 = vmatprep.mubr.f32.mxu0 0.0
  %917 = vmatmul.mubr.f32.gmra.mxu0 %v266
  %v918 = vpop.f32.mrf.mxu0
  %v919 = vadd.f32 %v534, %v918
  %v920 = vpop.f32.mrf.mxu0
  %921 = vmatprep.mubr.f32.mxu0 0.0
  %922 = vmatmul.mubr.f32.gmra.mxu0 %v269
  %v923 = vpop.f32.mrf.mxu0
  %v924 = vadd.f32 %v539, %v923
  %v925 = vpop.f32.mrf.mxu0
  %926 = vmatprep.mubr.f32.mxu0 0.0
  %927 = vmatmul.mubr.f32.gmra.mxu0 %v272
  %v928 = vpop.f32.mrf.mxu0
  %v929 = vadd.f32 %v544, %v928
  %v930 = vpop.f32.mrf.mxu0
  %931 = vmatprep.mubr.f32.mxu0 0.0
  %932 = vmatmul.mubr.f32.gmra.mxu0 %v275
  %v933 = vpop.f32.mrf.mxu0
  %v934 = vadd.f32 %v549, %v933
  %v935 = vpop.f32.mrf.mxu0
  %936 = vmatprep.mubr.f32.mxu0 0.0
  %937 = vmatmul.mubr.f32.gmra.mxu0 %v278
  %v938 = vpop.f32.mrf.mxu0
  %v939 = vadd.f32 %v554, %v938
  %v940 = vpop.f32.mrf.mxu0
  %941 = vmatprep.mubr.f32.mxu0 0.0
  %942 = vmatmul.mubr.f32.gmra.mxu0 %v281
  %v943 = vpop.f32.mrf.mxu0
  %v944 = vadd.f32 %v559, %v943
  %v945 = vpop.f32.mrf.mxu0
  %946 = vmatprep.mubr.f32.mxu0 0.0
  %947 = vmatmul.mubr.f32.gmra.mxu0 %v284
  %v948 = vpop.f32.mrf.mxu0
  %v949 = vadd.f32 %v564, %v948
  %v950 = vpop.f32.mrf.mxu0
  %951 = vmatprep.mubr.f32.mxu0 0.0
  %952 = vmatmul.mubr.f32.gmra.mxu0 %v287
  %v953 = vpop.f32.mrf.mxu0
  %v954 = vadd.f32 %v569, %v953
  %v955 = vpop.f32.mrf.mxu0
  %956 = vmatprep.mubr.f32.mxu0 0.0
  %957 = vmatmul.mubr.f32.gmra.mxu0 %v290
  %v958 = vpop.f32.mrf.mxu0
  %v959 = vadd.f32 %v574, %v958
  %v960 = vpop.f32.mrf.mxu0
  %961 = vmatprep.mubr.f32.mxu0 0.0
  %962 = vmatmul.mubr.f32.gmra.mxu0 %v293
  %v963 = vpop.f32.mrf.mxu0
  %v964 = vadd.f32 %v579, %v963
  %v965 = vpop.f32.mrf.mxu0
  %966 = vmatprep.mubr.f32.mxu0 0.0
  %967 = vmatmul.mubr.f32.gmra.mxu0 %v296
  %v968 = vpop.f32.mrf.mxu0
  %v969 = vadd.f32 %v584, %v968
  %v970 = vpop.f32.mrf.mxu0
  %971 = vmatprep.mubr.f32.mxu0 0.0
  %972 = vmatmul.mubr.f32.gmra.mxu0 %v299
  %v973 = vpop.f32.mrf.mxu0
  %v974 = vadd.f32 %v589, %v973
  %v975 = vpop.f32.mrf.mxu0
  %976 = vmatprep.mubr.f32.mxu0 0.0
  %977 = vmatmul.mubr.f32.gmra.mxu0 %v302
  %v978 = vpop.f32.mrf.mxu0
  %v979 = vadd.f32 %v594, %v978
  %v980 = vpop.f32.mrf.mxu0
  %981 = vmatprep.mubr.f32.mxu0 0.0
  %982 = vmatmul.mubr.f32.gmra.mxu0 %v305
  %v983 = vpop.f32.mrf.mxu0
  %v984 = vadd.f32 %v599, %v983
  %v985 = vpop.f32.mrf.mxu0
  %986 = vmatprep.mubr.f32.mxu0 0.0
  %987 = vmatmul.mubr.f32.gmra.mxu0 %v308
  %v988 = vpop.f32.mrf.mxu0
  %v989 = vadd.f32 %v604, %v988
  %v990 = vpop.f32.mrf.mxu0
  %991 = vmatprep.mubr.f32.mxu0 0.0
  %992 = vmatmul.mubr.f32.gmra.mxu0 %v311
  %v993 = vpop.f32.mrf.mxu0
  %v994 = vadd.f32 %v609, %v993
  %v995 = vpop.f32.mrf.mxu0
  %996 = vmatprep.mubr.f32.mxu0 0.0
  %997 = vmatmul.mubr.f32.gmra.mxu0 %v314
  %v998 = vpop.f32.mrf.mxu0
  %v999 = vadd.f32 %v614, %v998
  %v1000 = vpop.f32.mrf.mxu0
  %1001 = vmatprep.mubr.f32.mxu0 0.0
  %1002 = vmatmul.mubr.f32.gmra.mxu0 %v317
  %v1003 = vpop.f32.mrf.mxu0
  %v1004 = vadd.f32 %v619, %v1003
  %v1005 = vpop.f32.mrf.mxu0
  %1006 = vmatprep.mubr.f32.mxu0 0.0
  %1007 = vmatmul.mubr.f32.gmra.mxu0 %v320
  %v1008 = vpop.f32.mrf.mxu0
  %v1009 = vadd.f32 %v624, %v1008
  %v1010 = vpop.f32.mrf.mxu0
  %1011 = vmatprep.mubr.f32.mxu0 0.0
  %1012 = vmatmul.mubr.f32.gmra.mxu0 %v323
  %v1013 = vpop.f32.mrf.mxu0
  %v1014 = vadd.f32 %v629, %v1013
  %v1015 = vpop.f32.mrf.mxu0
  %1016 = vmatprep.mubr.f32.mxu0 0.0
  %1017 = vmatmul.mubr.f32.gmra.mxu0 %v326
  %v1018 = vpop.f32.mrf.mxu0
  %v1019 = vadd.f32 %v634, %v1018
  %v1020 = vpop.f32.mrf.mxu0
  %1021 = vmatprep.mubr.f32.mxu0 0.0
  %1022 = vmatmul.mubr.f32.gmra.mxu0 %v329
  %v1023 = vpop.f32.mrf.mxu0
  %v1024 = vadd.f32 %v639, %v1023
  %v1025 = vpop.f32.mrf.mxu0
  %1026 = vmatprep.mubr.f32.mxu0 0.0
  %1027 = vmatmul.mubr.f32.gmra.mxu0 %v332
  %v1028 = vpop.f32.mrf.mxu0
  %v1029 = vadd.f32 %v644, %v1028
  %v1030 = vpop.f32.mrf.mxu0
  %1031 = vmatprep.mubr.f32.mxu0 0.0
  %1032 = vmatmul.mubr.f32.gmra.mxu0 %v335
  %v1033 = vpop.f32.mrf.mxu0
  %v1034 = vadd.f32 %v649, %v1033
  %v1035 = vpop.f32.mrf.mxu0
  %1036 = vmatprep.mubr.f32.mxu0 0.0
  %1037 = vmatmul.mubr.f32.gmra.mxu0 %v338
  %v1038 = vpop.f32.mrf.mxu0
  %v1039 = vadd.f32 %v654, %v1038
  %v1040 = vpop.f32.mrf.mxu0
  %1041 = vmatprep.mubr.f32.mxu0 0.0
  %1042 = vmatmul.mubr.f32.gmra.mxu0 %v341
  %v1043 = vpop.f32.mrf.mxu0
  %v1044 = vadd.f32 %v659, %v1043
  %v1045 = vpop.f32.mrf.mxu0
  %1046 = vmatprep.mubr.f32.mxu0 0.0
  %1047 = vmatmul.mubr.f32.gmra.mxu0 %v344
  %v1048 = vpop.f32.mrf.mxu0
  %v1049 = vadd.f32 %v664, %v1048
  %v1050 = vpop.f32.mrf.mxu0
  %1051 = vmatprep.mubr.f32.mxu0 0.0
  %1052 = vmatmul.mubr.f32.gmra.mxu0 %v347
  %v1053 = vpop.f32.mrf.mxu0
  %v1054 = vadd.f32 %v669, %v1053
  %v1055 = vpop.f32.mrf.mxu0
  %1056 = vmatprep.mubr.f32.mxu0 0.0
  %1057 = vmatmul.mubr.f32.gmra.mxu0 %v350
  %v1058 = vpop.f32.mrf.mxu0
  %v1059 = vadd.f32 %v674, %v1058
  %v1060 = vpop.f32.mrf.mxu0
  %1061 = vmatprep.mubr.f32.mxu0 0.0
  %1062 = vmatmul.mubr.f32.gmra.mxu0 %v353
  %v1063 = vpop.f32.mrf.mxu0
  %v1064 = vadd.f32 %v679, %v1063
  %v1065 = vpop.f32.mrf.mxu0
  %1066 = vmatprep.mubr.f32.mxu0 0.0
  %1067 = vmatmul.mubr.f32.gmra.mxu0 %v356
  %v1068 = vpop.f32.mrf.mxu0
  %v1069 = vadd.f32 %v684, %v1068
  %v1070 = vpop.f32.mrf.mxu0
  %1071 = vmatprep.mubr.f32.mxu0 0.0
  %1072 = vmatmul.mubr.f32.gmra.mxu0 %v359
  %v1073 = vpop.f32.mrf.mxu0
  %v1074 = vadd.f32 %v689, %v1073
  %v1075 = vpop.f32.mrf.mxu0
  %1076 = vmatprep.mubr.f32.mxu0 0.0
  %1077 = vmatmul.mubr.f32.gmra.mxu0 %v362
  %v1078 = vpop.f32.mrf.mxu0
  %v1079 = vadd.f32 %v694, %v1078
  %v1080 = vpop.f32.mrf.mxu0
  %1081 = vmatprep.mubr.f32.mxu0 0.0
  %1082 = vmatmul.mubr.f32.gmra.mxu0 %v365
  %v1083 = vpop.f32.mrf.mxu0
  %v1084 = vadd.f32 %v699, %v1083
  %v1085 = vpop.f32.mrf.mxu0
  %1086 = vmatprep.mubr.f32.mxu0 0.0
  %1087 = vmatmul.mubr.f32.gmra.mxu0 %v368
  %v1088 = vpop.f32.mrf.mxu0
  %v1089 = vadd.f32 %v704, %v1088
  %v1090 = vpop.f32.mrf.mxu0
  %1091 = vmatprep.mubr.f32.mxu0 0.0
  %1092 = vmatmul.mubr.f32.gmra.mxu0 %v371
  %v1093 = vpop.f32.mrf.mxu0
  %v1094 = vadd.f32 %v709, %v1093
  %v1095 = vpop.f32.mrf.mxu0
  %1096 = vmatprep.mubr.f32.mxu0 0.0
  %1097 = vmatmul.mubr.f32.gmra.mxu0 %v374
  %v1098 = vpop.f32.mrf.mxu0
  %v1099 = vadd.f32 %v714, %v1098
  %v1100 = vpop.f32.mrf.mxu0
  %1101 = vmatprep.mubr.f32.mxu0 0.0
  %1102 = vmatmul.mubr.f32.gmra.mxu0 %v377
  %v1103 = vpop.f32.mrf.mxu0
  %v1104 = vadd.f32 %v719, %v1103
  %v1105 = vpop.f32.mrf.mxu0
  %1106 = vmatprep.mubr.f32.mxu0 0.0
  %1107 = vmatmul.mubr.f32.gmra.mxu0 %v380
  %v1108 = vpop.f32.mrf.mxu0
  %v1109 = vadd.f32 %v724, %v1108
  %v1110 = vpop.f32.mrf.mxu0
  %1111 = vmatprep.mubr.f32.mxu0 0.0
  %1112 = vmatmul.mubr.f32.gmra.mxu0 %v383
  %v1113 = vpop.f32.mrf.mxu0
  %v1114 = vadd.f32 %v729, %v1113
  %v1115 = vpop.f32.mrf.mxu0
  %1116 = vmatprep.mubr.f32.mxu0 0.0
  %1117 = vmatmul.mubr.f32.gmra.mxu0 %v386
  %v1118 = vpop.f32.mrf.mxu0
  %v1119 = vadd.f32 %v734, %v1118
  %v1120 = vpop.f32.mrf.mxu0
  %1121 = vmatprep.mubr.f32.mxu0 0.0
  %1122 = vmatmul.mubr.f32.gmra.mxu0 %v389
  %v1123 = vpop.f32.mrf.mxu0
  %v1124 = vadd.f32 %v739, %v1123
  %v1125 = vpop.f32.mrf.mxu0
  %1126 = vmatprep.mubr.f32.mxu0 0.0
  %1127 = vmatmul.mubr.f32.gmra.mxu0 %v392
  %v1128 = vpop.f32.mrf.mxu0
  %v1129 = vadd.f32 %v744, %v1128
  %v1130 = vpop.f32.mrf.mxu0
  %1131 = vmatprep.mubr.f32.mxu0 0.0
  %1132 = vmatmul.mubr.f32.gmra.mxu0 %v395
  %v1133 = vpop.f32.mrf.mxu0
  %v1134 = vadd.f32 %v749, %v1133
  %v1135 = vpop.f32.mrf.mxu0
  %1136 = vmatprep.mubr.f32.mxu0 0.0
  %1137 = vmatmul.mubr.f32.gmra.mxu0 %v398
  %v1138 = vpop.f32.mrf.mxu0
  %v1139 = vadd.f32 %v754, %v1138
  %v1140 = vpop.f32.mrf.mxu0
  %1141 = vmatprep.mubr.f32.mxu0 0.0
  %1142 = vmatmul.mubr.f32.gmra.mxu0 %v401
  %v1143 = vpop.f32.mrf.mxu0
  %v1144 = vadd.f32 %v759, %v1143
  %v1145 = vpop.f32.mrf.mxu0
  %1146 = vmatprep.mubr.f32.mxu0 0.0
  %1147 = vmatmul.mubr.f32.gmra.mxu0 %v404
  %v1148 = vpop.f32.mrf.mxu0
  %v1149 = vadd.f32 %v764, %v1148
  %v1150 = vpop.f32.mrf.mxu0
  %1151 = vmatprep.mubr.f32.mxu0 0.0
  %1152 = vmatmul.mubr.f32.gmra.mxu0 %v407
  %v1153 = vpop.f32.mrf.mxu0
  %v1154 = vadd.f32 %v769, %v1153
  %v1155 = vpop.f32.mrf.mxu0
  %1156 = vmatprep.mubr.f32.mxu0 0.0
  %1157 = vmatmul.mubr.f32.gmra.mxu0 %v410
  %v1158 = vpop.f32.mrf.mxu0
  %v1159 = vadd.f32 %v774, %v1158
  %v1160 = vpop.f32.mrf.mxu0
  %1161 = vmatprep.mubr.f32.mxu0 0.0
  %1162 = vmatmul.mubr.f32.gmra.mxu0 %v413
  %v1163 = vpop.f32.mrf.mxu0
  %v1164 = vadd.f32 %v779, %v1163
  %v1165 = vpop.f32.mrf.mxu0
  %1166 = vmatprep.mubr.f32.mxu0 0.0
  %1167 = vmatmul.mubr.f32.gmra.mxu0 %v416
  %v1168 = vpop.f32.mrf.mxu0
  %v1169 = vadd.f32 %v784, %v1168
  %v1170 = vpop.f32.mrf.mxu0
  %1171 = vmatprep.mubr.f32.mxu0 0.0
  %1172 = vmatmul.mubr.f32.gmra.mxu0 %v419
  %v1173 = vpop.f32.mrf.mxu0
  %v1174 = vadd.f32 %v789, %v1173
  %v1175 = vpop.f32.mrf.mxu0
  %1176 = vmatprep.mubr.f32.mxu0 0.0
  %1177 = vmatmul.mubr.f32.gmra.mxu0 %v422
  %v1178 = vpop.f32.mrf.mxu0
  %v1179 = vadd.f32 %v794, %v1178
  %v1180 = vpop.f32.mrf.mxu0
  %1181 = vmatprep.mubr.f32.mxu0 0.0
  %1182 = vmatmul.mubr.f32.gmra.mxu0 %v425
  %v1183 = vpop.f32.mrf.mxu0
  %v1184 = vadd.f32 %v799, %v1183
  %v1185 = vpop.f32.mrf.mxu0
  %1186 = vmatprep.mubr.f32.mxu0 0.0
  %1187 = vmatmul.mubr.f32.gmra.mxu0 %v428
  %v1188 = vpop.f32.mrf.mxu0
  %v1189 = vadd.f32 %v804, %v1188
  %v1190 = vpop.f32.mrf.mxu0
  %1191 = vmatprep.mubr.f32.mxu0 0.0
  %1192 = vmatmul.mubr.f32.gmra.mxu0 %v431
  %v1193 = vpop.f32.mrf.mxu0
  %v1194 = vadd.f32 %v809, %v1193
  %v1195 = vpop.f32.mrf.mxu0
  %1196 = vmatprep.mubr.f32.mxu0 0.0
  %1197 = vmatmul.mubr.f32.gmra.mxu0 %v434
  %v1198 = vpop.f32.mrf.mxu0
  %v1199 = vadd.f32 %v814, %v1198
  %v1200 = vpop.f32.mrf.mxu0
  %1201 = vmatprep.mubr.f32.mxu0 0.0
  %1202 = vmatmul.mubr.f32.gmra.mxu0 %v437
  %v1203 = vpop.f32.mrf.mxu0
  %v1204 = vadd.f32 %v819, %v1203
  %v1205 = vpop.f32.mrf.mxu0
  %1206 = vmatprep.mubr.f32.mxu0 0.0
  %1207 = vmatmul.mubr.f32.gmra.mxu0 %v440
  %v1208 = vpop.f32.mrf.mxu0
  %v1209 = vadd.f32 %v824, %v1208
  %v1210 = vpop.f32.mrf.mxu0
  %1211 = vdwg.mxu0
  %v1212 = vmax.f32 %v894, 0.0
  %v1213 = vmax.f32 %v899, 0.0
  %v1214 = vmax.f32 %v904, 0.0
  %v1215 = vmax.f32 %v909, 0.0
  %v1216 = vmax.f32 %v914, 0.0
  %v1217 = vmax.f32 %v919, 0.0
  %v1218 = vmax.f32 %v924, 0.0
  %v1219 = vmax.f32 %v929, 0.0
  %v1220 = vmax.f32 %v934, 0.0
  %v1221 = vmax.f32 %v939, 0.0
  %v1222 = vmax.f32 %v944, 0.0
  %v1223 = vmax.f32 %v949, 0.0
  %v1224 = vmax.f32 %v954, 0.0
  %v1225 = vmax.f32 %v959, 0.0
  %v1226 = vmax.f32 %v964, 0.0
  %v1227 = vmax.f32 %v969, 0.0
  %v1228 = vmax.f32 %v974, 0.0
  %v1229 = vmax.f32 %v979, 0.0
  %v1230 = vmax.f32 %v984, 0.0
  %v1231 = vmax.f32 %v989, 0.0
  %v1232 = vmax.f32 %v994, 0.0
  %v1233 = vmax.f32 %v999, 0.0
  %v1234 = vmax.f32 %v1004, 0.0
  %v1235 = vmax.f32 %v1009, 0.0
  %v1236 = vmax.f32 %v1014, 0.0
  %v1237 = vmax.f32 %v1019, 0.0
  %v1238 = vmax.f32 %v1024, 0.0
  %v1239 = vmax.f32 %v1029, 0.0
  %v1240 = vmax.f32 %v1034, 0.0
  %v1241 = vmax.f32 %v1039, 0.0
  %v1242 = vmax.f32 %v1044, 0.0
  %v1243 = vmax.f32 %v1049, 0.0
  %v1244 = vmax.f32 %v1054, 0.0
  %v1245 = vmax.f32 %v1059, 0.0
  %v1246 = vmax.f32 %v1064, 0.0
  %v1247 = vmax.f32 %v1069, 0.0
  %v1248 = vmax.f32 %v1074, 0.0
  %v1249 = vmax.f32 %v1079, 0.0
  %v1250 = vmax.f32 %v1084, 0.0
  %v1251 = vmax.f32 %v1089, 0.0
  %v1252 = vmax.f32 %v1094, 0.0
  %v1253 = vmax.f32 %v1099, 0.0
  %v1254 = vmax.f32 %v1104, 0.0
  %v1255 = vmax.f32 %v1109, 0.0
  %v1256 = vmax.f32 %v1114, 0.0
  %v1257 = vmax.f32 %v1119, 0.0
  %v1258 = vmax.f32 %v1124, 0.0
  %v1259 = vmax.f32 %v1129, 0.0
  %v1260 = vmax.f32 %v1134, 0.0
  %v1261 = vmax.f32 %v1139, 0.0
  %v1262 = vmax.f32 %v1144, 0.0
  %v1263 = vmax.f32 %v1149, 0.0
  %v1264 = vmax.f32 %v1154, 0.0
  %v1265 = vmax.f32 %v1159, 0.0
  %v1266 = vmax.f32 %v1164, 0.0
  %v1267 = vmax.f32 %v1169, 0.0
  %v1268 = vmax.f32 %v1174, 0.0
  %v1269 = vmax.f32 %v1179, 0.0
  %v1270 = vmax.f32 %v1184, 0.0
  %v1271 = vmax.f32 %v1189, 0.0
  %v1272 = vmax.f32 %v1194, 0.0
  %v1273 = vmax.f32 %v1199, 0.0
  %v1274 = vmax.f32 %v1204, 0.0
  %v1275 = vmax.f32 %v1209, 0.0
  %vm1276 = vcmask 523264
  %1277 = vst.msk [vmem:[%s3] sm:$0xff] %vm1276, %v1212
  %1278 = vst.msk [vmem:[%s3 + $0x8] sm:$0xff] %vm1276, %v1213
  %1279 = vst.msk [vmem:[%s3 + $0x10] sm:$0xff] %vm1276, %v1214
  %1280 = vst.msk [vmem:[%s3 + $0x18] sm:$0xff] %vm1276, %v1215
  %1281 = vst.msk [vmem:[%s3 + $0x20] sm:$0xff] %vm1276, %v1216
  %1282 = vst.msk [vmem:[%s3 + $0x28] sm:$0xff] %vm1276, %v1217
  %1283 = vst.msk [vmem:[%s3 + $0x30] sm:$0xff] %vm1276, %v1218
  %1284 = vst.msk [vmem:[%s3 + $0x38] sm:$0xff] %vm1276, %v1219
  %1285 = vst.msk [vmem:[%s3 + $0x40] sm:$0xff] %vm1276, %v1220
  %1286 = vst.msk [vmem:[%s3 + $0x48] sm:$0xff] %vm1276, %v1221
  %1287 = vst.msk [vmem:[%s3 + $0x50] sm:$0xff] %vm1276, %v1222
  %1288 = vst.msk [vmem:[%s3 + $0x58] sm:$0xff] %vm1276, %v1223
  %1289 = vst.msk [vmem:[%s3 + $0x60] sm:$0xff] %vm1276, %v1224
  %1290 = vst.msk [vmem:[%s3 + $0x68] sm:$0xff] %vm1276, %v1225
  %1291 = vst.msk [vmem:[%s3 + $0x70] sm:$0xff] %vm1276, %v1226
  %1292 = vst.msk [vmem:[%s3 + $0x78] sm:$0xff] %vm1276, %v1227
  %1293 = vst.msk [vmem:[%s3 + $0x80] sm:$0xff] %vm1276, %v1228
  %1294 = vst.msk [vmem:[%s3 + $0x88] sm:$0xff] %vm1276, %v1229
  %1295 = vst.msk [vmem:[%s3 + $0x90] sm:$0xff] %vm1276, %v1230
  %1296 = vst.msk [vmem:[%s3 + $0x98] sm:$0xff] %vm1276, %v1231
  %1297 = vst.msk [vmem:[%s3 + $0xa0] sm:$0xff] %vm1276, %v1232
  %1298 = vst.msk [vmem:[%s3 + $0xa8] sm:$0xff] %vm1276, %v1233
  %1299 = vst.msk [vmem:[%s3 + $0xb0] sm:$0xff] %vm1276, %v1234
  %1300 = vst.msk [vmem:[%s3 + $0xb8] sm:$0xff] %vm1276, %v1235
  %1301 = vst.msk [vmem:[%s3 + $0xc0] sm:$0xff] %vm1276, %v1236
  %1302 = vst.msk [vmem:[%s3 + $0xc8] sm:$0xff] %vm1276, %v1237
  %1303 = vst.msk [vmem:[%s3 + $0xd0] sm:$0xff] %vm1276, %v1238
  %1304 = vst.msk [vmem:[%s3 + $0xd8] sm:$0xff] %vm1276, %v1239
  %1305 = vst.msk [vmem:[%s3 + $0xe0] sm:$0xff] %vm1276, %v1240
  %1306 = vst.msk [vmem:[%s3 + $0xe8] sm:$0xff] %vm1276, %v1241
  %1307 = vst.msk [vmem:[%s3 + $0xf0] sm:$0xff] %vm1276, %v1242
  %1308 = vst.msk [vmem:[%s3 + $0xf8] sm:$0xff] %vm1276, %v1243
  %1309 = vst.msk [vmem:[%s3 + $0x100] sm:$0xff] %vm1276, %v1244
  %1310 = vst.msk [vmem:[%s3 + $0x108] sm:$0xff] %vm1276, %v1245
  %1311 = vst.msk [vmem:[%s3 + $0x110] sm:$0xff] %vm1276, %v1246
  %1312 = vst.msk [vmem:[%s3 + $0x118] sm:$0xff] %vm1276, %v1247
  %1313 = vst.msk [vmem:[%s3 + $0x120] sm:$0xff] %vm1276, %v1248
  %1314 = vst.msk [vmem:[%s3 + $0x128] sm:$0xff] %vm1276, %v1249
  %1315 = vst.msk [vmem:[%s3 + $0x130] sm:$0xff] %vm1276, %v1250
  %1316 = vst.msk [vmem:[%s3 + $0x138] sm:$0xff] %vm1276, %v1251
  %1317 = vst.msk [vmem:[%s3 + $0x140] sm:$0xff] %vm1276, %v1252
  %1318 = vst.msk [vmem:[%s3 + $0x148] sm:$0xff] %vm1276, %v1253
  %1319 = vst.msk [vmem:[%s3 + $0x150] sm:$0xff] %vm1276, %v1254
  %1320 = vst.msk [vmem:[%s3 + $0x158] sm:$0xff] %vm1276, %v1255
  %1321 = vst.msk [vmem:[%s3 + $0x160] sm:$0xff] %vm1276, %v1256
  %1322 = vst.msk [vmem:[%s3 + $0x168] sm:$0xff] %vm1276, %v1257
  %1323 = vst.msk [vmem:[%s3 + $0x170] sm:$0xff] %vm1276, %v1258
  %1324 = vst.msk [vmem:[%s3 + $0x178] sm:$0xff] %vm1276, %v1259
  %1325 = vst.msk [vmem:[%s3 + $0x180] sm:$0xff] %vm1276, %v1260
  %1326 = vst.msk [vmem:[%s3 + $0x188] sm:$0xff] %vm1276, %v1261
  %1327 = vst.msk [vmem:[%s3 + $0x190] sm:$0xff] %vm1276, %v1262
  %1328 = vst.msk [vmem:[%s3 + $0x198] sm:$0xff] %vm1276, %v1263
  %1329 = vst.msk [vmem:[%s3 + $0x1a0] sm:$0xff] %vm1276, %v1264
  %1330 = vst.msk [vmem:[%s3 + $0x1a8] sm:$0xff] %vm1276, %v1265
  %1331 = vst.msk [vmem:[%s3 + $0x1b0] sm:$0xff] %vm1276, %v1266
  %1332 = vst.msk [vmem:[%s3 + $0x1b8] sm:$0xff] %vm1276, %v1267
  %1333 = vst.msk [vmem:[%s3 + $0x1c0] sm:$0xff] %vm1276, %v1268
  %1334 = vst.msk [vmem:[%s3 + $0x1c8] sm:$0xff] %vm1276, %v1269
  %1335 = vst.msk [vmem:[%s3 + $0x1d0] sm:$0xff] %vm1276, %v1270
  %1336 = vst.msk [vmem:[%s3 + $0x1d8] sm:$0xff] %vm1276, %v1271
  %1337 = vst.msk [vmem:[%s3 + $0x1e0] sm:$0xff] %vm1276, %v1272
  %1338 = vst.msk [vmem:[%s3 + $0x1e8] sm:$0xff] %vm1276, %v1273
  %1339 = vst.msk [vmem:[%s3 + $0x1f0] sm:$0xff] %vm1276, %v1274
  %1340 = vst.msk [vmem:[%s3 + $0x1f8] sm:$0xff] %vm1276, %v1275
  // Predicated region
  $region14: #{forward.4} parent=0 // pred_check
    _
  $region15: #{forward.4} parent=0 // pred_check_branch
    %1342 = sbr.rel (0) target = $region17
  $region16: #{forward.4} parent=0 // pred_region
    _
  $region17: #{forward.4} parent=0 // pred_fallthru
    _
  // Predicated region
  $region18: #{forward.4} parent=0 // pred_check
    _
  $region19: #{forward.4} parent=0 // pred_check_branch
    %1344 = sbr.rel (0) target = $region21
  $region20: #{forward.4} parent=0 // pred_region
    _
  $region21: #{forward.4} parent=0 // pred_fallthru
    _

// kernel: forward.5
$region0: #{forward.5}
  #allocation0 [shape = 'u32[]', space=smem, size = 0x4, offset = 0x4, fixed_abs, tag = 'smem constant byte address 0x4 - core index']
  #allocation1 [shape = 'u32[144,128]{1,0:T(1,128)}', space=vmem, size = 0x12000, scoped, tag = 'internal scratch']
  %s0 = inlined_call_operand.vmem [shape: f32[32,256], index: 0, kind: input, shape index: {}]
  %s1 = inlined_call_operand.vmem [shape: f32[256,128], index: 1, kind: input, shape index: {}]
  %s2 = inlined_call_operand.vmem [shape: f32[1,128], index: 2, kind: input, shape index: {}]
  %s3 = inlined_call_operand.vmem [shape: f32[512,256], index: 3, kind: input, shape index: {}]
  %s4 = inlined_call_operand.vmem [shape: f32[1,256], index: 4, kind: input, shape index: {}]
  %s5 = inlined_call_operand.vmem [shape: f32[1024,512], index: 5, kind: input, shape index: {}]
  %s6 = inlined_call_operand.vmem [shape: f32[1,512], index: 6, kind: input, shape index: {}]
  %s7 = inlined_call_operand.vmem [shape: f32[512,512], index: 7, kind: input, shape index: {}]
  %s8 = inlined_call_operand.vmem [shape: f32[1,512], index: 8, kind: input, shape index: {}]
  %s9 = inlined_call_operand.vmem [shape: f32[512,100], index: 9, kind: input, shape index: {}]
  %s10 = inlined_call_operand.vmem [shape: f32[1,100], index: 10, kind: input, shape index: {}]
  %s11 = inlined_call_operand.hbm [shape: f32[2,100], index: 11, kind: output, shape index: {}]
  %s12 = sld [smem:[#allocation0]]
  $region54: #{forward.5} parent=0
    _
  %s14 = ssub.s32 1, %s12
  %s15 = scalar_select 0, %s14, %s12
  $region1: #{forward.5} parent=0
    #allocation2 [shape = 'u8[1024]{0}', space=vmem, size = 0x400, scoped, tag = 'output window, operand 0, single buffered']
    #allocation3 [shape = 's32[1]{0}', space=sflag, size = 0x4, scoped, tag = 'scoped memory for forward.5']
    %16 = vsyncpa [#allocation3], 0
    // Predicated region
    $region2: #{forward.5} parent=1 // pred_check
      _
    $region3: #{forward.5} parent=1 // pred_check_branch
      %18 = sbr.rel (0) target = $region5
    $region4: #{forward.5} parent=1 // pred_region
      _
    $region5: #{forward.5} parent=1 // pred_fallthru
      _
    // Predicated region
    $region6: #{forward.5} parent=1 // pred_check
      _
    $region7: #{forward.5} parent=1 // pred_check_branch
      %20 = sbr.rel (0) target = $region9
    $region8: #{forward.5} parent=1 // pred_region
      _
    $region9: #{forward.5} parent=1 // pred_fallthru
      _
    // Predicated region
    $region10: #{forward.5} parent=1 // pred_check
      _
    $region11: #{forward.5} parent=1 // pred_check_branch
      %22 = sbr.rel (0) target = $region13
    $region12: #{forward.5} parent=1 // pred_region
      _
    $region13: #{forward.5} parent=1 // pred_fallthru
      _
    // Predicated region
    $region14: #{forward.5} parent=1 // pred_check
      _
    $region15: #{forward.5} parent=1 // pred_check_branch
      %24 = sbr.rel (0) target = $region17
    $region16: #{forward.5} parent=1 // pred_region
      _
    $region17: #{forward.5} parent=1 // pred_fallthru
      _
    // Predicated region
    $region18: #{forward.5} parent=1 // pred_check
      _
    $region19: #{forward.5} parent=1 // pred_check_branch
      %26 = sbr.rel (0) target = $region21
    $region20: #{forward.5} parent=1 // pred_region
      _
    $region21: #{forward.5} parent=1 // pred_fallthru
      _
    // Predicated region
    $region22: #{forward.5} parent=1 // pred_check
      _
    $region23: #{forward.5} parent=1 // pred_check_branch
      %28 = sbr.rel (0) target = $region25
    $region24: #{forward.5} parent=1 // pred_region
      _
    $region25: #{forward.5} parent=1 // pred_fallthru
      _
    // Predicated region
    $region26: #{forward.5} parent=1 // pred_check
      _
    $region27: #{forward.5} parent=1 // pred_check_branch
      %30 = sbr.rel (0) target = $region29
    $region28: #{forward.5} parent=1 // pred_region
      _
    $region29: #{forward.5} parent=1 // pred_fallthru
      _
    // Predicated region
    $region30: #{forward.5} parent=1 // pred_check
      _
    $region31: #{forward.5} parent=1 // pred_check_branch
      %32 = sbr.rel (0) target = $region33
    $region32: #{forward.5} parent=1 // pred_region
      _
    $region33: #{forward.5} parent=1 // pred_fallthru
      _
    // Predicated region
    $region34: #{forward.5} parent=1 // pred_check
      _
    $region35: #{forward.5} parent=1 // pred_check_branch
      %34 = sbr.rel (0) target = $region37
    $region36: #{forward.5} parent=1 // pred_region
      _
    $region37: #{forward.5} parent=1 // pred_fallthru
      _
    // Predicated region
    $region38: #{forward.5} parent=1 // pred_check
      _
    $region39: #{forward.5} parent=1 // pred_check_branch
      %36 = sbr.rel (0) target = $region41
    $region40: #{forward.5} parent=1 // pred_region
      _
    $region41: #{forward.5} parent=1 // pred_fallthru
      _
    // Predicated region
    $region42: #{forward.5} parent=1 // pred_check
      _
    $region43: #{forward.5} parent=1 // pred_check_branch
      %38 = sbr.rel (0) target = $region45
    $region44: #{forward.5} parent=1 // pred_region
      _
    $region45: #{forward.5} parent=1 // pred_fallthru
      _
    %v39 = vld [vmem:[%s0] sm:$0xff]
    %v40 = vld [vmem:[%s0 + $0x8] sm:$0xff]
    %v41 = vld [vmem:[%s0 + $0x10] sm:$0xff]
    %v42 = vld [vmem:[%s0 + $0x18] sm:$0xff]
    %v43 = vld [vmem:[%s0 + $0x20] sm:$0xff]
    %v44 = vld [vmem:[%s0 + $0x28] sm:$0xff]
    %v45 = vld [vmem:[%s0 + $0x30] sm:$0xff]
    %v46 = vld [vmem:[%s0 + $0x38] sm:$0xff]
    %v47 = vld [vmem:[%s1] sm:$0xff]
    %v48 = vld [vmem:[%s1 + $0x8] sm:$0xff]
    %v49 = vld [vmem:[%s1 + $0x10] sm:$0xff]
    %v50 = vld [vmem:[%s1 + $0x18] sm:$0xff]
    %v51 = vld [vmem:[%s1 + $0x20] sm:$0xff]
    %v52 = vld [vmem:[%s1 + $0x28] sm:$0xff]
    %v53 = vld [vmem:[%s1 + $0x30] sm:$0xff]
    %v54 = vld [vmem:[%s1 + $0x38] sm:$0xff]
    %v55 = vld [vmem:[%s1 + $0x40] sm:$0xff]
    %v56 = vld [vmem:[%s1 + $0x48] sm:$0xff]
    %v57 = vld [vmem:[%s1 + $0x50] sm:$0xff]
    %v58 = vld [vmem:[%s1 + $0x58] sm:$0xff]
    %v59 = vld [vmem:[%s1 + $0x60] sm:$0xff]
    %v60 = vld [vmem:[%s1 + $0x68] sm:$0xff]
    %v61 = vld [vmem:[%s1 + $0x70] sm:$0xff]
    %v62 = vld [vmem:[%s1 + $0x78] sm:$0xff]
    %v63 = vld [vmem:[%s1 + $0x80] sm:$0xff]
    %v64 = vld [vmem:[%s1 + $0x88] sm:$0xff]
    %v65 = vld [vmem:[%s1 + $0x90] sm:$0xff]
    %v66 = vld [vmem:[%s1 + $0x98] sm:$0xff]
    %v67 = vld [vmem:[%s1 + $0xa0] sm:$0xff]
    %v68 = vld [vmem:[%s1 + $0xa8] sm:$0xff]
    %v69 = vld [vmem:[%s1 + $0xb0] sm:$0xff]
    %v70 = vld [vmem:[%s1 + $0xb8] sm:$0xff]
    %v71 = vld [vmem:[%s1 + $0xc0] sm:$0xff]
    %v72 = vld [vmem:[%s1 + $0xc8] sm:$0xff]
    %v73 = vld [vmem:[%s1 + $0xd0] sm:$0xff]
    %v74 = vld [vmem:[%s1 + $0xd8] sm:$0xff]
    %v75 = vld [vmem:[%s1 + $0xe0] sm:$0xff]
    %v76 = vld [vmem:[%s1 + $0xe8] sm:$0xff]
    %v77 = vld [vmem:[%s1 + $0xf0] sm:$0xff]
    %v78 = vld [vmem:[%s1 + $0xf8] sm:$0xff]
    %v79 = vld [vmem:[%s2] sm:$0x1]
    %v81 = vlaneseq
    %v82 = vshrl.u32 %v81, 7
    %v83 = vsub.s32 0, %v82
    %v84 = vrot.slane %v79, %v83
    %86 = vmatprep.subr.mxu0 0.0
    %87 = vmatpush1.msra.mxu0 %v62
    %88 = vmatprep.subr.mxu0 0.0
    %89 = vmatpush1.msra.mxu0 %v61
    %90 = vmatprep.subr.mxu0 0.0
    %91 = vmatpush1.msra.mxu0 %v60
    %92 = vmatprep.subr.mxu0 0.0
    %93 = vmatpush1.msra.mxu0 %v59
    %94 = vmatprep.subr.mxu0 0.0
    %95 = vmatpush1.msra.mxu0 %v58
    %96 = vmatprep.subr.mxu0 0.0
    %97 = vmatpush1.msra.mxu0 %v57
    %98 = vmatprep.subr.mxu0 0.0
    %99 = vmatpush1.msra.mxu0 %v56
    %100 = vmatprep.subr.mxu0 0.0
    %101 = vmatpush1.msra.mxu0 %v55
    %102 = vmatprep.subr.mxu0 0.0
    %103 = vmatpush1.msra.mxu0 %v54
    %104 = vmatprep.subr.mxu0 0.0
    %105 = vmatpush1.msra.mxu0 %v53
    %106 = vmatprep.subr.mxu0 0.0
    %107 = vmatpush1.msra.mxu0 %v52
    %108 = vmatprep.subr.mxu0 0.0
    %109 = vmatpush1.msra.mxu0 %v51
    %110 = vmatprep.subr.mxu0 0.0
    %111 = vmatpush1.msra.mxu0 %v50
    %112 = vmatprep.subr.mxu0 0.0
    %113 = vmatpush1.msra.mxu0 %v49
    %114 = vmatprep.subr.mxu0 0.0
    %115 = vmatpush1.msra.mxu0 %v48
    %116 = vmatprep.subr.mxu0 0.0
    %117 = vmatpush1.msra.mxu0 %v47
    %118 = vmatprep.subr.mxu0 0.0
    %119 = vmatpush2.msra.mxu0 %v78
    %120 = vmatprep.subr.mxu0 0.0
    %121 = vmatpush2.msra.mxu0 %v77
    %122 = vmatprep.subr.mxu0 0.0
    %123 = vmatpush2.msra.mxu0 %v76
    %124 = vmatprep.subr.mxu0 0.0
    %125 = vmatpush2.msra.mxu0 %v75
    %126 = vmatprep.subr.mxu0 0.0
    %127 = vmatpush2.msra.mxu0 %v74
    %128 = vmatprep.subr.mxu0 0.0
    %129 = vmatpush2.msra.mxu0 %v73
    %130 = vmatprep.subr.mxu0 0.0
    %131 = vmatpush2.msra.mxu0 %v72
    %132 = vmatprep.subr.mxu0 0.0
    %133 = vmatpush2.msra.mxu0 %v71
    %134 = vmatprep.subr.mxu0 0.0
    %135 = vmatpush2.msra.mxu0 %v70
    %136 = vmatprep.subr.mxu0 0.0
    %137 = vmatpush2.msra.mxu0 %v69
    %138 = vmatprep.subr.mxu0 0.0
    %139 = vmatpush2.msra.mxu0 %v68
    %140 = vmatprep.subr.mxu0 0.0
    %141 = vmatpush2.msra.mxu0 %v67
    %142 = vmatprep.subr.mxu0 0.0
    %143 = vmatpush2.msra.mxu0 %v66
    %144 = vmatprep.subr.mxu0 0.0
    %145 = vmatpush2.msra.mxu0 %v65
    %146 = vmatprep.subr.mxu0 0.0
    %147 = vmatpush2.msra.mxu0 %v64
    %148 = vmatprep.subr.mxu0 0.0
    %149 = vmatpush2.msra.mxu0 %v63
    %150 = vmatprep.mubr.f32.mxu0 %v40
    %151 = vmatmul.mubr.f32.gmra.mxu0 %v39
    %v152 = vpop.f32.mrf.mxu0
    %v153 = vadd.f32 %v84, %v152
    %v154 = vpop.f32.mrf.mxu0
    %155 = vmatprep.mubr.f32.mxu0 %v42
    %156 = vmatmul.mubr.f32.gmra.mxu0 %v41
    %v157 = vpop.f32.mrf.mxu0
    %v158 = vadd.f32 %v84, %v157
    %v159 = vpop.f32.mrf.mxu0
    %160 = vmatprep.mubr.f32.mxu0 %v44
    %161 = vmatmul.mubr.f32.gmra.mxu0 %v43
    %v162 = vpop.f32.mrf.mxu0
    %v163 = vadd.f32 %v84, %v162
    %v164 = vpop.f32.mrf.mxu0
    %165 = vmatprep.mubr.f32.mxu0 %v46
    %166 = vmatmul.mubr.f32.gmra.mxu0 %v45
    %v167 = vpop.f32.mrf.mxu0
    %v168 = vadd.f32 %v84, %v167
    %v169 = vpop.f32.mrf.mxu0
    %170 = vdwg.mxu0
    %v171 = vmax.f32 %v153, 0.0
    %v172 = vmax.f32 %v158, 0.0
    %v173 = vmax.f32 %v163, 0.0
    %v174 = vmax.f32 %v168, 0.0
    %v175 = vld [vmem:[%s3] sm:$0xff]
    %v176 = vld [vmem:[%s3 + $0x8] sm:$0xff]
    %v177 = vld [vmem:[%s3 + $0x10] sm:$0xff]
    %v178 = vld [vmem:[%s3 + $0x18] sm:$0xff]
    %v179 = vld [vmem:[%s3 + $0x20] sm:$0xff]
    %v180 = vld [vmem:[%s3 + $0x28] sm:$0xff]
    %v181 = vld [vmem:[%s3 + $0x30] sm:$0xff]
    %v182 = vld [vmem:[%s3 + $0x38] sm:$0xff]
    %v183 = vld [vmem:[%s3 + $0x40] sm:$0xff]
    %v184 = vld [vmem:[%s3 + $0x48] sm:$0xff]
    %v185 = vld [vmem:[%s3 + $0x50] sm:$0xff]
    %v186 = vld [vmem:[%s3 + $0x58] sm:$0xff]
    %v187 = vld [vmem:[%s3 + $0x60] sm:$0xff]
    %v188 = vld [vmem:[%s3 + $0x68] sm:$0xff]
    %v189 = vld [vmem:[%s3 + $0x70] sm:$0xff]
    %v190 = vld [vmem:[%s3 + $0x78] sm:$0xff]
    %v191 = vld [vmem:[%s3 + $0x80] sm:$0xff]
    %v192 = vld [vmem:[%s3 + $0x88] sm:$0xff]
    %v193 = vld [vmem:[%s3 + $0x90] sm:$0xff]
    %v194 = vld [vmem:[%s3 + $0x98] sm:$0xff]
    %v195 = vld [vmem:[%s3 + $0xa0] sm:$0xff]
    %v196 = vld [vmem:[%s3 + $0xa8] sm:$0xff]
    %v197 = vld [vmem:[%s3 + $0xb0] sm:$0xff]
    %v198 = vld [vmem:[%s3 + $0xb8] sm:$0xff]
    %v199 = vld [vmem:[%s3 + $0xc0] sm:$0xff]
    %v200 = vld [vmem:[%s3 + $0xc8] sm:$0xff]
    %v201 = vld [vmem:[%s3 + $0xd0] sm:$0xff]
    %v202 = vld [vmem:[%s3 + $0xd8] sm:$0xff]
    %v203 = vld [vmem:[%s3 + $0xe0] sm:$0xff]
    %v204 = vld [vmem:[%s3 + $0xe8] sm:$0xff]
    %v205 = vld [vmem:[%s3 + $0xf0] sm:$0xff]
    %v206 = vld [vmem:[%s3 + $0xf8] sm:$0xff]
    %v207 = vld [vmem:[%s3 + $0x100] sm:$0xff]
    %v208 = vld [vmem:[%s3 + $0x108] sm:$0xff]
    %v209 = vld [vmem:[%s3 + $0x110] sm:$0xff]
    %v210 = vld [vmem:[%s3 + $0x118] sm:$0xff]
    %v211 = vld [vmem:[%s3 + $0x120] sm:$0xff]
    %v212 = vld [vmem:[%s3 + $0x128] sm:$0xff]
    %v213 = vld [vmem:[%s3 + $0x130] sm:$0xff]
    %v214 = vld [vmem:[%s3 + $0x138] sm:$0xff]
    %v215 = vld [vmem:[%s3 + $0x140] sm:$0xff]
    %v216 = vld [vmem:[%s3 + $0x148] sm:$0xff]
    %v217 = vld [vmem:[%s3 + $0x150] sm:$0xff]
    %v218 = vld [vmem:[%s3 + $0x158] sm:$0xff]
    %v219 = vld [vmem:[%s3 + $0x160] sm:$0xff]
    %v220 = vld [vmem:[%s3 + $0x168] sm:$0xff]
    %v221 = vld [vmem:[%s3 + $0x170] sm:$0xff]
    %v222 = vld [vmem:[%s3 + $0x178] sm:$0xff]
    %v223 = vld [vmem:[%s3 + $0x180] sm:$0xff]
    %v224 = vld [vmem:[%s3 + $0x188] sm:$0xff]
    %v225 = vld [vmem:[%s3 + $0x190] sm:$0xff]
    %v226 = vld [vmem:[%s3 + $0x198] sm:$0xff]
    %v227 = vld [vmem:[%s3 + $0x1a0] sm:$0xff]
    %v228 = vld [vmem:[%s3 + $0x1a8] sm:$0xff]
    %v229 = vld [vmem:[%s3 + $0x1b0] sm:$0xff]
    %v230 = vld [vmem:[%s3 + $0x1b8] sm:$0xff]
    %v231 = vld [vmem:[%s3 + $0x1c0] sm:$0xff]
    %v232 = vld [vmem:[%s3 + $0x1c8] sm:$0xff]
    %v233 = vld [vmem:[%s3 + $0x1d0] sm:$0xff]
    %v234 = vld [vmem:[%s3 + $0x1d8] sm:$0xff]
    %v235 = vld [vmem:[%s3 + $0x1e0] sm:$0xff]
    %v236 = vld [vmem:[%s3 + $0x1e8] sm:$0xff]
    %v237 = vld [vmem:[%s3 + $0x1f0] sm:$0xff]
    %v238 = vld [vmem:[%s3 + $0x1f8] sm:$0xff]
    %239 = vmatprep.subr.mxu0 %v238
    %240 = vmatpush1.msra.mxu0 %v237
    %241 = vmatprep.subr.mxu0 %v236
    %242 = vmatpush1.msra.mxu0 %v235
    %243 = vmatprep.subr.mxu0 %v234
    %244 = vmatpush1.msra.mxu0 %v233
    %245 = vmatprep.subr.mxu0 %v232
    %246 = vmatpush1.msra.mxu0 %v231
    %247 = vmatprep.subr.mxu0 %v230
    %248 = vmatpush1.msra.mxu0 %v229
    %249 = vmatprep.subr.mxu0 %v228
    %250 = vmatpush1.msra.mxu0 %v227
    %251 = vmatprep.subr.mxu0 %v226
    %252 = vmatpush1.msra.mxu0 %v225
    %253 = vmatprep.subr.mxu0 %v224
    %254 = vmatpush1.msra.mxu0 %v223
    %255 = vmatprep.subr.mxu0 %v222
    %256 = vmatpush1.msra.mxu0 %v221
    %257 = vmatprep.subr.mxu0 %v220
    %258 = vmatpush1.msra.mxu0 %v219
    %259 = vmatprep.subr.mxu0 %v218
    %260 = vmatpush1.msra.mxu0 %v217
    %261 = vmatprep.subr.mxu0 %v216
    %262 = vmatpush1.msra.mxu0 %v215
    %263 = vmatprep.subr.mxu0 %v214
    %264 = vmatpush1.msra.mxu0 %v213
    %265 = vmatprep.subr.mxu0 %v212
    %266 = vmatpush1.msra.mxu0 %v211
    %267 = vmatprep.subr.mxu0 %v210
    %268 = vmatpush1.msra.mxu0 %v209
    %269 = vmatprep.subr.mxu0 %v208
    %270 = vmatpush1.msra.mxu0 %v207
    %271 = vmatprep.subr.mxu0 0.0
    %272 = vmatpush2.msra.mxu0 0.0
    %273 = vmatprep.subr.mxu0 0.0
    %274 = vmatpush2.msra.mxu0 0.0
    %275 = vmatprep.subr.mxu0 0.0
    %276 = vmatpush2.msra.mxu0 0.0
    %277 = vmatprep.subr.mxu0 0.0
    %278 = vmatpush2.msra.mxu0 0.0
    %279 = vmatprep.subr.mxu0 0.0
    %280 = vmatpush2.msra.mxu0 0.0
    %281 = vmatprep.subr.mxu0 0.0
    %282 = vmatpush2.msra.mxu0 0.0
    %283 = vmatprep.subr.mxu0 0.0
    %284 = vmatpush2.msra.mxu0 0.0
    %285 = vmatprep.subr.mxu0 0.0
    %286 = vmatpush2.msra.mxu0 0.0
    %287 = vmatprep.subr.mxu0 0.0
    %288 = vmatpush2.msra.mxu0 0.0
    %289 = vmatprep.subr.mxu0 0.0
    %290 = vmatpush2.msra.mxu0 0.0
    %291 = vmatprep.subr.mxu0 0.0
    %292 = vmatpush2.msra.mxu0 0.0
    %293 = vmatprep.subr.mxu0 0.0
    %294 = vmatpush2.msra.mxu0 0.0
    %295 = vmatprep.subr.mxu0 0.0
    %296 = vmatpush2.msra.mxu0 0.0
    %297 = vmatprep.subr.mxu0 0.0
    %298 = vmatpush2.msra.mxu0 0.0
    %299 = vmatprep.subr.mxu0 0.0
    %300 = vmatpush2.msra.mxu0 0.0
    %301 = vmatprep.subr.mxu0 0.0
    %302 = vmatpush2.msra.mxu0 0.0
    %303 = vmatprep.mubr.f32.mxu0 0.0
    %304 = vmatmul.mubr.f32.gmra.mxu0 %v172
    %v305 = vpop.f32.mrf.mxu0
    %v306 = vadd.f32 0.0, %v305
    %v307 = vpop.f32.mrf.mxu0
    %v308 = vadd.f32 0.0, %v307
    %309 = vdwg.mxu0
    %310 = vmatprep.subr.mxu0 %v206
    %311 = vmatpush1.msra.mxu0 %v205
    %312 = vmatprep.subr.mxu0 %v204
    %313 = vmatpush1.msra.mxu0 %v203
    %314 = vmatprep.subr.mxu0 %v202
    %315 = vmatpush1.msra.mxu0 %v201
    %316 = vmatprep.subr.mxu0 %v200
    %317 = vmatpush1.msra.mxu0 %v199
    %318 = vmatprep.subr.mxu0 %v198
    %319 = vmatpush1.msra.mxu0 %v197
    %320 = vmatprep.subr.mxu0 %v196
    %321 = vmatpush1.msra.mxu0 %v195
    %322 = vmatprep.subr.mxu0 %v194
    %323 = vmatpush1.msra.mxu0 %v193
    %324 = vmatprep.subr.mxu0 %v192
    %325 = vmatpush1.msra.mxu0 %v191
    %326 = vmatprep.subr.mxu0 %v190
    %327 = vmatpush1.msra.mxu0 %v189
    %328 = vmatprep.subr.mxu0 %v188
    %329 = vmatpush1.msra.mxu0 %v187
    %330 = vmatprep.subr.mxu0 %v186
    %331 = vmatpush1.msra.mxu0 %v185
    %332 = vmatprep.subr.mxu0 %v184
    %333 = vmatpush1.msra.mxu0 %v183
    %334 = vmatprep.subr.mxu0 %v182
    %335 = vmatpush1.msra.mxu0 %v181
    %336 = vmatprep.subr.mxu0 %v180
    %337 = vmatpush1.msra.mxu0 %v179
    %338 = vmatprep.subr.mxu0 %v178
    %339 = vmatpush1.msra.mxu0 %v177
    %340 = vmatprep.subr.mxu0 %v176
    %341 = vmatpush1.msra.mxu0 %v175
    %342 = vmatprep.subr.mxu0 0.0
    %343 = vmatpush2.msra.mxu0 0.0
    %344 = vmatprep.subr.mxu0 0.0
    %345 = vmatpush2.msra.mxu0 0.0
    %346 = vmatprep.subr.mxu0 0.0
    %347 = vmatpush2.msra.mxu0 0.0
    %348 = vmatprep.subr.mxu0 0.0
    %349 = vmatpush2.msra.mxu0 0.0
    %350 = vmatprep.subr.mxu0 0.0
    %351 = vmatpush2.msra.mxu0 0.0
    %352 = vmatprep.subr.mxu0 0.0
    %353 = vmatpush2.msra.mxu0 0.0
    %354 = vmatprep.subr.mxu0 0.0
    %355 = vmatpush2.msra.mxu0 0.0
    %356 = vmatprep.subr.mxu0 0.0
    %357 = vmatpush2.msra.mxu0 0.0
    %358 = vmatprep.subr.mxu0 0.0
    %359 = vmatpush2.msra.mxu0 0.0
    %360 = vmatprep.subr.mxu0 0.0
    %361 = vmatpush2.msra.mxu0 0.0
    %362 = vmatprep.subr.mxu0 0.0
    %363 = vmatpush2.msra.mxu0 0.0
    %364 = vmatprep.subr.mxu0 0.0
    %365 = vmatpush2.msra.mxu0 0.0
    %366 = vmatprep.subr.mxu0 0.0
    %367 = vmatpush2.msra.mxu0 0.0
    %368 = vmatprep.subr.mxu0 0.0
    %369 = vmatpush2.msra.mxu0 0.0
    %370 = vmatprep.subr.mxu0 0.0
    %371 = vmatpush2.msra.mxu0 0.0
    %372 = vmatprep.subr.mxu0 0.0
    %373 = vmatpush2.msra.mxu0 0.0
    %374 = vmatprep.mubr.f32.mxu0 0.0
    %375 = vmatmul.mubr.f32.gmra.mxu0 %v171
    %v376 = vpop.f32.mrf.mxu0
    %v377 = vadd.f32 %v306, %v376
    %v378 = vpop.f32.mrf.mxu0
    %v379 = vadd.f32 %v308, %v378
    %380 = vdwg.mxu0
    %v381 = vld [vmem:[%s3 + $0x200] sm:$0xff]
    %v382 = vld [vmem:[%s3 + $0x208] sm:$0xff]
    %v383 = vld [vmem:[%s3 + $0x210] sm:$0xff]
    %v384 = vld [vmem:[%s3 + $0x218] sm:$0xff]
    %v385 = vld [vmem:[%s3 + $0x220] sm:$0xff]
    %v386 = vld [vmem:[%s3 + $0x228] sm:$0xff]
    %v387 = vld [vmem:[%s3 + $0x230] sm:$0xff]
    %v388 = vld [vmem:[%s3 + $0x238] sm:$0xff]
    %v389 = vld [vmem:[%s3 + $0x240] sm:$0xff]
    %v390 = vld [vmem:[%s3 + $0x248] sm:$0xff]
    %v391 = vld [vmem:[%s3 + $0x250] sm:$0xff]
    %v392 = vld [vmem:[%s3 + $0x258] sm:$0xff]
    %v393 = vld [vmem:[%s3 + $0x260] sm:$0xff]
    %v394 = vld [vmem:[%s3 + $0x268] sm:$0xff]
    %v395 = vld [vmem:[%s3 + $0x270] sm:$0xff]
    %v396 = vld [vmem:[%s3 + $0x278] sm:$0xff]
    %v397 = vld [vmem:[%s3 + $0x280] sm:$0xff]
    %v398 = vld [vmem:[%s3 + $0x288] sm:$0xff]
    %v399 = vld [vmem:[%s3 + $0x290] sm:$0xff]
    %v400 = vld [vmem:[%s3 + $0x298] sm:$0xff]
    %v401 = vld [vmem:[%s3 + $0x2a0] sm:$0xff]
    %v402 = vld [vmem:[%s3 + $0x2a8] sm:$0xff]
    %v403 = vld [vmem:[%s3 + $0x2b0] sm:$0xff]
    %v404 = vld [vmem:[%s3 + $0x2b8] sm:$0xff]
    %v405 = vld [vmem:[%s3 + $0x2c0] sm:$0xff]
    %v406 = vld [vmem:[%s3 + $0x2c8] sm:$0xff]
    %v407 = vld [vmem:[%s3 + $0x2d0] sm:$0xff]
    %v408 = vld [vmem:[%s3 + $0x2d8] sm:$0xff]
    %v409 = vld [vmem:[%s3 + $0x2e0] sm:$0xff]
    %v410 = vld [vmem:[%s3 + $0x2e8] sm:$0xff]
    %v411 = vld [vmem:[%s3 + $0x2f0] sm:$0xff]
    %v412 = vld [vmem:[%s3 + $0x2f8] sm:$0xff]
    %413 = vmatprep.subr.mxu0 %v412
    %414 = vmatpush1.msra.mxu0 %v411
    %415 = vmatprep.subr.mxu0 %v410
    %416 = vmatpush1.msra.mxu0 %v409
    %417 = vmatprep.subr.mxu0 %v408
    %418 = vmatpush1.msra.mxu0 %v407
    %419 = vmatprep.subr.mxu0 %v406
    %420 = vmatpush1.msra.mxu0 %v405
    %421 = vmatprep.subr.mxu0 %v404
    %422 = vmatpush1.msra.mxu0 %v403
    %423 = vmatprep.subr.mxu0 %v402
    %424 = vmatpush1.msra.mxu0 %v401
    %425 = vmatprep.subr.mxu0 %v400
    %426 = vmatpush1.msra.mxu0 %v399
    %427 = vmatprep.subr.mxu0 %v398
    %428 = vmatpush1.msra.mxu0 %v397
    %429 = vmatprep.subr.mxu0 %v396
    %430 = vmatpush1.msra.mxu0 %v395
    %431 = vmatprep.subr.mxu0 %v394
    %432 = vmatpush1.msra.mxu0 %v393
    %433 = vmatprep.subr.mxu0 %v392
    %434 = vmatpush1.msra.mxu0 %v391
    %435 = vmatprep.subr.mxu0 %v390
    %436 = vmatpush1.msra.mxu0 %v389
    %437 = vmatprep.subr.mxu0 %v388
    %438 = vmatpush1.msra.mxu0 %v387
    %439 = vmatprep.subr.mxu0 %v386
    %440 = vmatpush1.msra.mxu0 %v385
    %441 = vmatprep.subr.mxu0 %v384
    %442 = vmatpush1.msra.mxu0 %v383
    %443 = vmatprep.subr.mxu0 %v382
    %444 = vmatpush1.msra.mxu0 %v381
    %445 = vmatprep.subr.mxu0 0.0
    %446 = vmatpush2.msra.mxu0 0.0
    %447 = vmatprep.subr.mxu0 0.0
    %448 = vmatpush2.msra.mxu0 0.0
    %449 = vmatprep.subr.mxu0 0.0
    %450 = vmatpush2.msra.mxu0 0.0
    %451 = vmatprep.subr.mxu0 0.0
    %452 = vmatpush2.msra.mxu0 0.0
    %453 = vmatprep.subr.mxu0 0.0
    %454 = vmatpush2.msra.mxu0 0.0
    %455 = vmatprep.subr.mxu0 0.0
    %456 = vmatpush2.msra.mxu0 0.0
    %457 = vmatprep.subr.mxu0 0.0
    %458 = vmatpush2.msra.mxu0 0.0
    %459 = vmatprep.subr.mxu0 0.0
    %460 = vmatpush2.msra.mxu0 0.0
    %461 = vmatprep.subr.mxu0 0.0
    %462 = vmatpush2.msra.mxu0 0.0
    %463 = vmatprep.subr.mxu0 0.0
    %464 = vmatpush2.msra.mxu0 0.0
    %465 = vmatprep.subr.mxu0 0.0
    %466 = vmatpush2.msra.mxu0 0.0
    %467 = vmatprep.subr.mxu0 0.0
    %468 = vmatpush2.msra.mxu0 0.0
    %469 = vmatprep.subr.mxu0 0.0
    %470 = vmatpush2.msra.mxu0 0.0
    %471 = vmatprep.subr.mxu0 0.0
    %472 = vmatpush2.msra.mxu0 0.0
    %473 = vmatprep.subr.mxu0 0.0
    %474 = vmatpush2.msra.mxu0 0.0
    %475 = vmatprep.subr.mxu0 0.0
    %476 = vmatpush2.msra.mxu0 0.0
    %477 = vmatprep.mubr.f32.mxu0 0.0
    %478 = vmatmul.mubr.f32.gmra.mxu0 %v173
    %v479 = vpop.f32.mrf.mxu0
    %v480 = vadd.f32 0.0, %v479
    %v481 = vpop.f32.mrf.mxu0
    %v482 = vadd.f32 0.0, %v481
    %483 = vdwg.mxu0
    %v484 = vadd.f32 %v377, %v480
    %v485 = vadd.f32 %v379, %v482
    %v486 = vld [vmem:[%s3 + $0x300] sm:$0xff]
    %v487 = vld [vmem:[%s3 + $0x308] sm:$0xff]
    %v488 = vld [vmem:[%s3 + $0x310] sm:$0xff]
    %v489 = vld [vmem:[%s3 + $0x318] sm:$0xff]
    %v490 = vld [vmem:[%s3 + $0x320] sm:$0xff]
    %v491 = vld [vmem:[%s3 + $0x328] sm:$0xff]
    %v492 = vld [vmem:[%s3 + $0x330] sm:$0xff]
    %v493 = vld [vmem:[%s3 + $0x338] sm:$0xff]
    %v494 = vld [vmem:[%s3 + $0x340] sm:$0xff]
    %v495 = vld [vmem:[%s3 + $0x348] sm:$0xff]
    %v496 = vld [vmem:[%s3 + $0x350] sm:$0xff]
    %v497 = vld [vmem:[%s3 + $0x358] sm:$0xff]
    %v498 = vld [vmem:[%s3 + $0x360] sm:$0xff]
    %v499 = vld [vmem:[%s3 + $0x368] sm:$0xff]
    %v500 = vld [vmem:[%s3 + $0x370] sm:$0xff]
    %v501 = vld [vmem:[%s3 + $0x378] sm:$0xff]
    %v502 = vld [vmem:[%s3 + $0x380] sm:$0xff]
    %v503 = vld [vmem:[%s3 + $0x388] sm:$0xff]
    %v504 = vld [vmem:[%s3 + $0x390] sm:$0xff]
    %v505 = vld [vmem:[%s3 + $0x398] sm:$0xff]
    %v506 = vld [vmem:[%s3 + $0x3a0] sm:$0xff]
    %v507 = vld [vmem:[%s3 + $0x3a8] sm:$0xff]
    %v508 = vld [vmem:[%s3 + $0x3b0] sm:$0xff]
    %v509 = vld [vmem:[%s3 + $0x3b8] sm:$0xff]
    %v510 = vld [vmem:[%s3 + $0x3c0] sm:$0xff]
    %v511 = vld [vmem:[%s3 + $0x3c8] sm:$0xff]
    %v512 = vld [vmem:[%s3 + $0x3d0] sm:$0xff]
    %v513 = vld [vmem:[%s3 + $0x3d8] sm:$0xff]
    %v514 = vld [vmem:[%s3 + $0x3e0] sm:$0xff]
    %v515 = vld [vmem:[%s3 + $0x3e8] sm:$0xff]
    %v516 = vld [vmem:[%s3 + $0x3f0] sm:$0xff]
    %v517 = vld [vmem:[%s3 + $0x3f8] sm:$0xff]
    %518 = vmatprep.subr.mxu0 %v517
    %519 = vmatpush1.msra.mxu0 %v516
    %520 = vmatprep.subr.mxu0 %v515
    %521 = vmatpush1.msra.mxu0 %v514
    %522 = vmatprep.subr.mxu0 %v513
    %523 = vmatpush1.msra.mxu0 %v512
    %524 = vmatprep.subr.mxu0 %v511
    %525 = vmatpush1.msra.mxu0 %v510
    %526 = vmatprep.subr.mxu0 %v509
    %527 = vmatpush1.msra.mxu0 %v508
    %528 = vmatprep.subr.mxu0 %v507
    %529 = vmatpush1.msra.mxu0 %v506
    %530 = vmatprep.subr.mxu0 %v505
    %531 = vmatpush1.msra.mxu0 %v504
    %532 = vmatprep.subr.mxu0 %v503
    %533 = vmatpush1.msra.mxu0 %v502
    %534 = vmatprep.subr.mxu0 %v501
    %535 = vmatpush1.msra.mxu0 %v500
    %536 = vmatprep.subr.mxu0 %v499
    %537 = vmatpush1.msra.mxu0 %v498
    %538 = vmatprep.subr.mxu0 %v497
    %539 = vmatpush1.msra.mxu0 %v496
    %540 = vmatprep.subr.mxu0 %v495
    %541 = vmatpush1.msra.mxu0 %v494
    %542 = vmatprep.subr.mxu0 %v493
    %543 = vmatpush1.msra.mxu0 %v492
    %544 = vmatprep.subr.mxu0 %v491
    %545 = vmatpush1.msra.mxu0 %v490
    %546 = vmatprep.subr.mxu0 %v489
    %547 = vmatpush1.msra.mxu0 %v488
    %548 = vmatprep.subr.mxu0 %v487
    %549 = vmatpush1.msra.mxu0 %v486
    %550 = vmatprep.subr.mxu0 0.0
    %551 = vmatpush2.msra.mxu0 0.0
    %552 = vmatprep.subr.mxu0 0.0
    %553 = vmatpush2.msra.mxu0 0.0
    %554 = vmatprep.subr.mxu0 0.0
    %555 = vmatpush2.msra.mxu0 0.0
    %556 = vmatprep.subr.mxu0 0.0
    %557 = vmatpush2.msra.mxu0 0.0
    %558 = vmatprep.subr.mxu0 0.0
    %559 = vmatpush2.msra.mxu0 0.0
    %560 = vmatprep.subr.mxu0 0.0
    %561 = vmatpush2.msra.mxu0 0.0
    %562 = vmatprep.subr.mxu0 0.0
    %563 = vmatpush2.msra.mxu0 0.0
    %564 = vmatprep.subr.mxu0 0.0
    %565 = vmatpush2.msra.mxu0 0.0
    %566 = vmatprep.subr.mxu0 0.0
    %567 = vmatpush2.msra.mxu0 0.0
    %568 = vmatprep.subr.mxu0 0.0
    %569 = vmatpush2.msra.mxu0 0.0
    %570 = vmatprep.subr.mxu0 0.0
    %571 = vmatpush2.msra.mxu0 0.0
    %572 = vmatprep.subr.mxu0 0.0
    %573 = vmatpush2.msra.mxu0 0.0
    %574 = vmatprep.subr.mxu0 0.0
    %575 = vmatpush2.msra.mxu0 0.0
    %576 = vmatprep.subr.mxu0 0.0
    %577 = vmatpush2.msra.mxu0 0.0
    %578 = vmatprep.subr.mxu0 0.0
    %579 = vmatpush2.msra.mxu0 0.0
    %580 = vmatprep.subr.mxu0 0.0
    %581 = vmatpush2.msra.mxu0 0.0
    %582 = vmatprep.mubr.f32.mxu0 0.0
    %583 = vmatmul.mubr.f32.gmra.mxu0 %v174
    %v584 = vpop.f32.mrf.mxu0
    %v585 = vadd.f32 0.0, %v584
    %v586 = vpop.f32.mrf.mxu0
    %v587 = vadd.f32 0.0, %v586
    %588 = vdwg.mxu0
    %v589 = vadd.f32 %v484, %v585
    %v590 = vadd.f32 %v485, %v587
    %v591 = vld [vmem:[%s4] sm:$0x3]
    %v593 = vlaneseq
    %v594 = vshrl.u32 %v593, 7
    %v595 = vsub.s32 0, %v594
    %v596 = vrot.slane %v591, %v595
    %v597 = vlaneseq
    %v598 = vshrl.u32 %v597, 7
    %v599 = vsub.s32 1, %v598
    %v600 = vrot.slane %v591, %v599
    %v603 = vadd.f32 %v589, %v596
    %v604 = vadd.f32 %v590, %v600
    %v605 = vmax.f32 %v603, 0.0
    %v606 = vmax.f32 %v604, 0.0
    %v607 = vld [vmem:[%s5] sm:$0xff]
    %v608 = vld [vmem:[%s5 + $0x8] sm:$0xff]
    %v609 = vld [vmem:[%s5 + $0x10] sm:$0xff]
    %v610 = vld [vmem:[%s5 + $0x18] sm:$0xff]
    %v611 = vld [vmem:[%s5 + $0x20] sm:$0xff]
    %v612 = vld [vmem:[%s5 + $0x28] sm:$0xff]
    %v613 = vld [vmem:[%s5 + $0x30] sm:$0xff]
    %v614 = vld [vmem:[%s5 + $0x38] sm:$0xff]
    %v615 = vld [vmem:[%s5 + $0x40] sm:$0xff]
    %v616 = vld [vmem:[%s5 + $0x48] sm:$0xff]
    %v617 = vld [vmem:[%s5 + $0x50] sm:$0xff]
    %v618 = vld [vmem:[%s5 + $0x58] sm:$0xff]
    %v619 = vld [vmem:[%s5 + $0x60] sm:$0xff]
    %v620 = vld [vmem:[%s5 + $0x68] sm:$0xff]
    %v621 = vld [vmem:[%s5 + $0x70] sm:$0xff]
    %v622 = vld [vmem:[%s5 + $0x78] sm:$0xff]
    %v623 = vld [vmem:[%s5 + $0x80] sm:$0xff]
    %v624 = vld [vmem:[%s5 + $0x88] sm:$0xff]
    %v625 = vld [vmem:[%s5 + $0x90] sm:$0xff]
    %v626 = vld [vmem:[%s5 + $0x98] sm:$0xff]
    %v627 = vld [vmem:[%s5 + $0xa0] sm:$0xff]
    %v628 = vld [vmem:[%s5 + $0xa8] sm:$0xff]
    %v629 = vld [vmem:[%s5 + $0xb0] sm:$0xff]
    %v630 = vld [vmem:[%s5 + $0xb8] sm:$0xff]
    %v631 = vld [vmem:[%s5 + $0xc0] sm:$0xff]
    %v632 = vld [vmem:[%s5 + $0xc8] sm:$0xff]
    %v633 = vld [vmem:[%s5 + $0xd0] sm:$0xff]
    %v634 = vld [vmem:[%s5 + $0xd8] sm:$0xff]
    %v635 = vld [vmem:[%s5 + $0xe0] sm:$0xff]
    %v636 = vld [vmem:[%s5 + $0xe8] sm:$0xff]
    %v637 = vld [vmem:[%s5 + $0xf0] sm:$0xff]
    %v638 = vld [vmem:[%s5 + $0xf8] sm:$0xff]
    %v639 = vld [vmem:[%s5 + $0x100] sm:$0xff]
    %v640 = vld [vmem:[%s5 + $0x108] sm:$0xff]
    %v641 = vld [vmem:[%s5 + $0x110] sm:$0xff]
    %v642 = vld [vmem:[%s5 + $0x118] sm:$0xff]
    %v643 = vld [vmem:[%s5 + $0x120] sm:$0xff]
    %v644 = vld [vmem:[%s5 + $0x128] sm:$0xff]
    %v645 = vld [vmem:[%s5 + $0x130] sm:$0xff]
    %v646 = vld [vmem:[%s5 + $0x138] sm:$0xff]
    %v647 = vld [vmem:[%s5 + $0x140] sm:$0xff]
    %v648 = vld [vmem:[%s5 + $0x148] sm:$0xff]
    %v649 = vld [vmem:[%s5 + $0x150] sm:$0xff]
    %v650 = vld [vmem:[%s5 + $0x158] sm:$0xff]
    %v651 = vld [vmem:[%s5 + $0x160] sm:$0xff]
    %v652 = vld [vmem:[%s5 + $0x168] sm:$0xff]
    %v653 = vld [vmem:[%s5 + $0x170] sm:$0xff]
    %v654 = vld [vmem:[%s5 + $0x178] sm:$0xff]
    %v655 = vld [vmem:[%s5 + $0x180] sm:$0xff]
    %v656 = vld [vmem:[%s5 + $0x188] sm:$0xff]
    %v657 = vld [vmem:[%s5 + $0x190] sm:$0xff]
    %v658 = vld [vmem:[%s5 + $0x198] sm:$0xff]
    %v659 = vld [vmem:[%s5 + $0x1a0] sm:$0xff]
    %v660 = vld [vmem:[%s5 + $0x1a8] sm:$0xff]
    %v661 = vld [vmem:[%s5 + $0x1b0] sm:$0xff]
    %v662 = vld [vmem:[%s5 + $0x1b8] sm:$0xff]
    %v663 = vld [vmem:[%s5 + $0x1c0] sm:$0xff]
    %v664 = vld [vmem:[%s5 + $0x1c8] sm:$0xff]
    %v665 = vld [vmem:[%s5 + $0x1d0] sm:$0xff]
    %v666 = vld [vmem:[%s5 + $0x1d8] sm:$0xff]
    %v667 = vld [vmem:[%s5 + $0x1e0] sm:$0xff]
    %v668 = vld [vmem:[%s5 + $0x1e8] sm:$0xff]
    %v669 = vld [vmem:[%s5 + $0x1f0] sm:$0xff]
    %v670 = vld [vmem:[%s5 + $0x1f8] sm:$0xff]
    %v671 = vld [vmem:[%s5 + $0x200] sm:$0xff]
    %v672 = vld [vmem:[%s5 + $0x208] sm:$0xff]
    %v673 = vld [vmem:[%s5 + $0x210] sm:$0xff]
    %v674 = vld [vmem:[%s5 + $0x218] sm:$0xff]
    %v675 = vld [vmem:[%s5 + $0x220] sm:$0xff]
    %v676 = vld [vmem:[%s5 + $0x228] sm:$0xff]
    %v677 = vld [vmem:[%s5 + $0x230] sm:$0xff]
    %v678 = vld [vmem:[%s5 + $0x238] sm:$0xff]
    %v679 = vld [vmem:[%s5 + $0x240] sm:$0xff]
    %v680 = vld [vmem:[%s5 + $0x248] sm:$0xff]
    %v681 = vld [vmem:[%s5 + $0x250] sm:$0xff]
    %v682 = vld [vmem:[%s5 + $0x258] sm:$0xff]
    %v683 = vld [vmem:[%s5 + $0x260] sm:$0xff]
    %v684 = vld [vmem:[%s5 + $0x268] sm:$0xff]
    %v685 = vld [vmem:[%s5 + $0x270] sm:$0xff]
    %v686 = vld [vmem:[%s5 + $0x278] sm:$0xff]
    %v687 = vld [vmem:[%s5 + $0x280] sm:$0xff]
    %v688 = vld [vmem:[%s5 + $0x288] sm:$0xff]
    %v689 = vld [vmem:[%s5 + $0x290] sm:$0xff]
    %v690 = vld [vmem:[%s5 + $0x298] sm:$0xff]
    %v691 = vld [vmem:[%s5 + $0x2a0] sm:$0xff]
    %v692 = vld [vmem:[%s5 + $0x2a8] sm:$0xff]
    %v693 = vld [vmem:[%s5 + $0x2b0] sm:$0xff]
    %v694 = vld [vmem:[%s5 + $0x2b8] sm:$0xff]
    %v695 = vld [vmem:[%s5 + $0x2c0] sm:$0xff]
    %v696 = vld [vmem:[%s5 + $0x2c8] sm:$0xff]
    %v697 = vld [vmem:[%s5 + $0x2d0] sm:$0xff]
    %v698 = vld [vmem:[%s5 + $0x2d8] sm:$0xff]
    %v699 = vld [vmem:[%s5 + $0x2e0] sm:$0xff]
    %v700 = vld [vmem:[%s5 + $0x2e8] sm:$0xff]
    %v701 = vld [vmem:[%s5 + $0x2f0] sm:$0xff]
    %v702 = vld [vmem:[%s5 + $0x2f8] sm:$0xff]
    %v703 = vld [vmem:[%s5 + $0x300] sm:$0xff]
    %v704 = vld [vmem:[%s5 + $0x308] sm:$0xff]
    %v705 = vld [vmem:[%s5 + $0x310] sm:$0xff]
    %v706 = vld [vmem:[%s5 + $0x318] sm:$0xff]
    %v707 = vld [vmem:[%s5 + $0x320] sm:$0xff]
    %v708 = vld [vmem:[%s5 + $0x328] sm:$0xff]
    %v709 = vld [vmem:[%s5 + $0x330] sm:$0xff]
    %v710 = vld [vmem:[%s5 + $0x338] sm:$0xff]
    %v711 = vld [vmem:[%s5 + $0x340] sm:$0xff]
    %v712 = vld [vmem:[%s5 + $0x348] sm:$0xff]
    %v713 = vld [vmem:[%s5 + $0x350] sm:$0xff]
    %v714 = vld [vmem:[%s5 + $0x358] sm:$0xff]
    %v715 = vld [vmem:[%s5 + $0x360] sm:$0xff]
    %v716 = vld [vmem:[%s5 + $0x368] sm:$0xff]
    %v717 = vld [vmem:[%s5 + $0x370] sm:$0xff]
    %v718 = vld [vmem:[%s5 + $0x378] sm:$0xff]
    %v719 = vld [vmem:[%s5 + $0x380] sm:$0xff]
    %v720 = vld [vmem:[%s5 + $0x388] sm:$0xff]
    %v721 = vld [vmem:[%s5 + $0x390] sm:$0xff]
    %v722 = vld [vmem:[%s5 + $0x398] sm:$0xff]
    %v723 = vld [vmem:[%s5 + $0x3a0] sm:$0xff]
    %v724 = vld [vmem:[%s5 + $0x3a8] sm:$0xff]
    %v725 = vld [vmem:[%s5 + $0x3b0] sm:$0xff]
    %v726 = vld [vmem:[%s5 + $0x3b8] sm:$0xff]
    %v727 = vld [vmem:[%s5 + $0x3c0] sm:$0xff]
    %v728 = vld [vmem:[%s5 + $0x3c8] sm:$0xff]
    %v729 = vld [vmem:[%s5 + $0x3d0] sm:$0xff]
    %v730 = vld [vmem:[%s5 + $0x3d8] sm:$0xff]
    %v731 = vld [vmem:[%s5 + $0x3e0] sm:$0xff]
    %v732 = vld [vmem:[%s5 + $0x3e8] sm:$0xff]
    %v733 = vld [vmem:[%s5 + $0x3f0] sm:$0xff]
    %v734 = vld [vmem:[%s5 + $0x3f8] sm:$0xff]
    %v735 = vld [vmem:[%s5 + $0x400] sm:$0xff]
    %v736 = vld [vmem:[%s5 + $0x408] sm:$0xff]
    %v737 = vld [vmem:[%s5 + $0x410] sm:$0xff]
    %v738 = vld [vmem:[%s5 + $0x418] sm:$0xff]
    %v739 = vld [vmem:[%s5 + $0x420] sm:$0xff]
    %v740 = vld [vmem:[%s5 + $0x428] sm:$0xff]
    %v741 = vld [vmem:[%s5 + $0x430] sm:$0xff]
    %v742 = vld [vmem:[%s5 + $0x438] sm:$0xff]
    %v743 = vld [vmem:[%s5 + $0x440] sm:$0xff]
    %v744 = vld [vmem:[%s5 + $0x448] sm:$0xff]
    %v745 = vld [vmem:[%s5 + $0x450] sm:$0xff]
    %v746 = vld [vmem:[%s5 + $0x458] sm:$0xff]
    %v747 = vld [vmem:[%s5 + $0x460] sm:$0xff]
    %v748 = vld [vmem:[%s5 + $0x468] sm:$0xff]
    %v749 = vld [vmem:[%s5 + $0x470] sm:$0xff]
    %v750 = vld [vmem:[%s5 + $0x478] sm:$0xff]
    %v751 = vld [vmem:[%s5 + $0x480] sm:$0xff]
    %v752 = vld [vmem:[%s5 + $0x488] sm:$0xff]
    %v753 = vld [vmem:[%s5 + $0x490] sm:$0xff]
    %v754 = vld [vmem:[%s5 + $0x498] sm:$0xff]
    %v755 = vld [vmem:[%s5 + $0x4a0] sm:$0xff]
    %v756 = vld [vmem:[%s5 + $0x4a8] sm:$0xff]
    %v757 = vld [vmem:[%s5 + $0x4b0] sm:$0xff]
    %v758 = vld [vmem:[%s5 + $0x4b8] sm:$0xff]
    %v759 = vld [vmem:[%s5 + $0x4c0] sm:$0xff]
    %v760 = vld [vmem:[%s5 + $0x4c8] sm:$0xff]
    %v761 = vld [vmem:[%s5 + $0x4d0] sm:$0xff]
    %v762 = vld [vmem:[%s5 + $0x4d8] sm:$0xff]
    %v763 = vld [vmem:[%s5 + $0x4e0] sm:$0xff]
    %v764 = vld [vmem:[%s5 + $0x4e8] sm:$0xff]
    %v765 = vld [vmem:[%s5 + $0x4f0] sm:$0xff]
    %v766 = vld [vmem:[%s5 + $0x4f8] sm:$0xff]
    %v767 = vld [vmem:[%s5 + $0x500] sm:$0xff]
    %v768 = vld [vmem:[%s5 + $0x508] sm:$0xff]
    %v769 = vld [vmem:[%s5 + $0x510] sm:$0xff]
    %v770 = vld [vmem:[%s5 + $0x518] sm:$0xff]
    %v771 = vld [vmem:[%s5 + $0x520] sm:$0xff]
    %v772 = vld [vmem:[%s5 + $0x528] sm:$0xff]
    %v773 = vld [vmem:[%s5 + $0x530] sm:$0xff]
    %v774 = vld [vmem:[%s5 + $0x538] sm:$0xff]
    %v775 = vld [vmem:[%s5 + $0x540] sm:$0xff]
    %v776 = vld [vmem:[%s5 + $0x548] sm:$0xff]
    %v777 = vld [vmem:[%s5 + $0x550] sm:$0xff]
    %v778 = vld [vmem:[%s5 + $0x558] sm:$0xff]
    %v779 = vld [vmem:[%s5 + $0x560] sm:$0xff]
    %v780 = vld [vmem:[%s5 + $0x568] sm:$0xff]
    %v781 = vld [vmem:[%s5 + $0x570] sm:$0xff]
    %v782 = vld [vmem:[%s5 + $0x578] sm:$0xff]
    %v783 = vld [vmem:[%s5 + $0x580] sm:$0xff]
    %v784 = vld [vmem:[%s5 + $0x588] sm:$0xff]
    %v785 = vld [vmem:[%s5 + $0x590] sm:$0xff]
    %v786 = vld [vmem:[%s5 + $0x598] sm:$0xff]
    %v787 = vld [vmem:[%s5 + $0x5a0] sm:$0xff]
    %v788 = vld [vmem:[%s5 + $0x5a8] sm:$0xff]
    %v789 = vld [vmem:[%s5 + $0x5b0] sm:$0xff]
    %v790 = vld [vmem:[%s5 + $0x5b8] sm:$0xff]
    %v791 = vld [vmem:[%s5 + $0x5c0] sm:$0xff]
    %v792 = vld [vmem:[%s5 + $0x5c8] sm:$0xff]
    %v793 = vld [vmem:[%s5 + $0x5d0] sm:$0xff]
    %v794 = vld [vmem:[%s5 + $0x5d8] sm:$0xff]
    %v795 = vld [vmem:[%s5 + $0x5e0] sm:$0xff]
    %v796 = vld [vmem:[%s5 + $0x5e8] sm:$0xff]
    %v797 = vld [vmem:[%s5 + $0x5f0] sm:$0xff]
    %v798 = vld [vmem:[%s5 + $0x5f8] sm:$0xff]
    %v799 = vld [vmem:[%s5 + $0x600] sm:$0xff]
    %v800 = vld [vmem:[%s5 + $0x608] sm:$0xff]
    %v801 = vld [vmem:[%s5 + $0x610] sm:$0xff]
    %v802 = vld [vmem:[%s5 + $0x618] sm:$0xff]
    %v803 = vld [vmem:[%s5 + $0x620] sm:$0xff]
    %v804 = vld [vmem:[%s5 + $0x628] sm:$0xff]
    %v805 = vld [vmem:[%s5 + $0x630] sm:$0xff]
    %v806 = vld [vmem:[%s5 + $0x638] sm:$0xff]
    %v807 = vld [vmem:[%s5 + $0x640] sm:$0xff]
    %v808 = vld [vmem:[%s5 + $0x648] sm:$0xff]
    %v809 = vld [vmem:[%s5 + $0x650] sm:$0xff]
    %v810 = vld [vmem:[%s5 + $0x658] sm:$0xff]
    %v811 = vld [vmem:[%s5 + $0x660] sm:$0xff]
    %v812 = vld [vmem:[%s5 + $0x668] sm:$0xff]
    %v813 = vld [vmem:[%s5 + $0x670] sm:$0xff]
    %v814 = vld [vmem:[%s5 + $0x678] sm:$0xff]
    %v815 = vld [vmem:[%s5 + $0x680] sm:$0xff]
    %v816 = vld [vmem:[%s5 + $0x688] sm:$0xff]
    %v817 = vld [vmem:[%s5 + $0x690] sm:$0xff]
    %v818 = vld [vmem:[%s5 + $0x698] sm:$0xff]
    %v819 = vld [vmem:[%s5 + $0x6a0] sm:$0xff]
    %v820 = vld [vmem:[%s5 + $0x6a8] sm:$0xff]
    %v821 = vld [vmem:[%s5 + $0x6b0] sm:$0xff]
    %v822 = vld [vmem:[%s5 + $0x6b8] sm:$0xff]
    %v823 = vld [vmem:[%s5 + $0x6c0] sm:$0xff]
    %v824 = vld [vmem:[%s5 + $0x6c8] sm:$0xff]
    %v825 = vld [vmem:[%s5 + $0x6d0] sm:$0xff]
    %v826 = vld [vmem:[%s5 + $0x6d8] sm:$0xff]
    %v827 = vld [vmem:[%s5 + $0x6e0] sm:$0xff]
    %v828 = vld [vmem:[%s5 + $0x6e8] sm:$0xff]
    %v829 = vld [vmem:[%s5 + $0x6f0] sm:$0xff]
    %v830 = vld [vmem:[%s5 + $0x6f8] sm:$0xff]
    %v831 = vld [vmem:[%s5 + $0x700] sm:$0xff]
    %v832 = vld [vmem:[%s5 + $0x708] sm:$0xff]
    %v833 = vld [vmem:[%s5 + $0x710] sm:$0xff]
    %v834 = vld [vmem:[%s5 + $0x718] sm:$0xff]
    %v835 = vld [vmem:[%s5 + $0x720] sm:$0xff]
    %v836 = vld [vmem:[%s5 + $0x728] sm:$0xff]
    %v837 = vld [vmem:[%s5 + $0x730] sm:$0xff]
    %v838 = vld [vmem:[%s5 + $0x738] sm:$0xff]
    %v839 = vld [vmem:[%s5 + $0x740] sm:$0xff]
    %v840 = vld [vmem:[%s5 + $0x748] sm:$0xff]
    %v841 = vld [vmem:[%s5 + $0x750] sm:$0xff]
    %v842 = vld [vmem:[%s5 + $0x758] sm:$0xff]
    %v843 = vld [vmem:[%s5 + $0x760] sm:$0xff]
    %v844 = vld [vmem:[%s5 + $0x768] sm:$0xff]
    %v845 = vld [vmem:[%s5 + $0x770] sm:$0xff]
    %v846 = vld [vmem:[%s5 + $0x778] sm:$0xff]
    %v847 = vld [vmem:[%s5 + $0x780] sm:$0xff]
    %v848 = vld [vmem:[%s5 + $0x788] sm:$0xff]
    %v849 = vld [vmem:[%s5 + $0x790] sm:$0xff]
    %v850 = vld [vmem:[%s5 + $0x798] sm:$0xff]
    %v851 = vld [vmem:[%s5 + $0x7a0] sm:$0xff]
    %v852 = vld [vmem:[%s5 + $0x7a8] sm:$0xff]
    %v853 = vld [vmem:[%s5 + $0x7b0] sm:$0xff]
    %v854 = vld [vmem:[%s5 + $0x7b8] sm:$0xff]
    %v855 = vld [vmem:[%s5 + $0x7c0] sm:$0xff]
    %v856 = vld [vmem:[%s5 + $0x7c8] sm:$0xff]
    %v857 = vld [vmem:[%s5 + $0x7d0] sm:$0xff]
    %v858 = vld [vmem:[%s5 + $0x7d8] sm:$0xff]
    %v859 = vld [vmem:[%s5 + $0x7e0] sm:$0xff]
    %v860 = vld [vmem:[%s5 + $0x7e8] sm:$0xff]
    %v861 = vld [vmem:[%s5 + $0x7f0] sm:$0xff]
    %v862 = vld [vmem:[%s5 + $0x7f8] sm:$0xff]
    %v865 = vrot.slane %v605, 2
    %v866 = vrot.slane %v606, 2
    %869 = vmatprep.subr.mxu0 %v796
    %870 = vmatpush1.msra.mxu0 %v795
    %871 = vmatprep.subr.mxu0 %v792
    %872 = vmatpush1.msra.mxu0 %v791
    %873 = vmatprep.subr.mxu0 %v788
    %874 = vmatpush1.msra.mxu0 %v787
    %875 = vmatprep.subr.mxu0 %v784
    %876 = vmatpush1.msra.mxu0 %v783
    %877 = vmatprep.subr.mxu0 %v780
    %878 = vmatpush1.msra.mxu0 %v779
    %879 = vmatprep.subr.mxu0 %v776
    %880 = vmatpush1.msra.mxu0 %v775
    %881 = vmatprep.subr.mxu0 %v772
    %882 = vmatpush1.msra.mxu0 %v771
    %883 = vmatprep.subr.mxu0 %v768
    %884 = vmatpush1.msra.mxu0 %v767
    %885 = vmatprep.subr.mxu0 %v764
    %886 = vmatpush1.msra.mxu0 %v763
    %887 = vmatprep.subr.mxu0 %v760
    %888 = vmatpush1.msra.mxu0 %v759
    %889 = vmatprep.subr.mxu0 %v756
    %890 = vmatpush1.msra.mxu0 %v755
    %891 = vmatprep.subr.mxu0 %v752
    %892 = vmatpush1.msra.mxu0 %v751
    %893 = vmatprep.subr.mxu0 %v748
    %894 = vmatpush1.msra.mxu0 %v747
    %895 = vmatprep.subr.mxu0 %v744
    %896 = vmatpush1.msra.mxu0 %v743
    %897 = vmatprep.subr.mxu0 %v740
    %898 = vmatpush1.msra.mxu0 %v739
    %899 = vmatprep.subr.mxu0 %v736
    %900 = vmatpush1.msra.mxu0 %v735
    %901 = vmatprep.subr.mxu0 %v860
    %902 = vmatpush2.msra.mxu0 %v859
    %903 = vmatprep.subr.mxu0 %v856
    %904 = vmatpush2.msra.mxu0 %v855
    %905 = vmatprep.subr.mxu0 %v852
    %906 = vmatpush2.msra.mxu0 %v851
    %907 = vmatprep.subr.mxu0 %v848
    %908 = vmatpush2.msra.mxu0 %v847
    %909 = vmatprep.subr.mxu0 %v844
    %910 = vmatpush2.msra.mxu0 %v843
    %911 = vmatprep.subr.mxu0 %v840
    %912 = vmatpush2.msra.mxu0 %v839
    %913 = vmatprep.subr.mxu0 %v836
    %914 = vmatpush2.msra.mxu0 %v835
    %915 = vmatprep.subr.mxu0 %v832
    %916 = vmatpush2.msra.mxu0 %v831
    %917 = vmatprep.subr.mxu0 %v828
    %918 = vmatpush2.msra.mxu0 %v827
    %919 = vmatprep.subr.mxu0 %v824
    %920 = vmatpush2.msra.mxu0 %v823
    %921 = vmatprep.subr.mxu0 %v820
    %922 = vmatpush2.msra.mxu0 %v819
    %923 = vmatprep.subr.mxu0 %v816
    %924 = vmatpush2.msra.mxu0 %v815
    %925 = vmatprep.subr.mxu0 %v812
    %926 = vmatpush2.msra.mxu0 %v811
    %927 = vmatprep.subr.mxu0 %v808
    %928 = vmatpush2.msra.mxu0 %v807
    %929 = vmatprep.subr.mxu0 %v804
    %930 = vmatpush2.msra.mxu0 %v803
    %931 = vmatprep.subr.mxu0 %v800
    %932 = vmatpush2.msra.mxu0 %v799
    %933 = vmatprep.mubr.f32.mxu0 %v866
    %934 = vmatmul.mubr.f32.gmra.mxu0 %v865
    %v935 = vpop.f32.mrf.mxu0
    %v936 = vadd.f32 0.0, %v935
    %v937 = vpop.f32.mrf.mxu0
    %v938 = vadd.f32 0.0, %v937
    %939 = vdwg.mxu0
    %940 = vmatprep.subr.mxu0 %v798
    %941 = vmatpush1.msra.mxu0 %v797
    %942 = vmatprep.subr.mxu0 %v794
    %943 = vmatpush1.msra.mxu0 %v793
    %944 = vmatprep.subr.mxu0 %v790
    %945 = vmatpush1.msra.mxu0 %v789
    %946 = vmatprep.subr.mxu0 %v786
    %947 = vmatpush1.msra.mxu0 %v785
    %948 = vmatprep.subr.mxu0 %v782
    %949 = vmatpush1.msra.mxu0 %v781
    %950 = vmatprep.subr.mxu0 %v778
    %951 = vmatpush1.msra.mxu0 %v777
    %952 = vmatprep.subr.mxu0 %v774
    %953 = vmatpush1.msra.mxu0 %v773
    %954 = vmatprep.subr.mxu0 %v770
    %955 = vmatpush1.msra.mxu0 %v769
    %956 = vmatprep.subr.mxu0 %v766
    %957 = vmatpush1.msra.mxu0 %v765
    %958 = vmatprep.subr.mxu0 %v762
    %959 = vmatpush1.msra.mxu0 %v761
    %960 = vmatprep.subr.mxu0 %v758
    %961 = vmatpush1.msra.mxu0 %v757
    %962 = vmatprep.subr.mxu0 %v754
    %963 = vmatpush1.msra.mxu0 %v753
    %964 = vmatprep.subr.mxu0 %v750
    %965 = vmatpush1.msra.mxu0 %v749
    %966 = vmatprep.subr.mxu0 %v746
    %967 = vmatpush1.msra.mxu0 %v745
    %968 = vmatprep.subr.mxu0 %v742
    %969 = vmatpush1.msra.mxu0 %v741
    %970 = vmatprep.subr.mxu0 %v738
    %971 = vmatpush1.msra.mxu0 %v737
    %972 = vmatprep.subr.mxu0 %v862
    %973 = vmatpush2.msra.mxu0 %v861
    %974 = vmatprep.subr.mxu0 %v858
    %975 = vmatpush2.msra.mxu0 %v857
    %976 = vmatprep.subr.mxu0 %v854
    %977 = vmatpush2.msra.mxu0 %v853
    %978 = vmatprep.subr.mxu0 %v850
    %979 = vmatpush2.msra.mxu0 %v849
    %980 = vmatprep.subr.mxu0 %v846
    %981 = vmatpush2.msra.mxu0 %v845
    %982 = vmatprep.subr.mxu0 %v842
    %983 = vmatpush2.msra.mxu0 %v841
    %984 = vmatprep.subr.mxu0 %v838
    %985 = vmatpush2.msra.mxu0 %v837
    %986 = vmatprep.subr.mxu0 %v834
    %987 = vmatpush2.msra.mxu0 %v833
    %988 = vmatprep.subr.mxu0 %v830
    %989 = vmatpush2.msra.mxu0 %v829
    %990 = vmatprep.subr.mxu0 %v826
    %991 = vmatpush2.msra.mxu0 %v825
    %992 = vmatprep.subr.mxu0 %v822
    %993 = vmatpush2.msra.mxu0 %v821
    %994 = vmatprep.subr.mxu0 %v818
    %995 = vmatpush2.msra.mxu0 %v817
    %996 = vmatprep.subr.mxu0 %v814
    %997 = vmatpush2.msra.mxu0 %v813
    %998 = vmatprep.subr.mxu0 %v810
    %999 = vmatpush2.msra.mxu0 %v809
    %1000 = vmatprep.subr.mxu0 %v806
    %1001 = vmatpush2.msra.mxu0 %v805
    %1002 = vmatprep.subr.mxu0 %v802
    %1003 = vmatpush2.msra.mxu0 %v801
    %1004 = vmatprep.mubr.f32.mxu0 %v866
    %1005 = vmatmul.mubr.f32.gmra.mxu0 %v865
    %v1006 = vpop.f32.mrf.mxu0
    %v1007 = vadd.f32 0.0, %v1006
    %v1008 = vpop.f32.mrf.mxu0
    %v1009 = vadd.f32 0.0, %v1008
    %1010 = vdwg.mxu0
    %1011 = vmatprep.subr.mxu0 %v668
    %1012 = vmatpush1.msra.mxu0 %v667
    %1013 = vmatprep.subr.mxu0 %v664
    %1014 = vmatpush1.msra.mxu0 %v663
    %1015 = vmatprep.subr.mxu0 %v660
    %1016 = vmatpush1.msra.mxu0 %v659
    %1017 = vmatprep.subr.mxu0 %v656
    %1018 = vmatpush1.msra.mxu0 %v655
    %1019 = vmatprep.subr.mxu0 %v652
    %1020 = vmatpush1.msra.mxu0 %v651
    %1021 = vmatprep.subr.mxu0 %v648
    %1022 = vmatpush1.msra.mxu0 %v647
    %1023 = vmatprep.subr.mxu0 %v644
    %1024 = vmatpush1.msra.mxu0 %v643
    %1025 = vmatprep.subr.mxu0 %v640
    %1026 = vmatpush1.msra.mxu0 %v639
    %1027 = vmatprep.subr.mxu0 %v636
    %1028 = vmatpush1.msra.mxu0 %v635
    %1029 = vmatprep.subr.mxu0 %v632
    %1030 = vmatpush1.msra.mxu0 %v631
    %1031 = vmatprep.subr.mxu0 %v628
    %1032 = vmatpush1.msra.mxu0 %v627
    %1033 = vmatprep.subr.mxu0 %v624
    %1034 = vmatpush1.msra.mxu0 %v623
    %1035 = vmatprep.subr.mxu0 %v620
    %1036 = vmatpush1.msra.mxu0 %v619
    %1037 = vmatprep.subr.mxu0 %v616
    %1038 = vmatpush1.msra.mxu0 %v615
    %1039 = vmatprep.subr.mxu0 %v612
    %1040 = vmatpush1.msra.mxu0 %v611
    %1041 = vmatprep.subr.mxu0 %v608
    %1042 = vmatpush1.msra.mxu0 %v607
    %1043 = vmatprep.subr.mxu0 %v732
    %1044 = vmatpush2.msra.mxu0 %v731
    %1045 = vmatprep.subr.mxu0 %v728
    %1046 = vmatpush2.msra.mxu0 %v727
    %1047 = vmatprep.subr.mxu0 %v724
    %1048 = vmatpush2.msra.mxu0 %v723
    %1049 = vmatprep.subr.mxu0 %v720
    %1050 = vmatpush2.msra.mxu0 %v719
    %1051 = vmatprep.subr.mxu0 %v716
    %1052 = vmatpush2.msra.mxu0 %v715
    %1053 = vmatprep.subr.mxu0 %v712
    %1054 = vmatpush2.msra.mxu0 %v711
    %1055 = vmatprep.subr.mxu0 %v708
    %1056 = vmatpush2.msra.mxu0 %v707
    %1057 = vmatprep.subr.mxu0 %v704
    %1058 = vmatpush2.msra.mxu0 %v703
    %1059 = vmatprep.subr.mxu0 %v700
    %1060 = vmatpush2.msra.mxu0 %v699
    %1061 = vmatprep.subr.mxu0 %v696
    %1062 = vmatpush2.msra.mxu0 %v695
    %1063 = vmatprep.subr.mxu0 %v692
    %1064 = vmatpush2.msra.mxu0 %v691
    %1065 = vmatprep.subr.mxu0 %v688
    %1066 = vmatpush2.msra.mxu0 %v687
    %1067 = vmatprep.subr.mxu0 %v684
    %1068 = vmatpush2.msra.mxu0 %v683
    %1069 = vmatprep.subr.mxu0 %v680
    %1070 = vmatpush2.msra.mxu0 %v679
    %1071 = vmatprep.subr.mxu0 %v676
    %1072 = vmatpush2.msra.mxu0 %v675
    %1073 = vmatprep.subr.mxu0 %v672
    %1074 = vmatpush2.msra.mxu0 %v671
    %1075 = vmatprep.mubr.f32.mxu0 %v606
    %1076 = vmatmul.mubr.f32.gmra.mxu0 %v605
    %v1077 = vpop.f32.mrf.mxu0
    %v1078 = vadd.f32 %v936, %v1077
    %v1079 = vpop.f32.mrf.mxu0
    %v1080 = vadd.f32 %v938, %v1079
    %1081 = vdwg.mxu0
    %1082 = vmatprep.subr.mxu0 %v670
    %1083 = vmatpush1.msra.mxu0 %v669
    %1084 = vmatprep.subr.mxu0 %v666
    %1085 = vmatpush1.msra.mxu0 %v665
    %1086 = vmatprep.subr.mxu0 %v662
    %1087 = vmatpush1.msra.mxu0 %v661
    %1088 = vmatprep.subr.mxu0 %v658
    %1089 = vmatpush1.msra.mxu0 %v657
    %1090 = vmatprep.subr.mxu0 %v654
    %1091 = vmatpush1.msra.mxu0 %v653
    %1092 = vmatprep.subr.mxu0 %v650
    %1093 = vmatpush1.msra.mxu0 %v649
    %1094 = vmatprep.subr.mxu0 %v646
    %1095 = vmatpush1.msra.mxu0 %v645
    %1096 = vmatprep.subr.mxu0 %v642
    %1097 = vmatpush1.msra.mxu0 %v641
    %1098 = vmatprep.subr.mxu0 %v638
    %1099 = vmatpush1.msra.mxu0 %v637
    %1100 = vmatprep.subr.mxu0 %v634
    %1101 = vmatpush1.msra.mxu0 %v633
    %1102 = vmatprep.subr.mxu0 %v630
    %1103 = vmatpush1.msra.mxu0 %v629
    %1104 = vmatprep.subr.mxu0 %v626
    %1105 = vmatpush1.msra.mxu0 %v625
    %1106 = vmatprep.subr.mxu0 %v622
    %1107 = vmatpush1.msra.mxu0 %v621
    %1108 = vmatprep.subr.mxu0 %v618
    %1109 = vmatpush1.msra.mxu0 %v617
    %1110 = vmatprep.subr.mxu0 %v614
    %1111 = vmatpush1.msra.mxu0 %v613
    %1112 = vmatprep.subr.mxu0 %v610
    %1113 = vmatpush1.msra.mxu0 %v609
    %1114 = vmatprep.subr.mxu0 %v734
    %1115 = vmatpush2.msra.mxu0 %v733
    %1116 = vmatprep.subr.mxu0 %v730
    %1117 = vmatpush2.msra.mxu0 %v729
    %1118 = vmatprep.subr.mxu0 %v726
    %1119 = vmatpush2.msra.mxu0 %v725
    %1120 = vmatprep.subr.mxu0 %v722
    %1121 = vmatpush2.msra.mxu0 %v721
    %1122 = vmatprep.subr.mxu0 %v718
    %1123 = vmatpush2.msra.mxu0 %v717
    %1124 = vmatprep.subr.mxu0 %v714
    %1125 = vmatpush2.msra.mxu0 %v713
    %1126 = vmatprep.subr.mxu0 %v710
    %1127 = vmatpush2.msra.mxu0 %v709
    %1128 = vmatprep.subr.mxu0 %v706
    %1129 = vmatpush2.msra.mxu0 %v705
    %1130 = vmatprep.subr.mxu0 %v702
    %1131 = vmatpush2.msra.mxu0 %v701
    %1132 = vmatprep.subr.mxu0 %v698
    %1133 = vmatpush2.msra.mxu0 %v697
    %1134 = vmatprep.subr.mxu0 %v694
    %1135 = vmatpush2.msra.mxu0 %v693
    %1136 = vmatprep.subr.mxu0 %v690
    %1137 = vmatpush2.msra.mxu0 %v689
    %1138 = vmatprep.subr.mxu0 %v686
    %1139 = vmatpush2.msra.mxu0 %v685
    %1140 = vmatprep.subr.mxu0 %v682
    %1141 = vmatpush2.msra.mxu0 %v681
    %1142 = vmatprep.subr.mxu0 %v678
    %1143 = vmatpush2.msra.mxu0 %v677
    %1144 = vmatprep.subr.mxu0 %v674
    %1145 = vmatpush2.msra.mxu0 %v673
    %1146 = vmatprep.mubr.f32.mxu0 %v606
    %1147 = vmatmul.mubr.f32.gmra.mxu0 %v605
    %v1148 = vpop.f32.mrf.mxu0
    %v1149 = vadd.f32 %v1007, %v1148
    %v1150 = vpop.f32.mrf.mxu0
    %v1151 = vadd.f32 %v1009, %v1150
    %1152 = vdwg.mxu0
    %v1153 = vld [vmem:[%s5 + $0x800] sm:$0xff]
    %v1154 = vld [vmem:[%s5 + $0x808] sm:$0xff]
    %v1155 = vld [vmem:[%s5 + $0x810] sm:$0xff]
    %v1156 = vld [vmem:[%s5 + $0x818] sm:$0xff]
    %v1157 = vld [vmem:[%s5 + $0x820] sm:$0xff]
    %v1158 = vld [vmem:[%s5 + $0x828] sm:$0xff]
    %v1159 = vld [vmem:[%s5 + $0x830] sm:$0xff]
    %v1160 = vld [vmem:[%s5 + $0x838] sm:$0xff]
    %v1161 = vld [vmem:[%s5 + $0x840] sm:$0xff]
    %v1162 = vld [vmem:[%s5 + $0x848] sm:$0xff]
    %v1163 = vld [vmem:[%s5 + $0x850] sm:$0xff]
    %v1164 = vld [vmem:[%s5 + $0x858] sm:$0xff]
    %v1165 = vld [vmem:[%s5 + $0x860] sm:$0xff]
    %v1166 = vld [vmem:[%s5 + $0x868] sm:$0xff]
    %v1167 = vld [vmem:[%s5 + $0x870] sm:$0xff]
    %v1168 = vld [vmem:[%s5 + $0x878] sm:$0xff]
    %v1169 = vld [vmem:[%s5 + $0x880] sm:$0xff]
    %v1170 = vld [vmem:[%s5 + $0x888] sm:$0xff]
    %v1171 = vld [vmem:[%s5 + $0x890] sm:$0xff]
    %v1172 = vld [vmem:[%s5 + $0x898] sm:$0xff]
    %v1173 = vld [vmem:[%s5 + $0x8a0] sm:$0xff]
    %v1174 = vld [vmem:[%s5 + $0x8a8] sm:$0xff]
    %v1175 = vld [vmem:[%s5 + $0x8b0] sm:$0xff]
    %v1176 = vld [vmem:[%s5 + $0x8b8] sm:$0xff]
    %v1177 = vld [vmem:[%s5 + $0x8c0] sm:$0xff]
    %v1178 = vld [vmem:[%s5 + $0x8c8] sm:$0xff]
    %v1179 = vld [vmem:[%s5 + $0x8d0] sm:$0xff]
    %v1180 = vld [vmem:[%s5 + $0x8d8] sm:$0xff]
    %v1181 = vld [vmem:[%s5 + $0x8e0] sm:$0xff]
    %v1182 = vld [vmem:[%s5 + $0x8e8] sm:$0xff]
    %v1183 = vld [vmem:[%s5 + $0x8f0] sm:$0xff]
    %v1184 = vld [vmem:[%s5 + $0x8f8] sm:$0xff]
    %v1185 = vld [vmem:[%s5 + $0x900] sm:$0xff]
    %v1186 = vld [vmem:[%s5 + $0x908] sm:$0xff]
    %v1187 = vld [vmem:[%s5 + $0x910] sm:$0xff]
    %v1188 = vld [vmem:[%s5 + $0x918] sm:$0xff]
    %v1189 = vld [vmem:[%s5 + $0x920] sm:$0xff]
    %v1190 = vld [vmem:[%s5 + $0x928] sm:$0xff]
    %v1191 = vld [vmem:[%s5 + $0x930] sm:$0xff]
    %v1192 = vld [vmem:[%s5 + $0x938] sm:$0xff]
    %v1193 = vld [vmem:[%s5 + $0x940] sm:$0xff]
    %v1194 = vld [vmem:[%s5 + $0x948] sm:$0xff]
    %v1195 = vld [vmem:[%s5 + $0x950] sm:$0xff]
    %v1196 = vld [vmem:[%s5 + $0x958] sm:$0xff]
    %v1197 = vld [vmem:[%s5 + $0x960] sm:$0xff]
    %v1198 = vld [vmem:[%s5 + $0x968] sm:$0xff]
    %v1199 = vld [vmem:[%s5 + $0x970] sm:$0xff]
    %v1200 = vld [vmem:[%s5 + $0x978] sm:$0xff]
    %v1201 = vld [vmem:[%s5 + $0x980] sm:$0xff]
    %v1202 = vld [vmem:[%s5 + $0x988] sm:$0xff]
    %v1203 = vld [vmem:[%s5 + $0x990] sm:$0xff]
    %v1204 = vld [vmem:[%s5 + $0x998] sm:$0xff]
    %v1205 = vld [vmem:[%s5 + $0x9a0] sm:$0xff]
    %v1206 = vld [vmem:[%s5 + $0x9a8] sm:$0xff]
    %v1207 = vld [vmem:[%s5 + $0x9b0] sm:$0xff]
    %v1208 = vld [vmem:[%s5 + $0x9b8] sm:$0xff]
    %v1209 = vld [vmem:[%s5 + $0x9c0] sm:$0xff]
    %v1210 = vld [vmem:[%s5 + $0x9c8] sm:$0xff]
    %v1211 = vld [vmem:[%s5 + $0x9d0] sm:$0xff]
    %v1212 = vld [vmem:[%s5 + $0x9d8] sm:$0xff]
    %v1213 = vld [vmem:[%s5 + $0x9e0] sm:$0xff]
    %v1214 = vld [vmem:[%s5 + $0x9e8] sm:$0xff]
    %v1215 = vld [vmem:[%s5 + $0x9f0] sm:$0xff]
    %v1216 = vld [vmem:[%s5 + $0x9f8] sm:$0xff]
    %v1217 = vld [vmem:[%s5 + $0xa00] sm:$0xff]
    %v1218 = vld [vmem:[%s5 + $0xa08] sm:$0xff]
    %v1219 = vld [vmem:[%s5 + $0xa10] sm:$0xff]
    %v1220 = vld [vmem:[%s5 + $0xa18] sm:$0xff]
    %v1221 = vld [vmem:[%s5 + $0xa20] sm:$0xff]
    %v1222 = vld [vmem:[%s5 + $0xa28] sm:$0xff]
    %v1223 = vld [vmem:[%s5 + $0xa30] sm:$0xff]
    %v1224 = vld [vmem:[%s5 + $0xa38] sm:$0xff]
    %v1225 = vld [vmem:[%s5 + $0xa40] sm:$0xff]
    %v1226 = vld [vmem:[%s5 + $0xa48] sm:$0xff]
    %v1227 = vld [vmem:[%s5 + $0xa50] sm:$0xff]
    %v1228 = vld [vmem:[%s5 + $0xa58] sm:$0xff]
    %v1229 = vld [vmem:[%s5 + $0xa60] sm:$0xff]
    %v1230 = vld [vmem:[%s5 + $0xa68] sm:$0xff]
    %v1231 = vld [vmem:[%s5 + $0xa70] sm:$0xff]
    %v1232 = vld [vmem:[%s5 + $0xa78] sm:$0xff]
    %v1233 = vld [vmem:[%s5 + $0xa80] sm:$0xff]
    %v1234 = vld [vmem:[%s5 + $0xa88] sm:$0xff]
    %v1235 = vld [vmem:[%s5 + $0xa90] sm:$0xff]
    %v1236 = vld [vmem:[%s5 + $0xa98] sm:$0xff]
    %v1237 = vld [vmem:[%s5 + $0xaa0] sm:$0xff]
    %v1238 = vld [vmem:[%s5 + $0xaa8] sm:$0xff]
    %v1239 = vld [vmem:[%s5 + $0xab0] sm:$0xff]
    %v1240 = vld [vmem:[%s5 + $0xab8] sm:$0xff]
    %v1241 = vld [vmem:[%s5 + $0xac0] sm:$0xff]
    %v1242 = vld [vmem:[%s5 + $0xac8] sm:$0xff]
    %v1243 = vld [vmem:[%s5 + $0xad0] sm:$0xff]
    %v1244 = vld [vmem:[%s5 + $0xad8] sm:$0xff]
    %v1245 = vld [vmem:[%s5 + $0xae0] sm:$0xff]
    %v1246 = vld [vmem:[%s5 + $0xae8] sm:$0xff]
    %v1247 = vld [vmem:[%s5 + $0xaf0] sm:$0xff]
    %v1248 = vld [vmem:[%s5 + $0xaf8] sm:$0xff]
    %v1249 = vld [vmem:[%s5 + $0xb00] sm:$0xff]
    %v1250 = vld [vmem:[%s5 + $0xb08] sm:$0xff]
    %v1251 = vld [vmem:[%s5 + $0xb10] sm:$0xff]
    %v1252 = vld [vmem:[%s5 + $0xb18] sm:$0xff]
    %v1253 = vld [vmem:[%s5 + $0xb20] sm:$0xff]
    %v1254 = vld [vmem:[%s5 + $0xb28] sm:$0xff]
    %v1255 = vld [vmem:[%s5 + $0xb30] sm:$0xff]
    %v1256 = vld [vmem:[%s5 + $0xb38] sm:$0xff]
    %v1257 = vld [vmem:[%s5 + $0xb40] sm:$0xff]
    %v1258 = vld [vmem:[%s5 + $0xb48] sm:$0xff]
    %v1259 = vld [vmem:[%s5 + $0xb50] sm:$0xff]
    %v1260 = vld [vmem:[%s5 + $0xb58] sm:$0xff]
    %v1261 = vld [vmem:[%s5 + $0xb60] sm:$0xff]
    %v1262 = vld [vmem:[%s5 + $0xb68] sm:$0xff]
    %v1263 = vld [vmem:[%s5 + $0xb70] sm:$0xff]
    %v1264 = vld [vmem:[%s5 + $0xb78] sm:$0xff]
    %v1265 = vld [vmem:[%s5 + $0xb80] sm:$0xff]
    %v1266 = vld [vmem:[%s5 + $0xb88] sm:$0xff]
    %v1267 = vld [vmem:[%s5 + $0xb90] sm:$0xff]
    %v1268 = vld [vmem:[%s5 + $0xb98] sm:$0xff]
    %v1269 = vld [vmem:[%s5 + $0xba0] sm:$0xff]
    %v1270 = vld [vmem:[%s5 + $0xba8] sm:$0xff]
    %v1271 = vld [vmem:[%s5 + $0xbb0] sm:$0xff]
    %v1272 = vld [vmem:[%s5 + $0xbb8] sm:$0xff]
    %v1273 = vld [vmem:[%s5 + $0xbc0] sm:$0xff]
    %v1274 = vld [vmem:[%s5 + $0xbc8] sm:$0xff]
    %v1275 = vld [vmem:[%s5 + $0xbd0] sm:$0xff]
    %v1276 = vld [vmem:[%s5 + $0xbd8] sm:$0xff]
    %v1277 = vld [vmem:[%s5 + $0xbe0] sm:$0xff]
    %v1278 = vld [vmem:[%s5 + $0xbe8] sm:$0xff]
    %v1279 = vld [vmem:[%s5 + $0xbf0] sm:$0xff]
    %v1280 = vld [vmem:[%s5 + $0xbf8] sm:$0xff]
    %v1281 = vrot.slane %v605, 4
    %v1282 = vrot.slane %v606, 4
    %1285 = vmatprep.subr.mxu0 %v1214
    %1286 = vmatpush1.msra.mxu0 %v1213
    %1287 = vmatprep.subr.mxu0 %v1210
    %1288 = vmatpush1.msra.mxu0 %v1209
    %1289 = vmatprep.subr.mxu0 %v1206
    %1290 = vmatpush1.msra.mxu0 %v1205
    %1291 = vmatprep.subr.mxu0 %v1202
    %1292 = vmatpush1.msra.mxu0 %v1201
    %1293 = vmatprep.subr.mxu0 %v1198
    %1294 = vmatpush1.msra.mxu0 %v1197
    %1295 = vmatprep.subr.mxu0 %v1194
    %1296 = vmatpush1.msra.mxu0 %v1193
    %1297 = vmatprep.subr.mxu0 %v1190
    %1298 = vmatpush1.msra.mxu0 %v1189
    %1299 = vmatprep.subr.mxu0 %v1186
    %1300 = vmatpush1.msra.mxu0 %v1185
    %1301 = vmatprep.subr.mxu0 %v1182
    %1302 = vmatpush1.msra.mxu0 %v1181
    %1303 = vmatprep.subr.mxu0 %v1178
    %1304 = vmatpush1.msra.mxu0 %v1177
    %1305 = vmatprep.subr.mxu0 %v1174
    %1306 = vmatpush1.msra.mxu0 %v1173
    %1307 = vmatprep.subr.mxu0 %v1170
    %1308 = vmatpush1.msra.mxu0 %v1169
    %1309 = vmatprep.subr.mxu0 %v1166
    %1310 = vmatpush1.msra.mxu0 %v1165
    %1311 = vmatprep.subr.mxu0 %v1162
    %1312 = vmatpush1.msra.mxu0 %v1161
    %1313 = vmatprep.subr.mxu0 %v1158
    %1314 = vmatpush1.msra.mxu0 %v1157
    %1315 = vmatprep.subr.mxu0 %v1154
    %1316 = vmatpush1.msra.mxu0 %v1153
    %1317 = vmatprep.subr.mxu0 %v1278
    %1318 = vmatpush2.msra.mxu0 %v1277
    %1319 = vmatprep.subr.mxu0 %v1274
    %1320 = vmatpush2.msra.mxu0 %v1273
    %1321 = vmatprep.subr.mxu0 %v1270
    %1322 = vmatpush2.msra.mxu0 %v1269
    %1323 = vmatprep.subr.mxu0 %v1266
    %1324 = vmatpush2.msra.mxu0 %v1265
    %1325 = vmatprep.subr.mxu0 %v1262
    %1326 = vmatpush2.msra.mxu0 %v1261
    %1327 = vmatprep.subr.mxu0 %v1258
    %1328 = vmatpush2.msra.mxu0 %v1257
    %1329 = vmatprep.subr.mxu0 %v1254
    %1330 = vmatpush2.msra.mxu0 %v1253
    %1331 = vmatprep.subr.mxu0 %v1250
    %1332 = vmatpush2.msra.mxu0 %v1249
    %1333 = vmatprep.subr.mxu0 %v1246
    %1334 = vmatpush2.msra.mxu0 %v1245
    %1335 = vmatprep.subr.mxu0 %v1242
    %1336 = vmatpush2.msra.mxu0 %v1241
    %1337 = vmatprep.subr.mxu0 %v1238
    %1338 = vmatpush2.msra.mxu0 %v1237
    %1339 = vmatprep.subr.mxu0 %v1234
    %1340 = vmatpush2.msra.mxu0 %v1233
    %1341 = vmatprep.subr.mxu0 %v1230
    %1342 = vmatpush2.msra.mxu0 %v1229
    %1343 = vmatprep.subr.mxu0 %v1226
    %1344 = vmatpush2.msra.mxu0 %v1225
    %1345 = vmatprep.subr.mxu0 %v1222
    %1346 = vmatpush2.msra.mxu0 %v1221
    %1347 = vmatprep.subr.mxu0 %v1218
    %1348 = vmatpush2.msra.mxu0 %v1217
    %1349 = vmatprep.mubr.f32.mxu0 %v1282
    %1350 = vmatmul.mubr.f32.gmra.mxu0 %v1281
    %v1351 = vpop.f32.mrf.mxu0
    %v1352 = vadd.f32 0.0, %v1351
    %v1353 = vpop.f32.mrf.mxu0
    %v1354 = vadd.f32 0.0, %v1353
    %1355 = vdwg.mxu0
    %1356 = vmatprep.subr.mxu0 %v1216
    %1357 = vmatpush1.msra.mxu0 %v1215
    %1358 = vmatprep.subr.mxu0 %v1212
    %1359 = vmatpush1.msra.mxu0 %v1211
    %1360 = vmatprep.subr.mxu0 %v1208
    %1361 = vmatpush1.msra.mxu0 %v1207
    %1362 = vmatprep.subr.mxu0 %v1204
    %1363 = vmatpush1.msra.mxu0 %v1203
    %1364 = vmatprep.subr.mxu0 %v1200
    %1365 = vmatpush1.msra.mxu0 %v1199
    %1366 = vmatprep.subr.mxu0 %v1196
    %1367 = vmatpush1.msra.mxu0 %v1195
    %1368 = vmatprep.subr.mxu0 %v1192
    %1369 = vmatpush1.msra.mxu0 %v1191
    %1370 = vmatprep.subr.mxu0 %v1188
    %1371 = vmatpush1.msra.mxu0 %v1187
    %1372 = vmatprep.subr.mxu0 %v1184
    %1373 = vmatpush1.msra.mxu0 %v1183
    %1374 = vmatprep.subr.mxu0 %v1180
    %1375 = vmatpush1.msra.mxu0 %v1179
    %1376 = vmatprep.subr.mxu0 %v1176
    %1377 = vmatpush1.msra.mxu0 %v1175
    %1378 = vmatprep.subr.mxu0 %v1172
    %1379 = vmatpush1.msra.mxu0 %v1171
    %1380 = vmatprep.subr.mxu0 %v1168
    %1381 = vmatpush1.msra.mxu0 %v1167
    %1382 = vmatprep.subr.mxu0 %v1164
    %1383 = vmatpush1.msra.mxu0 %v1163
    %1384 = vmatprep.subr.mxu0 %v1160
    %1385 = vmatpush1.msra.mxu0 %v1159
    %1386 = vmatprep.subr.mxu0 %v1156
    %1387 = vmatpush1.msra.mxu0 %v1155
    %1388 = vmatprep.subr.mxu0 %v1280
    %1389 = vmatpush2.msra.mxu0 %v1279
    %1390 = vmatprep.subr.mxu0 %v1276
    %1391 = vmatpush2.msra.mxu0 %v1275
    %1392 = vmatprep.subr.mxu0 %v1272
    %1393 = vmatpush2.msra.mxu0 %v1271
    %1394 = vmatprep.subr.mxu0 %v1268
    %1395 = vmatpush2.msra.mxu0 %v1267
    %1396 = vmatprep.subr.mxu0 %v1264
    %1397 = vmatpush2.msra.mxu0 %v1263
    %1398 = vmatprep.subr.mxu0 %v1260
    %1399 = vmatpush2.msra.mxu0 %v1259
    %1400 = vmatprep.subr.mxu0 %v1256
    %1401 = vmatpush2.msra.mxu0 %v1255
    %1402 = vmatprep.subr.mxu0 %v1252
    %1403 = vmatpush2.msra.mxu0 %v1251
    %1404 = vmatprep.subr.mxu0 %v1248
    %1405 = vmatpush2.msra.mxu0 %v1247
    %1406 = vmatprep.subr.mxu0 %v1244
    %1407 = vmatpush2.msra.mxu0 %v1243
    %1408 = vmatprep.subr.mxu0 %v1240
    %1409 = vmatpush2.msra.mxu0 %v1239
    %1410 = vmatprep.subr.mxu0 %v1236
    %1411 = vmatpush2.msra.mxu0 %v1235
    %1412 = vmatprep.subr.mxu0 %v1232
    %1413 = vmatpush2.msra.mxu0 %v1231
    %1414 = vmatprep.subr.mxu0 %v1228
    %1415 = vmatpush2.msra.mxu0 %v1227
    %1416 = vmatprep.subr.mxu0 %v1224
    %1417 = vmatpush2.msra.mxu0 %v1223
    %1418 = vmatprep.subr.mxu0 %v1220
    %1419 = vmatpush2.msra.mxu0 %v1219
    %1420 = vmatprep.mubr.f32.mxu0 %v1282
    %1421 = vmatmul.mubr.f32.gmra.mxu0 %v1281
    %v1422 = vpop.f32.mrf.mxu0
    %v1423 = vadd.f32 0.0, %v1422
    %v1424 = vpop.f32.mrf.mxu0
    %v1425 = vadd.f32 0.0, %v1424
    %1426 = vdwg.mxu0
    %v1427 = vadd.f32 %v1078, %v1352
    %v1428 = vadd.f32 %v1080, %v1354
    %v1429 = vadd.f32 %v1149, %v1423
    %v1430 = vadd.f32 %v1151, %v1425
    %v1431 = vld [vmem:[%s5 + $0xc00] sm:$0xff]
    %v1432 = vld [vmem:[%s5 + $0xc08] sm:$0xff]
    %v1433 = vld [vmem:[%s5 + $0xc10] sm:$0xff]
    %v1434 = vld [vmem:[%s5 + $0xc18] sm:$0xff]
    %v1435 = vld [vmem:[%s5 + $0xc20] sm:$0xff]
    %v1436 = vld [vmem:[%s5 + $0xc28] sm:$0xff]
    %v1437 = vld [vmem:[%s5 + $0xc30] sm:$0xff]
    %v1438 = vld [vmem:[%s5 + $0xc38] sm:$0xff]
    %v1439 = vld [vmem:[%s5 + $0xc40] sm:$0xff]
    %v1440 = vld [vmem:[%s5 + $0xc48] sm:$0xff]
    %v1441 = vld [vmem:[%s5 + $0xc50] sm:$0xff]
    %v1442 = vld [vmem:[%s5 + $0xc58] sm:$0xff]
    %v1443 = vld [vmem:[%s5 + $0xc60] sm:$0xff]
    %v1444 = vld [vmem:[%s5 + $0xc68] sm:$0xff]
    %v1445 = vld [vmem:[%s5 + $0xc70] sm:$0xff]
    %v1446 = vld [vmem:[%s5 + $0xc78] sm:$0xff]
    %v1447 = vld [vmem:[%s5 + $0xc80] sm:$0xff]
    %v1448 = vld [vmem:[%s5 + $0xc88] sm:$0xff]
    %v1449 = vld [vmem:[%s5 + $0xc90] sm:$0xff]
    %v1450 = vld [vmem:[%s5 + $0xc98] sm:$0xff]
    %v1451 = vld [vmem:[%s5 + $0xca0] sm:$0xff]
    %v1452 = vld [vmem:[%s5 + $0xca8] sm:$0xff]
    %v1453 = vld [vmem:[%s5 + $0xcb0] sm:$0xff]
    %v1454 = vld [vmem:[%s5 + $0xcb8] sm:$0xff]
    %v1455 = vld [vmem:[%s5 + $0xcc0] sm:$0xff]
    %v1456 = vld [vmem:[%s5 + $0xcc8] sm:$0xff]
    %v1457 = vld [vmem:[%s5 + $0xcd0] sm:$0xff]
    %v1458 = vld [vmem:[%s5 + $0xcd8] sm:$0xff]
    %v1459 = vld [vmem:[%s5 + $0xce0] sm:$0xff]
    %v1460 = vld [vmem:[%s5 + $0xce8] sm:$0xff]
    %v1461 = vld [vmem:[%s5 + $0xcf0] sm:$0xff]
    %v1462 = vld [vmem:[%s5 + $0xcf8] sm:$0xff]
    %v1463 = vld [vmem:[%s5 + $0xd00] sm:$0xff]
    %v1464 = vld [vmem:[%s5 + $0xd08] sm:$0xff]
    %v1465 = vld [vmem:[%s5 + $0xd10] sm:$0xff]
    %v1466 = vld [vmem:[%s5 + $0xd18] sm:$0xff]
    %v1467 = vld [vmem:[%s5 + $0xd20] sm:$0xff]
    %v1468 = vld [vmem:[%s5 + $0xd28] sm:$0xff]
    %v1469 = vld [vmem:[%s5 + $0xd30] sm:$0xff]
    %v1470 = vld [vmem:[%s5 + $0xd38] sm:$0xff]
    %v1471 = vld [vmem:[%s5 + $0xd40] sm:$0xff]
    %v1472 = vld [vmem:[%s5 + $0xd48] sm:$0xff]
    %v1473 = vld [vmem:[%s5 + $0xd50] sm:$0xff]
    %v1474 = vld [vmem:[%s5 + $0xd58] sm:$0xff]
    %v1475 = vld [vmem:[%s5 + $0xd60] sm:$0xff]
    %v1476 = vld [vmem:[%s5 + $0xd68] sm:$0xff]
    %v1477 = vld [vmem:[%s5 + $0xd70] sm:$0xff]
    %v1478 = vld [vmem:[%s5 + $0xd78] sm:$0xff]
    %v1479 = vld [vmem:[%s5 + $0xd80] sm:$0xff]
    %v1480 = vld [vmem:[%s5 + $0xd88] sm:$0xff]
    %v1481 = vld [vmem:[%s5 + $0xd90] sm:$0xff]
    %v1482 = vld [vmem:[%s5 + $0xd98] sm:$0xff]
    %v1483 = vld [vmem:[%s5 + $0xda0] sm:$0xff]
    %v1484 = vld [vmem:[%s5 + $0xda8] sm:$0xff]
    %v1485 = vld [vmem:[%s5 + $0xdb0] sm:$0xff]
    %v1486 = vld [vmem:[%s5 + $0xdb8] sm:$0xff]
    %v1487 = vld [vmem:[%s5 + $0xdc0] sm:$0xff]
    %v1488 = vld [vmem:[%s5 + $0xdc8] sm:$0xff]
    %v1489 = vld [vmem:[%s5 + $0xdd0] sm:$0xff]
    %v1490 = vld [vmem:[%s5 + $0xdd8] sm:$0xff]
    %v1491 = vld [vmem:[%s5 + $0xde0] sm:$0xff]
    %v1492 = vld [vmem:[%s5 + $0xde8] sm:$0xff]
    %v1493 = vld [vmem:[%s5 + $0xdf0] sm:$0xff]
    %v1494 = vld [vmem:[%s5 + $0xdf8] sm:$0xff]
    %v1495 = vld [vmem:[%s5 + $0xe00] sm:$0xff]
    %v1496 = vld [vmem:[%s5 + $0xe08] sm:$0xff]
    %v1497 = vld [vmem:[%s5 + $0xe10] sm:$0xff]
    %v1498 = vld [vmem:[%s5 + $0xe18] sm:$0xff]
    %v1499 = vld [vmem:[%s5 + $0xe20] sm:$0xff]
    %v1500 = vld [vmem:[%s5 + $0xe28] sm:$0xff]
    %v1501 = vld [vmem:[%s5 + $0xe30] sm:$0xff]
    %v1502 = vld [vmem:[%s5 + $0xe38] sm:$0xff]
    %v1503 = vld [vmem:[%s5 + $0xe40] sm:$0xff]
    %v1504 = vld [vmem:[%s5 + $0xe48] sm:$0xff]
    %v1505 = vld [vmem:[%s5 + $0xe50] sm:$0xff]
    %v1506 = vld [vmem:[%s5 + $0xe58] sm:$0xff]
    %v1507 = vld [vmem:[%s5 + $0xe60] sm:$0xff]
    %v1508 = vld [vmem:[%s5 + $0xe68] sm:$0xff]
    %v1509 = vld [vmem:[%s5 + $0xe70] sm:$0xff]
    %v1510 = vld [vmem:[%s5 + $0xe78] sm:$0xff]
    %v1511 = vld [vmem:[%s5 + $0xe80] sm:$0xff]
    %v1512 = vld [vmem:[%s5 + $0xe88] sm:$0xff]
    %v1513 = vld [vmem:[%s5 + $0xe90] sm:$0xff]
    %v1514 = vld [vmem:[%s5 + $0xe98] sm:$0xff]
    %v1515 = vld [vmem:[%s5 + $0xea0] sm:$0xff]
    %v1516 = vld [vmem:[%s5 + $0xea8] sm:$0xff]
    %v1517 = vld [vmem:[%s5 + $0xeb0] sm:$0xff]
    %v1518 = vld [vmem:[%s5 + $0xeb8] sm:$0xff]
    %v1519 = vld [vmem:[%s5 + $0xec0] sm:$0xff]
    %v1520 = vld [vmem:[%s5 + $0xec8] sm:$0xff]
    %v1521 = vld [vmem:[%s5 + $0xed0] sm:$0xff]
    %v1522 = vld [vmem:[%s5 + $0xed8] sm:$0xff]
    %v1523 = vld [vmem:[%s5 + $0xee0] sm:$0xff]
    %v1524 = vld [vmem:[%s5 + $0xee8] sm:$0xff]
    %v1525 = vld [vmem:[%s5 + $0xef0] sm:$0xff]
    %v1526 = vld [vmem:[%s5 + $0xef8] sm:$0xff]
    %v1527 = vld [vmem:[%s5 + $0xf00] sm:$0xff]
    %v1528 = vld [vmem:[%s5 + $0xf08] sm:$0xff]
    %v1529 = vld [vmem:[%s5 + $0xf10] sm:$0xff]
    %v1530 = vld [vmem:[%s5 + $0xf18] sm:$0xff]
    %v1531 = vld [vmem:[%s5 + $0xf20] sm:$0xff]
    %v1532 = vld [vmem:[%s5 + $0xf28] sm:$0xff]
    %v1533 = vld [vmem:[%s5 + $0xf30] sm:$0xff]
    %v1534 = vld [vmem:[%s5 + $0xf38] sm:$0xff]
    %v1535 = vld [vmem:[%s5 + $0xf40] sm:$0xff]
    %v1536 = vld [vmem:[%s5 + $0xf48] sm:$0xff]
    %v1537 = vld [vmem:[%s5 + $0xf50] sm:$0xff]
    %v1538 = vld [vmem:[%s5 + $0xf58] sm:$0xff]
    %v1539 = vld [vmem:[%s5 + $0xf60] sm:$0xff]
    %v1540 = vld [vmem:[%s5 + $0xf68] sm:$0xff]
    %v1541 = vld [vmem:[%s5 + $0xf70] sm:$0xff]
    %v1542 = vld [vmem:[%s5 + $0xf78] sm:$0xff]
    %v1543 = vld [vmem:[%s5 + $0xf80] sm:$0xff]
    %v1544 = vld [vmem:[%s5 + $0xf88] sm:$0xff]
    %v1545 = vld [vmem:[%s5 + $0xf90] sm:$0xff]
    %v1546 = vld [vmem:[%s5 + $0xf98] sm:$0xff]
    %v1547 = vld [vmem:[%s5 + $0xfa0] sm:$0xff]
    %v1548 = vld [vmem:[%s5 + $0xfa8] sm:$0xff]
    %v1549 = vld [vmem:[%s5 + $0xfb0] sm:$0xff]
    %v1550 = vld [vmem:[%s5 + $0xfb8] sm:$0xff]
    %v1551 = vld [vmem:[%s5 + $0xfc0] sm:$0xff]
    %v1552 = vld [vmem:[%s5 + $0xfc8] sm:$0xff]
    %v1553 = vld [vmem:[%s5 + $0xfd0] sm:$0xff]
    %v1554 = vld [vmem:[%s5 + $0xfd8] sm:$0xff]
    %v1555 = vld [vmem:[%s5 + $0xfe0] sm:$0xff]
    %v1556 = vld [vmem:[%s5 + $0xfe8] sm:$0xff]
    %v1557 = vld [vmem:[%s5 + $0xff0] sm:$0xff]
    %v1558 = vld [vmem:[%s5 + $0xff8] sm:$0xff]
    %v1559 = vrot.slane %v605, 6
    %v1560 = vrot.slane %v606, 6
    %1563 = vmatprep.subr.mxu0 %v1492
    %1564 = vmatpush1.msra.mxu0 %v1491
    %1565 = vmatprep.subr.mxu0 %v1488
    %1566 = vmatpush1.msra.mxu0 %v1487
    %1567 = vmatprep.subr.mxu0 %v1484
    %1568 = vmatpush1.msra.mxu0 %v1483
    %1569 = vmatprep.subr.mxu0 %v1480
    %1570 = vmatpush1.msra.mxu0 %v1479
    %1571 = vmatprep.subr.mxu0 %v1476
    %1572 = vmatpush1.msra.mxu0 %v1475
    %1573 = vmatprep.subr.mxu0 %v1472
    %1574 = vmatpush1.msra.mxu0 %v1471
    %1575 = vmatprep.subr.mxu0 %v1468
    %1576 = vmatpush1.msra.mxu0 %v1467
    %1577 = vmatprep.subr.mxu0 %v1464
    %1578 = vmatpush1.msra.mxu0 %v1463
    %1579 = vmatprep.subr.mxu0 %v1460
    %1580 = vmatpush1.msra.mxu0 %v1459
    %1581 = vmatprep.subr.mxu0 %v1456
    %1582 = vmatpush1.msra.mxu0 %v1455
    %1583 = vmatprep.subr.mxu0 %v1452
    %1584 = vmatpush1.msra.mxu0 %v1451
    %1585 = vmatprep.subr.mxu0 %v1448
    %1586 = vmatpush1.msra.mxu0 %v1447
    %1587 = vmatprep.subr.mxu0 %v1444
    %1588 = vmatpush1.msra.mxu0 %v1443
    %1589 = vmatprep.subr.mxu0 %v1440
    %1590 = vmatpush1.msra.mxu0 %v1439
    %1591 = vmatprep.subr.mxu0 %v1436
    %1592 = vmatpush1.msra.mxu0 %v1435
    %1593 = vmatprep.subr.mxu0 %v1432
    %1594 = vmatpush1.msra.mxu0 %v1431
    %1595 = vmatprep.subr.mxu0 %v1556
    %1596 = vmatpush2.msra.mxu0 %v1555
    %1597 = vmatprep.subr.mxu0 %v1552
    %1598 = vmatpush2.msra.mxu0 %v1551
    %1599 = vmatprep.subr.mxu0 %v1548
    %1600 = vmatpush2.msra.mxu0 %v1547
    %1601 = vmatprep.subr.mxu0 %v1544
    %1602 = vmatpush2.msra.mxu0 %v1543
    %1603 = vmatprep.subr.mxu0 %v1540
    %1604 = vmatpush2.msra.mxu0 %v1539
    %1605 = vmatprep.subr.mxu0 %v1536
    %1606 = vmatpush2.msra.mxu0 %v1535
    %1607 = vmatprep.subr.mxu0 %v1532
    %1608 = vmatpush2.msra.mxu0 %v1531
    %1609 = vmatprep.subr.mxu0 %v1528
    %1610 = vmatpush2.msra.mxu0 %v1527
    %1611 = vmatprep.subr.mxu0 %v1524
    %1612 = vmatpush2.msra.mxu0 %v1523
    %1613 = vmatprep.subr.mxu0 %v1520
    %1614 = vmatpush2.msra.mxu0 %v1519
    %1615 = vmatprep.subr.mxu0 %v1516
    %1616 = vmatpush2.msra.mxu0 %v1515
    %1617 = vmatprep.subr.mxu0 %v1512
    %1618 = vmatpush2.msra.mxu0 %v1511
    %1619 = vmatprep.subr.mxu0 %v1508
    %1620 = vmatpush2.msra.mxu0 %v1507
    %1621 = vmatprep.subr.mxu0 %v1504
    %1622 = vmatpush2.msra.mxu0 %v1503
    %1623 = vmatprep.subr.mxu0 %v1500
    %1624 = vmatpush2.msra.mxu0 %v1499
    %1625 = vmatprep.subr.mxu0 %v1496
    %1626 = vmatpush2.msra.mxu0 %v1495
    %1627 = vmatprep.mubr.f32.mxu0 %v1560
    %1628 = vmatmul.mubr.f32.gmra.mxu0 %v1559
    %v1629 = vpop.f32.mrf.mxu0
    %v1630 = vadd.f32 0.0, %v1629
    %v1631 = vpop.f32.mrf.mxu0
    %v1632 = vadd.f32 0.0, %v1631
    %1633 = vdwg.mxu0
    %1634 = vmatprep.subr.mxu0 %v1494
    %1635 = vmatpush1.msra.mxu0 %v1493
    %1636 = vmatprep.subr.mxu0 %v1490
    %1637 = vmatpush1.msra.mxu0 %v1489
    %1638 = vmatprep.subr.mxu0 %v1486
    %1639 = vmatpush1.msra.mxu0 %v1485
    %1640 = vmatprep.subr.mxu0 %v1482
    %1641 = vmatpush1.msra.mxu0 %v1481
    %1642 = vmatprep.subr.mxu0 %v1478
    %1643 = vmatpush1.msra.mxu0 %v1477
    %1644 = vmatprep.subr.mxu0 %v1474
    %1645 = vmatpush1.msra.mxu0 %v1473
    %1646 = vmatprep.subr.mxu0 %v1470
    %1647 = vmatpush1.msra.mxu0 %v1469
    %1648 = vmatprep.subr.mxu0 %v1466
    %1649 = vmatpush1.msra.mxu0 %v1465
    %1650 = vmatprep.subr.mxu0 %v1462
    %1651 = vmatpush1.msra.mxu0 %v1461
    %1652 = vmatprep.subr.mxu0 %v1458
    %1653 = vmatpush1.msra.mxu0 %v1457
    %1654 = vmatprep.subr.mxu0 %v1454
    %1655 = vmatpush1.msra.mxu0 %v1453
    %1656 = vmatprep.subr.mxu0 %v1450
    %1657 = vmatpush1.msra.mxu0 %v1449
    %1658 = vmatprep.subr.mxu0 %v1446
    %1659 = vmatpush1.msra.mxu0 %v1445
    %1660 = vmatprep.subr.mxu0 %v1442
    %1661 = vmatpush1.msra.mxu0 %v1441
    %1662 = vmatprep.subr.mxu0 %v1438
    %1663 = vmatpush1.msra.mxu0 %v1437
    %1664 = vmatprep.subr.mxu0 %v1434
    %1665 = vmatpush1.msra.mxu0 %v1433
    %1666 = vmatprep.subr.mxu0 %v1558
    %1667 = vmatpush2.msra.mxu0 %v1557
    %1668 = vmatprep.subr.mxu0 %v1554
    %1669 = vmatpush2.msra.mxu0 %v1553
    %1670 = vmatprep.subr.mxu0 %v1550
    %1671 = vmatpush2.msra.mxu0 %v1549
    %1672 = vmatprep.subr.mxu0 %v1546
    %1673 = vmatpush2.msra.mxu0 %v1545
    %1674 = vmatprep.subr.mxu0 %v1542
    %1675 = vmatpush2.msra.mxu0 %v1541
    %1676 = vmatprep.subr.mxu0 %v1538
    %1677 = vmatpush2.msra.mxu0 %v1537
    %1678 = vmatprep.subr.mxu0 %v1534
    %1679 = vmatpush2.msra.mxu0 %v1533
    %1680 = vmatprep.subr.mxu0 %v1530
    %1681 = vmatpush2.msra.mxu0 %v1529
    %1682 = vmatprep.subr.mxu0 %v1526
    %1683 = vmatpush2.msra.mxu0 %v1525
    %1684 = vmatprep.subr.mxu0 %v1522
    %1685 = vmatpush2.msra.mxu0 %v1521
    %1686 = vmatprep.subr.mxu0 %v1518
    %1687 = vmatpush2.msra.mxu0 %v1517
    %1688 = vmatprep.subr.mxu0 %v1514
    %1689 = vmatpush2.msra.mxu0 %v1513
    %1690 = vmatprep.subr.mxu0 %v1510
    %1691 = vmatpush2.msra.mxu0 %v1509
    %1692 = vmatprep.subr.mxu0 %v1506
    %1693 = vmatpush2.msra.mxu0 %v1505
    %1694 = vmatprep.subr.mxu0 %v1502
    %1695 = vmatpush2.msra.mxu0 %v1501
    %1696 = vmatprep.subr.mxu0 %v1498
    %1697 = vmatpush2.msra.mxu0 %v1497
    %1698 = vmatprep.mubr.f32.mxu0 %v1560
    %1699 = vmatmul.mubr.f32.gmra.mxu0 %v1559
    %v1700 = vpop.f32.mrf.mxu0
    %v1701 = vadd.f32 0.0, %v1700
    %v1702 = vpop.f32.mrf.mxu0
    %v1703 = vadd.f32 0.0, %v1702
    %1704 = vdwg.mxu0
    %v1705 = vadd.f32 %v1427, %v1630
    %v1706 = vadd.f32 %v1428, %v1632
    %v1707 = vadd.f32 %v1429, %v1701
    %v1708 = vadd.f32 %v1430, %v1703
    %v1709 = vld [vmem:[%s6] sm:$0xf]
    %v1711 = vlaneseq
    %v1712 = vshrl.u32 %v1711, 7
    %v1713 = vsub.s32 0, %v1712
    %v1714 = vrot.slane %v1709, %v1713
    %v1715 = vlaneseq
    %v1716 = vshrl.u32 %v1715, 7
    %v1717 = vsub.s32 1, %v1716
    %v1718 = vrot.slane %v1709, %v1717
    %v1719 = vlaneseq
    %v1720 = vshrl.u32 %v1719, 7
    %v1721 = vsub.s32 2, %v1720
    %v1722 = vrot.slane %v1709, %v1721
    %v1723 = vlaneseq
    %v1724 = vshrl.u32 %v1723, 7
    %v1725 = vsub.s32 3, %v1724
    %v1726 = vrot.slane %v1709, %v1725
    %v1731 = vadd.f32 %v1705, %v1714
    %v1732 = vadd.f32 %v1706, %v1718
    %v1733 = vadd.f32 %v1707, %v1722
    %v1734 = vadd.f32 %v1708, %v1726
    %v1735 = vmax.f32 %v1731, 0.0
    %v1736 = vmax.f32 %v1732, 0.0
    %v1737 = vmax.f32 %v1733, 0.0
    %v1738 = vmax.f32 %v1734, 0.0
    %v1739 = vld [vmem:[%s7] sm:$0xff]
    %v1740 = vld [vmem:[%s7 + $0x8] sm:$0xff]
    %v1741 = vld [vmem:[%s7 + $0x10] sm:$0xff]
    %v1742 = vld [vmem:[%s7 + $0x18] sm:$0xff]
    %v1743 = vld [vmem:[%s7 + $0x20] sm:$0xff]
    %v1744 = vld [vmem:[%s7 + $0x28] sm:$0xff]
    %v1745 = vld [vmem:[%s7 + $0x30] sm:$0xff]
    %v1746 = vld [vmem:[%s7 + $0x38] sm:$0xff]
    %v1747 = vld [vmem:[%s7 + $0x40] sm:$0xff]
    %v1748 = vld [vmem:[%s7 + $0x48] sm:$0xff]
    %v1749 = vld [vmem:[%s7 + $0x50] sm:$0xff]
    %v1750 = vld [vmem:[%s7 + $0x58] sm:$0xff]
    %v1751 = vld [vmem:[%s7 + $0x60] sm:$0xff]
    %v1752 = vld [vmem:[%s7 + $0x68] sm:$0xff]
    %v1753 = vld [vmem:[%s7 + $0x70] sm:$0xff]
    %v1754 = vld [vmem:[%s7 + $0x78] sm:$0xff]
    %v1755 = vld [vmem:[%s7 + $0x80] sm:$0xff]
    %v1756 = vld [vmem:[%s7 + $0x88] sm:$0xff]
    %v1757 = vld [vmem:[%s7 + $0x90] sm:$0xff]
    %v1758 = vld [vmem:[%s7 + $0x98] sm:$0xff]
    %v1759 = vld [vmem:[%s7 + $0xa0] sm:$0xff]
    %v1760 = vld [vmem:[%s7 + $0xa8] sm:$0xff]
    %v1761 = vld [vmem:[%s7 + $0xb0] sm:$0xff]
    %v1762 = vld [vmem:[%s7 + $0xb8] sm:$0xff]
    %v1763 = vld [vmem:[%s7 + $0xc0] sm:$0xff]
    %v1764 = vld [vmem:[%s7 + $0xc8] sm:$0xff]
    %v1765 = vld [vmem:[%s7 + $0xd0] sm:$0xff]
    %v1766 = vld [vmem:[%s7 + $0xd8] sm:$0xff]
    %v1767 = vld [vmem:[%s7 + $0xe0] sm:$0xff]
    %v1768 = vld [vmem:[%s7 + $0xe8] sm:$0xff]
    %v1769 = vld [vmem:[%s7 + $0xf0] sm:$0xff]
    %v1770 = vld [vmem:[%s7 + $0xf8] sm:$0xff]
    %v1771 = vld [vmem:[%s7 + $0x100] sm:$0xff]
    %v1772 = vld [vmem:[%s7 + $0x108] sm:$0xff]
    %v1773 = vld [vmem:[%s7 + $0x110] sm:$0xff]
    %v1774 = vld [vmem:[%s7 + $0x118] sm:$0xff]
    %v1775 = vld [vmem:[%s7 + $0x120] sm:$0xff]
    %v1776 = vld [vmem:[%s7 + $0x128] sm:$0xff]
    %v1777 = vld [vmem:[%s7 + $0x130] sm:$0xff]
    %v1778 = vld [vmem:[%s7 + $0x138] sm:$0xff]
    %v1779 = vld [vmem:[%s7 + $0x140] sm:$0xff]
    %v1780 = vld [vmem:[%s7 + $0x148] sm:$0xff]
    %v1781 = vld [vmem:[%s7 + $0x150] sm:$0xff]
    %v1782 = vld [vmem:[%s7 + $0x158] sm:$0xff]
    %v1783 = vld [vmem:[%s7 + $0x160] sm:$0xff]
    %v1784 = vld [vmem:[%s7 + $0x168] sm:$0xff]
    %v1785 = vld [vmem:[%s7 + $0x170] sm:$0xff]
    %v1786 = vld [vmem:[%s7 + $0x178] sm:$0xff]
    %v1787 = vld [vmem:[%s7 + $0x180] sm:$0xff]
    %v1788 = vld [vmem:[%s7 + $0x188] sm:$0xff]
    %v1789 = vld [vmem:[%s7 + $0x190] sm:$0xff]
    %v1790 = vld [vmem:[%s7 + $0x198] sm:$0xff]
    %v1791 = vld [vmem:[%s7 + $0x1a0] sm:$0xff]
    %v1792 = vld [vmem:[%s7 + $0x1a8] sm:$0xff]
    %v1793 = vld [vmem:[%s7 + $0x1b0] sm:$0xff]
    %v1794 = vld [vmem:[%s7 + $0x1b8] sm:$0xff]
    %v1795 = vld [vmem:[%s7 + $0x1c0] sm:$0xff]
    %v1796 = vld [vmem:[%s7 + $0x1c8] sm:$0xff]
    %v1797 = vld [vmem:[%s7 + $0x1d0] sm:$0xff]
    %v1798 = vld [vmem:[%s7 + $0x1d8] sm:$0xff]
    %v1799 = vld [vmem:[%s7 + $0x1e0] sm:$0xff]
    %v1800 = vld [vmem:[%s7 + $0x1e8] sm:$0xff]
    %v1801 = vld [vmem:[%s7 + $0x1f0] sm:$0xff]
    %v1802 = vld [vmem:[%s7 + $0x1f8] sm:$0xff]
    %v1803 = vld [vmem:[%s7 + $0x200] sm:$0xff]
    %v1804 = vld [vmem:[%s7 + $0x208] sm:$0xff]
    %v1805 = vld [vmem:[%s7 + $0x210] sm:$0xff]
    %v1806 = vld [vmem:[%s7 + $0x218] sm:$0xff]
    %v1807 = vld [vmem:[%s7 + $0x220] sm:$0xff]
    %v1808 = vld [vmem:[%s7 + $0x228] sm:$0xff]
    %v1809 = vld [vmem:[%s7 + $0x230] sm:$0xff]
    %v1810 = vld [vmem:[%s7 + $0x238] sm:$0xff]
    %v1811 = vld [vmem:[%s7 + $0x240] sm:$0xff]
    %v1812 = vld [vmem:[%s7 + $0x248] sm:$0xff]
    %v1813 = vld [vmem:[%s7 + $0x250] sm:$0xff]
    %v1814 = vld [vmem:[%s7 + $0x258] sm:$0xff]
    %v1815 = vld [vmem:[%s7 + $0x260] sm:$0xff]
    %v1816 = vld [vmem:[%s7 + $0x268] sm:$0xff]
    %v1817 = vld [vmem:[%s7 + $0x270] sm:$0xff]
    %v1818 = vld [vmem:[%s7 + $0x278] sm:$0xff]
    %v1819 = vld [vmem:[%s7 + $0x280] sm:$0xff]
    %v1820 = vld [vmem:[%s7 + $0x288] sm:$0xff]
    %v1821 = vld [vmem:[%s7 + $0x290] sm:$0xff]
    %v1822 = vld [vmem:[%s7 + $0x298] sm:$0xff]
    %v1823 = vld [vmem:[%s7 + $0x2a0] sm:$0xff]
    %v1824 = vld [vmem:[%s7 + $0x2a8] sm:$0xff]
    %v1825 = vld [vmem:[%s7 + $0x2b0] sm:$0xff]
    %v1826 = vld [vmem:[%s7 + $0x2b8] sm:$0xff]
    %v1827 = vld [vmem:[%s7 + $0x2c0] sm:$0xff]
    %v1828 = vld [vmem:[%s7 + $0x2c8] sm:$0xff]
    %v1829 = vld [vmem:[%s7 + $0x2d0] sm:$0xff]
    %v1830 = vld [vmem:[%s7 + $0x2d8] sm:$0xff]
    %v1831 = vld [vmem:[%s7 + $0x2e0] sm:$0xff]
    %v1832 = vld [vmem:[%s7 + $0x2e8] sm:$0xff]
    %v1833 = vld [vmem:[%s7 + $0x2f0] sm:$0xff]
    %v1834 = vld [vmem:[%s7 + $0x2f8] sm:$0xff]
    %v1835 = vld [vmem:[%s7 + $0x300] sm:$0xff]
    %v1836 = vld [vmem:[%s7 + $0x308] sm:$0xff]
    %v1837 = vld [vmem:[%s7 + $0x310] sm:$0xff]
    %v1838 = vld [vmem:[%s7 + $0x318] sm:$0xff]
    %v1839 = vld [vmem:[%s7 + $0x320] sm:$0xff]
    %v1840 = vld [vmem:[%s7 + $0x328] sm:$0xff]
    %v1841 = vld [vmem:[%s7 + $0x330] sm:$0xff]
    %v1842 = vld [vmem:[%s7 + $0x338] sm:$0xff]
    %v1843 = vld [vmem:[%s7 + $0x340] sm:$0xff]
    %v1844 = vld [vmem:[%s7 + $0x348] sm:$0xff]
    %v1845 = vld [vmem:[%s7 + $0x350] sm:$0xff]
    %v1846 = vld [vmem:[%s7 + $0x358] sm:$0xff]
    %v1847 = vld [vmem:[%s7 + $0x360] sm:$0xff]
    %v1848 = vld [vmem:[%s7 + $0x368] sm:$0xff]
    %v1849 = vld [vmem:[%s7 + $0x370] sm:$0xff]
    %v1850 = vld [vmem:[%s7 + $0x378] sm:$0xff]
    %v1851 = vld [vmem:[%s7 + $0x380] sm:$0xff]
    %v1852 = vld [vmem:[%s7 + $0x388] sm:$0xff]
    %v1853 = vld [vmem:[%s7 + $0x390] sm:$0xff]
    %v1854 = vld [vmem:[%s7 + $0x398] sm:$0xff]
    %v1855 = vld [vmem:[%s7 + $0x3a0] sm:$0xff]
    %v1856 = vld [vmem:[%s7 + $0x3a8] sm:$0xff]
    %v1857 = vld [vmem:[%s7 + $0x3b0] sm:$0xff]
    %v1858 = vld [vmem:[%s7 + $0x3b8] sm:$0xff]
    %v1859 = vld [vmem:[%s7 + $0x3c0] sm:$0xff]
    %v1860 = vld [vmem:[%s7 + $0x3c8] sm:$0xff]
    %v1861 = vld [vmem:[%s7 + $0x3d0] sm:$0xff]
    %v1862 = vld [vmem:[%s7 + $0x3d8] sm:$0xff]
    %v1863 = vld [vmem:[%s7 + $0x3e0] sm:$0xff]
    %v1864 = vld [vmem:[%s7 + $0x3e8] sm:$0xff]
    %v1865 = vld [vmem:[%s7 + $0x3f0] sm:$0xff]
    %v1866 = vld [vmem:[%s7 + $0x3f8] sm:$0xff]
    %v1867 = vld [vmem:[%s7 + $0x400] sm:$0xff]
    %v1868 = vld [vmem:[%s7 + $0x408] sm:$0xff]
    %v1869 = vld [vmem:[%s7 + $0x410] sm:$0xff]
    %v1870 = vld [vmem:[%s7 + $0x418] sm:$0xff]
    %v1871 = vld [vmem:[%s7 + $0x420] sm:$0xff]
    %v1872 = vld [vmem:[%s7 + $0x428] sm:$0xff]
    %v1873 = vld [vmem:[%s7 + $0x430] sm:$0xff]
    %v1874 = vld [vmem:[%s7 + $0x438] sm:$0xff]
    %v1875 = vld [vmem:[%s7 + $0x440] sm:$0xff]
    %v1876 = vld [vmem:[%s7 + $0x448] sm:$0xff]
    %v1877 = vld [vmem:[%s7 + $0x450] sm:$0xff]
    %v1878 = vld [vmem:[%s7 + $0x458] sm:$0xff]
    %v1879 = vld [vmem:[%s7 + $0x460] sm:$0xff]
    %v1880 = vld [vmem:[%s7 + $0x468] sm:$0xff]
    %v1881 = vld [vmem:[%s7 + $0x470] sm:$0xff]
    %v1882 = vld [vmem:[%s7 + $0x478] sm:$0xff]
    %v1883 = vld [vmem:[%s7 + $0x480] sm:$0xff]
    %v1884 = vld [vmem:[%s7 + $0x488] sm:$0xff]
    %v1885 = vld [vmem:[%s7 + $0x490] sm:$0xff]
    %v1886 = vld [vmem:[%s7 + $0x498] sm:$0xff]
    %v1887 = vld [vmem:[%s7 + $0x4a0] sm:$0xff]
    %v1888 = vld [vmem:[%s7 + $0x4a8] sm:$0xff]
    %v1889 = vld [vmem:[%s7 + $0x4b0] sm:$0xff]
    %v1890 = vld [vmem:[%s7 + $0x4b8] sm:$0xff]
    %v1891 = vld [vmem:[%s7 + $0x4c0] sm:$0xff]
    %v1892 = vld [vmem:[%s7 + $0x4c8] sm:$0xff]
    %v1893 = vld [vmem:[%s7 + $0x4d0] sm:$0xff]
    %v1894 = vld [vmem:[%s7 + $0x4d8] sm:$0xff]
    %v1895 = vld [vmem:[%s7 + $0x4e0] sm:$0xff]
    %v1896 = vld [vmem:[%s7 + $0x4e8] sm:$0xff]
    %v1897 = vld [vmem:[%s7 + $0x4f0] sm:$0xff]
    %v1898 = vld [vmem:[%s7 + $0x4f8] sm:$0xff]
    %v1899 = vld [vmem:[%s7 + $0x500] sm:$0xff]
    %v1900 = vld [vmem:[%s7 + $0x508] sm:$0xff]
    %v1901 = vld [vmem:[%s7 + $0x510] sm:$0xff]
    %v1902 = vld [vmem:[%s7 + $0x518] sm:$0xff]
    %v1903 = vld [vmem:[%s7 + $0x520] sm:$0xff]
    %v1904 = vld [vmem:[%s7 + $0x528] sm:$0xff]
    %v1905 = vld [vmem:[%s7 + $0x530] sm:$0xff]
    %v1906 = vld [vmem:[%s7 + $0x538] sm:$0xff]
    %v1907 = vld [vmem:[%s7 + $0x540] sm:$0xff]
    %v1908 = vld [vmem:[%s7 + $0x548] sm:$0xff]
    %v1909 = vld [vmem:[%s7 + $0x550] sm:$0xff]
    %v1910 = vld [vmem:[%s7 + $0x558] sm:$0xff]
    %v1911 = vld [vmem:[%s7 + $0x560] sm:$0xff]
    %v1912 = vld [vmem:[%s7 + $0x568] sm:$0xff]
    %v1913 = vld [vmem:[%s7 + $0x570] sm:$0xff]
    %v1914 = vld [vmem:[%s7 + $0x578] sm:$0xff]
    %v1915 = vld [vmem:[%s7 + $0x580] sm:$0xff]
    %v1916 = vld [vmem:[%s7 + $0x588] sm:$0xff]
    %v1917 = vld [vmem:[%s7 + $0x590] sm:$0xff]
    %v1918 = vld [vmem:[%s7 + $0x598] sm:$0xff]
    %v1919 = vld [vmem:[%s7 + $0x5a0] sm:$0xff]
    %v1920 = vld [vmem:[%s7 + $0x5a8] sm:$0xff]
    %v1921 = vld [vmem:[%s7 + $0x5b0] sm:$0xff]
    %v1922 = vld [vmem:[%s7 + $0x5b8] sm:$0xff]
    %v1923 = vld [vmem:[%s7 + $0x5c0] sm:$0xff]
    %v1924 = vld [vmem:[%s7 + $0x5c8] sm:$0xff]
    %v1925 = vld [vmem:[%s7 + $0x5d0] sm:$0xff]
    %v1926 = vld [vmem:[%s7 + $0x5d8] sm:$0xff]
    %v1927 = vld [vmem:[%s7 + $0x5e0] sm:$0xff]
    %v1928 = vld [vmem:[%s7 + $0x5e8] sm:$0xff]
    %v1929 = vld [vmem:[%s7 + $0x5f0] sm:$0xff]
    %v1930 = vld [vmem:[%s7 + $0x5f8] sm:$0xff]
    %v1931 = vld [vmem:[%s7 + $0x600] sm:$0xff]
    %v1932 = vld [vmem:[%s7 + $0x608] sm:$0xff]
    %v1933 = vld [vmem:[%s7 + $0x610] sm:$0xff]
    %v1934 = vld [vmem:[%s7 + $0x618] sm:$0xff]
    %v1935 = vld [vmem:[%s7 + $0x620] sm:$0xff]
    %v1936 = vld [vmem:[%s7 + $0x628] sm:$0xff]
    %v1937 = vld [vmem:[%s7 + $0x630] sm:$0xff]
    %v1938 = vld [vmem:[%s7 + $0x638] sm:$0xff]
    %v1939 = vld [vmem:[%s7 + $0x640] sm:$0xff]
    %v1940 = vld [vmem:[%s7 + $0x648] sm:$0xff]
    %v1941 = vld [vmem:[%s7 + $0x650] sm:$0xff]
    %v1942 = vld [vmem:[%s7 + $0x658] sm:$0xff]
    %v1943 = vld [vmem:[%s7 + $0x660] sm:$0xff]
    %v1944 = vld [vmem:[%s7 + $0x668] sm:$0xff]
    %v1945 = vld [vmem:[%s7 + $0x670] sm:$0xff]
    %v1946 = vld [vmem:[%s7 + $0x678] sm:$0xff]
    %v1947 = vld [vmem:[%s7 + $0x680] sm:$0xff]
    %v1948 = vld [vmem:[%s7 + $0x688] sm:$0xff]
    %v1949 = vld [vmem:[%s7 + $0x690] sm:$0xff]
    %v1950 = vld [vmem:[%s7 + $0x698] sm:$0xff]
    %v1951 = vld [vmem:[%s7 + $0x6a0] sm:$0xff]
    %v1952 = vld [vmem:[%s7 + $0x6a8] sm:$0xff]
    %v1953 = vld [vmem:[%s7 + $0x6b0] sm:$0xff]
    %v1954 = vld [vmem:[%s7 + $0x6b8] sm:$0xff]
    %v1955 = vld [vmem:[%s7 + $0x6c0] sm:$0xff]
    %v1956 = vld [vmem:[%s7 + $0x6c8] sm:$0xff]
    %v1957 = vld [vmem:[%s7 + $0x6d0] sm:$0xff]
    %v1958 = vld [vmem:[%s7 + $0x6d8] sm:$0xff]
    %v1959 = vld [vmem:[%s7 + $0x6e0] sm:$0xff]
    %v1960 = vld [vmem:[%s7 + $0x6e8] sm:$0xff]
    %v1961 = vld [vmem:[%s7 + $0x6f0] sm:$0xff]
    %v1962 = vld [vmem:[%s7 + $0x6f8] sm:$0xff]
    %v1963 = vld [vmem:[%s7 + $0x700] sm:$0xff]
    %v1964 = vld [vmem:[%s7 + $0x708] sm:$0xff]
    %v1965 = vld [vmem:[%s7 + $0x710] sm:$0xff]
    %v1966 = vld [vmem:[%s7 + $0x718] sm:$0xff]
    %v1967 = vld [vmem:[%s7 + $0x720] sm:$0xff]
    %v1968 = vld [vmem:[%s7 + $0x728] sm:$0xff]
    %v1969 = vld [vmem:[%s7 + $0x730] sm:$0xff]
    %v1970 = vld [vmem:[%s7 + $0x738] sm:$0xff]
    %v1971 = vld [vmem:[%s7 + $0x740] sm:$0xff]
    %v1972 = vld [vmem:[%s7 + $0x748] sm:$0xff]
    %v1973 = vld [vmem:[%s7 + $0x750] sm:$0xff]
    %v1974 = vld [vmem:[%s7 + $0x758] sm:$0xff]
    %v1975 = vld [vmem:[%s7 + $0x760] sm:$0xff]
    %v1976 = vld [vmem:[%s7 + $0x768] sm:$0xff]
    %v1977 = vld [vmem:[%s7 + $0x770] sm:$0xff]
    %v1978 = vld [vmem:[%s7 + $0x778] sm:$0xff]
    %v1979 = vld [vmem:[%s7 + $0x780] sm:$0xff]
    %v1980 = vld [vmem:[%s7 + $0x788] sm:$0xff]
    %v1981 = vld [vmem:[%s7 + $0x790] sm:$0xff]
    %v1982 = vld [vmem:[%s7 + $0x798] sm:$0xff]
    %v1983 = vld [vmem:[%s7 + $0x7a0] sm:$0xff]
    %v1984 = vld [vmem:[%s7 + $0x7a8] sm:$0xff]
    %v1985 = vld [vmem:[%s7 + $0x7b0] sm:$0xff]
    %v1986 = vld [vmem:[%s7 + $0x7b8] sm:$0xff]
    %v1987 = vld [vmem:[%s7 + $0x7c0] sm:$0xff]
    %v1988 = vld [vmem:[%s7 + $0x7c8] sm:$0xff]
    %v1989 = vld [vmem:[%s7 + $0x7d0] sm:$0xff]
    %v1990 = vld [vmem:[%s7 + $0x7d8] sm:$0xff]
    %v1991 = vld [vmem:[%s7 + $0x7e0] sm:$0xff]
    %v1992 = vld [vmem:[%s7 + $0x7e8] sm:$0xff]
    %v1993 = vld [vmem:[%s7 + $0x7f0] sm:$0xff]
    %v1994 = vld [vmem:[%s7 + $0x7f8] sm:$0xff]
    %v1995 = vld [vmem:[%s8] sm:$0xf]
    %v1997 = vlaneseq
    %v1998 = vshrl.u32 %v1997, 7
    %v1999 = vsub.s32 0, %v1998
    %v2000 = vrot.slane %v1995, %v1999
    %v2001 = vlaneseq
    %v2002 = vshrl.u32 %v2001, 7
    %v2003 = vsub.s32 1, %v2002
    %v2004 = vrot.slane %v1995, %v2003
    %v2005 = vlaneseq
    %v2006 = vshrl.u32 %v2005, 7
    %v2007 = vsub.s32 2, %v2006
    %v2008 = vrot.slane %v1995, %v2007
    %v2009 = vlaneseq
    %v2010 = vshrl.u32 %v2009, 7
    %v2011 = vsub.s32 3, %v2010
    %v2012 = vrot.slane %v1995, %v2011
    %2017 = vmatprep.subr.mxu0 %v1800
    %2018 = vmatpush1.msra.mxu0 %v1799
    %2019 = vmatprep.subr.mxu0 %v1796
    %2020 = vmatpush1.msra.mxu0 %v1795
    %2021 = vmatprep.subr.mxu0 %v1792
    %2022 = vmatpush1.msra.mxu0 %v1791
    %2023 = vmatprep.subr.mxu0 %v1788
    %2024 = vmatpush1.msra.mxu0 %v1787
    %2025 = vmatprep.subr.mxu0 %v1784
    %2026 = vmatpush1.msra.mxu0 %v1783
    %2027 = vmatprep.subr.mxu0 %v1780
    %2028 = vmatpush1.msra.mxu0 %v1779
    %2029 = vmatprep.subr.mxu0 %v1776
    %2030 = vmatpush1.msra.mxu0 %v1775
    %2031 = vmatprep.subr.mxu0 %v1772
    %2032 = vmatpush1.msra.mxu0 %v1771
    %2033 = vmatprep.subr.mxu0 %v1768
    %2034 = vmatpush1.msra.mxu0 %v1767
    %2035 = vmatprep.subr.mxu0 %v1764
    %2036 = vmatpush1.msra.mxu0 %v1763
    %2037 = vmatprep.subr.mxu0 %v1760
    %2038 = vmatpush1.msra.mxu0 %v1759
    %2039 = vmatprep.subr.mxu0 %v1756
    %2040 = vmatpush1.msra.mxu0 %v1755
    %2041 = vmatprep.subr.mxu0 %v1752
    %2042 = vmatpush1.msra.mxu0 %v1751
    %2043 = vmatprep.subr.mxu0 %v1748
    %2044 = vmatpush1.msra.mxu0 %v1747
    %2045 = vmatprep.subr.mxu0 %v1744
    %2046 = vmatpush1.msra.mxu0 %v1743
    %2047 = vmatprep.subr.mxu0 %v1740
    %2048 = vmatpush1.msra.mxu0 %v1739
    %2049 = vmatprep.subr.mxu0 %v1864
    %2050 = vmatpush2.msra.mxu0 %v1863
    %2051 = vmatprep.subr.mxu0 %v1860
    %2052 = vmatpush2.msra.mxu0 %v1859
    %2053 = vmatprep.subr.mxu0 %v1856
    %2054 = vmatpush2.msra.mxu0 %v1855
    %2055 = vmatprep.subr.mxu0 %v1852
    %2056 = vmatpush2.msra.mxu0 %v1851
    %2057 = vmatprep.subr.mxu0 %v1848
    %2058 = vmatpush2.msra.mxu0 %v1847
    %2059 = vmatprep.subr.mxu0 %v1844
    %2060 = vmatpush2.msra.mxu0 %v1843
    %2061 = vmatprep.subr.mxu0 %v1840
    %2062 = vmatpush2.msra.mxu0 %v1839
    %2063 = vmatprep.subr.mxu0 %v1836
    %2064 = vmatpush2.msra.mxu0 %v1835
    %2065 = vmatprep.subr.mxu0 %v1832
    %2066 = vmatpush2.msra.mxu0 %v1831
    %2067 = vmatprep.subr.mxu0 %v1828
    %2068 = vmatpush2.msra.mxu0 %v1827
    %2069 = vmatprep.subr.mxu0 %v1824
    %2070 = vmatpush2.msra.mxu0 %v1823
    %2071 = vmatprep.subr.mxu0 %v1820
    %2072 = vmatpush2.msra.mxu0 %v1819
    %2073 = vmatprep.subr.mxu0 %v1816
    %2074 = vmatpush2.msra.mxu0 %v1815
    %2075 = vmatprep.subr.mxu0 %v1812
    %2076 = vmatpush2.msra.mxu0 %v1811
    %2077 = vmatprep.subr.mxu0 %v1808
    %2078 = vmatpush2.msra.mxu0 %v1807
    %2079 = vmatprep.subr.mxu0 %v1804
    %2080 = vmatpush2.msra.mxu0 %v1803
    %2081 = vmatprep.mubr.f32.mxu0 %v1736
    %2082 = vmatmul.mubr.f32.gmra.mxu0 %v1735
    %v2083 = vpop.f32.mrf.mxu0
    %v2084 = vadd.f32 %v2000, %v2083
    %v2085 = vpop.f32.mrf.mxu0
    %v2086 = vadd.f32 %v2004, %v2085
    %2087 = vdwg.mxu0
    %2088 = vmatprep.subr.mxu0 %v1928
    %2089 = vmatpush1.msra.mxu0 %v1927
    %2090 = vmatprep.subr.mxu0 %v1924
    %2091 = vmatpush1.msra.mxu0 %v1923
    %2092 = vmatprep.subr.mxu0 %v1920
    %2093 = vmatpush1.msra.mxu0 %v1919
    %2094 = vmatprep.subr.mxu0 %v1916
    %2095 = vmatpush1.msra.mxu0 %v1915
    %2096 = vmatprep.subr.mxu0 %v1912
    %2097 = vmatpush1.msra.mxu0 %v1911
    %2098 = vmatprep.subr.mxu0 %v1908
    %2099 = vmatpush1.msra.mxu0 %v1907
    %2100 = vmatprep.subr.mxu0 %v1904
    %2101 = vmatpush1.msra.mxu0 %v1903
    %2102 = vmatprep.subr.mxu0 %v1900
    %2103 = vmatpush1.msra.mxu0 %v1899
    %2104 = vmatprep.subr.mxu0 %v1896
    %2105 = vmatpush1.msra.mxu0 %v1895
    %2106 = vmatprep.subr.mxu0 %v1892
    %2107 = vmatpush1.msra.mxu0 %v1891
    %2108 = vmatprep.subr.mxu0 %v1888
    %2109 = vmatpush1.msra.mxu0 %v1887
    %2110 = vmatprep.subr.mxu0 %v1884
    %2111 = vmatpush1.msra.mxu0 %v1883
    %2112 = vmatprep.subr.mxu0 %v1880
    %2113 = vmatpush1.msra.mxu0 %v1879
    %2114 = vmatprep.subr.mxu0 %v1876
    %2115 = vmatpush1.msra.mxu0 %v1875
    %2116 = vmatprep.subr.mxu0 %v1872
    %2117 = vmatpush1.msra.mxu0 %v1871
    %2118 = vmatprep.subr.mxu0 %v1868
    %2119 = vmatpush1.msra.mxu0 %v1867
    %2120 = vmatprep.subr.mxu0 %v1992
    %2121 = vmatpush2.msra.mxu0 %v1991
    %2122 = vmatprep.subr.mxu0 %v1988
    %2123 = vmatpush2.msra.mxu0 %v1987
    %2124 = vmatprep.subr.mxu0 %v1984
    %2125 = vmatpush2.msra.mxu0 %v1983
    %2126 = vmatprep.subr.mxu0 %v1980
    %2127 = vmatpush2.msra.mxu0 %v1979
    %2128 = vmatprep.subr.mxu0 %v1976
    %2129 = vmatpush2.msra.mxu0 %v1975
    %2130 = vmatprep.subr.mxu0 %v1972
    %2131 = vmatpush2.msra.mxu0 %v1971
    %2132 = vmatprep.subr.mxu0 %v1968
    %2133 = vmatpush2.msra.mxu0 %v1967
    %2134 = vmatprep.subr.mxu0 %v1964
    %2135 = vmatpush2.msra.mxu0 %v1963
    %2136 = vmatprep.subr.mxu0 %v1960
    %2137 = vmatpush2.msra.mxu0 %v1959
    %2138 = vmatprep.subr.mxu0 %v1956
    %2139 = vmatpush2.msra.mxu0 %v1955
    %2140 = vmatprep.subr.mxu0 %v1952
    %2141 = vmatpush2.msra.mxu0 %v1951
    %2142 = vmatprep.subr.mxu0 %v1948
    %2143 = vmatpush2.msra.mxu0 %v1947
    %2144 = vmatprep.subr.mxu0 %v1944
    %2145 = vmatpush2.msra.mxu0 %v1943
    %2146 = vmatprep.subr.mxu0 %v1940
    %2147 = vmatpush2.msra.mxu0 %v1939
    %2148 = vmatprep.subr.mxu0 %v1936
    %2149 = vmatpush2.msra.mxu0 %v1935
    %2150 = vmatprep.subr.mxu0 %v1932
    %2151 = vmatpush2.msra.mxu0 %v1931
    %2152 = vmatprep.mubr.f32.mxu0 %v1738
    %2153 = vmatmul.mubr.f32.gmra.mxu0 %v1737
    %v2154 = vpop.f32.mrf.mxu0
    %v2155 = vadd.f32 %v2084, %v2154
    %v2156 = vpop.f32.mrf.mxu0
    %v2157 = vadd.f32 %v2086, %v2156
    %2158 = vdwg.mxu0
    %2159 = vmatprep.subr.mxu0 %v1802
    %2160 = vmatpush1.msra.mxu0 %v1801
    %2161 = vmatprep.subr.mxu0 %v1798
    %2162 = vmatpush1.msra.mxu0 %v1797
    %2163 = vmatprep.subr.mxu0 %v1794
    %2164 = vmatpush1.msra.mxu0 %v1793
    %2165 = vmatprep.subr.mxu0 %v1790
    %2166 = vmatpush1.msra.mxu0 %v1789
    %2167 = vmatprep.subr.mxu0 %v1786
    %2168 = vmatpush1.msra.mxu0 %v1785
    %2169 = vmatprep.subr.mxu0 %v1782
    %2170 = vmatpush1.msra.mxu0 %v1781
    %2171 = vmatprep.subr.mxu0 %v1778
    %2172 = vmatpush1.msra.mxu0 %v1777
    %2173 = vmatprep.subr.mxu0 %v1774
    %2174 = vmatpush1.msra.mxu0 %v1773
    %2175 = vmatprep.subr.mxu0 %v1770
    %2176 = vmatpush1.msra.mxu0 %v1769
    %2177 = vmatprep.subr.mxu0 %v1766
    %2178 = vmatpush1.msra.mxu0 %v1765
    %2179 = vmatprep.subr.mxu0 %v1762
    %2180 = vmatpush1.msra.mxu0 %v1761
    %2181 = vmatprep.subr.mxu0 %v1758
    %2182 = vmatpush1.msra.mxu0 %v1757
    %2183 = vmatprep.subr.mxu0 %v1754
    %2184 = vmatpush1.msra.mxu0 %v1753
    %2185 = vmatprep.subr.mxu0 %v1750
    %2186 = vmatpush1.msra.mxu0 %v1749
    %2187 = vmatprep.subr.mxu0 %v1746
    %2188 = vmatpush1.msra.mxu0 %v1745
    %2189 = vmatprep.subr.mxu0 %v1742
    %2190 = vmatpush1.msra.mxu0 %v1741
    %2191 = vmatprep.subr.mxu0 %v1866
    %2192 = vmatpush2.msra.mxu0 %v1865
    %2193 = vmatprep.subr.mxu0 %v1862
    %2194 = vmatpush2.msra.mxu0 %v1861
    %2195 = vmatprep.subr.mxu0 %v1858
    %2196 = vmatpush2.msra.mxu0 %v1857
    %2197 = vmatprep.subr.mxu0 %v1854
    %2198 = vmatpush2.msra.mxu0 %v1853
    %2199 = vmatprep.subr.mxu0 %v1850
    %2200 = vmatpush2.msra.mxu0 %v1849
    %2201 = vmatprep.subr.mxu0 %v1846
    %2202 = vmatpush2.msra.mxu0 %v1845
    %2203 = vmatprep.subr.mxu0 %v1842
    %2204 = vmatpush2.msra.mxu0 %v1841
    %2205 = vmatprep.subr.mxu0 %v1838
    %2206 = vmatpush2.msra.mxu0 %v1837
    %2207 = vmatprep.subr.mxu0 %v1834
    %2208 = vmatpush2.msra.mxu0 %v1833
    %2209 = vmatprep.subr.mxu0 %v1830
    %2210 = vmatpush2.msra.mxu0 %v1829
    %2211 = vmatprep.subr.mxu0 %v1826
    %2212 = vmatpush2.msra.mxu0 %v1825
    %2213 = vmatprep.subr.mxu0 %v1822
    %2214 = vmatpush2.msra.mxu0 %v1821
    %2215 = vmatprep.subr.mxu0 %v1818
    %2216 = vmatpush2.msra.mxu0 %v1817
    %2217 = vmatprep.subr.mxu0 %v1814
    %2218 = vmatpush2.msra.mxu0 %v1813
    %2219 = vmatprep.subr.mxu0 %v1810
    %2220 = vmatpush2.msra.mxu0 %v1809
    %2221 = vmatprep.subr.mxu0 %v1806
    %2222 = vmatpush2.msra.mxu0 %v1805
    %2223 = vmatprep.mubr.f32.mxu0 %v1736
    %2224 = vmatmul.mubr.f32.gmra.mxu0 %v1735
    %v2225 = vpop.f32.mrf.mxu0
    %v2226 = vadd.f32 %v2008, %v2225
    %v2227 = vpop.f32.mrf.mxu0
    %v2228 = vadd.f32 %v2012, %v2227
    %2229 = vdwg.mxu0
    %2230 = vmatprep.subr.mxu0 %v1930
    %2231 = vmatpush1.msra.mxu0 %v1929
    %2232 = vmatprep.subr.mxu0 %v1926
    %2233 = vmatpush1.msra.mxu0 %v1925
    %2234 = vmatprep.subr.mxu0 %v1922
    %2235 = vmatpush1.msra.mxu0 %v1921
    %2236 = vmatprep.subr.mxu0 %v1918
    %2237 = vmatpush1.msra.mxu0 %v1917
    %2238 = vmatprep.subr.mxu0 %v1914
    %2239 = vmatpush1.msra.mxu0 %v1913
    %2240 = vmatprep.subr.mxu0 %v1910
    %2241 = vmatpush1.msra.mxu0 %v1909
    %2242 = vmatprep.subr.mxu0 %v1906
    %2243 = vmatpush1.msra.mxu0 %v1905
    %2244 = vmatprep.subr.mxu0 %v1902
    %2245 = vmatpush1.msra.mxu0 %v1901
    %2246 = vmatprep.subr.mxu0 %v1898
    %2247 = vmatpush1.msra.mxu0 %v1897
    %2248 = vmatprep.subr.mxu0 %v1894
    %2249 = vmatpush1.msra.mxu0 %v1893
    %2250 = vmatprep.subr.mxu0 %v1890
    %2251 = vmatpush1.msra.mxu0 %v1889
    %2252 = vmatprep.subr.mxu0 %v1886
    %2253 = vmatpush1.msra.mxu0 %v1885
    %2254 = vmatprep.subr.mxu0 %v1882
    %2255 = vmatpush1.msra.mxu0 %v1881
    %2256 = vmatprep.subr.mxu0 %v1878
    %2257 = vmatpush1.msra.mxu0 %v1877
    %2258 = vmatprep.subr.mxu0 %v1874
    %2259 = vmatpush1.msra.mxu0 %v1873
    %2260 = vmatprep.subr.mxu0 %v1870
    %2261 = vmatpush1.msra.mxu0 %v1869
    %2262 = vmatprep.subr.mxu0 %v1994
    %2263 = vmatpush2.msra.mxu0 %v1993
    %2264 = vmatprep.subr.mxu0 %v1990
    %2265 = vmatpush2.msra.mxu0 %v1989
    %2266 = vmatprep.subr.mxu0 %v1986
    %2267 = vmatpush2.msra.mxu0 %v1985
    %2268 = vmatprep.subr.mxu0 %v1982
    %2269 = vmatpush2.msra.mxu0 %v1981
    %2270 = vmatprep.subr.mxu0 %v1978
    %2271 = vmatpush2.msra.mxu0 %v1977
    %2272 = vmatprep.subr.mxu0 %v1974
    %2273 = vmatpush2.msra.mxu0 %v1973
    %2274 = vmatprep.subr.mxu0 %v1970
    %2275 = vmatpush2.msra.mxu0 %v1969
    %2276 = vmatprep.subr.mxu0 %v1966
    %2277 = vmatpush2.msra.mxu0 %v1965
    %2278 = vmatprep.subr.mxu0 %v1962
    %2279 = vmatpush2.msra.mxu0 %v1961
    %2280 = vmatprep.subr.mxu0 %v1958
    %2281 = vmatpush2.msra.mxu0 %v1957
    %2282 = vmatprep.subr.mxu0 %v1954
    %2283 = vmatpush2.msra.mxu0 %v1953
    %2284 = vmatprep.subr.mxu0 %v1950
    %2285 = vmatpush2.msra.mxu0 %v1949
    %2286 = vmatprep.subr.mxu0 %v1946
    %2287 = vmatpush2.msra.mxu0 %v1945
    %2288 = vmatprep.subr.mxu0 %v1942
    %2289 = vmatpush2.msra.mxu0 %v1941
    %2290 = vmatprep.subr.mxu0 %v1938
    %2291 = vmatpush2.msra.mxu0 %v1937
    %2292 = vmatprep.subr.mxu0 %v1934
    %2293 = vmatpush2.msra.mxu0 %v1933
    %2294 = vmatprep.mubr.f32.mxu0 %v1738
    %2295 = vmatmul.mubr.f32.gmra.mxu0 %v1737
    %v2296 = vpop.f32.mrf.mxu0
    %v2297 = vadd.f32 %v2226, %v2296
    %v2298 = vpop.f32.mrf.mxu0
    %v2299 = vadd.f32 %v2228, %v2298
    %2300 = vdwg.mxu0
    %v2301 = vmax.f32 %v2155, 0.0
    %v2302 = vmax.f32 %v2157, 0.0
    %v2303 = vmax.f32 %v2297, 0.0
    %v2304 = vmax.f32 %v2299, 0.0
    %v2305 = vld [vmem:[%s9] sm:$0xff]
    %v2306 = vld [vmem:[%s9 + $0x8] sm:$0xff]
    %v2307 = vld [vmem:[%s9 + $0x10] sm:$0xff]
    %v2308 = vld [vmem:[%s9 + $0x18] sm:$0xff]
    %v2309 = vld [vmem:[%s9 + $0x20] sm:$0xff]
    %v2310 = vld [vmem:[%s9 + $0x28] sm:$0xff]
    %v2311 = vld [vmem:[%s9 + $0x30] sm:$0xff]
    %v2312 = vld [vmem:[%s9 + $0x38] sm:$0xff]
    %v2313 = vld [vmem:[%s9 + $0x40] sm:$0xff]
    %v2314 = vld [vmem:[%s9 + $0x48] sm:$0xff]
    %v2315 = vld [vmem:[%s9 + $0x50] sm:$0xff]
    %v2316 = vld [vmem:[%s9 + $0x58] sm:$0xff]
    %v2317 = vld [vmem:[%s9 + $0x60] sm:$0xff]
    %v2318 = vld [vmem:[%s9 + $0x68] sm:$0xff]
    %v2319 = vld [vmem:[%s9 + $0x70] sm:$0xff]
    %v2320 = vld [vmem:[%s9 + $0x78] sm:$0xff]
    %v2321 = vld [vmem:[%s9 + $0x80] sm:$0xff]
    %v2322 = vld [vmem:[%s9 + $0x88] sm:$0xff]
    %v2323 = vld [vmem:[%s9 + $0x90] sm:$0xff]
    %v2324 = vld [vmem:[%s9 + $0x98] sm:$0xff]
    %v2325 = vld [vmem:[%s9 + $0xa0] sm:$0xff]
    %v2326 = vld [vmem:[%s9 + $0xa8] sm:$0xff]
    %v2327 = vld [vmem:[%s9 + $0xb0] sm:$0xff]
    %v2328 = vld [vmem:[%s9 + $0xb8] sm:$0xff]
    %v2329 = vld [vmem:[%s9 + $0xc0] sm:$0xff]
    %v2330 = vld [vmem:[%s9 + $0xc8] sm:$0xff]
    %v2331 = vld [vmem:[%s9 + $0xd0] sm:$0xff]
    %v2332 = vld [vmem:[%s9 + $0xd8] sm:$0xff]
    %v2333 = vld [vmem:[%s9 + $0xe0] sm:$0xff]
    %v2334 = vld [vmem:[%s9 + $0xe8] sm:$0xff]
    %v2335 = vld [vmem:[%s9 + $0xf0] sm:$0xff]
    %v2336 = vld [vmem:[%s9 + $0xf8] sm:$0xff]
    %v2337 = vld [vmem:[%s9 + $0x100] sm:$0xff]
    %v2338 = vld [vmem:[%s9 + $0x108] sm:$0xff]
    %v2339 = vld [vmem:[%s9 + $0x110] sm:$0xff]
    %v2340 = vld [vmem:[%s9 + $0x118] sm:$0xff]
    %v2341 = vld [vmem:[%s9 + $0x120] sm:$0xff]
    %v2342 = vld [vmem:[%s9 + $0x128] sm:$0xff]
    %v2343 = vld [vmem:[%s9 + $0x130] sm:$0xff]
    %v2344 = vld [vmem:[%s9 + $0x138] sm:$0xff]
    %v2345 = vld [vmem:[%s9 + $0x140] sm:$0xff]
    %v2346 = vld [vmem:[%s9 + $0x148] sm:$0xff]
    %v2347 = vld [vmem:[%s9 + $0x150] sm:$0xff]
    %v2348 = vld [vmem:[%s9 + $0x158] sm:$0xff]
    %v2349 = vld [vmem:[%s9 + $0x160] sm:$0xff]
    %v2350 = vld [vmem:[%s9 + $0x168] sm:$0xff]
    %v2351 = vld [vmem:[%s9 + $0x170] sm:$0xff]
    %v2352 = vld [vmem:[%s9 + $0x178] sm:$0xff]
    %v2353 = vld [vmem:[%s9 + $0x180] sm:$0xff]
    %v2354 = vld [vmem:[%s9 + $0x188] sm:$0xff]
    %v2355 = vld [vmem:[%s9 + $0x190] sm:$0xff]
    %v2356 = vld [vmem:[%s9 + $0x198] sm:$0xff]
    %v2357 = vld [vmem:[%s9 + $0x1a0] sm:$0xff]
    %v2358 = vld [vmem:[%s9 + $0x1a8] sm:$0xff]
    %v2359 = vld [vmem:[%s9 + $0x1b0] sm:$0xff]
    %v2360 = vld [vmem:[%s9 + $0x1b8] sm:$0xff]
    %v2361 = vld [vmem:[%s9 + $0x1c0] sm:$0xff]
    %v2362 = vld [vmem:[%s9 + $0x1c8] sm:$0xff]
    %v2363 = vld [vmem:[%s9 + $0x1d0] sm:$0xff]
    %v2364 = vld [vmem:[%s9 + $0x1d8] sm:$0xff]
    %v2365 = vld [vmem:[%s9 + $0x1e0] sm:$0xff]
    %v2366 = vld [vmem:[%s9 + $0x1e8] sm:$0xff]
    %v2367 = vld [vmem:[%s9 + $0x1f0] sm:$0xff]
    %v2368 = vld [vmem:[%s9 + $0x1f8] sm:$0xff]
    %v2369 = vld [vmem:[%s10] sm:$0x1]
    %v2371 = vlaneseq
    %v2372 = vshrl.u32 %v2371, 7
    %v2373 = vsub.s32 0, %v2372
    %v2374 = vrot.slane %v2369, %v2373
    %2376 = vmatprep.subr.mxu0 0.0
    %2377 = vmatpush1.msra.mxu0 %v2320
    %2378 = vmatprep.subr.mxu0 0.0
    %2379 = vmatpush1.msra.mxu0 %v2319
    %2380 = vmatprep.subr.mxu0 0.0
    %2381 = vmatpush1.msra.mxu0 %v2318
    %2382 = vmatprep.subr.mxu0 0.0
    %2383 = vmatpush1.msra.mxu0 %v2317
    %2384 = vmatprep.subr.mxu0 0.0
    %2385 = vmatpush1.msra.mxu0 %v2316
    %2386 = vmatprep.subr.mxu0 0.0
    %2387 = vmatpush1.msra.mxu0 %v2315
    %2388 = vmatprep.subr.mxu0 0.0
    %2389 = vmatpush1.msra.mxu0 %v2314
    %2390 = vmatprep.subr.mxu0 0.0
    %2391 = vmatpush1.msra.mxu0 %v2313
    %2392 = vmatprep.subr.mxu0 0.0
    %2393 = vmatpush1.msra.mxu0 %v2312
    %2394 = vmatprep.subr.mxu0 0.0
    %2395 = vmatpush1.msra.mxu0 %v2311
    %2396 = vmatprep.subr.mxu0 0.0
    %2397 = vmatpush1.msra.mxu0 %v2310
    %2398 = vmatprep.subr.mxu0 0.0
    %2399 = vmatpush1.msra.mxu0 %v2309
    %2400 = vmatprep.subr.mxu0 0.0
    %2401 = vmatpush1.msra.mxu0 %v2308
    %2402 = vmatprep.subr.mxu0 0.0
    %2403 = vmatpush1.msra.mxu0 %v2307
    %2404 = vmatprep.subr.mxu0 0.0
    %2405 = vmatpush1.msra.mxu0 %v2306
    %2406 = vmatprep.subr.mxu0 0.0
    %2407 = vmatpush1.msra.mxu0 %v2305
    %2408 = vmatprep.subr.mxu0 0.0
    %2409 = vmatpush2.msra.mxu0 %v2336
    %2410 = vmatprep.subr.mxu0 0.0
    %2411 = vmatpush2.msra.mxu0 %v2335
    %2412 = vmatprep.subr.mxu0 0.0
    %2413 = vmatpush2.msra.mxu0 %v2334
    %2414 = vmatprep.subr.mxu0 0.0
    %2415 = vmatpush2.msra.mxu0 %v2333
    %2416 = vmatprep.subr.mxu0 0.0
    %2417 = vmatpush2.msra.mxu0 %v2332
    %2418 = vmatprep.subr.mxu0 0.0
    %2419 = vmatpush2.msra.mxu0 %v2331
    %2420 = vmatprep.subr.mxu0 0.0
    %2421 = vmatpush2.msra.mxu0 %v2330
    %2422 = vmatprep.subr.mxu0 0.0
    %2423 = vmatpush2.msra.mxu0 %v2329
    %2424 = vmatprep.subr.mxu0 0.0
    %2425 = vmatpush2.msra.mxu0 %v2328
    %2426 = vmatprep.subr.mxu0 0.0
    %2427 = vmatpush2.msra.mxu0 %v2327
    %2428 = vmatprep.subr.mxu0 0.0
    %2429 = vmatpush2.msra.mxu0 %v2326
    %2430 = vmatprep.subr.mxu0 0.0
    %2431 = vmatpush2.msra.mxu0 %v2325
    %2432 = vmatprep.subr.mxu0 0.0
    %2433 = vmatpush2.msra.mxu0 %v2324
    %2434 = vmatprep.subr.mxu0 0.0
    %2435 = vmatpush2.msra.mxu0 %v2323
    %2436 = vmatprep.subr.mxu0 0.0
    %2437 = vmatpush2.msra.mxu0 %v2322
    %2438 = vmatprep.subr.mxu0 0.0
    %2439 = vmatpush2.msra.mxu0 %v2321
    %2440 = vmatprep.mubr.f32.mxu0 %v2302
    %2441 = vmatmul.mubr.f32.gmra.mxu0 %v2301
    %v2442 = vpop.f32.mrf.mxu0
    %v2443 = vadd.f32 %v2374, %v2442
    %v2444 = vpop.f32.mrf.mxu0
    %2445 = vdwg.mxu0
    %2446 = vmatprep.subr.mxu0 0.0
    %2447 = vmatpush1.msra.mxu0 %v2352
    %2448 = vmatprep.subr.mxu0 0.0
    %2449 = vmatpush1.msra.mxu0 %v2351
    %2450 = vmatprep.subr.mxu0 0.0
    %2451 = vmatpush1.msra.mxu0 %v2350
    %2452 = vmatprep.subr.mxu0 0.0
    %2453 = vmatpush1.msra.mxu0 %v2349
    %2454 = vmatprep.subr.mxu0 0.0
    %2455 = vmatpush1.msra.mxu0 %v2348
    %2456 = vmatprep.subr.mxu0 0.0
    %2457 = vmatpush1.msra.mxu0 %v2347
    %2458 = vmatprep.subr.mxu0 0.0
    %2459 = vmatpush1.msra.mxu0 %v2346
    %2460 = vmatprep.subr.mxu0 0.0
    %2461 = vmatpush1.msra.mxu0 %v2345
    %2462 = vmatprep.subr.mxu0 0.0
    %2463 = vmatpush1.msra.mxu0 %v2344
    %2464 = vmatprep.subr.mxu0 0.0
    %2465 = vmatpush1.msra.mxu0 %v2343
    %2466 = vmatprep.subr.mxu0 0.0
    %2467 = vmatpush1.msra.mxu0 %v2342
    %2468 = vmatprep.subr.mxu0 0.0
    %2469 = vmatpush1.msra.mxu0 %v2341
    %2470 = vmatprep.subr.mxu0 0.0
    %2471 = vmatpush1.msra.mxu0 %v2340
    %2472 = vmatprep.subr.mxu0 0.0
    %2473 = vmatpush1.msra.mxu0 %v2339
    %2474 = vmatprep.subr.mxu0 0.0
    %2475 = vmatpush1.msra.mxu0 %v2338
    %2476 = vmatprep.subr.mxu0 0.0
    %2477 = vmatpush1.msra.mxu0 %v2337
    %2478 = vmatprep.subr.mxu0 0.0
    %2479 = vmatpush2.msra.mxu0 %v2368
    %2480 = vmatprep.subr.mxu0 0.0
    %2481 = vmatpush2.msra.mxu0 %v2367
    %2482 = vmatprep.subr.mxu0 0.0
    %2483 = vmatpush2.msra.mxu0 %v2366
    %2484 = vmatprep.subr.mxu0 0.0
    %2485 = vmatpush2.msra.mxu0 %v2365
    %2486 = vmatprep.subr.mxu0 0.0
    %2487 = vmatpush2.msra.mxu0 %v2364
    %2488 = vmatprep.subr.mxu0 0.0
    %2489 = vmatpush2.msra.mxu0 %v2363
    %2490 = vmatprep.subr.mxu0 0.0
    %2491 = vmatpush2.msra.mxu0 %v2362
    %2492 = vmatprep.subr.mxu0 0.0
    %2493 = vmatpush2.msra.mxu0 %v2361
    %2494 = vmatprep.subr.mxu0 0.0
    %2495 = vmatpush2.msra.mxu0 %v2360
    %2496 = vmatprep.subr.mxu0 0.0
    %2497 = vmatpush2.msra.mxu0 %v2359
    %2498 = vmatprep.subr.mxu0 0.0
    %2499 = vmatpush2.msra.mxu0 %v2358
    %2500 = vmatprep.subr.mxu0 0.0
    %2501 = vmatpush2.msra.mxu0 %v2357
    %2502 = vmatprep.subr.mxu0 0.0
    %2503 = vmatpush2.msra.mxu0 %v2356
    %2504 = vmatprep.subr.mxu0 0.0
    %2505 = vmatpush2.msra.mxu0 %v2355
    %2506 = vmatprep.subr.mxu0 0.0
    %2507 = vmatpush2.msra.mxu0 %v2354
    %2508 = vmatprep.subr.mxu0 0.0
    %2509 = vmatpush2.msra.mxu0 %v2353
    %2510 = vmatprep.mubr.f32.mxu0 %v2304
    %2511 = vmatmul.mubr.f32.gmra.mxu0 %v2303
    %v2512 = vpop.f32.mrf.mxu0
    %v2513 = vadd.f32 %v2443, %v2512
    %v2514 = vpop.f32.mrf.mxu0
    %2515 = vdwg.mxu0
    %vm2516 = vcmask 812032
    %2517 = vst.msk [vmem:[#allocation2] sm:$0x3] %vm2516, %v2513
    // Predicated region
    $region46: #{forward.5} parent=1 // pred_check
      _
    $region47: #{forward.5} parent=1 // pred_check_branch
      %2519 = sbr.rel (0) target = $region49
    $region48: #{forward.5} parent=1 // pred_region
      %s2521 = ssub.s32 32, 32
      %2522 = vsyncadd [#allocation3], %s2521
      %s2524 = sshll.u32 [#allocation2], 4
      %s2525 = int_to_ptr.vmem [resolvable:$true] %s2524
      %2527 = dma.vmem_to_hbm [thread:$0]  %s2525, 32, %s11, [#allocation3]
    $region49: #{forward.5} parent=1 // pred_fallthru
      _
    // Predicated region
    $region50: #{forward.5} parent=1 // pred_check
      _
    $region51: #{forward.5} parent=1 // pred_check_branch
      %2529 = sbr.rel (0) target = $region53
    $region52: #{forward.5} parent=1 // pred_region
      %2530 = dma.done [#allocation3], 32
    $region53: #{forward.5} parent=1 // pred_fallthru
      _
    %2531 = vsyncpa [#allocation3], 1

</llo_original>
